<compile_context>
chip_gen: v5e
topology: v5e:2x2
jax: 0.10.0
libtpu: 0.0.40
codegen_flags: <defaults>
</compile_context>

<pallas_src>
import functools
import math

import numpy as np
import jax
import jax.numpy as jnp
from jax.experimental import pallas as pl
from jax.experimental.pallas import tpu as pltpu

# ----------------------------- configuration ------------------------------
B_IMG = 2          # batch
IMG = 16           # input image H = W
NUM_CHANNELS = 4   # backbone.num_channels
D_MODEL = 32       # transformer.d_model (hidden_dim)
NHEAD = 4
DH = D_MODEL // NHEAD
FFN = 64
NQ = 8             # number of query points
# TODO(synk): N_ENC = N_DEC = 1 here; deeper stacks would repeat the layer blocks.

_VMEM = pl.BlockSpec(memory_space=pltpu.MemorySpace.VMEM)


# ------------------------- in-kernel building blocks -----------------------
def _layer_norm(x, gb, eps=1e-5):
    """LayerNorm over the last axis. gb: (2, D), row 0 = gamma, row 1 = beta."""
    mu = jnp.mean(x, axis=-1, keepdims=True)
    xc = x - mu
    var = jnp.mean(xc * xc, axis=-1, keepdims=True)
    return xc * jax.lax.rsqrt(var + eps) * gb[0:1, :] + gb[1:2, :]


def _attn_core(q_all, k_all, v_all, wo_ref, bo_ref, nheads, dh):
    """Scaled-dot-product attention on ALREADY-PROJECTED, head-packed activations.

    q_all: (Lq, H*dh)  (1/sqrt(dh) already folded into the q projection)
    k_all, v_all: (Lk, H*dh)
    wo_ref: (H, dh, D) per-head row slices of out_proj;  bo_ref: (1, D)
    Heads are never concatenated: each head's output goes through its slice of the
    output projection and is summed (identical to concat + out_proj).
    """
    acc = None
    for h in range(nheads):
        q = q_all[:, h * dh:(h + 1) * dh]
        k = k_all[:, h * dh:(h + 1) * dh]
        v = v_all[:, h * dh:(h + 1) * dh]
        s = jax.lax.dot_general(q, k, (((1,), (1,)), ((), ())),
                                preferred_element_type=jnp.float32)          # (Lq, Lk)
        s = s - jnp.max(s, axis=-1, keepdims=True)
        p = jnp.exp(s)
        p = p * pl.reciprocal(jnp.sum(p, axis=-1, keepdims=True), approx=True)
        o = jnp.dot(p, v, preferred_element_type=jnp.float32)                # (Lq, dh)
        c = jnp.dot(o, wo_ref[h], preferred_element_type=jnp.float32)        # (Lq, D)
        acc = c if acc is None else acc + c
    return acc + bo_ref[...]


# ------------------------------ fused kernel -------------------------------
def _cotr_kernel(x_ref, pos_ref, qxy_ref, qpe_ref, tsa_ref,
                 win_ref, bin_ref,
                 e_wqk_ref, e_bqk_ref, e_wv_ref, e_bv_ref, e_wo_ref, e_bo_ref,
                 e_w1_ref, e_b1_ref, e_w2_ref, e_b2_ref, e_norms_ref,
                 c_wqkv_ref, c_bqkv_ref, c_wo_ref, c_bo_ref,
                 d_w1_ref, d_b1_ref, d_w2_ref, d_b2_ref, d_norms_ref,
                 cw12_ref, cb12_ref, cw3_ref, cb3_ref,
                 out_ref, *, n_batch, l_tok, n_q, nheads, dh):
    d_model = e_wv_ref.shape[1]

    # ------------------------------- encoder -------------------------------
    # (folded backbone 1x1 conv + input_proj) -> src
    src = jnp.dot(x_ref[...], win_ref[...],
                  preferred_element_type=jnp.float32) + bin_ref[...]          # (B*L, D)
    pos = pos_ref[...]
    qk_in = src + pos                                                         # q = k = src + pos

    # wide packed [Wq*scale | Wk] projection, plus Wv (v input is src, not src+pos)
    qk = jnp.dot(qk_in, e_wqk_ref[...],
                 preferred_element_type=jnp.float32) + e_bqk_ref[...]         # (B*L, 2D)
    v = jnp.dot(src, e_wv_ref[...],
                preferred_element_type=jnp.float32) + e_bv_ref[...]           # (B*L, D)

    blocks = []
    for b in range(n_batch):                        # attention is per-batch (block-diag mask)
        lo = b * l_tok
        blocks.append(_attn_core(qk[lo:lo + l_tok, :d_model],
                                 qk[lo:lo + l_tok, d_model:],
                                 v[lo:lo + l_tok, :],
                                 e_wo_ref, e_bo_ref, nheads, dh))
    attn = jnp.concatenate(blocks, axis=0) if n_batch > 1 else blocks[0]

    # batch-independent: residual + norm1, FFN, norm2 on the full slab
    x = _layer_norm(src + attn, e_norms_ref[0])
    hdn = jnp.maximum(jnp.dot(x, e_w1_ref[...],
                              preferred_element_type=jnp.float32) + e_b1_ref[...], 0.0)
    y = jnp.dot(hdn, e_w2_ref[...], preferred_element_type=jnp.float32) + e_b2_ref[...]
    memory = _layer_norm(x + y, e_norms_ref[1])      # encoder memory stays in VMEM (fused)

    # ------------------------------- decoder -------------------------------
    # NerfPositionalEncoding('lin_sine'): one matmul + one sin; the cos half comes from
    # the +pi/2 phase columns baked into the constant qpe matrix.
    qpos = jnp.sin(jnp.dot(qxy_ref[...], qpe_ref[0:2, :],
                           preferred_element_type=jnp.float32) + qpe_ref[2:3, :])  # (B*Q, D)

    # Decoder self-attention on tgt == 0 is input-independent (value rows == value bias,
    # softmax rows sum to 1): its post-norm1 result is the precomputed constant row tsa.
    # TODO(synk): reinstate in-kernel self-attention for N_DEC > 1 or nonzero tgt.
    tsa = tsa_ref[...]                                                        # (1, D)

    memk = memory + pos                               # cross-attn keys get pos, values don't
    # TODO(synk): key_padding_mask omitted — the stand-in backbone mask is all-valid.

    # cross-attn projections over the FULL slabs (scale folded into the q projection)
    q_all = jnp.dot(tsa + qpos, c_wqkv_ref[0],
                    preferred_element_type=jnp.float32) + c_bqkv_ref[0]       # (B*Q, D)
    k_all = jnp.dot(memk, c_wqkv_ref[1],
                    preferred_element_type=jnp.float32) + c_bqkv_ref[1]       # (B*L, D)
    v_all = jnp.dot(memory, c_wqkv_ref[2],
                    preferred_element_type=jnp.float32) + c_bqkv_ref[2]       # (B*L, D)

    blocks = []
    for b in range(n_batch):
        qlo = b * n_q
        mlo = b * l_tok
        blocks.append(_attn_core(q_all[qlo:qlo + n_q, :],
                                 k_all[mlo:mlo + l_tok, :],
                                 v_all[mlo:mlo + l_tok, :],
                                 c_wo_ref, c_bo_ref, nheads, dh))
    t2 = jnp.concatenate(blocks, axis=0) if n_batch > 1 else blocks[0]        # (B*Q, D)

    # batch-independent tail: norm2, FFN, norm3, decoder norm, corr MLP, single store
    tgt = _layer_norm(tsa + t2, d_norms_ref[0])
    hdn = jnp.maximum(jnp.dot(tgt, d_w1_ref[...],
                              preferred_element_type=jnp.float32) + d_b1_ref[...], 0.0)
    y = jnp.dot(hdn, d_w2_ref[...], preferred_element_type=jnp.float32) + d_b2_ref[...]
    tgt = _layer_norm(tgt + y, d_norms_ref[1])
    hs = _layer_norm(tgt, d_norms_ref[2])             # return_intermediate decoder norm

    # corr_embed MLP: D -> D -> D -> 2 with ReLU between
    x = jnp.maximum(jnp.dot(hs, cw12_ref[0],
                            preferred_element_type=jnp.float32) + cb12_ref[0], 0.0)
    x = jnp.maximum(jnp.dot(x, cw12_ref[1],
                            preferred_element_type=jnp.float32) + cb12_ref[1], 0.0)
    out_ref[...] = jnp.dot(x, cw3_ref[...],
                           preferred_element_type=jnp.float32) + cb3_ref[...]


# --------------------------- compile-time constants ------------------------
def _sine_pos_embedding(b, h, w, num_pos_feats, temperature=10000.0):
    """DETR PositionEmbeddingSine (normalize=True) for an all-valid mask, flattened
    batch-major to (b*h*w, 2*num_pos_feats). Static shapes -> compile-time constant."""
    not_mask = np.ones((b, h, w), dtype=np.float32)
    y_embed = not_mask.cumsum(1)
    x_embed = not_mask.cumsum(2)
    eps = 1e-6
    scale = 2.0 * math.pi
    y_embed = y_embed / (y_embed[:, -1:, :] + eps) * scale
    x_embed = x_embed / (x_embed[:, :, -1:] + eps) * scale
    dim_t = np.arange(num_pos_feats, dtype=np.float32)
    dim_t = (temperature ** (2.0 * np.floor(dim_t / 2.0) / num_pos_feats)).astype(np.float32)
    pos_x = x_embed[..., None] / dim_t
    pos_y = y_embed[..., None] / dim_t
    pos_x = np.stack([np.sin(pos_x[..., 0::2]), np.cos(pos_x[..., 1::2])],
                     axis=4).reshape(b, h, w, num_pos_feats)
    pos_y = np.stack([np.sin(pos_y[..., 0::2]), np.cos(pos_y[..., 1::2])],
                     axis=4).reshape(b, h, w, num_pos_feats)
    pos = np.concatenate([pos_y, pos_x], axis=3)                   # (b, h, w, 2*npf)
    return jnp.asarray(pos.reshape(b * h * w, 2 * num_pos_feats), dtype=jnp.float32)


def _nerf_pe_consts(d_model):
    """Constant (3, D) matrix for the NeRF query PE: rows 0-1 map (x,y) to the
    lin_sine arguments for both the sin half and the (duplicated) cos half; row 2 is the
    phase (+pi/2 on the cos half), so qpos = sin(xy @ rows01 + row2)."""
    m = d_model // 2                               # = 2 * depth
    tmat = np.zeros((2, m), np.float32)
    for j in range(m):
        tmat[j % 2, j] = (j // 2 + 1) * math.pi    # col j: (j//2+1)*pi * xy[j%2]
    tmat2 = np.concatenate([tmat, tmat], axis=1)                              # (2, D)
    phase = np.concatenate([np.zeros((1, m), np.float32),
                            np.full((1, m), math.pi / 2.0, np.float32)], axis=1)  # (1, D)
    return jnp.asarray(np.concatenate([tmat2, phase], axis=0))                # (3, D)


# ----------------------------- COTR forward --------------------------------
def cotr_forward(packed, samples, queries):
    """samples: (B, 3, H, W) f32; queries: (B, Q, 2) in [0,1] -> {'pred_corrs': (B, Q, 2)}."""
    b = samples.shape[0]

    # --- backbone ---
    # TODO(synk): the real COTR backbone is an injected ResNet + NestedTensor module; this
    # deterministic stand-in (stride-2 subsample, 1x1 conv folded into the kernel's first
    # matmul, all-valid mask, DETR sine pos-embed) produces the (features, mask, pos)
    # triple that COTR.forward consumes.
    feat = samples[:, :, ::2, ::2]                                       # (B, 3, Hf, Wf)
    hf, wf = feat.shape[2], feat.shape[3]
    l_tok = hf * wf
    x_feat = jnp.transpose(feat, (0, 2, 3, 1)).reshape(b * l_tok, feat.shape[1])

    pos_flat = _sine_pos_embedding(b, hf, wf, D_MODEL // 2)              # (B*L, D) constant
    qpe = _nerf_pe_consts(D_MODEL)                                       # (3, D)  constant

    n_q = queries.shape[1]
    q_xy = queries.reshape(b * n_q, 2).astype(jnp.float32)               # row = b*Q + q

    pred = pl.pallas_call(
        functools.partial(_cotr_kernel, n_batch=b, l_tok=l_tok, n_q=n_q,
                          nheads=NHEAD, dh=DH),
        out_shape=jax.ShapeDtypeStruct((b * n_q, 2), jnp.float32),
        in_specs=[_VMEM] * 31,
        out_specs=_VMEM,
    )(x_feat, pos_flat, q_xy, qpe, packed['tsa'],
      packed['w_in'], packed['b_in'],
      packed['e_wqk'], packed['e_bqk'], packed['e_wv'], packed['e_bv'],
      packed['e_wo'], packed['e_bo'],
      packed['e_w1'], packed['e_b1'], packed['e_w2'], packed['e_b2'], packed['e_norms'],
      packed['c_wqkv'], packed['c_bqkv'], packed['c_wo'], packed['c_bo'],
      packed['d_w1'], packed['d_b1'], packed['d_w2'], packed['d_b2'], packed['d_norms'],
      packed['corr_w12'], packed['corr_b12'], packed['corr_w3'], packed['corr_b3'])

    return {'pred_corrs': pred.reshape(b, n_q, 2)}


# ----------------------------- parameter init ------------------------------
def init_params(key):
    """PyTorch-layout parameters (per-head nn.MultiheadAttention packing)."""
    ks = iter(jax.random.split(key, 32))

    def nrm(shape):
        return jax.random.normal(next(ks), shape, jnp.float32) * 0.05

    def zeros(shape):
        return jnp.zeros(shape, jnp.float32)

    def attn():
        # per-head packing of nn.MultiheadAttention's in_proj (q|k|v) and out_proj:
        #   wqkv[p, h] <-> W_p[:, h*dh:(h+1)*dh],  wo[h] <-> W_out[h*dh:(h+1)*dh, :]
        return {'wqkv': nrm((3, NHEAD, D_MODEL, DH)),
                'bqkv': zeros((3, NHEAD, 1, DH)),
                'wo': nrm((NHEAD, DH, D_MODEL)),
                'bo': zeros((1, D_MODEL))}

    def norm_stack(n):  # (n, 2, D): [:, 0] = gamma, [:, 1] = beta
        return jnp.stack([jnp.ones((n, D_MODEL), jnp.float32),
                          jnp.zeros((n, D_MODEL), jnp.float32)], axis=1)

    return {
        'backbone': {'w': nrm((3, NUM_CHANNELS)), 'b': zeros((1, NUM_CHANNELS))},
        'input_proj': {'w': nrm((NUM_CHANNELS, D_MODEL)), 'b': zeros((1, D_MODEL))},
        'encoder': {'attn': attn(),
                    'w1': nrm((D_MODEL, FFN)), 'b1': zeros((1, FFN)),
                    'w2': nrm((FFN, D_MODEL)), 'b2': zeros((1, D_MODEL)),
                    'norms': norm_stack(2)},                   # [norm1, norm2]
        'decoder': {'self_attn': attn(), 'cross_attn': attn(),
                    'w1': nrm((D_MODEL, FFN)), 'b1': zeros((1, FFN)),
                    'w2': nrm((FFN, D_MODEL)), 'b2': zeros((1, D_MODEL)),
                    'norms': norm_stack(4)},                   # [norm1, norm2, norm3, dec_norm]
        'corr': {'w12': nrm((2, D_MODEL, D_MODEL)), 'b12': zeros((2, 1, D_MODEL)),
                 'w3': nrm((D_MODEL, 2)), 'b3': zeros((1, 2))},
    }


def pack_params(params):
    """One-time repack of PyTorch-layout params into kernel-friendly slabs (zero per-call
    cost): conv+input_proj fold, wide [Wq*scale|Wk] packing, scale folded into q-proj,
    decoder-self-attn(tgt=0)+norm1 constant fold."""
    d = D_MODEL
    scale = 1.0 / math.sqrt(DH)

    def heads_w(w):   # (H, D, dh) -> (D, H*dh), heads packed along lanes
        return jnp.transpose(w, (1, 0, 2)).reshape(d, NHEAD * DH)

    def heads_b(bb):  # (H, 1, dh) -> (1, H*dh)
        return jnp.transpose(bb, (1, 0, 2)).reshape(1, NHEAD * DH)

    enc, dec, corr = params['encoder'], params['decoder'], params['corr']
    ea, sa, ca = enc['attn'], dec['self_attn'], dec['cross_attn']

    # backbone 1x1 conv folded into input_proj
    w_in = params['backbone']['w'] @ params['input_proj']['w']
    b_in = params['backbone']['b'] @ params['input_proj']['w'] + params['input_proj']['b']

    # encoder self-attention: q/k share the input (src+pos) -> one wide packed weight
    e_wqk = jnp.concatenate([heads_w(ea['wqkv'][0]) * scale, heads_w(ea['wqkv'][1])], axis=1)
    e_bqk = jnp.concatenate([heads_b(ea['bqkv'][0]) * scale, heads_b(ea['bqkv'][1])], axis=1)

    # decoder cross-attention: q/k/v inputs differ -> keep three (D, D) projections
    c_wqkv = jnp.stack([heads_w(ca['wqkv'][0]) * scale,
                        heads_w(ca['wqkv'][1]),
                        heads_w(ca['wqkv'][2])])
    c_bqkv = jnp.stack([heads_b(ca['bqkv'][0]) * scale,
                        heads_b(ca['bqkv'][1]),
                        heads_b(ca['bqkv'][2])])

    # Decoder self-attn with tgt == 0 (single layer): value rows == value bias and softmax
    # rows sum to 1, so the attention output is the constant row sum_h bv_h @ Wo_h + bo;
    # fold norm1 of it here as well.
    # TODO(synk): reinstate the in-kernel self-attention for N_DEC > 1 / nonzero tgt.
    dsa = jnp.einsum('hd,hdm->m', sa['bqkv'][2][:, 0, :], sa['wo'])[None, :] + sa['bo']
    gb1 = dec['norms'][0]
    mu = jnp.mean(dsa, axis=-1, keepdims=True)
    var = jnp.mean((dsa - mu) ** 2, axis=-1, keepdims=True)
    tsa = (dsa - mu) * jax.lax.rsqrt(var + 1e-5) * gb1[0:1, :] + gb1[1:2, :]

    return {
        'w_in': w_in, 'b_in': b_in,
        'e_wqk': e_wqk, 'e_bqk': e_bqk,
        'e_wv': heads_w(ea['wqkv'][2]), 'e_bv': heads_b(ea['bqkv'][2]),
        'e_wo': ea['wo'], 'e_bo': ea['bo'],
        'e_w1': enc['w1'], 'e_b1': enc['b1'], 'e_w2': enc['w2'], 'e_b2': enc['b2'],
        'e_norms': enc['norms'],
        'tsa': tsa,
        'c_wqkv': c_wqkv, 'c_bqkv': c_bqkv, 'c_wo': ca['wo'], 'c_bo': ca['bo'],
        'd_w1': dec['w1'], 'd_b1': dec['b1'], 'd_w2': dec['w2'], 'd_b2': dec['b2'],
        'd_norms': dec['norms'][1:4],                  # [norm2, norm3, dec_norm]
        'corr_w12': corr['w12'], 'corr_b12': corr['b12'],
        'corr_w3': corr['w3'], 'corr_b3': corr['b3'],
    }


# --------------------------------- main -------------------------------------
if __name__ == "__main__":
    key = jax.random.PRNGKey(0)
    k_params, k_img, k_q = jax.random.split(key, 3)

    params = init_params(k_params)
    packed = pack_params(params)                      # one-time, outside the jitted forward

    samples = jax.random.normal(k_img, (B_IMG, 3, IMG, IMG), dtype=jnp.float32)
    queries = jax.random.uniform(k_q, (B_IMG, NQ, 2), dtype=jnp.float32)

    fwd = jax.jit(cotr_forward)
    out = fwd(packed, samples, queries)
    pred = out['pred_corrs']
    jax.block_until_ready(pred)

    assert pred.shape == (B_IMG, NQ, 2), pred.shape
    assert pred.dtype == jnp.float32
    assert bool(jnp.all(jnp.isfinite(pred)))
    print("KERNEL_OK")
</pallas_src>

<mosaic_0001>
module attributes {stable_mosaic.version = 11 : i64} {
  func.func @_cotr_kernel(%arg0: memref<128x3xf32, #tpu.memory_space<vmem>>, %arg1: memref<128x32xf32, #tpu.memory_space<vmem>>, %arg2: memref<16x2xf32, #tpu.memory_space<vmem>>, %arg3: memref<3x32xf32, #tpu.memory_space<vmem>>, %arg4: memref<1x32xf32, #tpu.memory_space<vmem>>, %arg5: memref<3x32xf32, #tpu.memory_space<vmem>>, %arg6: memref<1x32xf32, #tpu.memory_space<vmem>>, %arg7: memref<32x64xf32, #tpu.memory_space<vmem>>, %arg8: memref<1x64xf32, #tpu.memory_space<vmem>>, %arg9: memref<32x32xf32, #tpu.memory_space<vmem>>, %arg10: memref<1x32xf32, #tpu.memory_space<vmem>>, %arg11: memref<4x8x32xf32, #tpu.memory_space<vmem>>, %arg12: memref<1x32xf32, #tpu.memory_space<vmem>>, %arg13: memref<32x64xf32, #tpu.memory_space<vmem>>, %arg14: memref<1x64xf32, #tpu.memory_space<vmem>>, %arg15: memref<64x32xf32, #tpu.memory_space<vmem>>, %arg16: memref<1x32xf32, #tpu.memory_space<vmem>>, %arg17: memref<2x2x32xf32, #tpu.memory_space<vmem>>, %arg18: memref<3x32x32xf32, #tpu.memory_space<vmem>>, %arg19: memref<3x1x32xf32, #tpu.memory_space<vmem>>, %arg20: memref<4x8x32xf32, #tpu.memory_space<vmem>>, %arg21: memref<1x32xf32, #tpu.memory_space<vmem>>, %arg22: memref<32x64xf32, #tpu.memory_space<vmem>>, %arg23: memref<1x64xf32, #tpu.memory_space<vmem>>, %arg24: memref<64x32xf32, #tpu.memory_space<vmem>>, %arg25: memref<1x32xf32, #tpu.memory_space<vmem>>, %arg26: memref<3x2x32xf32, #tpu.memory_space<vmem>>, %arg27: memref<2x32x32xf32, #tpu.memory_space<vmem>>, %arg28: memref<2x1x32xf32, #tpu.memory_space<vmem>>, %arg29: memref<32x2xf32, #tpu.memory_space<vmem>>, %arg30: memref<1x2xf32, #tpu.memory_space<vmem>>, %arg31: memref<16x2xf32, #tpu.memory_space<vmem>>) attributes {dimension_semantics = [], scalar_prefetch = 0 : i64, scratch_operands = 0 : i64, tpu.core_type = #tpu.core_type<tc>} {
    %c0 = arith.constant 0 : index
    %c0_0 = arith.constant 0 : index
    %0 = vector.load %arg0[%c0, %c0_0] : memref<128x3xf32, #tpu.memory_space<vmem>>, vector<128x3xf32>
    %c0_1 = arith.constant 0 : index
    %c0_2 = arith.constant 0 : index
    %1 = vector.load %arg5[%c0_1, %c0_2] : memref<3x32xf32, #tpu.memory_space<vmem>>, vector<3x32xf32>
    %cst = arith.constant dense<0.000000e+00> : vector<128x32xf32>
    %2 = tpu.matmul %0, %1, %cst {dimension_numbers = #tpu.dot_dimension_numbers<[1], [0], [0], [1], [0, 0, 1, 1], [], []>} : vector<128x3xf32>, vector<3x32xf32>, vector<128x32xf32> -> vector<128x32xf32>
    %c0_3 = arith.constant 0 : index
    %c0_4 = arith.constant 0 : index
    %3 = vector.load %arg6[%c0_3, %c0_4] : memref<1x32xf32, #tpu.memory_space<vmem>>, vector<1x32xf32>
    %4 = vector.broadcast %3 : vector<1x32xf32> to vector<128x32xf32>
    %5 = arith.addf %2, %4 : vector<128x32xf32>
    %c0_5 = arith.constant 0 : index
    %c0_6 = arith.constant 0 : index
    %6 = vector.load %arg1[%c0_5, %c0_6] : memref<128x32xf32, #tpu.memory_space<vmem>>, vector<128x32xf32>
    %7 = arith.addf %5, %6 : vector<128x32xf32>
    %c0_7 = arith.constant 0 : index
    %c0_8 = arith.constant 0 : index
    %8 = vector.load %arg7[%c0_7, %c0_8] : memref<32x64xf32, #tpu.memory_space<vmem>>, vector<32x64xf32>
    %cst_9 = arith.constant dense<0.000000e+00> : vector<128x64xf32>
    %9 = tpu.matmul %7, %8, %cst_9 {dimension_numbers = #tpu.dot_dimension_numbers<[1], [0], [0], [1], [0, 0, 1, 1], [], []>} : vector<128x32xf32>, vector<32x64xf32>, vector<128x64xf32> -> vector<128x64xf32>
    %c0_10 = arith.constant 0 : index
    %c0_11 = arith.constant 0 : index
    %10 = vector.load %arg8[%c0_10, %c0_11] : memref<1x64xf32, #tpu.memory_space<vmem>>, vector<1x64xf32>
    %11 = vector.broadcast %10 : vector<1x64xf32> to vector<128x64xf32>
    %12 = arith.addf %9, %11 : vector<128x64xf32>
    %c0_12 = arith.constant 0 : index
    %c0_13 = arith.constant 0 : index
    %13 = vector.load %arg9[%c0_12, %c0_13] : memref<32x32xf32, #tpu.memory_space<vmem>>, vector<32x32xf32>
    %cst_14 = arith.constant dense<0.000000e+00> : vector<128x32xf32>
    %14 = tpu.matmul %5, %13, %cst_14 {dimension_numbers = #tpu.dot_dimension_numbers<[1], [0], [0], [1], [0, 0, 1, 1], [], []>} : vector<128x32xf32>, vector<32x32xf32>, vector<128x32xf32> -> vector<128x32xf32>
    %c0_15 = arith.constant 0 : index
    %c0_16 = arith.constant 0 : index
    %15 = vector.load %arg10[%c0_15, %c0_16] : memref<1x32xf32, #tpu.memory_space<vmem>>, vector<1x32xf32>
    %16 = vector.broadcast %15 : vector<1x32xf32> to vector<128x32xf32>
    %17 = arith.addf %14, %16 : vector<128x32xf32>
    %18 = vector.extract_strided_slice %12 {offsets = [0, 0], sizes = [64, 32], strides = [1, 1]} : vector<128x64xf32> to vector<64x32xf32>
    %19 = vector.extract_strided_slice %12 {offsets = [0, 32], sizes = [64, 32], strides = [1, 1]} : vector<128x64xf32> to vector<64x32xf32>
    %20 = vector.extract_strided_slice %17 {offsets = [0, 0], sizes = [64, 32], strides = [1, 1]} : vector<128x32xf32> to vector<64x32xf32>
    %21 = vector.extract_strided_slice %18 {offsets = [0, 0], sizes = [64, 8], strides = [1, 1]} : vector<64x32xf32> to vector<64x8xf32>
    %22 = vector.extract_strided_slice %19 {offsets = [0, 0], sizes = [64, 8], strides = [1, 1]} : vector<64x32xf32> to vector<64x8xf32>
    %23 = vector.extract_strided_slice %20 {offsets = [0, 0], sizes = [64, 8], strides = [1, 1]} : vector<64x32xf32> to vector<64x8xf32>
    %cst_17 = arith.constant dense<0.000000e+00> : vector<64x64xf32>
    %24 = tpu.matmul %21, %22, %cst_17 {dimension_numbers = #tpu.dot_dimension_numbers<[1], [1], [0], [0], [0, 0, 1, 0], [], []>} : vector<64x8xf32>, vector<64x8xf32>, vector<64x64xf32> -> vector<64x64xf32>
    %cst_18 = arith.constant dense<0xFF800000> : vector<64xf32>
    %25 = vector.multi_reduction <maximumf>, %24, %cst_18 [1] : vector<64x64xf32> to vector<64xf32>
    %26 = vector.shape_cast %25 : vector<64xf32> to vector<64x1xf32>
    %27 = vector.broadcast %26 : vector<64x1xf32> to vector<64x64xf32>
    %28 = arith.subf %24, %27 : vector<64x64xf32>
    %29 = math.exp %28 : vector<64x64xf32>
    %cst_19 = arith.constant dense<0.000000e+00> : vector<64xf32>
    %30 = vector.multi_reduction <add>, %29, %cst_19 [1] : vector<64x64xf32> to vector<64xf32>
    %31 = vector.shape_cast %30 : vector<64xf32> to vector<64x1xf32>
    %32 = tpu.reciprocal %31 {approx = true} : vector<64x1xf32> -> vector<64x1xf32>
    %33 = vector.broadcast %32 : vector<64x1xf32> to vector<64x64xf32>
    %34 = arith.mulf %29, %33 : vector<64x64xf32>
    %cst_20 = arith.constant dense<0.000000e+00> : vector<64x8xf32>
    %35 = tpu.matmul %34, %23, %cst_20 {dimension_numbers = #tpu.dot_dimension_numbers<[1], [0], [0], [1], [0, 0, 1, 1], [], []>} : vector<64x64xf32>, vector<64x8xf32>, vector<64x8xf32> -> vector<64x8xf32>
    %c0_21 = arith.constant 0 : index
    %c0_22 = arith.constant 0 : index
    %c0_23 = arith.constant 0 : index
    %36 = vector.load %arg11[%c0_21, %c0_22, %c0_23] : memref<4x8x32xf32, #tpu.memory_space<vmem>>, vector<1x8x32xf32>
    %37 = vector.shape_cast %36 : vector<1x8x32xf32> to vector<8x32xf32>
    %cst_24 = arith.constant dense<0.000000e+00> : vector<64x32xf32>
    %38 = tpu.matmul %35, %37, %cst_24 {dimension_numbers = #tpu.dot_dimension_numbers<[1], [0], [0], [1], [0, 0, 1, 1], [], []>} : vector<64x8xf32>, vector<8x32xf32>, vector<64x32xf32> -> vector<64x32xf32>
    %39 = vector.extract_strided_slice %18 {offsets = [0, 8], sizes = [64, 8], strides = [1, 1]} : vector<64x32xf32> to vector<64x8xf32>
    %40 = vector.extract_strided_slice %19 {offsets = [0, 8], sizes = [64, 8], strides = [1, 1]} : vector<64x32xf32> to vector<64x8xf32>
    %41 = vector.extract_strided_slice %20 {offsets = [0, 8], sizes = [64, 8], strides = [1, 1]} : vector<64x32xf32> to vector<64x8xf32>
    %cst_25 = arith.constant dense<0.000000e+00> : vector<64x64xf32>
    %42 = tpu.matmul %39, %40, %cst_25 {dimension_numbers = #tpu.dot_dimension_numbers<[1], [1], [0], [0], [0, 0, 1, 0], [], []>} : vector<64x8xf32>, vector<64x8xf32>, vector<64x64xf32> -> vector<64x64xf32>
    %cst_26 = arith.constant dense<0xFF800000> : vector<64xf32>
    %43 = vector.multi_reduction <maximumf>, %42, %cst_26 [1] : vector<64x64xf32> to vector<64xf32>
    %44 = vector.shape_cast %43 : vector<64xf32> to vector<64x1xf32>
    %45 = vector.broadcast %44 : vector<64x1xf32> to vector<64x64xf32>
    %46 = arith.subf %42, %45 : vector<64x64xf32>
    %47 = math.exp %46 : vector<64x64xf32>
    %cst_27 = arith.constant dense<0.000000e+00> : vector<64xf32>
    %48 = vector.multi_reduction <add>, %47, %cst_27 [1] : vector<64x64xf32> to vector<64xf32>
    %49 = vector.shape_cast %48 : vector<64xf32> to vector<64x1xf32>
    %50 = tpu.reciprocal %49 {approx = true} : vector<64x1xf32> -> vector<64x1xf32>
    %51 = vector.broadcast %50 : vector<64x1xf32> to vector<64x64xf32>
    %52 = arith.mulf %47, %51 : vector<64x64xf32>
    %cst_28 = arith.constant dense<0.000000e+00> : vector<64x8xf32>
    %53 = tpu.matmul %52, %41, %cst_28 {dimension_numbers = #tpu.dot_dimension_numbers<[1], [0], [0], [1], [0, 0, 1, 1], [], []>} : vector<64x64xf32>, vector<64x8xf32>, vector<64x8xf32> -> vector<64x8xf32>
    %c1 = arith.constant 1 : index
    %c0_29 = arith.constant 0 : index
    %c0_30 = arith.constant 0 : index
    %54 = vector.load %arg11[%c1, %c0_29, %c0_30] : memref<4x8x32xf32, #tpu.memory_space<vmem>>, vector<1x8x32xf32>
    %55 = vector.shape_cast %54 : vector<1x8x32xf32> to vector<8x32xf32>
    %cst_31 = arith.constant dense<0.000000e+00> : vector<64x32xf32>
    %56 = tpu.matmul %53, %55, %cst_31 {dimension_numbers = #tpu.dot_dimension_numbers<[1], [0], [0], [1], [0, 0, 1, 1], [], []>} : vector<64x8xf32>, vector<8x32xf32>, vector<64x32xf32> -> vector<64x32xf32>
    %57 = arith.addf %38, %56 : vector<64x32xf32>
    %58 = vector.extract_strided_slice %18 {offsets = [0, 16], sizes = [64, 8], strides = [1, 1]} : vector<64x32xf32> to vector<64x8xf32>
    %59 = vector.extract_strided_slice %19 {offsets = [0, 16], sizes = [64, 8], strides = [1, 1]} : vector<64x32xf32> to vector<64x8xf32>
    %60 = vector.extract_strided_slice %20 {offsets = [0, 16], sizes = [64, 8], strides = [1, 1]} : vector<64x32xf32> to vector<64x8xf32>
    %cst_32 = arith.constant dense<0.000000e+00> : vector<64x64xf32>
    %61 = tpu.matmul %58, %59, %cst_32 {dimension_numbers = #tpu.dot_dimension_numbers<[1], [1], [0], [0], [0, 0, 1, 0], [], []>} : vector<64x8xf32>, vector<64x8xf32>, vector<64x64xf32> -> vector<64x64xf32>
    %cst_33 = arith.constant dense<0xFF800000> : vector<64xf32>
    %62 = vector.multi_reduction <maximumf>, %61, %cst_33 [1] : vector<64x64xf32> to vector<64xf32>
    %63 = vector.shape_cast %62 : vector<64xf32> to vector<64x1xf32>
    %64 = vector.broadcast %63 : vector<64x1xf32> to vector<64x64xf32>
    %65 = arith.subf %61, %64 : vector<64x64xf32>
    %66 = math.exp %65 : vector<64x64xf32>
    %cst_34 = arith.constant dense<0.000000e+00> : vector<64xf32>
    %67 = vector.multi_reduction <add>, %66, %cst_34 [1] : vector<64x64xf32> to vector<64xf32>
    %68 = vector.shape_cast %67 : vector<64xf32> to vector<64x1xf32>
    %69 = tpu.reciprocal %68 {approx = true} : vector<64x1xf32> -> vector<64x1xf32>
    %70 = vector.broadcast %69 : vector<64x1xf32> to vector<64x64xf32>
    %71 = arith.mulf %66, %70 : vector<64x64xf32>
    %cst_35 = arith.constant dense<0.000000e+00> : vector<64x8xf32>
    %72 = tpu.matmul %71, %60, %cst_35 {dimension_numbers = #tpu.dot_dimension_numbers<[1], [0], [0], [1], [0, 0, 1, 1], [], []>} : vector<64x64xf32>, vector<64x8xf32>, vector<64x8xf32> -> vector<64x8xf32>
    %c2 = arith.constant 2 : index
    %c0_36 = arith.constant 0 : index
    %c0_37 = arith.constant 0 : index
    %73 = vector.load %arg11[%c2, %c0_36, %c0_37] : memref<4x8x32xf32, #tpu.memory_space<vmem>>, vector<1x8x32xf32>
    %74 = vector.shape_cast %73 : vector<1x8x32xf32> to vector<8x32xf32>
    %cst_38 = arith.constant dense<0.000000e+00> : vector<64x32xf32>
    %75 = tpu.matmul %72, %74, %cst_38 {dimension_numbers = #tpu.dot_dimension_numbers<[1], [0], [0], [1], [0, 0, 1, 1], [], []>} : vector<64x8xf32>, vector<8x32xf32>, vector<64x32xf32> -> vector<64x32xf32>
    %76 = arith.addf %57, %75 : vector<64x32xf32>
    %77 = vector.extract_strided_slice %18 {offsets = [0, 24], sizes = [64, 8], strides = [1, 1]} : vector<64x32xf32> to vector<64x8xf32>
    %78 = vector.extract_strided_slice %19 {offsets = [0, 24], sizes = [64, 8], strides = [1, 1]} : vector<64x32xf32> to vector<64x8xf32>
    %79 = vector.extract_strided_slice %20 {offsets = [0, 24], sizes = [64, 8], strides = [1, 1]} : vector<64x32xf32> to vector<64x8xf32>
    %cst_39 = arith.constant dense<0.000000e+00> : vector<64x64xf32>
    %80 = tpu.matmul %77, %78, %cst_39 {dimension_numbers = #tpu.dot_dimension_numbers<[1], [1], [0], [0], [0, 0, 1, 0], [], []>} : vector<64x8xf32>, vector<64x8xf32>, vector<64x64xf32> -> vector<64x64xf32>
    %cst_40 = arith.constant dense<0xFF800000> : vector<64xf32>
    %81 = vector.multi_reduction <maximumf>, %80, %cst_40 [1] : vector<64x64xf32> to vector<64xf32>
    %82 = vector.shape_cast %81 : vector<64xf32> to vector<64x1xf32>
    %83 = vector.broadcast %82 : vector<64x1xf32> to vector<64x64xf32>
    %84 = arith.subf %80, %83 : vector<64x64xf32>
    %85 = math.exp %84 : vector<64x64xf32>
    %cst_41 = arith.constant dense<0.000000e+00> : vector<64xf32>
    %86 = vector.multi_reduction <add>, %85, %cst_41 [1] : vector<64x64xf32> to vector<64xf32>
    %87 = vector.shape_cast %86 : vector<64xf32> to vector<64x1xf32>
    %88 = tpu.reciprocal %87 {approx = true} : vector<64x1xf32> -> vector<64x1xf32>
    %89 = vector.broadcast %88 : vector<64x1xf32> to vector<64x64xf32>
    %90 = arith.mulf %85, %89 : vector<64x64xf32>
    %cst_42 = arith.constant dense<0.000000e+00> : vector<64x8xf32>
    %91 = tpu.matmul %90, %79, %cst_42 {dimension_numbers = #tpu.dot_dimension_numbers<[1], [0], [0], [1], [0, 0, 1, 1], [], []>} : vector<64x64xf32>, vector<64x8xf32>, vector<64x8xf32> -> vector<64x8xf32>
    %c3 = arith.constant 3 : index
    %c0_43 = arith.constant 0 : index
    %c0_44 = arith.constant 0 : index
    %92 = vector.load %arg11[%c3, %c0_43, %c0_44] : memref<4x8x32xf32, #tpu.memory_space<vmem>>, vector<1x8x32xf32>
    %93 = vector.shape_cast %92 : vector<1x8x32xf32> to vector<8x32xf32>
    %cst_45 = arith.constant dense<0.000000e+00> : vector<64x32xf32>
    %94 = tpu.matmul %91, %93, %cst_45 {dimension_numbers = #tpu.dot_dimension_numbers<[1], [0], [0], [1], [0, 0, 1, 1], [], []>} : vector<64x8xf32>, vector<8x32xf32>, vector<64x32xf32> -> vector<64x32xf32>
    %95 = arith.addf %76, %94 : vector<64x32xf32>
    %c0_46 = arith.constant 0 : index
    %c0_47 = arith.constant 0 : index
    %96 = vector.load %arg12[%c0_46, %c0_47] : memref<1x32xf32, #tpu.memory_space<vmem>>, vector<1x32xf32>
    %97 = vector.broadcast %96 : vector<1x32xf32> to vector<64x32xf32>
    %98 = arith.addf %95, %97 : vector<64x32xf32>
    %99 = vector.extract_strided_slice %12 {offsets = [64, 0], sizes = [64, 32], strides = [1, 1]} : vector<128x64xf32> to vector<64x32xf32>
    %100 = vector.extract_strided_slice %12 {offsets = [64, 32], sizes = [64, 32], strides = [1, 1]} : vector<128x64xf32> to vector<64x32xf32>
    %101 = vector.extract_strided_slice %17 {offsets = [64, 0], sizes = [64, 32], strides = [1, 1]} : vector<128x32xf32> to vector<64x32xf32>
    %102 = vector.extract_strided_slice %99 {offsets = [0, 0], sizes = [64, 8], strides = [1, 1]} : vector<64x32xf32> to vector<64x8xf32>
    %103 = vector.extract_strided_slice %100 {offsets = [0, 0], sizes = [64, 8], strides = [1, 1]} : vector<64x32xf32> to vector<64x8xf32>
    %104 = vector.extract_strided_slice %101 {offsets = [0, 0], sizes = [64, 8], strides = [1, 1]} : vector<64x32xf32> to vector<64x8xf32>
    %cst_48 = arith.constant dense<0.000000e+00> : vector<64x64xf32>
    %105 = tpu.matmul %102, %103, %cst_48 {dimension_numbers = #tpu.dot_dimension_numbers<[1], [1], [0], [0], [0, 0, 1, 0], [], []>} : vector<64x8xf32>, vector<64x8xf32>, vector<64x64xf32> -> vector<64x64xf32>
    %cst_49 = arith.constant dense<0xFF800000> : vector<64xf32>
    %106 = vector.multi_reduction <maximumf>, %105, %cst_49 [1] : vector<64x64xf32> to vector<64xf32>
    %107 = vector.shape_cast %106 : vector<64xf32> to vector<64x1xf32>
    %108 = vector.broadcast %107 : vector<64x1xf32> to vector<64x64xf32>
    %109 = arith.subf %105, %108 : vector<64x64xf32>
    %110 = math.exp %109 : vector<64x64xf32>
    %cst_50 = arith.constant dense<0.000000e+00> : vector<64xf32>
    %111 = vector.multi_reduction <add>, %110, %cst_50 [1] : vector<64x64xf32> to vector<64xf32>
    %112 = vector.shape_cast %111 : vector<64xf32> to vector<64x1xf32>
    %113 = tpu.reciprocal %112 {approx = true} : vector<64x1xf32> -> vector<64x1xf32>
    %114 = vector.broadcast %113 : vector<64x1xf32> to vector<64x64xf32>
    %115 = arith.mulf %110, %114 : vector<64x64xf32>
    %cst_51 = arith.constant dense<0.000000e+00> : vector<64x8xf32>
    %116 = tpu.matmul %115, %104, %cst_51 {dimension_numbers = #tpu.dot_dimension_numbers<[1], [0], [0], [1], [0, 0, 1, 1], [], []>} : vector<64x64xf32>, vector<64x8xf32>, vector<64x8xf32> -> vector<64x8xf32>
    %c0_52 = arith.constant 0 : index
    %c0_53 = arith.constant 0 : index
    %c0_54 = arith.constant 0 : index
    %117 = vector.load %arg11[%c0_52, %c0_53, %c0_54] : memref<4x8x32xf32, #tpu.memory_space<vmem>>, vector<1x8x32xf32>
    %118 = vector.shape_cast %117 : vector<1x8x32xf32> to vector<8x32xf32>
    %cst_55 = arith.constant dense<0.000000e+00> : vector<64x32xf32>
    %119 = tpu.matmul %116, %118, %cst_55 {dimension_numbers = #tpu.dot_dimension_numbers<[1], [0], [0], [1], [0, 0, 1, 1], [], []>} : vector<64x8xf32>, vector<8x32xf32>, vector<64x32xf32> -> vector<64x32xf32>
    %120 = vector.extract_strided_slice %99 {offsets = [0, 8], sizes = [64, 8], strides = [1, 1]} : vector<64x32xf32> to vector<64x8xf32>
    %121 = vector.extract_strided_slice %100 {offsets = [0, 8], sizes = [64, 8], strides = [1, 1]} : vector<64x32xf32> to vector<64x8xf32>
    %122 = vector.extract_strided_slice %101 {offsets = [0, 8], sizes = [64, 8], strides = [1, 1]} : vector<64x32xf32> to vector<64x8xf32>
    %cst_56 = arith.constant dense<0.000000e+00> : vector<64x64xf32>
    %123 = tpu.matmul %120, %121, %cst_56 {dimension_numbers = #tpu.dot_dimension_numbers<[1], [1], [0], [0], [0, 0, 1, 0], [], []>} : vector<64x8xf32>, vector<64x8xf32>, vector<64x64xf32> -> vector<64x64xf32>
    %cst_57 = arith.constant dense<0xFF800000> : vector<64xf32>
    %124 = vector.multi_reduction <maximumf>, %123, %cst_57 [1] : vector<64x64xf32> to vector<64xf32>
    %125 = vector.shape_cast %124 : vector<64xf32> to vector<64x1xf32>
    %126 = vector.broadcast %125 : vector<64x1xf32> to vector<64x64xf32>
    %127 = arith.subf %123, %126 : vector<64x64xf32>
    %128 = math.exp %127 : vector<64x64xf32>
    %cst_58 = arith.constant dense<0.000000e+00> : vector<64xf32>
    %129 = vector.multi_reduction <add>, %128, %cst_58 [1] : vector<64x64xf32> to vector<64xf32>
    %130 = vector.shape_cast %129 : vector<64xf32> to vector<64x1xf32>
    %131 = tpu.reciprocal %130 {approx = true} : vector<64x1xf32> -> vector<64x1xf32>
    %132 = vector.broadcast %131 : vector<64x1xf32> to vector<64x64xf32>
    %133 = arith.mulf %128, %132 : vector<64x64xf32>
    %cst_59 = arith.constant dense<0.000000e+00> : vector<64x8xf32>
    %134 = tpu.matmul %133, %122, %cst_59 {dimension_numbers = #tpu.dot_dimension_numbers<[1], [0], [0], [1], [0, 0, 1, 1], [], []>} : vector<64x64xf32>, vector<64x8xf32>, vector<64x8xf32> -> vector<64x8xf32>
    %c1_60 = arith.constant 1 : index
    %c0_61 = arith.constant 0 : index
    %c0_62 = arith.constant 0 : index
    %135 = vector.load %arg11[%c1_60, %c0_61, %c0_62] : memref<4x8x32xf32, #tpu.memory_space<vmem>>, vector<1x8x32xf32>
    %136 = vector.shape_cast %135 : vector<1x8x32xf32> to vector<8x32xf32>
    %cst_63 = arith.constant dense<0.000000e+00> : vector<64x32xf32>
    %137 = tpu.matmul %134, %136, %cst_63 {dimension_numbers = #tpu.dot_dimension_numbers<[1], [0], [0], [1], [0, 0, 1, 1], [], []>} : vector<64x8xf32>, vector<8x32xf32>, vector<64x32xf32> -> vector<64x32xf32>
    %138 = arith.addf %119, %137 : vector<64x32xf32>
    %139 = vector.extract_strided_slice %99 {offsets = [0, 16], sizes = [64, 8], strides = [1, 1]} : vector<64x32xf32> to vector<64x8xf32>
    %140 = vector.extract_strided_slice %100 {offsets = [0, 16], sizes = [64, 8], strides = [1, 1]} : vector<64x32xf32> to vector<64x8xf32>
    %141 = vector.extract_strided_slice %101 {offsets = [0, 16], sizes = [64, 8], strides = [1, 1]} : vector<64x32xf32> to vector<64x8xf32>
    %cst_64 = arith.constant dense<0.000000e+00> : vector<64x64xf32>
    %142 = tpu.matmul %139, %140, %cst_64 {dimension_numbers = #tpu.dot_dimension_numbers<[1], [1], [0], [0], [0, 0, 1, 0], [], []>} : vector<64x8xf32>, vector<64x8xf32>, vector<64x64xf32> -> vector<64x64xf32>
    %cst_65 = arith.constant dense<0xFF800000> : vector<64xf32>
    %143 = vector.multi_reduction <maximumf>, %142, %cst_65 [1] : vector<64x64xf32> to vector<64xf32>
    %144 = vector.shape_cast %143 : vector<64xf32> to vector<64x1xf32>
    %145 = vector.broadcast %144 : vector<64x1xf32> to vector<64x64xf32>
    %146 = arith.subf %142, %145 : vector<64x64xf32>
    %147 = math.exp %146 : vector<64x64xf32>
    %cst_66 = arith.constant dense<0.000000e+00> : vector<64xf32>
    %148 = vector.multi_reduction <add>, %147, %cst_66 [1] : vector<64x64xf32> to vector<64xf32>
    %149 = vector.shape_cast %148 : vector<64xf32> to vector<64x1xf32>
    %150 = tpu.reciprocal %149 {approx = true} : vector<64x1xf32> -> vector<64x1xf32>
    %151 = vector.broadcast %150 : vector<64x1xf32> to vector<64x64xf32>
    %152 = arith.mulf %147, %151 : vector<64x64xf32>
    %cst_67 = arith.constant dense<0.000000e+00> : vector<64x8xf32>
    %153 = tpu.matmul %152, %141, %cst_67 {dimension_numbers = #tpu.dot_dimension_numbers<[1], [0], [0], [1], [0, 0, 1, 1], [], []>} : vector<64x64xf32>, vector<64x8xf32>, vector<64x8xf32> -> vector<64x8xf32>
    %c2_68 = arith.constant 2 : index
    %c0_69 = arith.constant 0 : index
    %c0_70 = arith.constant 0 : index
    %154 = vector.load %arg11[%c2_68, %c0_69, %c0_70] : memref<4x8x32xf32, #tpu.memory_space<vmem>>, vector<1x8x32xf32>
    %155 = vector.shape_cast %154 : vector<1x8x32xf32> to vector<8x32xf32>
    %cst_71 = arith.constant dense<0.000000e+00> : vector<64x32xf32>
    %156 = tpu.matmul %153, %155, %cst_71 {dimension_numbers = #tpu.dot_dimension_numbers<[1], [0], [0], [1], [0, 0, 1, 1], [], []>} : vector<64x8xf32>, vector<8x32xf32>, vector<64x32xf32> -> vector<64x32xf32>
    %157 = arith.addf %138, %156 : vector<64x32xf32>
    %158 = vector.extract_strided_slice %99 {offsets = [0, 24], sizes = [64, 8], strides = [1, 1]} : vector<64x32xf32> to vector<64x8xf32>
    %159 = vector.extract_strided_slice %100 {offsets = [0, 24], sizes = [64, 8], strides = [1, 1]} : vector<64x32xf32> to vector<64x8xf32>
    %160 = vector.extract_strided_slice %101 {offsets = [0, 24], sizes = [64, 8], strides = [1, 1]} : vector<64x32xf32> to vector<64x8xf32>
    %cst_72 = arith.constant dense<0.000000e+00> : vector<64x64xf32>
    %161 = tpu.matmul %158, %159, %cst_72 {dimension_numbers = #tpu.dot_dimension_numbers<[1], [1], [0], [0], [0, 0, 1, 0], [], []>} : vector<64x8xf32>, vector<64x8xf32>, vector<64x64xf32> -> vector<64x64xf32>
    %cst_73 = arith.constant dense<0xFF800000> : vector<64xf32>
    %162 = vector.multi_reduction <maximumf>, %161, %cst_73 [1] : vector<64x64xf32> to vector<64xf32>
    %163 = vector.shape_cast %162 : vector<64xf32> to vector<64x1xf32>
    %164 = vector.broadcast %163 : vector<64x1xf32> to vector<64x64xf32>
    %165 = arith.subf %161, %164 : vector<64x64xf32>
    %166 = math.exp %165 : vector<64x64xf32>
    %cst_74 = arith.constant dense<0.000000e+00> : vector<64xf32>
    %167 = vector.multi_reduction <add>, %166, %cst_74 [1] : vector<64x64xf32> to vector<64xf32>
    %168 = vector.shape_cast %167 : vector<64xf32> to vector<64x1xf32>
    %169 = tpu.reciprocal %168 {approx = true} : vector<64x1xf32> -> vector<64x1xf32>
    %170 = vector.broadcast %169 : vector<64x1xf32> to vector<64x64xf32>
    %171 = arith.mulf %166, %170 : vector<64x64xf32>
    %cst_75 = arith.constant dense<0.000000e+00> : vector<64x8xf32>
    %172 = tpu.matmul %171, %160, %cst_75 {dimension_numbers = #tpu.dot_dimension_numbers<[1], [0], [0], [1], [0, 0, 1, 1], [], []>} : vector<64x64xf32>, vector<64x8xf32>, vector<64x8xf32> -> vector<64x8xf32>
    %c3_76 = arith.constant 3 : index
    %c0_77 = arith.constant 0 : index
    %c0_78 = arith.constant 0 : index
    %173 = vector.load %arg11[%c3_76, %c0_77, %c0_78] : memref<4x8x32xf32, #tpu.memory_space<vmem>>, vector<1x8x32xf32>
    %174 = vector.shape_cast %173 : vector<1x8x32xf32> to vector<8x32xf32>
    %cst_79 = arith.constant dense<0.000000e+00> : vector<64x32xf32>
    %175 = tpu.matmul %172, %174, %cst_79 {dimension_numbers = #tpu.dot_dimension_numbers<[1], [0], [0], [1], [0, 0, 1, 1], [], []>} : vector<64x8xf32>, vector<8x32xf32>, vector<64x32xf32> -> vector<64x32xf32>
    %176 = arith.addf %157, %175 : vector<64x32xf32>
    %c0_80 = arith.constant 0 : index
    %c0_81 = arith.constant 0 : index
    %177 = vector.load %arg12[%c0_80, %c0_81] : memref<1x32xf32, #tpu.memory_space<vmem>>, vector<1x32xf32>
    %178 = vector.broadcast %177 : vector<1x32xf32> to vector<64x32xf32>
    %179 = arith.addf %176, %178 : vector<64x32xf32>
    %180 = tpu.concatenate %98, %179 in 0 : vector<64x32xf32>, vector<64x32xf32> -> vector<128x32xf32>
    %181 = arith.addf %5, %180 : vector<128x32xf32>
    %c0_82 = arith.constant 0 : index
    %c0_83 = arith.constant 0 : index
    %c0_84 = arith.constant 0 : index
    %182 = vector.load %arg17[%c0_82, %c0_83, %c0_84] : memref<2x2x32xf32, #tpu.memory_space<vmem>>, vector<1x2x32xf32>
    %183 = vector.shape_cast %182 : vector<1x2x32xf32> to vector<2x32xf32>
    %cst_85 = arith.constant dense<0.000000e+00> : vector<128xf32>
    %184 = vector.multi_reduction <add>, %181, %cst_85 [1] : vector<128x32xf32> to vector<128xf32>
    %185 = vector.shape_cast %184 : vector<128xf32> to vector<128x1xf32>
    %cst_86 = arith.constant 3.200000e+01 : f32
    %186 = vector.broadcast %cst_86 : f32 to vector<128x1xf32>
    %187 = arith.divf %185, %186 : vector<128x1xf32>
    %188 = vector.broadcast %187 : vector<128x1xf32> to vector<128x32xf32>
    %189 = arith.subf %181, %188 : vector<128x32xf32>
    %190 = arith.mulf %189, %189 : vector<128x32xf32>
    %cst_87 = arith.constant dense<0.000000e+00> : vector<128xf32>
    %191 = vector.multi_reduction <add>, %190, %cst_87 [1] : vector<128x32xf32> to vector<128xf32>
    %192 = vector.shape_cast %191 : vector<128xf32> to vector<128x1xf32>
    %cst_88 = arith.constant 3.200000e+01 : f32
    %193 = vector.broadcast %cst_88 : f32 to vector<128x1xf32>
    %194 = arith.divf %192, %193 : vector<128x1xf32>
    %cst_89 = arith.constant 9.99999974E-6 : f32
    %195 = vector.broadcast %cst_89 : f32 to vector<128x1xf32>
    %196 = arith.addf %194, %195 : vector<128x1xf32>
    %197 = math.rsqrt %196 : vector<128x1xf32>
    %198 = vector.broadcast %197 : vector<128x1xf32> to vector<128x32xf32>
    %199 = arith.mulf %189, %198 : vector<128x32xf32>
    %200 = vector.extract_strided_slice %183 {offsets = [0, 0], sizes = [1, 32], strides = [1, 1]} : vector<2x32xf32> to vector<1x32xf32>
    %201 = vector.broadcast %200 : vector<1x32xf32> to vector<128x32xf32>
    %202 = arith.mulf %199, %201 : vector<128x32xf32>
    %203 = vector.extract_strided_slice %183 {offsets = [1, 0], sizes = [1, 32], strides = [1, 1]} : vector<2x32xf32> to vector<1x32xf32>
    %204 = vector.broadcast %203 : vector<1x32xf32> to vector<128x32xf32>
    %205 = arith.addf %202, %204 : vector<128x32xf32>
    %c0_90 = arith.constant 0 : index
    %c0_91 = arith.constant 0 : index
    %206 = vector.load %arg13[%c0_90, %c0_91] : memref<32x64xf32, #tpu.memory_space<vmem>>, vector<32x64xf32>
    %cst_92 = arith.constant dense<0.000000e+00> : vector<128x64xf32>
    %207 = tpu.matmul %205, %206, %cst_92 {dimension_numbers = #tpu.dot_dimension_numbers<[1], [0], [0], [1], [0, 0, 1, 1], [], []>} : vector<128x32xf32>, vector<32x64xf32>, vector<128x64xf32> -> vector<128x64xf32>
    %c0_93 = arith.constant 0 : index
    %c0_94 = arith.constant 0 : index
    %208 = vector.load %arg14[%c0_93, %c0_94] : memref<1x64xf32, #tpu.memory_space<vmem>>, vector<1x64xf32>
    %209 = vector.broadcast %208 : vector<1x64xf32> to vector<128x64xf32>
    %210 = arith.addf %207, %209 : vector<128x64xf32>
    %cst_95 = arith.constant 0.000000e+00 : f32
    %211 = vector.broadcast %cst_95 : f32 to vector<128x64xf32>
    %212 = arith.maximumf %210, %211 : vector<128x64xf32>
    %c0_96 = arith.constant 0 : index
    %c0_97 = arith.constant 0 : index
    %213 = vector.load %arg15[%c0_96, %c0_97] : memref<64x32xf32, #tpu.memory_space<vmem>>, vector<64x32xf32>
    %cst_98 = arith.constant dense<0.000000e+00> : vector<128x32xf32>
    %214 = tpu.matmul %212, %213, %cst_98 {dimension_numbers = #tpu.dot_dimension_numbers<[1], [0], [0], [1], [0, 0, 1, 1], [], []>} : vector<128x64xf32>, vector<64x32xf32>, vector<128x32xf32> -> vector<128x32xf32>
    %c0_99 = arith.constant 0 : index
    %c0_100 = arith.constant 0 : index
    %215 = vector.load %arg16[%c0_99, %c0_100] : memref<1x32xf32, #tpu.memory_space<vmem>>, vector<1x32xf32>
    %216 = vector.broadcast %215 : vector<1x32xf32> to vector<128x32xf32>
    %217 = arith.addf %214, %216 : vector<128x32xf32>
    %218 = arith.addf %205, %217 : vector<128x32xf32>
    %c1_101 = arith.constant 1 : index
    %c0_102 = arith.constant 0 : index
    %c0_103 = arith.constant 0 : index
    %219 = vector.load %arg17[%c1_101, %c0_102, %c0_103] : memref<2x2x32xf32, #tpu.memory_space<vmem>>, vector<1x2x32xf32>
    %220 = vector.shape_cast %219 : vector<1x2x32xf32> to vector<2x32xf32>
    %cst_104 = arith.constant dense<0.000000e+00> : vector<128xf32>
    %221 = vector.multi_reduction <add>, %218, %cst_104 [1] : vector<128x32xf32> to vector<128xf32>
    %222 = vector.shape_cast %221 : vector<128xf32> to vector<128x1xf32>
    %cst_105 = arith.constant 3.200000e+01 : f32
    %223 = vector.broadcast %cst_105 : f32 to vector<128x1xf32>
    %224 = arith.divf %222, %223 : vector<128x1xf32>
    %225 = vector.broadcast %224 : vector<128x1xf32> to vector<128x32xf32>
    %226 = arith.subf %218, %225 : vector<128x32xf32>
    %227 = arith.mulf %226, %226 : vector<128x32xf32>
    %cst_106 = arith.constant dense<0.000000e+00> : vector<128xf32>
    %228 = vector.multi_reduction <add>, %227, %cst_106 [1] : vector<128x32xf32> to vector<128xf32>
    %229 = vector.shape_cast %228 : vector<128xf32> to vector<128x1xf32>
    %cst_107 = arith.constant 3.200000e+01 : f32
    %230 = vector.broadcast %cst_107 : f32 to vector<128x1xf32>
    %231 = arith.divf %229, %230 : vector<128x1xf32>
    %cst_108 = arith.constant 9.99999974E-6 : f32
    %232 = vector.broadcast %cst_108 : f32 to vector<128x1xf32>
    %233 = arith.addf %231, %232 : vector<128x1xf32>
    %234 = math.rsqrt %233 : vector<128x1xf32>
    %235 = vector.broadcast %234 : vector<128x1xf32> to vector<128x32xf32>
    %236 = arith.mulf %226, %235 : vector<128x32xf32>
    %237 = vector.extract_strided_slice %220 {offsets = [0, 0], sizes = [1, 32], strides = [1, 1]} : vector<2x32xf32> to vector<1x32xf32>
    %238 = vector.broadcast %237 : vector<1x32xf32> to vector<128x32xf32>
    %239 = arith.mulf %236, %238 : vector<128x32xf32>
    %240 = vector.extract_strided_slice %220 {offsets = [1, 0], sizes = [1, 32], strides = [1, 1]} : vector<2x32xf32> to vector<1x32xf32>
    %241 = vector.broadcast %240 : vector<1x32xf32> to vector<128x32xf32>
    %242 = arith.addf %239, %241 : vector<128x32xf32>
    %c0_109 = arith.constant 0 : index
    %c0_110 = arith.constant 0 : index
    %243 = vector.load %arg2[%c0_109, %c0_110] : memref<16x2xf32, #tpu.memory_space<vmem>>, vector<16x2xf32>
    %c0_111 = arith.constant 0 : index
    %c0_112 = arith.constant 0 : index
    %244 = vector.load %arg3[%c0_111, %c0_112] : memref<3x32xf32, #tpu.memory_space<vmem>>, vector<2x32xf32>
    %cst_113 = arith.constant dense<0.000000e+00> : vector<16x32xf32>
    %245 = tpu.matmul %243, %244, %cst_113 {dimension_numbers = #tpu.dot_dimension_numbers<[1], [0], [0], [1], [0, 0, 1, 1], [], []>} : vector<16x2xf32>, vector<2x32xf32>, vector<16x32xf32> -> vector<16x32xf32>
    %c2_114 = arith.constant 2 : index
    %c0_115 = arith.constant 0 : index
    %246 = vector.load %arg3[%c2_114, %c0_115] : memref<3x32xf32, #tpu.memory_space<vmem>>, vector<1x32xf32>
    %247 = vector.broadcast %246 : vector<1x32xf32> to vector<16x32xf32>
    %248 = arith.addf %245, %247 : vector<16x32xf32>
    %249 = math.sin %248 : vector<16x32xf32>
    %c0_116 = arith.constant 0 : index
    %c0_117 = arith.constant 0 : index
    %250 = vector.load %arg4[%c0_116, %c0_117] : memref<1x32xf32, #tpu.memory_space<vmem>>, vector<1x32xf32>
    %251 = arith.addf %242, %6 : vector<128x32xf32>
    %252 = vector.broadcast %250 : vector<1x32xf32> to vector<16x32xf32>
    %253 = arith.addf %252, %249 : vector<16x32xf32>
    %c0_118 = arith.constant 0 : index
    %c0_119 = arith.constant 0 : index
    %c0_120 = arith.constant 0 : index
    %254 = vector.load %arg18[%c0_118, %c0_119, %c0_120] : memref<3x32x32xf32, #tpu.memory_space<vmem>>, vector<1x32x32xf32>
    %255 = vector.shape_cast %254 : vector<1x32x32xf32> to vector<32x32xf32>
    %cst_121 = arith.constant dense<0.000000e+00> : vector<16x32xf32>
    %256 = tpu.matmul %253, %255, %cst_121 {dimension_numbers = #tpu.dot_dimension_numbers<[1], [0], [0], [1], [0, 0, 1, 1], [], []>} : vector<16x32xf32>, vector<32x32xf32>, vector<16x32xf32> -> vector<16x32xf32>
    %c0_122 = arith.constant 0 : index
    %c0_123 = arith.constant 0 : index
    %c0_124 = arith.constant 0 : index
    %257 = vector.load %arg19[%c0_122, %c0_123, %c0_124] : memref<3x1x32xf32, #tpu.memory_space<vmem>>, vector<1x1x32xf32>
    %258 = vector.shape_cast %257 : vector<1x1x32xf32> to vector<1x32xf32>
    %259 = vector.broadcast %258 : vector<1x32xf32> to vector<16x32xf32>
    %260 = arith.addf %256, %259 : vector<16x32xf32>
    %c1_125 = arith.constant 1 : index
    %c0_126 = arith.constant 0 : index
    %c0_127 = arith.constant 0 : index
    %261 = vector.load %arg18[%c1_125, %c0_126, %c0_127] : memref<3x32x32xf32, #tpu.memory_space<vmem>>, vector<1x32x32xf32>
    %262 = vector.shape_cast %261 : vector<1x32x32xf32> to vector<32x32xf32>
    %cst_128 = arith.constant dense<0.000000e+00> : vector<128x32xf32>
    %263 = tpu.matmul %251, %262, %cst_128 {dimension_numbers = #tpu.dot_dimension_numbers<[1], [0], [0], [1], [0, 0, 1, 1], [], []>} : vector<128x32xf32>, vector<32x32xf32>, vector<128x32xf32> -> vector<128x32xf32>
    %c1_129 = arith.constant 1 : index
    %c0_130 = arith.constant 0 : index
    %c0_131 = arith.constant 0 : index
    %264 = vector.load %arg19[%c1_129, %c0_130, %c0_131] : memref<3x1x32xf32, #tpu.memory_space<vmem>>, vector<1x1x32xf32>
    %265 = vector.shape_cast %264 : vector<1x1x32xf32> to vector<1x32xf32>
    %266 = vector.broadcast %265 : vector<1x32xf32> to vector<128x32xf32>
    %267 = arith.addf %263, %266 : vector<128x32xf32>
    %c2_132 = arith.constant 2 : index
    %c0_133 = arith.constant 0 : index
    %c0_134 = arith.constant 0 : index
    %268 = vector.load %arg18[%c2_132, %c0_133, %c0_134] : memref<3x32x32xf32, #tpu.memory_space<vmem>>, vector<1x32x32xf32>
    %269 = vector.shape_cast %268 : vector<1x32x32xf32> to vector<32x32xf32>
    %cst_135 = arith.constant dense<0.000000e+00> : vector<128x32xf32>
    %270 = tpu.matmul %242, %269, %cst_135 {dimension_numbers = #tpu.dot_dimension_numbers<[1], [0], [0], [1], [0, 0, 1, 1], [], []>} : vector<128x32xf32>, vector<32x32xf32>, vector<128x32xf32> -> vector<128x32xf32>
    %c2_136 = arith.constant 2 : index
    %c0_137 = arith.constant 0 : index
    %c0_138 = arith.constant 0 : index
    %271 = vector.load %arg19[%c2_136, %c0_137, %c0_138] : memref<3x1x32xf32, #tpu.memory_space<vmem>>, vector<1x1x32xf32>
    %272 = vector.shape_cast %271 : vector<1x1x32xf32> to vector<1x32xf32>
    %273 = vector.broadcast %272 : vector<1x32xf32> to vector<128x32xf32>
    %274 = arith.addf %270, %273 : vector<128x32xf32>
    %275 = vector.extract_strided_slice %260 {offsets = [0, 0], sizes = [8, 32], strides = [1, 1]} : vector<16x32xf32> to vector<8x32xf32>
    %276 = vector.extract_strided_slice %267 {offsets = [0, 0], sizes = [64, 32], strides = [1, 1]} : vector<128x32xf32> to vector<64x32xf32>
    %277 = vector.extract_strided_slice %274 {offsets = [0, 0], sizes = [64, 32], strides = [1, 1]} : vector<128x32xf32> to vector<64x32xf32>
    %278 = vector.extract_strided_slice %275 {offsets = [0, 0], sizes = [8, 8], strides = [1, 1]} : vector<8x32xf32> to vector<8x8xf32>
    %279 = vector.extract_strided_slice %276 {offsets = [0, 0], sizes = [64, 8], strides = [1, 1]} : vector<64x32xf32> to vector<64x8xf32>
    %280 = vector.extract_strided_slice %277 {offsets = [0, 0], sizes = [64, 8], strides = [1, 1]} : vector<64x32xf32> to vector<64x8xf32>
    %cst_139 = arith.constant dense<0.000000e+00> : vector<8x64xf32>
    %281 = tpu.matmul %278, %279, %cst_139 {dimension_numbers = #tpu.dot_dimension_numbers<[1], [1], [0], [0], [0, 0, 1, 0], [], []>} : vector<8x8xf32>, vector<64x8xf32>, vector<8x64xf32> -> vector<8x64xf32>
    %cst_140 = arith.constant dense<0xFF800000> : vector<8xf32>
    %282 = vector.multi_reduction <maximumf>, %281, %cst_140 [1] : vector<8x64xf32> to vector<8xf32>
    %283 = vector.shape_cast %282 : vector<8xf32> to vector<8x1xf32>
    %284 = vector.broadcast %283 : vector<8x1xf32> to vector<8x64xf32>
    %285 = arith.subf %281, %284 : vector<8x64xf32>
    %286 = math.exp %285 : vector<8x64xf32>
    %cst_141 = arith.constant dense<0.000000e+00> : vector<8xf32>
    %287 = vector.multi_reduction <add>, %286, %cst_141 [1] : vector<8x64xf32> to vector<8xf32>
    %288 = vector.shape_cast %287 : vector<8xf32> to vector<8x1xf32>
    %289 = tpu.reciprocal %288 {approx = true} : vector<8x1xf32> -> vector<8x1xf32>
    %290 = vector.broadcast %289 : vector<8x1xf32> to vector<8x64xf32>
    %291 = arith.mulf %286, %290 : vector<8x64xf32>
    %cst_142 = arith.constant dense<0.000000e+00> : vector<8x8xf32>
    %292 = tpu.matmul %291, %280, %cst_142 {dimension_numbers = #tpu.dot_dimension_numbers<[1], [0], [0], [1], [0, 0, 1, 1], [], []>} : vector<8x64xf32>, vector<64x8xf32>, vector<8x8xf32> -> vector<8x8xf32>
    %c0_143 = arith.constant 0 : index
    %c0_144 = arith.constant 0 : index
    %c0_145 = arith.constant 0 : index
    %293 = vector.load %arg20[%c0_143, %c0_144, %c0_145] : memref<4x8x32xf32, #tpu.memory_space<vmem>>, vector<1x8x32xf32>
    %294 = vector.shape_cast %293 : vector<1x8x32xf32> to vector<8x32xf32>
    %cst_146 = arith.constant dense<0.000000e+00> : vector<8x32xf32>
    %295 = tpu.matmul %292, %294, %cst_146 {dimension_numbers = #tpu.dot_dimension_numbers<[1], [0], [0], [1], [0, 0, 1, 1], [], []>} : vector<8x8xf32>, vector<8x32xf32>, vector<8x32xf32> -> vector<8x32xf32>
    %296 = vector.extract_strided_slice %275 {offsets = [0, 8], sizes = [8, 8], strides = [1, 1]} : vector<8x32xf32> to vector<8x8xf32>
    %297 = vector.extract_strided_slice %276 {offsets = [0, 8], sizes = [64, 8], strides = [1, 1]} : vector<64x32xf32> to vector<64x8xf32>
    %298 = vector.extract_strided_slice %277 {offsets = [0, 8], sizes = [64, 8], strides = [1, 1]} : vector<64x32xf32> to vector<64x8xf32>
    %cst_147 = arith.constant dense<0.000000e+00> : vector<8x64xf32>
    %299 = tpu.matmul %296, %297, %cst_147 {dimension_numbers = #tpu.dot_dimension_numbers<[1], [1], [0], [0], [0, 0, 1, 0], [], []>} : vector<8x8xf32>, vector<64x8xf32>, vector<8x64xf32> -> vector<8x64xf32>
    %cst_148 = arith.constant dense<0xFF800000> : vector<8xf32>
    %300 = vector.multi_reduction <maximumf>, %299, %cst_148 [1] : vector<8x64xf32> to vector<8xf32>
    %301 = vector.shape_cast %300 : vector<8xf32> to vector<8x1xf32>
    %302 = vector.broadcast %301 : vector<8x1xf32> to vector<8x64xf32>
    %303 = arith.subf %299, %302 : vector<8x64xf32>
    %304 = math.exp %303 : vector<8x64xf32>
    %cst_149 = arith.constant dense<0.000000e+00> : vector<8xf32>
    %305 = vector.multi_reduction <add>, %304, %cst_149 [1] : vector<8x64xf32> to vector<8xf32>
    %306 = vector.shape_cast %305 : vector<8xf32> to vector<8x1xf32>
    %307 = tpu.reciprocal %306 {approx = true} : vector<8x1xf32> -> vector<8x1xf32>
    %308 = vector.broadcast %307 : vector<8x1xf32> to vector<8x64xf32>
    %309 = arith.mulf %304, %308 : vector<8x64xf32>
    %cst_150 = arith.constant dense<0.000000e+00> : vector<8x8xf32>
    %310 = tpu.matmul %309, %298, %cst_150 {dimension_numbers = #tpu.dot_dimension_numbers<[1], [0], [0], [1], [0, 0, 1, 1], [], []>} : vector<8x64xf32>, vector<64x8xf32>, vector<8x8xf32> -> vector<8x8xf32>
    %c1_151 = arith.constant 1 : index
    %c0_152 = arith.constant 0 : index
    %c0_153 = arith.constant 0 : index
    %311 = vector.load %arg20[%c1_151, %c0_152, %c0_153] : memref<4x8x32xf32, #tpu.memory_space<vmem>>, vector<1x8x32xf32>
    %312 = vector.shape_cast %311 : vector<1x8x32xf32> to vector<8x32xf32>
    %cst_154 = arith.constant dense<0.000000e+00> : vector<8x32xf32>
    %313 = tpu.matmul %310, %312, %cst_154 {dimension_numbers = #tpu.dot_dimension_numbers<[1], [0], [0], [1], [0, 0, 1, 1], [], []>} : vector<8x8xf32>, vector<8x32xf32>, vector<8x32xf32> -> vector<8x32xf32>
    %314 = arith.addf %295, %313 : vector<8x32xf32>
    %315 = vector.extract_strided_slice %275 {offsets = [0, 16], sizes = [8, 8], strides = [1, 1]} : vector<8x32xf32> to vector<8x8xf32>
    %316 = vector.extract_strided_slice %276 {offsets = [0, 16], sizes = [64, 8], strides = [1, 1]} : vector<64x32xf32> to vector<64x8xf32>
    %317 = vector.extract_strided_slice %277 {offsets = [0, 16], sizes = [64, 8], strides = [1, 1]} : vector<64x32xf32> to vector<64x8xf32>
    %cst_155 = arith.constant dense<0.000000e+00> : vector<8x64xf32>
    %318 = tpu.matmul %315, %316, %cst_155 {dimension_numbers = #tpu.dot_dimension_numbers<[1], [1], [0], [0], [0, 0, 1, 0], [], []>} : vector<8x8xf32>, vector<64x8xf32>, vector<8x64xf32> -> vector<8x64xf32>
    %cst_156 = arith.constant dense<0xFF800000> : vector<8xf32>
    %319 = vector.multi_reduction <maximumf>, %318, %cst_156 [1] : vector<8x64xf32> to vector<8xf32>
    %320 = vector.shape_cast %319 : vector<8xf32> to vector<8x1xf32>
    %321 = vector.broadcast %320 : vector<8x1xf32> to vector<8x64xf32>
    %322 = arith.subf %318, %321 : vector<8x64xf32>
    %323 = math.exp %322 : vector<8x64xf32>
    %cst_157 = arith.constant dense<0.000000e+00> : vector<8xf32>
    %324 = vector.multi_reduction <add>, %323, %cst_157 [1] : vector<8x64xf32> to vector<8xf32>
    %325 = vector.shape_cast %324 : vector<8xf32> to vector<8x1xf32>
    %326 = tpu.reciprocal %325 {approx = true} : vector<8x1xf32> -> vector<8x1xf32>
    %327 = vector.broadcast %326 : vector<8x1xf32> to vector<8x64xf32>
    %328 = arith.mulf %323, %327 : vector<8x64xf32>
    %cst_158 = arith.constant dense<0.000000e+00> : vector<8x8xf32>
    %329 = tpu.matmul %328, %317, %cst_158 {dimension_numbers = #tpu.dot_dimension_numbers<[1], [0], [0], [1], [0, 0, 1, 1], [], []>} : vector<8x64xf32>, vector<64x8xf32>, vector<8x8xf32> -> vector<8x8xf32>
    %c2_159 = arith.constant 2 : index
    %c0_160 = arith.constant 0 : index
    %c0_161 = arith.constant 0 : index
    %330 = vector.load %arg20[%c2_159, %c0_160, %c0_161] : memref<4x8x32xf32, #tpu.memory_space<vmem>>, vector<1x8x32xf32>
    %331 = vector.shape_cast %330 : vector<1x8x32xf32> to vector<8x32xf32>
    %cst_162 = arith.constant dense<0.000000e+00> : vector<8x32xf32>
    %332 = tpu.matmul %329, %331, %cst_162 {dimension_numbers = #tpu.dot_dimension_numbers<[1], [0], [0], [1], [0, 0, 1, 1], [], []>} : vector<8x8xf32>, vector<8x32xf32>, vector<8x32xf32> -> vector<8x32xf32>
    %333 = arith.addf %314, %332 : vector<8x32xf32>
    %334 = vector.extract_strided_slice %275 {offsets = [0, 24], sizes = [8, 8], strides = [1, 1]} : vector<8x32xf32> to vector<8x8xf32>
    %335 = vector.extract_strided_slice %276 {offsets = [0, 24], sizes = [64, 8], strides = [1, 1]} : vector<64x32xf32> to vector<64x8xf32>
    %336 = vector.extract_strided_slice %277 {offsets = [0, 24], sizes = [64, 8], strides = [1, 1]} : vector<64x32xf32> to vector<64x8xf32>
    %cst_163 = arith.constant dense<0.000000e+00> : vector<8x64xf32>
    %337 = tpu.matmul %334, %335, %cst_163 {dimension_numbers = #tpu.dot_dimension_numbers<[1], [1], [0], [0], [0, 0, 1, 0], [], []>} : vector<8x8xf32>, vector<64x8xf32>, vector<8x64xf32> -> vector<8x64xf32>
    %cst_164 = arith.constant dense<0xFF800000> : vector<8xf32>
    %338 = vector.multi_reduction <maximumf>, %337, %cst_164 [1] : vector<8x64xf32> to vector<8xf32>
    %339 = vector.shape_cast %338 : vector<8xf32> to vector<8x1xf32>
    %340 = vector.broadcast %339 : vector<8x1xf32> to vector<8x64xf32>
    %341 = arith.subf %337, %340 : vector<8x64xf32>
    %342 = math.exp %341 : vector<8x64xf32>
    %cst_165 = arith.constant dense<0.000000e+00> : vector<8xf32>
    %343 = vector.multi_reduction <add>, %342, %cst_165 [1] : vector<8x64xf32> to vector<8xf32>
    %344 = vector.shape_cast %343 : vector<8xf32> to vector<8x1xf32>
    %345 = tpu.reciprocal %344 {approx = true} : vector<8x1xf32> -> vector<8x1xf32>
    %346 = vector.broadcast %345 : vector<8x1xf32> to vector<8x64xf32>
    %347 = arith.mulf %342, %346 : vector<8x64xf32>
    %cst_166 = arith.constant dense<0.000000e+00> : vector<8x8xf32>
    %348 = tpu.matmul %347, %336, %cst_166 {dimension_numbers = #tpu.dot_dimension_numbers<[1], [0], [0], [1], [0, 0, 1, 1], [], []>} : vector<8x64xf32>, vector<64x8xf32>, vector<8x8xf32> -> vector<8x8xf32>
    %c3_167 = arith.constant 3 : index
    %c0_168 = arith.constant 0 : index
    %c0_169 = arith.constant 0 : index
    %349 = vector.load %arg20[%c3_167, %c0_168, %c0_169] : memref<4x8x32xf32, #tpu.memory_space<vmem>>, vector<1x8x32xf32>
    %350 = vector.shape_cast %349 : vector<1x8x32xf32> to vector<8x32xf32>
    %cst_170 = arith.constant dense<0.000000e+00> : vector<8x32xf32>
    %351 = tpu.matmul %348, %350, %cst_170 {dimension_numbers = #tpu.dot_dimension_numbers<[1], [0], [0], [1], [0, 0, 1, 1], [], []>} : vector<8x8xf32>, vector<8x32xf32>, vector<8x32xf32> -> vector<8x32xf32>
    %352 = arith.addf %333, %351 : vector<8x32xf32>
    %c0_171 = arith.constant 0 : index
    %c0_172 = arith.constant 0 : index
    %353 = vector.load %arg21[%c0_171, %c0_172] : memref<1x32xf32, #tpu.memory_space<vmem>>, vector<1x32xf32>
    %354 = vector.broadcast %353 : vector<1x32xf32> to vector<8x32xf32>
    %355 = arith.addf %352, %354 : vector<8x32xf32>
    %356 = vector.extract_strided_slice %260 {offsets = [8, 0], sizes = [8, 32], strides = [1, 1]} : vector<16x32xf32> to vector<8x32xf32>
    %357 = vector.extract_strided_slice %267 {offsets = [64, 0], sizes = [64, 32], strides = [1, 1]} : vector<128x32xf32> to vector<64x32xf32>
    %358 = vector.extract_strided_slice %274 {offsets = [64, 0], sizes = [64, 32], strides = [1, 1]} : vector<128x32xf32> to vector<64x32xf32>
    %359 = vector.extract_strided_slice %356 {offsets = [0, 0], sizes = [8, 8], strides = [1, 1]} : vector<8x32xf32> to vector<8x8xf32>
    %360 = vector.extract_strided_slice %357 {offsets = [0, 0], sizes = [64, 8], strides = [1, 1]} : vector<64x32xf32> to vector<64x8xf32>
    %361 = vector.extract_strided_slice %358 {offsets = [0, 0], sizes = [64, 8], strides = [1, 1]} : vector<64x32xf32> to vector<64x8xf32>
    %cst_173 = arith.constant dense<0.000000e+00> : vector<8x64xf32>
    %362 = tpu.matmul %359, %360, %cst_173 {dimension_numbers = #tpu.dot_dimension_numbers<[1], [1], [0], [0], [0, 0, 1, 0], [], []>} : vector<8x8xf32>, vector<64x8xf32>, vector<8x64xf32> -> vector<8x64xf32>
    %cst_174 = arith.constant dense<0xFF800000> : vector<8xf32>
    %363 = vector.multi_reduction <maximumf>, %362, %cst_174 [1] : vector<8x64xf32> to vector<8xf32>
    %364 = vector.shape_cast %363 : vector<8xf32> to vector<8x1xf32>
    %365 = vector.broadcast %364 : vector<8x1xf32> to vector<8x64xf32>
    %366 = arith.subf %362, %365 : vector<8x64xf32>
    %367 = math.exp %366 : vector<8x64xf32>
    %cst_175 = arith.constant dense<0.000000e+00> : vector<8xf32>
    %368 = vector.multi_reduction <add>, %367, %cst_175 [1] : vector<8x64xf32> to vector<8xf32>
    %369 = vector.shape_cast %368 : vector<8xf32> to vector<8x1xf32>
    %370 = tpu.reciprocal %369 {approx = true} : vector<8x1xf32> -> vector<8x1xf32>
    %371 = vector.broadcast %370 : vector<8x1xf32> to vector<8x64xf32>
    %372 = arith.mulf %367, %371 : vector<8x64xf32>
    %cst_176 = arith.constant dense<0.000000e+00> : vector<8x8xf32>
    %373 = tpu.matmul %372, %361, %cst_176 {dimension_numbers = #tpu.dot_dimension_numbers<[1], [0], [0], [1], [0, 0, 1, 1], [], []>} : vector<8x64xf32>, vector<64x8xf32>, vector<8x8xf32> -> vector<8x8xf32>
    %c0_177 = arith.constant 0 : index
    %c0_178 = arith.constant 0 : index
    %c0_179 = arith.constant 0 : index
    %374 = vector.load %arg20[%c0_177, %c0_178, %c0_179] : memref<4x8x32xf32, #tpu.memory_space<vmem>>, vector<1x8x32xf32>
    %375 = vector.shape_cast %374 : vector<1x8x32xf32> to vector<8x32xf32>
    %cst_180 = arith.constant dense<0.000000e+00> : vector<8x32xf32>
    %376 = tpu.matmul %373, %375, %cst_180 {dimension_numbers = #tpu.dot_dimension_numbers<[1], [0], [0], [1], [0, 0, 1, 1], [], []>} : vector<8x8xf32>, vector<8x32xf32>, vector<8x32xf32> -> vector<8x32xf32>
    %377 = vector.extract_strided_slice %356 {offsets = [0, 8], sizes = [8, 8], strides = [1, 1]} : vector<8x32xf32> to vector<8x8xf32>
    %378 = vector.extract_strided_slice %357 {offsets = [0, 8], sizes = [64, 8], strides = [1, 1]} : vector<64x32xf32> to vector<64x8xf32>
    %379 = vector.extract_strided_slice %358 {offsets = [0, 8], sizes = [64, 8], strides = [1, 1]} : vector<64x32xf32> to vector<64x8xf32>
    %cst_181 = arith.constant dense<0.000000e+00> : vector<8x64xf32>
    %380 = tpu.matmul %377, %378, %cst_181 {dimension_numbers = #tpu.dot_dimension_numbers<[1], [1], [0], [0], [0, 0, 1, 0], [], []>} : vector<8x8xf32>, vector<64x8xf32>, vector<8x64xf32> -> vector<8x64xf32>
    %cst_182 = arith.constant dense<0xFF800000> : vector<8xf32>
    %381 = vector.multi_reduction <maximumf>, %380, %cst_182 [1] : vector<8x64xf32> to vector<8xf32>
    %382 = vector.shape_cast %381 : vector<8xf32> to vector<8x1xf32>
    %383 = vector.broadcast %382 : vector<8x1xf32> to vector<8x64xf32>
    %384 = arith.subf %380, %383 : vector<8x64xf32>
    %385 = math.exp %384 : vector<8x64xf32>
    %cst_183 = arith.constant dense<0.000000e+00> : vector<8xf32>
    %386 = vector.multi_reduction <add>, %385, %cst_183 [1] : vector<8x64xf32> to vector<8xf32>
    %387 = vector.shape_cast %386 : vector<8xf32> to vector<8x1xf32>
    %388 = tpu.reciprocal %387 {approx = true} : vector<8x1xf32> -> vector<8x1xf32>
    %389 = vector.broadcast %388 : vector<8x1xf32> to vector<8x64xf32>
    %390 = arith.mulf %385, %389 : vector<8x64xf32>
    %cst_184 = arith.constant dense<0.000000e+00> : vector<8x8xf32>
    %391 = tpu.matmul %390, %379, %cst_184 {dimension_numbers = #tpu.dot_dimension_numbers<[1], [0], [0], [1], [0, 0, 1, 1], [], []>} : vector<8x64xf32>, vector<64x8xf32>, vector<8x8xf32> -> vector<8x8xf32>
    %c1_185 = arith.constant 1 : index
    %c0_186 = arith.constant 0 : index
    %c0_187 = arith.constant 0 : index
    %392 = vector.load %arg20[%c1_185, %c0_186, %c0_187] : memref<4x8x32xf32, #tpu.memory_space<vmem>>, vector<1x8x32xf32>
    %393 = vector.shape_cast %392 : vector<1x8x32xf32> to vector<8x32xf32>
    %cst_188 = arith.constant dense<0.000000e+00> : vector<8x32xf32>
    %394 = tpu.matmul %391, %393, %cst_188 {dimension_numbers = #tpu.dot_dimension_numbers<[1], [0], [0], [1], [0, 0, 1, 1], [], []>} : vector<8x8xf32>, vector<8x32xf32>, vector<8x32xf32> -> vector<8x32xf32>
    %395 = arith.addf %376, %394 : vector<8x32xf32>
    %396 = vector.extract_strided_slice %356 {offsets = [0, 16], sizes = [8, 8], strides = [1, 1]} : vector<8x32xf32> to vector<8x8xf32>
    %397 = vector.extract_strided_slice %357 {offsets = [0, 16], sizes = [64, 8], strides = [1, 1]} : vector<64x32xf32> to vector<64x8xf32>
    %398 = vector.extract_strided_slice %358 {offsets = [0, 16], sizes = [64, 8], strides = [1, 1]} : vector<64x32xf32> to vector<64x8xf32>
    %cst_189 = arith.constant dense<0.000000e+00> : vector<8x64xf32>
    %399 = tpu.matmul %396, %397, %cst_189 {dimension_numbers = #tpu.dot_dimension_numbers<[1], [1], [0], [0], [0, 0, 1, 0], [], []>} : vector<8x8xf32>, vector<64x8xf32>, vector<8x64xf32> -> vector<8x64xf32>
    %cst_190 = arith.constant dense<0xFF800000> : vector<8xf32>
    %400 = vector.multi_reduction <maximumf>, %399, %cst_190 [1] : vector<8x64xf32> to vector<8xf32>
    %401 = vector.shape_cast %400 : vector<8xf32> to vector<8x1xf32>
    %402 = vector.broadcast %401 : vector<8x1xf32> to vector<8x64xf32>
    %403 = arith.subf %399, %402 : vector<8x64xf32>
    %404 = math.exp %403 : vector<8x64xf32>
    %cst_191 = arith.constant dense<0.000000e+00> : vector<8xf32>
    %405 = vector.multi_reduction <add>, %404, %cst_191 [1] : vector<8x64xf32> to vector<8xf32>
    %406 = vector.shape_cast %405 : vector<8xf32> to vector<8x1xf32>
    %407 = tpu.reciprocal %406 {approx = true} : vector<8x1xf32> -> vector<8x1xf32>
    %408 = vector.broadcast %407 : vector<8x1xf32> to vector<8x64xf32>
    %409 = arith.mulf %404, %408 : vector<8x64xf32>
    %cst_192 = arith.constant dense<0.000000e+00> : vector<8x8xf32>
    %410 = tpu.matmul %409, %398, %cst_192 {dimension_numbers = #tpu.dot_dimension_numbers<[1], [0], [0], [1], [0, 0, 1, 1], [], []>} : vector<8x64xf32>, vector<64x8xf32>, vector<8x8xf32> -> vector<8x8xf32>
    %c2_193 = arith.constant 2 : index
    %c0_194 = arith.constant 0 : index
    %c0_195 = arith.constant 0 : index
    %411 = vector.load %arg20[%c2_193, %c0_194, %c0_195] : memref<4x8x32xf32, #tpu.memory_space<vmem>>, vector<1x8x32xf32>
    %412 = vector.shape_cast %411 : vector<1x8x32xf32> to vector<8x32xf32>
    %cst_196 = arith.constant dense<0.000000e+00> : vector<8x32xf32>
    %413 = tpu.matmul %410, %412, %cst_196 {dimension_numbers = #tpu.dot_dimension_numbers<[1], [0], [0], [1], [0, 0, 1, 1], [], []>} : vector<8x8xf32>, vector<8x32xf32>, vector<8x32xf32> -> vector<8x32xf32>
    %414 = arith.addf %395, %413 : vector<8x32xf32>
    %415 = vector.extract_strided_slice %356 {offsets = [0, 24], sizes = [8, 8], strides = [1, 1]} : vector<8x32xf32> to vector<8x8xf32>
    %416 = vector.extract_strided_slice %357 {offsets = [0, 24], sizes = [64, 8], strides = [1, 1]} : vector<64x32xf32> to vector<64x8xf32>
    %417 = vector.extract_strided_slice %358 {offsets = [0, 24], sizes = [64, 8], strides = [1, 1]} : vector<64x32xf32> to vector<64x8xf32>
    %cst_197 = arith.constant dense<0.000000e+00> : vector<8x64xf32>
    %418 = tpu.matmul %415, %416, %cst_197 {dimension_numbers = #tpu.dot_dimension_numbers<[1], [1], [0], [0], [0, 0, 1, 0], [], []>} : vector<8x8xf32>, vector<64x8xf32>, vector<8x64xf32> -> vector<8x64xf32>
    %cst_198 = arith.constant dense<0xFF800000> : vector<8xf32>
    %419 = vector.multi_reduction <maximumf>, %418, %cst_198 [1] : vector<8x64xf32> to vector<8xf32>
    %420 = vector.shape_cast %419 : vector<8xf32> to vector<8x1xf32>
    %421 = vector.broadcast %420 : vector<8x1xf32> to vector<8x64xf32>
    %422 = arith.subf %418, %421 : vector<8x64xf32>
    %423 = math.exp %422 : vector<8x64xf32>
    %cst_199 = arith.constant dense<0.000000e+00> : vector<8xf32>
    %424 = vector.multi_reduction <add>, %423, %cst_199 [1] : vector<8x64xf32> to vector<8xf32>
    %425 = vector.shape_cast %424 : vector<8xf32> to vector<8x1xf32>
    %426 = tpu.reciprocal %425 {approx = true} : vector<8x1xf32> -> vector<8x1xf32>
    %427 = vector.broadcast %426 : vector<8x1xf32> to vector<8x64xf32>
    %428 = arith.mulf %423, %427 : vector<8x64xf32>
    %cst_200 = arith.constant dense<0.000000e+00> : vector<8x8xf32>
    %429 = tpu.matmul %428, %417, %cst_200 {dimension_numbers = #tpu.dot_dimension_numbers<[1], [0], [0], [1], [0, 0, 1, 1], [], []>} : vector<8x64xf32>, vector<64x8xf32>, vector<8x8xf32> -> vector<8x8xf32>
    %c3_201 = arith.constant 3 : index
    %c0_202 = arith.constant 0 : index
    %c0_203 = arith.constant 0 : index
    %430 = vector.load %arg20[%c3_201, %c0_202, %c0_203] : memref<4x8x32xf32, #tpu.memory_space<vmem>>, vector<1x8x32xf32>
    %431 = vector.shape_cast %430 : vector<1x8x32xf32> to vector<8x32xf32>
    %cst_204 = arith.constant dense<0.000000e+00> : vector<8x32xf32>
    %432 = tpu.matmul %429, %431, %cst_204 {dimension_numbers = #tpu.dot_dimension_numbers<[1], [0], [0], [1], [0, 0, 1, 1], [], []>} : vector<8x8xf32>, vector<8x32xf32>, vector<8x32xf32> -> vector<8x32xf32>
    %433 = arith.addf %414, %432 : vector<8x32xf32>
    %c0_205 = arith.constant 0 : index
    %c0_206 = arith.constant 0 : index
    %434 = vector.load %arg21[%c0_205, %c0_206] : memref<1x32xf32, #tpu.memory_space<vmem>>, vector<1x32xf32>
    %435 = vector.broadcast %434 : vector<1x32xf32> to vector<8x32xf32>
    %436 = arith.addf %433, %435 : vector<8x32xf32>
    %437 = tpu.concatenate %355, %436 in 0 : vector<8x32xf32>, vector<8x32xf32> -> vector<16x32xf32>
    %438 = vector.broadcast %250 : vector<1x32xf32> to vector<16x32xf32>
    %439 = arith.addf %438, %437 : vector<16x32xf32>
    %c0_207 = arith.constant 0 : index
    %c0_208 = arith.constant 0 : index
    %c0_209 = arith.constant 0 : index
    %440 = vector.load %arg26[%c0_207, %c0_208, %c0_209] : memref<3x2x32xf32, #tpu.memory_space<vmem>>, vector<1x2x32xf32>
    %441 = vector.shape_cast %440 : vector<1x2x32xf32> to vector<2x32xf32>
    %cst_210 = arith.constant dense<0.000000e+00> : vector<16xf32>
    %442 = vector.multi_reduction <add>, %439, %cst_210 [1] : vector<16x32xf32> to vector<16xf32>
    %443 = vector.shape_cast %442 : vector<16xf32> to vector<16x1xf32>
    %cst_211 = arith.constant 3.200000e+01 : f32
    %444 = vector.broadcast %cst_211 : f32 to vector<16x1xf32>
    %445 = arith.divf %443, %444 : vector<16x1xf32>
    %446 = vector.broadcast %445 : vector<16x1xf32> to vector<16x32xf32>
    %447 = arith.subf %439, %446 : vector<16x32xf32>
    %448 = arith.mulf %447, %447 : vector<16x32xf32>
    %cst_212 = arith.constant dense<0.000000e+00> : vector<16xf32>
    %449 = vector.multi_reduction <add>, %448, %cst_212 [1] : vector<16x32xf32> to vector<16xf32>
    %450 = vector.shape_cast %449 : vector<16xf32> to vector<16x1xf32>
    %cst_213 = arith.constant 3.200000e+01 : f32
    %451 = vector.broadcast %cst_213 : f32 to vector<16x1xf32>
    %452 = arith.divf %450, %451 : vector<16x1xf32>
    %cst_214 = arith.constant 9.99999974E-6 : f32
    %453 = vector.broadcast %cst_214 : f32 to vector<16x1xf32>
    %454 = arith.addf %452, %453 : vector<16x1xf32>
    %455 = math.rsqrt %454 : vector<16x1xf32>
    %456 = vector.broadcast %455 : vector<16x1xf32> to vector<16x32xf32>
    %457 = arith.mulf %447, %456 : vector<16x32xf32>
    %458 = vector.extract_strided_slice %441 {offsets = [0, 0], sizes = [1, 32], strides = [1, 1]} : vector<2x32xf32> to vector<1x32xf32>
    %459 = vector.broadcast %458 : vector<1x32xf32> to vector<16x32xf32>
    %460 = arith.mulf %457, %459 : vector<16x32xf32>
    %461 = vector.extract_strided_slice %441 {offsets = [1, 0], sizes = [1, 32], strides = [1, 1]} : vector<2x32xf32> to vector<1x32xf32>
    %462 = vector.broadcast %461 : vector<1x32xf32> to vector<16x32xf32>
    %463 = arith.addf %460, %462 : vector<16x32xf32>
    %c0_215 = arith.constant 0 : index
    %c0_216 = arith.constant 0 : index
    %464 = vector.load %arg22[%c0_215, %c0_216] : memref<32x64xf32, #tpu.memory_space<vmem>>, vector<32x64xf32>
    %cst_217 = arith.constant dense<0.000000e+00> : vector<16x64xf32>
    %465 = tpu.matmul %463, %464, %cst_217 {dimension_numbers = #tpu.dot_dimension_numbers<[1], [0], [0], [1], [0, 0, 1, 1], [], []>} : vector<16x32xf32>, vector<32x64xf32>, vector<16x64xf32> -> vector<16x64xf32>
    %c0_218 = arith.constant 0 : index
    %c0_219 = arith.constant 0 : index
    %466 = vector.load %arg23[%c0_218, %c0_219] : memref<1x64xf32, #tpu.memory_space<vmem>>, vector<1x64xf32>
    %467 = vector.broadcast %466 : vector<1x64xf32> to vector<16x64xf32>
    %468 = arith.addf %465, %467 : vector<16x64xf32>
    %cst_220 = arith.constant 0.000000e+00 : f32
    %469 = vector.broadcast %cst_220 : f32 to vector<16x64xf32>
    %470 = arith.maximumf %468, %469 : vector<16x64xf32>
    %c0_221 = arith.constant 0 : index
    %c0_222 = arith.constant 0 : index
    %471 = vector.load %arg24[%c0_221, %c0_222] : memref<64x32xf32, #tpu.memory_space<vmem>>, vector<64x32xf32>
    %cst_223 = arith.constant dense<0.000000e+00> : vector<16x32xf32>
    %472 = tpu.matmul %470, %471, %cst_223 {dimension_numbers = #tpu.dot_dimension_numbers<[1], [0], [0], [1], [0, 0, 1, 1], [], []>} : vector<16x64xf32>, vector<64x32xf32>, vector<16x32xf32> -> vector<16x32xf32>
    %c0_224 = arith.constant 0 : index
    %c0_225 = arith.constant 0 : index
    %473 = vector.load %arg25[%c0_224, %c0_225] : memref<1x32xf32, #tpu.memory_space<vmem>>, vector<1x32xf32>
    %474 = vector.broadcast %473 : vector<1x32xf32> to vector<16x32xf32>
    %475 = arith.addf %472, %474 : vector<16x32xf32>
    %476 = arith.addf %463, %475 : vector<16x32xf32>
    %c1_226 = arith.constant 1 : index
    %c0_227 = arith.constant 0 : index
    %c0_228 = arith.constant 0 : index
    %477 = vector.load %arg26[%c1_226, %c0_227, %c0_228] : memref<3x2x32xf32, #tpu.memory_space<vmem>>, vector<1x2x32xf32>
    %478 = vector.shape_cast %477 : vector<1x2x32xf32> to vector<2x32xf32>
    %cst_229 = arith.constant dense<0.000000e+00> : vector<16xf32>
    %479 = vector.multi_reduction <add>, %476, %cst_229 [1] : vector<16x32xf32> to vector<16xf32>
    %480 = vector.shape_cast %479 : vector<16xf32> to vector<16x1xf32>
    %cst_230 = arith.constant 3.200000e+01 : f32
    %481 = vector.broadcast %cst_230 : f32 to vector<16x1xf32>
    %482 = arith.divf %480, %481 : vector<16x1xf32>
    %483 = vector.broadcast %482 : vector<16x1xf32> to vector<16x32xf32>
    %484 = arith.subf %476, %483 : vector<16x32xf32>
    %485 = arith.mulf %484, %484 : vector<16x32xf32>
    %cst_231 = arith.constant dense<0.000000e+00> : vector<16xf32>
    %486 = vector.multi_reduction <add>, %485, %cst_231 [1] : vector<16x32xf32> to vector<16xf32>
    %487 = vector.shape_cast %486 : vector<16xf32> to vector<16x1xf32>
    %cst_232 = arith.constant 3.200000e+01 : f32
    %488 = vector.broadcast %cst_232 : f32 to vector<16x1xf32>
    %489 = arith.divf %487, %488 : vector<16x1xf32>
    %cst_233 = arith.constant 9.99999974E-6 : f32
    %490 = vector.broadcast %cst_233 : f32 to vector<16x1xf32>
    %491 = arith.addf %489, %490 : vector<16x1xf32>
    %492 = math.rsqrt %491 : vector<16x1xf32>
    %493 = vector.broadcast %492 : vector<16x1xf32> to vector<16x32xf32>
    %494 = arith.mulf %484, %493 : vector<16x32xf32>
    %495 = vector.extract_strided_slice %478 {offsets = [0, 0], sizes = [1, 32], strides = [1, 1]} : vector<2x32xf32> to vector<1x32xf32>
    %496 = vector.broadcast %495 : vector<1x32xf32> to vector<16x32xf32>
    %497 = arith.mulf %494, %496 : vector<16x32xf32>
    %498 = vector.extract_strided_slice %478 {offsets = [1, 0], sizes = [1, 32], strides = [1, 1]} : vector<2x32xf32> to vector<1x32xf32>
    %499 = vector.broadcast %498 : vector<1x32xf32> to vector<16x32xf32>
    %500 = arith.addf %497, %499 : vector<16x32xf32>
    %c2_234 = arith.constant 2 : index
    %c0_235 = arith.constant 0 : index
    %c0_236 = arith.constant 0 : index
    %501 = vector.load %arg26[%c2_234, %c0_235, %c0_236] : memref<3x2x32xf32, #tpu.memory_space<vmem>>, vector<1x2x32xf32>
    %502 = vector.shape_cast %501 : vector<1x2x32xf32> to vector<2x32xf32>
    %cst_237 = arith.constant dense<0.000000e+00> : vector<16xf32>
    %503 = vector.multi_reduction <add>, %500, %cst_237 [1] : vector<16x32xf32> to vector<16xf32>
    %504 = vector.shape_cast %503 : vector<16xf32> to vector<16x1xf32>
    %cst_238 = arith.constant 3.200000e+01 : f32
    %505 = vector.broadcast %cst_238 : f32 to vector<16x1xf32>
    %506 = arith.divf %504, %505 : vector<16x1xf32>
    %507 = vector.broadcast %506 : vector<16x1xf32> to vector<16x32xf32>
    %508 = arith.subf %500, %507 : vector<16x32xf32>
    %509 = arith.mulf %508, %508 : vector<16x32xf32>
    %cst_239 = arith.constant dense<0.000000e+00> : vector<16xf32>
    %510 = vector.multi_reduction <add>, %509, %cst_239 [1] : vector<16x32xf32> to vector<16xf32>
    %511 = vector.shape_cast %510 : vector<16xf32> to vector<16x1xf32>
    %cst_240 = arith.constant 3.200000e+01 : f32
    %512 = vector.broadcast %cst_240 : f32 to vector<16x1xf32>
    %513 = arith.divf %511, %512 : vector<16x1xf32>
    %cst_241 = arith.constant 9.99999974E-6 : f32
    %514 = vector.broadcast %cst_241 : f32 to vector<16x1xf32>
    %515 = arith.addf %513, %514 : vector<16x1xf32>
    %516 = math.rsqrt %515 : vector<16x1xf32>
    %517 = vector.broadcast %516 : vector<16x1xf32> to vector<16x32xf32>
    %518 = arith.mulf %508, %517 : vector<16x32xf32>
    %519 = vector.extract_strided_slice %502 {offsets = [0, 0], sizes = [1, 32], strides = [1, 1]} : vector<2x32xf32> to vector<1x32xf32>
    %520 = vector.broadcast %519 : vector<1x32xf32> to vector<16x32xf32>
    %521 = arith.mulf %518, %520 : vector<16x32xf32>
    %522 = vector.extract_strided_slice %502 {offsets = [1, 0], sizes = [1, 32], strides = [1, 1]} : vector<2x32xf32> to vector<1x32xf32>
    %523 = vector.broadcast %522 : vector<1x32xf32> to vector<16x32xf32>
    %524 = arith.addf %521, %523 : vector<16x32xf32>
    %c0_242 = arith.constant 0 : index
    %c0_243 = arith.constant 0 : index
    %c0_244 = arith.constant 0 : index
    %525 = vector.load %arg27[%c0_242, %c0_243, %c0_244] : memref<2x32x32xf32, #tpu.memory_space<vmem>>, vector<1x32x32xf32>
    %526 = vector.shape_cast %525 : vector<1x32x32xf32> to vector<32x32xf32>
    %cst_245 = arith.constant dense<0.000000e+00> : vector<16x32xf32>
    %527 = tpu.matmul %524, %526, %cst_245 {dimension_numbers = #tpu.dot_dimension_numbers<[1], [0], [0], [1], [0, 0, 1, 1], [], []>} : vector<16x32xf32>, vector<32x32xf32>, vector<16x32xf32> -> vector<16x32xf32>
    %c0_246 = arith.constant 0 : index
    %c0_247 = arith.constant 0 : index
    %c0_248 = arith.constant 0 : index
    %528 = vector.load %arg28[%c0_246, %c0_247, %c0_248] : memref<2x1x32xf32, #tpu.memory_space<vmem>>, vector<1x1x32xf32>
    %529 = vector.shape_cast %528 : vector<1x1x32xf32> to vector<1x32xf32>
    %530 = vector.broadcast %529 : vector<1x32xf32> to vector<16x32xf32>
    %531 = arith.addf %527, %530 : vector<16x32xf32>
    %cst_249 = arith.constant 0.000000e+00 : f32
    %532 = vector.broadcast %cst_249 : f32 to vector<16x32xf32>
    %533 = arith.maximumf %531, %532 : vector<16x32xf32>
    %c1_250 = arith.constant 1 : index
    %c0_251 = arith.constant 0 : index
    %c0_252 = arith.constant 0 : index
    %534 = vector.load %arg27[%c1_250, %c0_251, %c0_252] : memref<2x32x32xf32, #tpu.memory_space<vmem>>, vector<1x32x32xf32>
    %535 = vector.shape_cast %534 : vector<1x32x32xf32> to vector<32x32xf32>
    %cst_253 = arith.constant dense<0.000000e+00> : vector<16x32xf32>
    %536 = tpu.matmul %533, %535, %cst_253 {dimension_numbers = #tpu.dot_dimension_numbers<[1], [0], [0], [1], [0, 0, 1, 1], [], []>} : vector<16x32xf32>, vector<32x32xf32>, vector<16x32xf32> -> vector<16x32xf32>
    %c1_254 = arith.constant 1 : index
    %c0_255 = arith.constant 0 : index
    %c0_256 = arith.constant 0 : index
    %537 = vector.load %arg28[%c1_254, %c0_255, %c0_256] : memref<2x1x32xf32, #tpu.memory_space<vmem>>, vector<1x1x32xf32>
    %538 = vector.shape_cast %537 : vector<1x1x32xf32> to vector<1x32xf32>
    %539 = vector.broadcast %538 : vector<1x32xf32> to vector<16x32xf32>
    %540 = arith.addf %536, %539 : vector<16x32xf32>
    %cst_257 = arith.constant 0.000000e+00 : f32
    %541 = vector.broadcast %cst_257 : f32 to vector<16x32xf32>
    %542 = arith.maximumf %540, %541 : vector<16x32xf32>
    %c0_258 = arith.constant 0 : index
    %c0_259 = arith.constant 0 : index
    %543 = vector.load %arg29[%c0_258, %c0_259] : memref<32x2xf32, #tpu.memory_space<vmem>>, vector<32x2xf32>
    %cst_260 = arith.constant dense<0.000000e+00> : vector<16x2xf32>
    %544 = tpu.matmul %542, %543, %cst_260 {dimension_numbers = #tpu.dot_dimension_numbers<[1], [0], [0], [1], [0, 0, 1, 1], [], []>} : vector<16x32xf32>, vector<32x2xf32>, vector<16x2xf32> -> vector<16x2xf32>
    %c0_261 = arith.constant 0 : index
    %c0_262 = arith.constant 0 : index
    %545 = vector.load %arg30[%c0_261, %c0_262] : memref<1x2xf32, #tpu.memory_space<vmem>>, vector<1x2xf32>
    %546 = vector.broadcast %545 : vector<1x2xf32> to vector<16x2xf32>
    %547 = arith.addf %544, %546 : vector<16x2xf32>
    %c0_263 = arith.constant 0 : index
    %c0_264 = arith.constant 0 : index
    %548 = vector.load %arg31[%c0_263, %c0_264] : memref<16x2xf32, #tpu.memory_space<vmem>>, vector<16x2xf32>
    tpu.vector_store %arg31[%c0_263, %c0_264], %547 {strides = array<i32>} : memref<16x2xf32, #tpu.memory_space<vmem>>, vector<16x2xf32>,
    return
  }
}

</mosaic_0001>

<llo_original>
// kernel: cotr_forward.1
$region0: #{cotr_forward.1}
  #allocation0 [shape = 'u32[]', space=smem, size = 0x4, offset = 0x4, fixed_abs, tag = 'smem constant byte address 0x4 - core index']
  #allocation1 [shape = 'u32[72,128]{1,0:T(1,128)}', space=vmem, size = 0x9000, scoped, tag = 'internal scratch']
  %s0 = inlined_call_operand.smem [shape: u32[32], index: -1, kind: input, shape index: {}]
  %s1 = sld [smem:[%s0]]
  %s2 = scalar_lea.smem %s0, 1
  %s3 = sld [smem:[%s2]]
  %s4 = scalar_lea.smem %s0, 2
  %s5 = sld [smem:[%s4]]
  %s6 = scalar_lea.smem %s0, 3
  %s7 = sld [smem:[%s6]]
  %s8 = scalar_lea.smem %s0, 4
  %s9 = sld [smem:[%s8]]
  %s10 = scalar_lea.smem %s0, 5
  %s11 = sld [smem:[%s10]]
  %s12 = scalar_lea.smem %s0, 6
  %s13 = sld [smem:[%s12]]
  %s14 = scalar_lea.smem %s0, 7
  %s15 = sld [smem:[%s14]]
  %s16 = scalar_lea.smem %s0, 8
  %s17 = sld [smem:[%s16]]
  %s18 = scalar_lea.smem %s0, 9
  %s19 = sld [smem:[%s18]]
  %s20 = scalar_lea.smem %s0, 10
  %s21 = sld [smem:[%s20]]
  %s22 = scalar_lea.smem %s0, 11
  %s23 = sld [smem:[%s22]]
  %s24 = scalar_lea.smem %s0, 12
  %s25 = sld [smem:[%s24]]
  %s26 = scalar_lea.smem %s0, 13
  %s27 = sld [smem:[%s26]]
  %s28 = scalar_lea.smem %s0, 14
  %s29 = sld [smem:[%s28]]
  %s30 = scalar_lea.smem %s0, 15
  %s31 = sld [smem:[%s30]]
  %s32 = scalar_lea.smem %s0, 16
  %s33 = sld [smem:[%s32]]
  %s34 = scalar_lea.smem %s0, 17
  %s35 = sld [smem:[%s34]]
  %s36 = scalar_lea.smem %s0, 18
  %s37 = sld [smem:[%s36]]
  %s38 = scalar_lea.smem %s0, 19
  %s39 = sld [smem:[%s38]]
  %s40 = scalar_lea.smem %s0, 20
  %s41 = sld [smem:[%s40]]
  %s42 = scalar_lea.smem %s0, 21
  %s43 = sld [smem:[%s42]]
  %s44 = scalar_lea.smem %s0, 22
  %s45 = sld [smem:[%s44]]
  %s46 = scalar_lea.smem %s0, 23
  %s47 = sld [smem:[%s46]]
  %s48 = scalar_lea.smem %s0, 24
  %s49 = sld [smem:[%s48]]
  %s50 = scalar_lea.smem %s0, 25
  %s51 = sld [smem:[%s50]]
  %s52 = scalar_lea.smem %s0, 26
  %s53 = sld [smem:[%s52]]
  %s54 = scalar_lea.smem %s0, 27
  %s55 = sld [smem:[%s54]]
  %s56 = scalar_lea.smem %s0, 28
  %s57 = sld [smem:[%s56]]
  %s58 = scalar_lea.smem %s0, 29
  %s59 = sld [smem:[%s58]]
  %s60 = scalar_lea.smem %s0, 30
  %s61 = sld [smem:[%s60]]
  %s62 = scalar_lea.smem %s0, 31
  %s63 = sld [smem:[%s62]]
  %s64 = sld [smem:[#allocation0]]
  $region178: #{cotr_forward.1} parent=0
    _
  %s66 = ssub.s32 1, %s64
  %s67 = scalar_select 0, %s66, %s64
  $region1: #{cotr_forward.1} parent=0
    #allocation2 [shape = 'u8[2048]{0}', space=vmem, size = 0x800, scoped, tag = 'input window, operand 5, single buffered']
    #allocation3 [shape = 's32[1]{0}', space=sflag, size = 0x4, scoped, tag = 'scoped memory for cotr_forward.1']
    #allocation4 [shape = 'u8[512]{0}', space=vmem, size = 0x400, scoped, tag = 'input window, operand 8, single buffered']
    #allocation5 [shape = 's32[1]{0}', space=sflag, size = 0x4, scoped, tag = 'scoped memory for cotr_forward.1']
    #allocation6 [shape = 'u8[512]{0}', space=vmem, size = 0x400, scoped, tag = 'input window, operand 10, single buffered']
    #allocation7 [shape = 'u8[512]{0}', space=vmem, size = 0x400, scoped, tag = 'input window, operand 12, single buffered']
    #allocation8 [shape = 's32[1]{0}', space=sflag, size = 0x4, scoped, tag = 'scoped memory for cotr_forward.1']
    #allocation9 [shape = 'u8[512]{0}', space=vmem, size = 0x400, scoped, tag = 'input window, operand 14, single buffered']
    #allocation10 [shape = 'u8[512]{0}', space=vmem, size = 0x400, scoped, tag = 'input window, operand 16, single buffered']
    #allocation11 [shape = 's32[1]{0}', space=sflag, size = 0x4, scoped, tag = 'scoped memory for cotr_forward.1']
    #allocation12 [shape = 'u8[2048]{0}', space=vmem, size = 0x800, scoped, tag = 'input window, operand 17, single buffered']
    #allocation13 [shape = 'u8[16384]{0}', space=vmem, size = 0x4000, scoped, tag = 'input window, operand 22, single buffered']
    #allocation14 [shape = 's32[1]{0}', space=sflag, size = 0x4, scoped, tag = 'scoped memory for cotr_forward.1']
    #allocation15 [shape = 'u8[512]{0}', space=vmem, size = 0x400, scoped, tag = 'input window, operand 23, single buffered']
    #allocation16 [shape = 'u8[512]{0}', space=vmem, size = 0x400, scoped, tag = 'input window, operand 25, single buffered']
    #allocation17 [shape = 's32[1]{0}', space=sflag, size = 0x4, scoped, tag = 'scoped memory for cotr_forward.1']
    #allocation18 [shape = 'u8[512]{0}', space=vmem, size = 0x400, scoped, tag = 'input window, operand 30, single buffered']
    %68 = vsyncpa [#allocation3], 0
    %69 = vsyncpa [#allocation5], 0
    %70 = vsyncpa [#allocation8], 0
    %71 = vsyncpa [#allocation11], 0
    %72 = vsyncpa [#allocation14], 0
    %73 = vsyncpa [#allocation17], 0
    // Predicated region
    $region2: #{cotr_forward.1} parent=1 // pred_check
      _
    $region3: #{cotr_forward.1} parent=1 // pred_check_branch
      %75 = sbr.rel (0) target = $region5
    $region4: #{cotr_forward.1} parent=1 // pred_region
      _
    $region5: #{cotr_forward.1} parent=1 // pred_fallthru
      _
    // Predicated region
    $region6: #{cotr_forward.1} parent=1 // pred_check
      _
    $region7: #{cotr_forward.1} parent=1 // pred_check_branch
      %77 = sbr.rel (0) target = $region9
    $region8: #{cotr_forward.1} parent=1 // pred_region
      _
    $region9: #{cotr_forward.1} parent=1 // pred_fallthru
      _
    // Predicated region
    $region10: #{cotr_forward.1} parent=1 // pred_check
      _
    $region11: #{cotr_forward.1} parent=1 // pred_check_branch
      %79 = sbr.rel (0) target = $region13
    $region12: #{cotr_forward.1} parent=1 // pred_region
      _
    $region13: #{cotr_forward.1} parent=1 // pred_fallthru
      _
    // Predicated region
    $region14: #{cotr_forward.1} parent=1 // pred_check
      _
    $region15: #{cotr_forward.1} parent=1 // pred_check_branch
      %81 = sbr.rel (0) target = $region17
    $region16: #{cotr_forward.1} parent=1 // pred_region
      _
    $region17: #{cotr_forward.1} parent=1 // pred_fallthru
      _
    // Predicated region
    $region18: #{cotr_forward.1} parent=1 // pred_check
      _
    $region19: #{cotr_forward.1} parent=1 // pred_check_branch
      %83 = sbr.rel (0) target = $region21
    $region20: #{cotr_forward.1} parent=1 // pred_region
      _
    $region21: #{cotr_forward.1} parent=1 // pred_fallthru
      _
    // Predicated region
    $region22: #{cotr_forward.1} parent=1 // pred_check
      _
    $region23: #{cotr_forward.1} parent=1 // pred_check_branch
      %85 = sbr.rel (0) target = $region25
    $region24: #{cotr_forward.1} parent=1 // pred_region
      %87 = vsyncadd [#allocation3], 0
      %s89 = sshll.u32 %s11, 4
      %s90 = int_to_ptr.hbm [resolvable:$true] %s89
      %s91 = sshll.u32 [#allocation2], 4
      %s92 = int_to_ptr.vmem [resolvable:$true] %s91
      %94 = dma.hbm_to_vmem [thread:$0]  %s90, 64, %s92, [#allocation3]
    $region25: #{cotr_forward.1} parent=1 // pred_fallthru
      _
    // Predicated region
    $region26: #{cotr_forward.1} parent=1 // pred_check
      _
    $region27: #{cotr_forward.1} parent=1 // pred_check_branch
      %96 = sbr.rel (0) target = $region29
    $region28: #{cotr_forward.1} parent=1 // pred_region
      _
    $region29: #{cotr_forward.1} parent=1 // pred_fallthru
      _
    // Predicated region
    $region30: #{cotr_forward.1} parent=1 // pred_check
      _
    $region31: #{cotr_forward.1} parent=1 // pred_check_branch
      %98 = sbr.rel (0) target = $region33
    $region32: #{cotr_forward.1} parent=1 // pred_region
      _
    $region33: #{cotr_forward.1} parent=1 // pred_fallthru
      _
    // Predicated region
    $region34: #{cotr_forward.1} parent=1 // pred_check
      _
    $region35: #{cotr_forward.1} parent=1 // pred_check_branch
      %100 = sbr.rel (0) target = $region37
    $region36: #{cotr_forward.1} parent=1 // pred_region
      %102 = vsyncadd [#allocation5], 0
      %s104 = sshll.u32 %s17, 4
      %s105 = int_to_ptr.hbm [resolvable:$true] %s104
      %s106 = sshll.u32 [#allocation4], 4
      %s107 = int_to_ptr.vmem [resolvable:$true] %s106
      %109 = dma.hbm_to_vmem [thread:$0]  %s105, 16, %s107, [#allocation5]
    $region37: #{cotr_forward.1} parent=1 // pred_fallthru
      _
    // Predicated region
    $region38: #{cotr_forward.1} parent=1 // pred_check
      _
    $region39: #{cotr_forward.1} parent=1 // pred_check_branch
      %111 = sbr.rel (0) target = $region41
    $region40: #{cotr_forward.1} parent=1 // pred_region
      _
    $region41: #{cotr_forward.1} parent=1 // pred_fallthru
      _
    // Predicated region
    $region42: #{cotr_forward.1} parent=1 // pred_check
      _
    $region43: #{cotr_forward.1} parent=1 // pred_check_branch
      %113 = sbr.rel (0) target = $region45
    $region44: #{cotr_forward.1} parent=1 // pred_region
      %115 = vsyncadd [#allocation5], 0
      %s117 = sshll.u32 %s21, 4
      %s118 = int_to_ptr.hbm [resolvable:$true] %s117
      %s119 = sshll.u32 [#allocation6], 4
      %s120 = int_to_ptr.vmem [resolvable:$true] %s119
      %122 = dma.hbm_to_vmem [thread:$0]  %s118, 16, %s120, [#allocation5]
    $region45: #{cotr_forward.1} parent=1 // pred_fallthru
      _
    // Predicated region
    $region46: #{cotr_forward.1} parent=1 // pred_check
      _
    $region47: #{cotr_forward.1} parent=1 // pred_check_branch
      %124 = sbr.rel (0) target = $region49
    $region48: #{cotr_forward.1} parent=1 // pred_region
      _
    $region49: #{cotr_forward.1} parent=1 // pred_fallthru
      _
    // Predicated region
    $region50: #{cotr_forward.1} parent=1 // pred_check
      _
    $region51: #{cotr_forward.1} parent=1 // pred_check_branch
      %126 = sbr.rel (0) target = $region53
    $region52: #{cotr_forward.1} parent=1 // pred_region
      %128 = vsyncadd [#allocation8], 0
      %s130 = sshll.u32 %s25, 4
      %s131 = int_to_ptr.hbm [resolvable:$true] %s130
      %s132 = sshll.u32 [#allocation7], 4
      %s133 = int_to_ptr.vmem [resolvable:$true] %s132
      %135 = dma.hbm_to_vmem [thread:$0]  %s131, 16, %s133, [#allocation8]
    $region53: #{cotr_forward.1} parent=1 // pred_fallthru
      _
    // Predicated region
    $region54: #{cotr_forward.1} parent=1 // pred_check
      _
    $region55: #{cotr_forward.1} parent=1 // pred_check_branch
      %137 = sbr.rel (0) target = $region57
    $region56: #{cotr_forward.1} parent=1 // pred_region
      _
    $region57: #{cotr_forward.1} parent=1 // pred_fallthru
      _
    // Predicated region
    $region58: #{cotr_forward.1} parent=1 // pred_check
      _
    $region59: #{cotr_forward.1} parent=1 // pred_check_branch
      %139 = sbr.rel (0) target = $region61
    $region60: #{cotr_forward.1} parent=1 // pred_region
      %141 = vsyncadd [#allocation8], 0
      %s143 = sshll.u32 %s29, 4
      %s144 = int_to_ptr.hbm [resolvable:$true] %s143
      %s145 = sshll.u32 [#allocation9], 4
      %s146 = int_to_ptr.vmem [resolvable:$true] %s145
      %148 = dma.hbm_to_vmem [thread:$0]  %s144, 16, %s146, [#allocation8]
    $region61: #{cotr_forward.1} parent=1 // pred_fallthru
      _
    // Predicated region
    $region62: #{cotr_forward.1} parent=1 // pred_check
      _
    $region63: #{cotr_forward.1} parent=1 // pred_check_branch
      %150 = sbr.rel (0) target = $region65
    $region64: #{cotr_forward.1} parent=1 // pred_region
      _
    $region65: #{cotr_forward.1} parent=1 // pred_fallthru
      _
    // Predicated region
    $region66: #{cotr_forward.1} parent=1 // pred_check
      _
    $region67: #{cotr_forward.1} parent=1 // pred_check_branch
      %152 = sbr.rel (0) target = $region69
    $region68: #{cotr_forward.1} parent=1 // pred_region
      %154 = vsyncadd [#allocation11], 0
      %s156 = sshll.u32 %s33, 4
      %s157 = int_to_ptr.hbm [resolvable:$true] %s156
      %s158 = sshll.u32 [#allocation10], 4
      %s159 = int_to_ptr.vmem [resolvable:$true] %s158
      %161 = dma.hbm_to_vmem [thread:$0]  %s157, 16, %s159, [#allocation11]
    $region69: #{cotr_forward.1} parent=1 // pred_fallthru
      _
    // Predicated region
    $region70: #{cotr_forward.1} parent=1 // pred_check
      _
    $region71: #{cotr_forward.1} parent=1 // pred_check_branch
      %163 = sbr.rel (0) target = $region73
    $region72: #{cotr_forward.1} parent=1 // pred_region
      %165 = vsyncadd [#allocation11], 0
      %s166 = sshll.u32 %s35, 4
      %s167 = int_to_ptr.hbm [resolvable:$true] %s166
      %s168 = sshll.u32 [#allocation12], 4
      %s169 = int_to_ptr.vmem [resolvable:$true] %s168
      %174 = dma.hbm_to_vmem [thread:$0]  %s167, 64, %s169, [#allocation11], 32, 32, 2
    $region73: #{cotr_forward.1} parent=1 // pred_fallthru
      _
    // Predicated region
    $region74: #{cotr_forward.1} parent=1 // pred_check
      _
    $region75: #{cotr_forward.1} parent=1 // pred_check_branch
      %176 = sbr.rel (0) target = $region77
    $region76: #{cotr_forward.1} parent=1 // pred_region
      _
    $region77: #{cotr_forward.1} parent=1 // pred_fallthru
      _
    // Predicated region
    $region78: #{cotr_forward.1} parent=1 // pred_check
      _
    $region79: #{cotr_forward.1} parent=1 // pred_check_branch
      %178 = sbr.rel (0) target = $region81
    $region80: #{cotr_forward.1} parent=1 // pred_region
      _
    $region81: #{cotr_forward.1} parent=1 // pred_fallthru
      _
    // Predicated region
    $region82: #{cotr_forward.1} parent=1 // pred_check
      _
    $region83: #{cotr_forward.1} parent=1 // pred_check_branch
      %180 = sbr.rel (0) target = $region85
    $region84: #{cotr_forward.1} parent=1 // pred_region
      _
    $region85: #{cotr_forward.1} parent=1 // pred_fallthru
      _
    // Predicated region
    $region86: #{cotr_forward.1} parent=1 // pred_check
      _
    $region87: #{cotr_forward.1} parent=1 // pred_check_branch
      %182 = sbr.rel (0) target = $region89
    $region88: #{cotr_forward.1} parent=1 // pred_region
      _
    $region89: #{cotr_forward.1} parent=1 // pred_fallthru
      _
    // Predicated region
    $region90: #{cotr_forward.1} parent=1 // pred_check
      _
    $region91: #{cotr_forward.1} parent=1 // pred_check_branch
      %184 = sbr.rel (0) target = $region93
    $region92: #{cotr_forward.1} parent=1 // pred_region
      %186 = vsyncadd [#allocation14], 0
      %s187 = sshll.u32 %s45, 4
      %s188 = int_to_ptr.hbm [resolvable:$true] %s187
      %s189 = sshll.u32 [#allocation13], 4
      %s190 = int_to_ptr.vmem [resolvable:$true] %s189
      %195 = dma.hbm_to_vmem [thread:$0]  %s188, 512, %s190, [#allocation14], 128, 128, 8
    $region93: #{cotr_forward.1} parent=1 // pred_fallthru
      _
    // Predicated region
    $region94: #{cotr_forward.1} parent=1 // pred_check
      _
    $region95: #{cotr_forward.1} parent=1 // pred_check_branch
      %197 = sbr.rel (0) target = $region97
    $region96: #{cotr_forward.1} parent=1 // pred_region
      %199 = vsyncadd [#allocation14], 0
      %s201 = sshll.u32 %s47, 4
      %s202 = int_to_ptr.hbm [resolvable:$true] %s201
      %s203 = sshll.u32 [#allocation15], 4
      %s204 = int_to_ptr.vmem [resolvable:$true] %s203
      %206 = dma.hbm_to_vmem [thread:$0]  %s202, 16, %s204, [#allocation14]
    $region97: #{cotr_forward.1} parent=1 // pred_fallthru
      _
    // Predicated region
    $region98: #{cotr_forward.1} parent=1 // pred_check
      _
    $region99: #{cotr_forward.1} parent=1 // pred_check_branch
      %208 = sbr.rel (0) target = $region101
    $region100: #{cotr_forward.1} parent=1 // pred_region
      _
    $region101: #{cotr_forward.1} parent=1 // pred_fallthru
      _
    // Predicated region
    $region102: #{cotr_forward.1} parent=1 // pred_check
      _
    $region103: #{cotr_forward.1} parent=1 // pred_check_branch
      %210 = sbr.rel (0) target = $region105
    $region104: #{cotr_forward.1} parent=1 // pred_region
      %212 = vsyncadd [#allocation17], 0
      %s214 = sshll.u32 %s51, 4
      %s215 = int_to_ptr.hbm [resolvable:$true] %s214
      %s216 = sshll.u32 [#allocation16], 4
      %s217 = int_to_ptr.vmem [resolvable:$true] %s216
      %219 = dma.hbm_to_vmem [thread:$0]  %s215, 16, %s217, [#allocation17]
    $region105: #{cotr_forward.1} parent=1 // pred_fallthru
      _
    // Predicated region
    $region106: #{cotr_forward.1} parent=1 // pred_check
      _
    $region107: #{cotr_forward.1} parent=1 // pred_check_branch
      %221 = sbr.rel (0) target = $region109
    $region108: #{cotr_forward.1} parent=1 // pred_region
      _
    $region109: #{cotr_forward.1} parent=1 // pred_fallthru
      _
    // Predicated region
    $region110: #{cotr_forward.1} parent=1 // pred_check
      _
    $region111: #{cotr_forward.1} parent=1 // pred_check_branch
      %223 = sbr.rel (0) target = $region113
    $region112: #{cotr_forward.1} parent=1 // pred_region
      _
    $region113: #{cotr_forward.1} parent=1 // pred_fallthru
      _
    // Predicated region
    $region114: #{cotr_forward.1} parent=1 // pred_check
      _
    $region115: #{cotr_forward.1} parent=1 // pred_check_branch
      %225 = sbr.rel (0) target = $region117
    $region116: #{cotr_forward.1} parent=1 // pred_region
      _
    $region117: #{cotr_forward.1} parent=1 // pred_fallthru
      _
    // Predicated region
    $region118: #{cotr_forward.1} parent=1 // pred_check
      _
    $region119: #{cotr_forward.1} parent=1 // pred_check_branch
      %227 = sbr.rel (0) target = $region121
    $region120: #{cotr_forward.1} parent=1 // pred_region
      _
    $region121: #{cotr_forward.1} parent=1 // pred_fallthru
      _
    // Predicated region
    $region122: #{cotr_forward.1} parent=1 // pred_check
      _
    $region123: #{cotr_forward.1} parent=1 // pred_check_branch
      %229 = sbr.rel (0) target = $region125
    $region124: #{cotr_forward.1} parent=1 // pred_region
      %231 = vsyncadd [#allocation17], 0
      %s233 = sshll.u32 %s61, 4
      %s234 = int_to_ptr.hbm [resolvable:$true] %s233
      %s235 = sshll.u32 [#allocation18], 4
      %s236 = int_to_ptr.vmem [resolvable:$true] %s235
      %238 = dma.hbm_to_vmem [thread:$0]  %s234, 16, %s236, [#allocation17]
    $region125: #{cotr_forward.1} parent=1 // pred_fallthru
      _
    // Predicated region
    $region126: #{cotr_forward.1} parent=1 // pred_check
      _
    $region127: #{cotr_forward.1} parent=1 // pred_check_branch
      %240 = sbr.rel (0) target = $region129
    $region128: #{cotr_forward.1} parent=1 // pred_region
      %242 = dma.done [#allocation3], 64
    $region129: #{cotr_forward.1} parent=1 // pred_fallthru
      _
    // Predicated region
    $region130: #{cotr_forward.1} parent=1 // pred_check
      _
    $region131: #{cotr_forward.1} parent=1 // pred_check_branch
      %244 = sbr.rel (0) target = $region133
    $region132: #{cotr_forward.1} parent=1 // pred_region
      %246 = dma.done [#allocation5], 16
    $region133: #{cotr_forward.1} parent=1 // pred_fallthru
      _
    // Predicated region
    $region134: #{cotr_forward.1} parent=1 // pred_check
      _
    $region135: #{cotr_forward.1} parent=1 // pred_check_branch
      %248 = sbr.rel (0) target = $region137
    $region136: #{cotr_forward.1} parent=1 // pred_region
      %250 = dma.done [#allocation5], 16
    $region137: #{cotr_forward.1} parent=1 // pred_fallthru
      _
    // Predicated region
    $region138: #{cotr_forward.1} parent=1 // pred_check
      _
    $region139: #{cotr_forward.1} parent=1 // pred_check_branch
      %252 = sbr.rel (0) target = $region141
    $region140: #{cotr_forward.1} parent=1 // pred_region
      %254 = dma.done [#allocation8], 16
    $region141: #{cotr_forward.1} parent=1 // pred_fallthru
      _
    // Predicated region
    $region142: #{cotr_forward.1} parent=1 // pred_check
      _
    $region143: #{cotr_forward.1} parent=1 // pred_check_branch
      %256 = sbr.rel (0) target = $region145
    $region144: #{cotr_forward.1} parent=1 // pred_region
      %258 = dma.done [#allocation8], 16
    $region145: #{cotr_forward.1} parent=1 // pred_fallthru
      _
    // Predicated region
    $region146: #{cotr_forward.1} parent=1 // pred_check
      _
    $region147: #{cotr_forward.1} parent=1 // pred_check_branch
      %260 = sbr.rel (0) target = $region149
    $region148: #{cotr_forward.1} parent=1 // pred_region
      %262 = dma.done [#allocation11], 16
    $region149: #{cotr_forward.1} parent=1 // pred_fallthru
      _
    // Predicated region
    $region150: #{cotr_forward.1} parent=1 // pred_check
      _
    $region151: #{cotr_forward.1} parent=1 // pred_check_branch
      %264 = sbr.rel (0) target = $region153
    $region152: #{cotr_forward.1} parent=1 // pred_region
      %266 = dma.done [#allocation11], 64
    $region153: #{cotr_forward.1} parent=1 // pred_fallthru
      _
    // Predicated region
    $region154: #{cotr_forward.1} parent=1 // pred_check
      _
    $region155: #{cotr_forward.1} parent=1 // pred_check_branch
      %268 = sbr.rel (0) target = $region157
    $region156: #{cotr_forward.1} parent=1 // pred_region
      %270 = dma.done [#allocation14], 512
    $region157: #{cotr_forward.1} parent=1 // pred_fallthru
      _
    // Predicated region
    $region158: #{cotr_forward.1} parent=1 // pred_check
      _
    $region159: #{cotr_forward.1} parent=1 // pred_check_branch
      %272 = sbr.rel (0) target = $region161
    $region160: #{cotr_forward.1} parent=1 // pred_region
      %274 = dma.done [#allocation14], 16
    $region161: #{cotr_forward.1} parent=1 // pred_fallthru
      _
    // Predicated region
    $region162: #{cotr_forward.1} parent=1 // pred_check
      _
    $region163: #{cotr_forward.1} parent=1 // pred_check_branch
      %276 = sbr.rel (0) target = $region165
    $region164: #{cotr_forward.1} parent=1 // pred_region
      %278 = dma.done [#allocation17], 16
    $region165: #{cotr_forward.1} parent=1 // pred_fallthru
      _
    // Predicated region
    $region166: #{cotr_forward.1} parent=1 // pred_check
      _
    $region167: #{cotr_forward.1} parent=1 // pred_check_branch
      %280 = sbr.rel (0) target = $region169
    $region168: #{cotr_forward.1} parent=1 // pred_region
      %282 = dma.done [#allocation17], 16
    $region169: #{cotr_forward.1} parent=1 // pred_fallthru
      _
    %v283 = vld [vmem:[%s1] sm:$0xff]
    %v284 = vld [vmem:[%s1 + $0x8] sm:$0xff]
    %v285 = vld [vmem:[%s1 + $0x10] sm:$0xff]
    %v286 = vld [vmem:[%s1 + $0x18] sm:$0xff]
    %v287 = vld [vmem:[%s1 + $0x20] sm:$0xff]
    %v288 = vld [vmem:[%s1 + $0x28] sm:$0xff]
    %v289 = vld [vmem:[%s1 + $0x30] sm:$0xff]
    %v290 = vld [vmem:[%s1 + $0x38] sm:$0xff]
    %v291 = vld [vmem:[%s1 + $0x40] sm:$0xff]
    %v292 = vld [vmem:[%s1 + $0x48] sm:$0xff]
    %v293 = vld [vmem:[%s1 + $0x50] sm:$0xff]
    %v294 = vld [vmem:[%s1 + $0x58] sm:$0xff]
    %v295 = vld [vmem:[%s1 + $0x60] sm:$0xff]
    %v296 = vld [vmem:[%s1 + $0x68] sm:$0xff]
    %v297 = vld [vmem:[%s1 + $0x70] sm:$0xff]
    %v298 = vld [vmem:[%s1 + $0x78] sm:$0xff]
    %v299 = vld [vmem:[#allocation2] sm:$0x7]
    %v300 = vld [vmem:[%s13] sm:$0x1]
    %v302 = vperm.slane %v300, 0
    %vm304 = vcmask 23552
    %v306 = vsel %vm304, %v283, 0
    %v309 = vsel %vm304, %v284, 0
    %v312 = vsel %vm304, %v285, 0
    %v315 = vsel %vm304, %v286, 0
    %v318 = vsel %vm304, %v287, 0
    %v321 = vsel %vm304, %v288, 0
    %v324 = vsel %vm304, %v289, 0
    %v327 = vsel %vm304, %v290, 0
    %v330 = vsel %vm304, %v291, 0
    %v333 = vsel %vm304, %v292, 0
    %v336 = vsel %vm304, %v293, 0
    %v339 = vsel %vm304, %v294, 0
    %v342 = vsel %vm304, %v295, 0
    %v345 = vsel %vm304, %v296, 0
    %v348 = vsel %vm304, %v297, 0
    %v351 = vsel %vm304, %v298, 0
    %vm353 = vcmask 1042432
    %v355 = vsel %vm353, %v299, 0
    %357 = vmatpush.msra.mxu0 0.0
    %358 = vmatpush.msra.mxu0 0.0
    %359 = vmatpush.msra.mxu0 0.0
    %360 = vmatpush.msra.mxu0 0.0
    %361 = vmatpush.msra.mxu0 0.0
    %362 = vmatpush.msra.mxu0 0.0
    %363 = vmatpush.msra.mxu0 0.0
    %364 = vmatpush.msra.mxu0 0.0
    %365 = vmatpush.msra.mxu0 0.0
    %366 = vmatpush.msra.mxu0 0.0
    %367 = vmatpush.msra.mxu0 0.0
    %368 = vmatpush.msra.mxu0 0.0
    %369 = vmatpush.msra.mxu0 0.0
    %370 = vmatpush.msra.mxu0 0.0
    %371 = vmatpush.msra.mxu0 0.0
    %372 = vmatpush.msra.mxu0 %v355
    %373 = vmatmul.f32.gmra.mxu0 %v306
    %v374 = vpop.f32.mrf.mxu0
    %v375 = vadd.f32 %v302, %v374
    %376 = vmatmul.f32.gmra.mxu0 %v309
    %v377 = vpop.f32.mrf.mxu0
    %v378 = vadd.f32 %v302, %v377
    %379 = vmatmul.f32.gmra.mxu0 %v312
    %v380 = vpop.f32.mrf.mxu0
    %v381 = vadd.f32 %v302, %v380
    %382 = vmatmul.f32.gmra.mxu0 %v315
    %v383 = vpop.f32.mrf.mxu0
    %v384 = vadd.f32 %v302, %v383
    %385 = vmatmul.f32.gmra.mxu0 %v318
    %v386 = vpop.f32.mrf.mxu0
    %v387 = vadd.f32 %v302, %v386
    %388 = vmatmul.f32.gmra.mxu0 %v321
    %v389 = vpop.f32.mrf.mxu0
    %v390 = vadd.f32 %v302, %v389
    %391 = vmatmul.f32.gmra.mxu0 %v324
    %v392 = vpop.f32.mrf.mxu0
    %v393 = vadd.f32 %v302, %v392
    %394 = vmatmul.f32.gmra.mxu0 %v327
    %v395 = vpop.f32.mrf.mxu0
    %v396 = vadd.f32 %v302, %v395
    %397 = vmatmul.f32.gmra.mxu0 %v330
    %v398 = vpop.f32.mrf.mxu0
    %v399 = vadd.f32 %v302, %v398
    %400 = vmatmul.f32.gmra.mxu0 %v333
    %v401 = vpop.f32.mrf.mxu0
    %v402 = vadd.f32 %v302, %v401
    %403 = vmatmul.f32.gmra.mxu0 %v336
    %v404 = vpop.f32.mrf.mxu0
    %v405 = vadd.f32 %v302, %v404
    %406 = vmatmul.f32.gmra.mxu0 %v339
    %v407 = vpop.f32.mrf.mxu0
    %v408 = vadd.f32 %v302, %v407
    %409 = vmatmul.f32.gmra.mxu0 %v342
    %v410 = vpop.f32.mrf.mxu0
    %v411 = vadd.f32 %v302, %v410
    %412 = vmatmul.f32.gmra.mxu0 %v345
    %v413 = vpop.f32.mrf.mxu0
    %v414 = vadd.f32 %v302, %v413
    %415 = vmatmul.f32.gmra.mxu0 %v348
    %v416 = vpop.f32.mrf.mxu0
    %v417 = vadd.f32 %v302, %v416
    %418 = vmatmul.f32.gmra.mxu0 %v351
    %v419 = vpop.f32.mrf.mxu0
    %v420 = vadd.f32 %v302, %v419
    %421 = vdwg.mxu0
    %v422 = vld [vmem:[%s3] sm:$0xff]
    %v423 = vld [vmem:[%s3 + $0x8] sm:$0xff]
    %v424 = vld [vmem:[%s3 + $0x10] sm:$0xff]
    %v425 = vld [vmem:[%s3 + $0x18] sm:$0xff]
    %v426 = vld [vmem:[%s3 + $0x20] sm:$0xff]
    %v427 = vld [vmem:[%s3 + $0x28] sm:$0xff]
    %v428 = vld [vmem:[%s3 + $0x30] sm:$0xff]
    %v429 = vld [vmem:[%s3 + $0x38] sm:$0xff]
    %v430 = vld [vmem:[%s3 + $0x40] sm:$0xff]
    %v431 = vld [vmem:[%s3 + $0x48] sm:$0xff]
    %v432 = vld [vmem:[%s3 + $0x50] sm:$0xff]
    %v433 = vld [vmem:[%s3 + $0x58] sm:$0xff]
    %v434 = vld [vmem:[%s3 + $0x60] sm:$0xff]
    %v435 = vld [vmem:[%s3 + $0x68] sm:$0xff]
    %v436 = vld [vmem:[%s3 + $0x70] sm:$0xff]
    %v437 = vld [vmem:[%s3 + $0x78] sm:$0xff]
    %v438 = vadd.f32 %v375, %v422
    %v439 = vadd.f32 %v378, %v423
    %v440 = vadd.f32 %v381, %v424
    %v441 = vadd.f32 %v384, %v425
    %v442 = vadd.f32 %v387, %v426
    %v443 = vadd.f32 %v390, %v427
    %v444 = vadd.f32 %v393, %v428
    %v445 = vadd.f32 %v396, %v429
    %v446 = vadd.f32 %v399, %v430
    %v447 = vadd.f32 %v402, %v431
    %v448 = vadd.f32 %v405, %v432
    %v449 = vadd.f32 %v408, %v433
    %v450 = vadd.f32 %v411, %v434
    %v451 = vadd.f32 %v414, %v435
    %v452 = vadd.f32 %v417, %v436
    %v453 = vadd.f32 %v420, %v437
    %v454 = vld [vmem:[%s15] sm:$0xff]
    %v455 = vld [vmem:[%s15 + $0x8] sm:$0xff]
    %v456 = vld [vmem:[%s15 + $0x10] sm:$0xff]
    %v457 = vld [vmem:[%s15 + $0x18] sm:$0xff]
    %v458 = vld [vmem:[#allocation4] sm:$0x1]
    %v460 = vperm.slane %v458, 0
    %vm462 = vcmask 261120
    %v464 = vsel %vm462, %v438, 0
    %v467 = vsel %vm462, %v439, 0
    %v470 = vsel %vm462, %v440, 0
    %v473 = vsel %vm462, %v441, 0
    %v476 = vsel %vm462, %v442, 0
    %v479 = vsel %vm462, %v443, 0
    %v482 = vsel %vm462, %v444, 0
    %v485 = vsel %vm462, %v445, 0
    %v488 = vsel %vm462, %v446, 0
    %v491 = vsel %vm462, %v447, 0
    %v494 = vsel %vm462, %v448, 0
    %v497 = vsel %vm462, %v449, 0
    %v500 = vsel %vm462, %v450, 0
    %v503 = vsel %vm462, %v451, 0
    %v506 = vsel %vm462, %v452, 0
    %v509 = vsel %vm462, %v453, 0
    %511 = vmatpush.msra.mxu0 0.0
    %512 = vmatpush.msra.mxu0 0.0
    %513 = vmatpush.msra.mxu0 0.0
    %514 = vmatpush.msra.mxu0 0.0
    %515 = vmatpush.msra.mxu0 0.0
    %516 = vmatpush.msra.mxu0 0.0
    %517 = vmatpush.msra.mxu0 0.0
    %518 = vmatpush.msra.mxu0 0.0
    %519 = vmatpush.msra.mxu0 0.0
    %520 = vmatpush.msra.mxu0 0.0
    %521 = vmatpush.msra.mxu0 0.0
    %522 = vmatpush.msra.mxu0 0.0
    %523 = vmatpush.msra.mxu0 %v457
    %524 = vmatpush.msra.mxu0 %v456
    %525 = vmatpush.msra.mxu0 %v455
    %526 = vmatpush.msra.mxu0 %v454
    %527 = vmatmul.f32.gmra.mxu0 %v464
    %v528 = vpop.f32.mrf.mxu0
    %v529 = vadd.f32 %v460, %v528
    %530 = vmatmul.f32.gmra.mxu0 %v467
    %v531 = vpop.f32.mrf.mxu0
    %v532 = vadd.f32 %v460, %v531
    %533 = vmatmul.f32.gmra.mxu0 %v470
    %v534 = vpop.f32.mrf.mxu0
    %v535 = vadd.f32 %v460, %v534
    %536 = vmatmul.f32.gmra.mxu0 %v473
    %v537 = vpop.f32.mrf.mxu0
    %v538 = vadd.f32 %v460, %v537
    %539 = vmatmul.f32.gmra.mxu0 %v476
    %v540 = vpop.f32.mrf.mxu0
    %v541 = vadd.f32 %v460, %v540
    %542 = vmatmul.f32.gmra.mxu0 %v479
    %v543 = vpop.f32.mrf.mxu0
    %v544 = vadd.f32 %v460, %v543
    %545 = vmatmul.f32.gmra.mxu0 %v482
    %v546 = vpop.f32.mrf.mxu0
    %v547 = vadd.f32 %v460, %v546
    %548 = vmatmul.f32.gmra.mxu0 %v485
    %v549 = vpop.f32.mrf.mxu0
    %v550 = vadd.f32 %v460, %v549
    %551 = vmatmul.f32.gmra.mxu0 %v488
    %v552 = vpop.f32.mrf.mxu0
    %v553 = vadd.f32 %v460, %v552
    %554 = vmatmul.f32.gmra.mxu0 %v491
    %v555 = vpop.f32.mrf.mxu0
    %v556 = vadd.f32 %v460, %v555
    %557 = vmatmul.f32.gmra.mxu0 %v494
    %v558 = vpop.f32.mrf.mxu0
    %v559 = vadd.f32 %v460, %v558
    %560 = vmatmul.f32.gmra.mxu0 %v497
    %v561 = vpop.f32.mrf.mxu0
    %v562 = vadd.f32 %v460, %v561
    %563 = vmatmul.f32.gmra.mxu0 %v500
    %v564 = vpop.f32.mrf.mxu0
    %v565 = vadd.f32 %v460, %v564
    %566 = vmatmul.f32.gmra.mxu0 %v503
    %v567 = vpop.f32.mrf.mxu0
    %v568 = vadd.f32 %v460, %v567
    %569 = vmatmul.f32.gmra.mxu0 %v506
    %v570 = vpop.f32.mrf.mxu0
    %v571 = vadd.f32 %v460, %v570
    %572 = vmatmul.f32.gmra.mxu0 %v509
    %v573 = vpop.f32.mrf.mxu0
    %v574 = vadd.f32 %v460, %v573
    %575 = vdwg.mxu0
    %v576 = vld [vmem:[%s19] sm:$0xff]
    %v577 = vld [vmem:[%s19 + $0x8] sm:$0xff]
    %v578 = vld [vmem:[%s19 + $0x10] sm:$0xff]
    %v579 = vld [vmem:[%s19 + $0x18] sm:$0xff]
    %v580 = vld [vmem:[#allocation6] sm:$0x1]
    %v582 = vperm.slane %v580, 0
    %v585 = vsel %vm462, %v375, 0
    %v588 = vsel %vm462, %v378, 0
    %v591 = vsel %vm462, %v381, 0
    %v594 = vsel %vm462, %v384, 0
    %v597 = vsel %vm462, %v387, 0
    %v600 = vsel %vm462, %v390, 0
    %v603 = vsel %vm462, %v393, 0
    %v606 = vsel %vm462, %v396, 0
    %v609 = vsel %vm462, %v399, 0
    %v612 = vsel %vm462, %v402, 0
    %v615 = vsel %vm462, %v405, 0
    %v618 = vsel %vm462, %v408, 0
    %v621 = vsel %vm462, %v411, 0
    %v624 = vsel %vm462, %v414, 0
    %v627 = vsel %vm462, %v417, 0
    %v630 = vsel %vm462, %v420, 0
    %632 = vmatpush.msra.mxu0 0.0
    %633 = vmatpush.msra.mxu0 0.0
    %634 = vmatpush.msra.mxu0 0.0
    %635 = vmatpush.msra.mxu0 0.0
    %636 = vmatpush.msra.mxu0 0.0
    %637 = vmatpush.msra.mxu0 0.0
    %638 = vmatpush.msra.mxu0 0.0
    %639 = vmatpush.msra.mxu0 0.0
    %640 = vmatpush.msra.mxu0 0.0
    %641 = vmatpush.msra.mxu0 0.0
    %642 = vmatpush.msra.mxu0 0.0
    %643 = vmatpush.msra.mxu0 0.0
    %644 = vmatpush.msra.mxu0 %v579
    %645 = vmatpush.msra.mxu0 %v578
    %646 = vmatpush.msra.mxu0 %v577
    %647 = vmatpush.msra.mxu0 %v576
    %648 = vmatmul.f32.gmra.mxu0 %v585
    %v649 = vpop.f32.mrf.mxu0
    %v650 = vadd.f32 %v582, %v649
    %651 = vmatmul.f32.gmra.mxu0 %v588
    %v652 = vpop.f32.mrf.mxu0
    %v653 = vadd.f32 %v582, %v652
    %654 = vmatmul.f32.gmra.mxu0 %v591
    %v655 = vpop.f32.mrf.mxu0
    %v656 = vadd.f32 %v582, %v655
    %657 = vmatmul.f32.gmra.mxu0 %v594
    %v658 = vpop.f32.mrf.mxu0
    %v659 = vadd.f32 %v582, %v658
    %660 = vmatmul.f32.gmra.mxu0 %v597
    %v661 = vpop.f32.mrf.mxu0
    %v662 = vadd.f32 %v582, %v661
    %663 = vmatmul.f32.gmra.mxu0 %v600
    %v664 = vpop.f32.mrf.mxu0
    %v665 = vadd.f32 %v582, %v664
    %666 = vmatmul.f32.gmra.mxu0 %v603
    %v667 = vpop.f32.mrf.mxu0
    %v668 = vadd.f32 %v582, %v667
    %669 = vmatmul.f32.gmra.mxu0 %v606
    %v670 = vpop.f32.mrf.mxu0
    %v671 = vadd.f32 %v582, %v670
    %672 = vmatmul.f32.gmra.mxu0 %v609
    %v673 = vpop.f32.mrf.mxu0
    %v674 = vadd.f32 %v582, %v673
    %675 = vmatmul.f32.gmra.mxu0 %v612
    %v676 = vpop.f32.mrf.mxu0
    %v677 = vadd.f32 %v582, %v676
    %678 = vmatmul.f32.gmra.mxu0 %v615
    %v679 = vpop.f32.mrf.mxu0
    %v680 = vadd.f32 %v582, %v679
    %681 = vmatmul.f32.gmra.mxu0 %v618
    %v682 = vpop.f32.mrf.mxu0
    %v683 = vadd.f32 %v582, %v682
    %684 = vmatmul.f32.gmra.mxu0 %v621
    %v685 = vpop.f32.mrf.mxu0
    %v686 = vadd.f32 %v582, %v685
    %687 = vmatmul.f32.gmra.mxu0 %v624
    %v688 = vpop.f32.mrf.mxu0
    %v689 = vadd.f32 %v582, %v688
    %690 = vmatmul.f32.gmra.mxu0 %v627
    %v691 = vpop.f32.mrf.mxu0
    %v692 = vadd.f32 %v582, %v691
    %693 = vmatmul.f32.gmra.mxu0 %v630
    %v694 = vpop.f32.mrf.mxu0
    %v695 = vadd.f32 %v582, %v694
    %696 = vdwg.mxu0
    %705 = vrot.lane.b32.xlu0 %v529, 96
    %v706 = vpop.permute.xlu0 %705
    %707 = vrot.lane.b32.xlu0 %v532, 96
    %v708 = vpop.permute.xlu0 %707
    %709 = vrot.lane.b32.xlu0 %v535, 96
    %v710 = vpop.permute.xlu0 %709
    %711 = vrot.lane.b32.xlu0 %v538, 96
    %v712 = vpop.permute.xlu0 %711
    %713 = vrot.lane.b32.xlu0 %v541, 96
    %v714 = vpop.permute.xlu0 %713
    %715 = vrot.lane.b32.xlu0 %v544, 96
    %v716 = vpop.permute.xlu0 %715
    %717 = vrot.lane.b32.xlu0 %v547, 96
    %v718 = vpop.permute.xlu0 %717
    %719 = vrot.lane.b32.xlu0 %v550, 96
    %v720 = vpop.permute.xlu0 %719
    %vm721 = vcmask 64512
    %v722 = vsel %vm721, %v529, 0
    %v724 = vsel %vm721, %v532, 0
    %v726 = vsel %vm721, %v535, 0
    %v728 = vsel %vm721, %v538, 0
    %v730 = vsel %vm721, %v541, 0
    %v732 = vsel %vm721, %v544, 0
    %v734 = vsel %vm721, %v547, 0
    %v736 = vsel %vm721, %v550, 0
    %v738 = vsel %vm721, %v706, 0
    %v740 = vsel %vm721, %v708, 0
    %v742 = vsel %vm721, %v710, 0
    %v744 = vsel %vm721, %v712, 0
    %v746 = vsel %vm721, %v714, 0
    %v748 = vsel %vm721, %v716, 0
    %v750 = vsel %vm721, %v718, 0
    %v752 = vsel %vm721, %v720, 0
    %754 = vmatpush.xpose.msra.mxu0 0.0
    %755 = vmatpush.xpose.msra.mxu0 0.0
    %756 = vmatpush.xpose.msra.mxu0 0.0
    %757 = vmatpush.xpose.msra.mxu0 0.0
    %758 = vmatpush.xpose.msra.mxu0 0.0
    %759 = vmatpush.xpose.msra.mxu0 0.0
    %760 = vmatpush.xpose.msra.mxu0 0.0
    %761 = vmatpush.xpose.msra.mxu0 0.0
    %762 = vmatpush.xpose.msra.mxu0 %v752
    %763 = vmatpush.xpose.msra.mxu0 %v750
    %764 = vmatpush.xpose.msra.mxu0 %v748
    %765 = vmatpush.xpose.msra.mxu0 %v746
    %766 = vmatpush.xpose.msra.mxu0 %v744
    %767 = vmatpush.xpose.msra.mxu0 %v742
    %768 = vmatpush.xpose.msra.mxu0 %v740
    %769 = vmatpush.xpose.msra.mxu0 %v738
    %770 = vmatmul.f32.gmra.mxu0 %v722
    %v771 = vpop.f32.mrf.mxu0
    %v772 = vadd.f32 0.0, %v771
    %773 = vmatmul.f32.gmra.mxu0 %v724
    %v774 = vpop.f32.mrf.mxu0
    %v775 = vadd.f32 0.0, %v774
    %776 = vmatmul.f32.gmra.mxu0 %v726
    %v777 = vpop.f32.mrf.mxu0
    %v778 = vadd.f32 0.0, %v777
    %779 = vmatmul.f32.gmra.mxu0 %v728
    %v780 = vpop.f32.mrf.mxu0
    %v781 = vadd.f32 0.0, %v780
    %782 = vmatmul.f32.gmra.mxu0 %v730
    %v783 = vpop.f32.mrf.mxu0
    %v784 = vadd.f32 0.0, %v783
    %785 = vmatmul.f32.gmra.mxu0 %v732
    %v786 = vpop.f32.mrf.mxu0
    %v787 = vadd.f32 0.0, %v786
    %788 = vmatmul.f32.gmra.mxu0 %v734
    %v789 = vpop.f32.mrf.mxu0
    %v790 = vadd.f32 0.0, %v789
    %791 = vmatmul.f32.gmra.mxu0 %v736
    %v792 = vpop.f32.mrf.mxu0
    %v793 = vadd.f32 0.0, %v792
    %794 = vdwg.mxu0
    %vm795 = vcmask 523264
    %v796 = vsel %vm795, %v772, -inf
    %797 = vmax.xlane.f32.xlu0 %v796
    %v798 = vpop.xlane.xlu0 %797
    %v799 = vsel %vm795, %v775, -inf
    %800 = vmax.xlane.f32.xlu0 %v799
    %v801 = vpop.xlane.xlu0 %800
    %v802 = vsel %vm795, %v778, -inf
    %803 = vmax.xlane.f32.xlu0 %v802
    %v804 = vpop.xlane.xlu0 %803
    %v805 = vsel %vm795, %v781, -inf
    %806 = vmax.xlane.f32.xlu0 %v805
    %v807 = vpop.xlane.xlu0 %806
    %v808 = vsel %vm795, %v784, -inf
    %809 = vmax.xlane.f32.xlu0 %v808
    %v810 = vpop.xlane.xlu0 %809
    %v811 = vsel %vm795, %v787, -inf
    %812 = vmax.xlane.f32.xlu0 %v811
    %v813 = vpop.xlane.xlu0 %812
    %v814 = vsel %vm795, %v790, -inf
    %815 = vmax.xlane.f32.xlu0 %v814
    %v816 = vpop.xlane.xlu0 %815
    %v817 = vsel %vm795, %v793, -inf
    %818 = vmax.xlane.f32.xlu0 %v817
    %v819 = vpop.xlane.xlu0 %818
    %v820 = vsub.f32 %v772, %v798
    %v821 = vsub.f32 %v775, %v801
    %v822 = vsub.f32 %v778, %v804
    %v823 = vsub.f32 %v781, %v807
    %v824 = vsub.f32 %v784, %v810
    %v825 = vsub.f32 %v787, %v813
    %v826 = vsub.f32 %v790, %v816
    %v827 = vsub.f32 %v793, %v819
    %v828 = vmul.f32 %v820, 1.442695
    %v829 = vpow.pop %v828
    %v830 = vmul.f32 %v821, 1.442695
    %v831 = vpow.pop %v830
    %v832 = vmul.f32 %v822, 1.442695
    %v833 = vpow.pop %v832
    %v834 = vmul.f32 %v823, 1.442695
    %v835 = vpow.pop %v834
    %v836 = vmul.f32 %v824, 1.442695
    %v837 = vpow.pop %v836
    %v838 = vmul.f32 %v825, 1.442695
    %v839 = vpow.pop %v838
    %v840 = vmul.f32 %v826, 1.442695
    %v841 = vpow.pop %v840
    %v842 = vmul.f32 %v827, 1.442695
    %v843 = vpow.pop %v842
    %v844 = vsel %vm795, %v829, 0.0
    %845 = vadd.xlane.f32.xlu0 %v844
    %v846 = vpop.xlane.xlu0 %845
    %v847 = vsel %vm795, %v831, 0.0
    %848 = vadd.xlane.f32.xlu0 %v847
    %v849 = vpop.xlane.xlu0 %848
    %v850 = vsel %vm795, %v833, 0.0
    %851 = vadd.xlane.f32.xlu0 %v850
    %v852 = vpop.xlane.xlu0 %851
    %v853 = vsel %vm795, %v835, 0.0
    %854 = vadd.xlane.f32.xlu0 %v853
    %v855 = vpop.xlane.xlu0 %854
    %v856 = vsel %vm795, %v837, 0.0
    %857 = vadd.xlane.f32.xlu0 %v856
    %v858 = vpop.xlane.xlu0 %857
    %v859 = vsel %vm795, %v839, 0.0
    %860 = vadd.xlane.f32.xlu0 %v859
    %v861 = vpop.xlane.xlu0 %860
    %v862 = vsel %vm795, %v841, 0.0
    %863 = vadd.xlane.f32.xlu0 %v862
    %v864 = vpop.xlane.xlu0 %863
    %v865 = vsel %vm795, %v843, 0.0
    %866 = vadd.xlane.f32.xlu0 %v865
    %v867 = vpop.xlane.xlu0 %866
    %v868 = vrcp.pop %v846
    %v869 = vrcp.pop %v849
    %v870 = vrcp.pop %v852
    %v871 = vrcp.pop %v855
    %v872 = vrcp.pop %v858
    %v873 = vrcp.pop %v861
    %v874 = vrcp.pop %v864
    %v875 = vrcp.pop %v867
    %v876 = vmul.f32 %v829, %v868
    %v877 = vmul.f32 %v831, %v869
    %v878 = vmul.f32 %v833, %v870
    %v879 = vmul.f32 %v835, %v871
    %v880 = vmul.f32 %v837, %v872
    %v881 = vmul.f32 %v839, %v873
    %v882 = vmul.f32 %v841, %v874
    %v883 = vmul.f32 %v843, %v875
    %v885 = vsel %vm795, %v876, 0
    %v888 = vsel %vm795, %v877, 0
    %v891 = vsel %vm795, %v878, 0
    %v894 = vsel %vm795, %v879, 0
    %v897 = vsel %vm795, %v880, 0
    %v900 = vsel %vm795, %v881, 0
    %v903 = vsel %vm795, %v882, 0
    %v906 = vsel %vm795, %v883, 0
    %908 = vmatpush.msra.mxu0 0.0
    %909 = vmatpush.msra.mxu0 0.0
    %910 = vmatpush.msra.mxu0 0.0
    %911 = vmatpush.msra.mxu0 0.0
    %912 = vmatpush.msra.mxu0 0.0
    %913 = vmatpush.msra.mxu0 0.0
    %914 = vmatpush.msra.mxu0 0.0
    %915 = vmatpush.msra.mxu0 0.0
    %916 = vmatpush.msra.mxu0 %v671
    %917 = vmatpush.msra.mxu0 %v668
    %918 = vmatpush.msra.mxu0 %v665
    %919 = vmatpush.msra.mxu0 %v662
    %920 = vmatpush.msra.mxu0 %v659
    %921 = vmatpush.msra.mxu0 %v656
    %922 = vmatpush.msra.mxu0 %v653
    %923 = vmatpush.msra.mxu0 %v650
    %924 = vmatmul.f32.gmra.mxu0 %v885
    %v925 = vpop.f32.mrf.mxu0
    %v926 = vadd.f32 0.0, %v925
    %927 = vmatmul.f32.gmra.mxu0 %v888
    %v928 = vpop.f32.mrf.mxu0
    %v929 = vadd.f32 0.0, %v928
    %930 = vmatmul.f32.gmra.mxu0 %v891
    %v931 = vpop.f32.mrf.mxu0
    %v932 = vadd.f32 0.0, %v931
    %933 = vmatmul.f32.gmra.mxu0 %v894
    %v934 = vpop.f32.mrf.mxu0
    %v935 = vadd.f32 0.0, %v934
    %936 = vmatmul.f32.gmra.mxu0 %v897
    %v937 = vpop.f32.mrf.mxu0
    %v938 = vadd.f32 0.0, %v937
    %939 = vmatmul.f32.gmra.mxu0 %v900
    %v940 = vpop.f32.mrf.mxu0
    %v941 = vadd.f32 0.0, %v940
    %942 = vmatmul.f32.gmra.mxu0 %v903
    %v943 = vpop.f32.mrf.mxu0
    %v944 = vadd.f32 0.0, %v943
    %945 = vmatmul.f32.gmra.mxu0 %v906
    %v946 = vpop.f32.mrf.mxu0
    %v947 = vadd.f32 0.0, %v946
    %948 = vdwg.mxu0
    %v949 = vld [vmem:[%s23] sm:$0xff]
    %950 = vrot.lane.b32.xlu0 %v529, 120
    %v951 = vpop.permute.xlu0 %950
    %952 = vrot.lane.b32.xlu0 %v532, 120
    %v953 = vpop.permute.xlu0 %952
    %954 = vrot.lane.b32.xlu0 %v535, 120
    %v955 = vpop.permute.xlu0 %954
    %956 = vrot.lane.b32.xlu0 %v538, 120
    %v957 = vpop.permute.xlu0 %956
    %958 = vrot.lane.b32.xlu0 %v541, 120
    %v959 = vpop.permute.xlu0 %958
    %960 = vrot.lane.b32.xlu0 %v544, 120
    %v961 = vpop.permute.xlu0 %960
    %962 = vrot.lane.b32.xlu0 %v547, 120
    %v963 = vpop.permute.xlu0 %962
    %964 = vrot.lane.b32.xlu0 %v550, 120
    %v965 = vpop.permute.xlu0 %964
    %966 = vrot.lane.b32.xlu0 %v529, 88
    %v967 = vpop.permute.xlu0 %966
    %968 = vrot.lane.b32.xlu0 %v532, 88
    %v969 = vpop.permute.xlu0 %968
    %970 = vrot.lane.b32.xlu0 %v535, 88
    %v971 = vpop.permute.xlu0 %970
    %972 = vrot.lane.b32.xlu0 %v538, 88
    %v973 = vpop.permute.xlu0 %972
    %974 = vrot.lane.b32.xlu0 %v541, 88
    %v975 = vpop.permute.xlu0 %974
    %976 = vrot.lane.b32.xlu0 %v544, 88
    %v977 = vpop.permute.xlu0 %976
    %978 = vrot.lane.b32.xlu0 %v547, 88
    %v979 = vpop.permute.xlu0 %978
    %980 = vrot.lane.b32.xlu0 %v550, 88
    %v981 = vpop.permute.xlu0 %980
    %v982 = vsel %vm721, %v951, 0
    %v984 = vsel %vm721, %v953, 0
    %v986 = vsel %vm721, %v955, 0
    %v988 = vsel %vm721, %v957, 0
    %v990 = vsel %vm721, %v959, 0
    %v992 = vsel %vm721, %v961, 0
    %v994 = vsel %vm721, %v963, 0
    %v996 = vsel %vm721, %v965, 0
    %v998 = vsel %vm721, %v967, 0
    %v1000 = vsel %vm721, %v969, 0
    %v1002 = vsel %vm721, %v971, 0
    %v1004 = vsel %vm721, %v973, 0
    %v1006 = vsel %vm721, %v975, 0
    %v1008 = vsel %vm721, %v977, 0
    %v1010 = vsel %vm721, %v979, 0
    %v1012 = vsel %vm721, %v981, 0
    %1014 = vmatpush.xpose.msra.mxu0 0.0
    %1015 = vmatpush.xpose.msra.mxu0 0.0
    %1016 = vmatpush.xpose.msra.mxu0 0.0
    %1017 = vmatpush.xpose.msra.mxu0 0.0
    %1018 = vmatpush.xpose.msra.mxu0 0.0
    %1019 = vmatpush.xpose.msra.mxu0 0.0
    %1020 = vmatpush.xpose.msra.mxu0 0.0
    %1021 = vmatpush.xpose.msra.mxu0 0.0
    %1022 = vmatpush.xpose.msra.mxu0 %v1012
    %1023 = vmatpush.xpose.msra.mxu0 %v1010
    %1024 = vmatpush.xpose.msra.mxu0 %v1008
    %1025 = vmatpush.xpose.msra.mxu0 %v1006
    %1026 = vmatpush.xpose.msra.mxu0 %v1004
    %1027 = vmatpush.xpose.msra.mxu0 %v1002
    %1028 = vmatpush.xpose.msra.mxu0 %v1000
    %1029 = vmatpush.xpose.msra.mxu0 %v998
    %1030 = vmatmul.f32.gmra.mxu0 %v982
    %v1031 = vpop.f32.mrf.mxu0
    %v1032 = vadd.f32 0.0, %v1031
    %1033 = vmatmul.f32.gmra.mxu0 %v984
    %v1034 = vpop.f32.mrf.mxu0
    %v1035 = vadd.f32 0.0, %v1034
    %1036 = vmatmul.f32.gmra.mxu0 %v986
    %v1037 = vpop.f32.mrf.mxu0
    %v1038 = vadd.f32 0.0, %v1037
    %1039 = vmatmul.f32.gmra.mxu0 %v988
    %v1040 = vpop.f32.mrf.mxu0
    %v1041 = vadd.f32 0.0, %v1040
    %1042 = vmatmul.f32.gmra.mxu0 %v990
    %v1043 = vpop.f32.mrf.mxu0
    %v1044 = vadd.f32 0.0, %v1043
    %1045 = vmatmul.f32.gmra.mxu0 %v992
    %v1046 = vpop.f32.mrf.mxu0
    %v1047 = vadd.f32 0.0, %v1046
    %1048 = vmatmul.f32.gmra.mxu0 %v994
    %v1049 = vpop.f32.mrf.mxu0
    %v1050 = vadd.f32 0.0, %v1049
    %1051 = vmatmul.f32.gmra.mxu0 %v996
    %v1052 = vpop.f32.mrf.mxu0
    %v1053 = vadd.f32 0.0, %v1052
    %1054 = vdwg.mxu0
    %v1055 = vsel %vm795, %v1032, -inf
    %1056 = vmax.xlane.f32.xlu0 %v1055
    %v1057 = vpop.xlane.xlu0 %1056
    %v1058 = vsel %vm795, %v1035, -inf
    %1059 = vmax.xlane.f32.xlu0 %v1058
    %v1060 = vpop.xlane.xlu0 %1059
    %v1061 = vsel %vm795, %v1038, -inf
    %1062 = vmax.xlane.f32.xlu0 %v1061
    %v1063 = vpop.xlane.xlu0 %1062
    %v1064 = vsel %vm795, %v1041, -inf
    %1065 = vmax.xlane.f32.xlu0 %v1064
    %v1066 = vpop.xlane.xlu0 %1065
    %v1067 = vsel %vm795, %v1044, -inf
    %1068 = vmax.xlane.f32.xlu0 %v1067
    %v1069 = vpop.xlane.xlu0 %1068
    %v1070 = vsel %vm795, %v1047, -inf
    %1071 = vmax.xlane.f32.xlu0 %v1070
    %v1072 = vpop.xlane.xlu0 %1071
    %v1073 = vsel %vm795, %v1050, -inf
    %1074 = vmax.xlane.f32.xlu0 %v1073
    %v1075 = vpop.xlane.xlu0 %1074
    %v1076 = vsel %vm795, %v1053, -inf
    %1077 = vmax.xlane.f32.xlu0 %v1076
    %v1078 = vpop.xlane.xlu0 %1077
    %v1079 = vsub.f32 %v1032, %v1057
    %v1080 = vsub.f32 %v1035, %v1060
    %v1081 = vsub.f32 %v1038, %v1063
    %v1082 = vsub.f32 %v1041, %v1066
    %v1083 = vsub.f32 %v1044, %v1069
    %v1084 = vsub.f32 %v1047, %v1072
    %v1085 = vsub.f32 %v1050, %v1075
    %v1086 = vsub.f32 %v1053, %v1078
    %v1087 = vmul.f32 %v1079, 1.442695
    %v1088 = vpow.pop %v1087
    %v1089 = vmul.f32 %v1080, 1.442695
    %v1090 = vpow.pop %v1089
    %v1091 = vmul.f32 %v1081, 1.442695
    %v1092 = vpow.pop %v1091
    %v1093 = vmul.f32 %v1082, 1.442695
    %v1094 = vpow.pop %v1093
    %v1095 = vmul.f32 %v1083, 1.442695
    %v1096 = vpow.pop %v1095
    %v1097 = vmul.f32 %v1084, 1.442695
    %v1098 = vpow.pop %v1097
    %v1099 = vmul.f32 %v1085, 1.442695
    %v1100 = vpow.pop %v1099
    %v1101 = vmul.f32 %v1086, 1.442695
    %v1102 = vpow.pop %v1101
    %v1103 = vsel %vm795, %v1088, 0.0
    %1104 = vadd.xlane.f32.xlu0 %v1103
    %v1105 = vpop.xlane.xlu0 %1104
    %v1106 = vsel %vm795, %v1090, 0.0
    %1107 = vadd.xlane.f32.xlu0 %v1106
    %v1108 = vpop.xlane.xlu0 %1107
    %v1109 = vsel %vm795, %v1092, 0.0
    %1110 = vadd.xlane.f32.xlu0 %v1109
    %v1111 = vpop.xlane.xlu0 %1110
    %v1112 = vsel %vm795, %v1094, 0.0
    %1113 = vadd.xlane.f32.xlu0 %v1112
    %v1114 = vpop.xlane.xlu0 %1113
    %v1115 = vsel %vm795, %v1096, 0.0
    %1116 = vadd.xlane.f32.xlu0 %v1115
    %v1117 = vpop.xlane.xlu0 %1116
    %v1118 = vsel %vm795, %v1098, 0.0
    %1119 = vadd.xlane.f32.xlu0 %v1118
    %v1120 = vpop.xlane.xlu0 %1119
    %v1121 = vsel %vm795, %v1100, 0.0
    %1122 = vadd.xlane.f32.xlu0 %v1121
    %v1123 = vpop.xlane.xlu0 %1122
    %v1124 = vsel %vm795, %v1102, 0.0
    %1125 = vadd.xlane.f32.xlu0 %v1124
    %v1126 = vpop.xlane.xlu0 %1125
    %v1127 = vrcp.pop %v1105
    %v1128 = vrcp.pop %v1108
    %v1129 = vrcp.pop %v1111
    %v1130 = vrcp.pop %v1114
    %v1131 = vrcp.pop %v1117
    %v1132 = vrcp.pop %v1120
    %v1133 = vrcp.pop %v1123
    %v1134 = vrcp.pop %v1126
    %v1135 = vmul.f32 %v1088, %v1127
    %v1136 = vmul.f32 %v1090, %v1128
    %v1137 = vmul.f32 %v1092, %v1129
    %v1138 = vmul.f32 %v1094, %v1130
    %v1139 = vmul.f32 %v1096, %v1131
    %v1140 = vmul.f32 %v1098, %v1132
    %v1141 = vmul.f32 %v1100, %v1133
    %v1142 = vmul.f32 %v1102, %v1134
    %1151 = vrot.lane.b32.xlu0 %v650, 120
    %v1152 = vpop.permute.xlu0 %1151
    %1153 = vrot.lane.b32.xlu0 %v653, 120
    %v1154 = vpop.permute.xlu0 %1153
    %1155 = vrot.lane.b32.xlu0 %v656, 120
    %v1156 = vpop.permute.xlu0 %1155
    %1157 = vrot.lane.b32.xlu0 %v659, 120
    %v1158 = vpop.permute.xlu0 %1157
    %1159 = vrot.lane.b32.xlu0 %v662, 120
    %v1160 = vpop.permute.xlu0 %1159
    %1161 = vrot.lane.b32.xlu0 %v665, 120
    %v1162 = vpop.permute.xlu0 %1161
    %1163 = vrot.lane.b32.xlu0 %v668, 120
    %v1164 = vpop.permute.xlu0 %1163
    %1165 = vrot.lane.b32.xlu0 %v671, 120
    %v1166 = vpop.permute.xlu0 %1165
    %v1176 = vsel %vm795, %v1135, 0
    %v1179 = vsel %vm795, %v1136, 0
    %v1182 = vsel %vm795, %v1137, 0
    %v1185 = vsel %vm795, %v1138, 0
    %v1188 = vsel %vm795, %v1139, 0
    %v1191 = vsel %vm795, %v1140, 0
    %v1194 = vsel %vm795, %v1141, 0
    %v1197 = vsel %vm795, %v1142, 0
    %1199 = vmatpush.msra.mxu0 0.0
    %1200 = vmatpush.msra.mxu0 0.0
    %1201 = vmatpush.msra.mxu0 0.0
    %1202 = vmatpush.msra.mxu0 0.0
    %1203 = vmatpush.msra.mxu0 0.0
    %1204 = vmatpush.msra.mxu0 0.0
    %1205 = vmatpush.msra.mxu0 0.0
    %1206 = vmatpush.msra.mxu0 0.0
    %1207 = vmatpush.msra.mxu0 %v1166
    %1208 = vmatpush.msra.mxu0 %v1164
    %1209 = vmatpush.msra.mxu0 %v1162
    %1210 = vmatpush.msra.mxu0 %v1160
    %1211 = vmatpush.msra.mxu0 %v1158
    %1212 = vmatpush.msra.mxu0 %v1156
    %1213 = vmatpush.msra.mxu0 %v1154
    %1214 = vmatpush.msra.mxu0 %v1152
    %1215 = vmatmul.f32.gmra.mxu0 %v1176
    %v1216 = vpop.f32.mrf.mxu0
    %v1217 = vadd.f32 0.0, %v1216
    %1218 = vmatmul.f32.gmra.mxu0 %v1179
    %v1219 = vpop.f32.mrf.mxu0
    %v1220 = vadd.f32 0.0, %v1219
    %1221 = vmatmul.f32.gmra.mxu0 %v1182
    %v1222 = vpop.f32.mrf.mxu0
    %v1223 = vadd.f32 0.0, %v1222
    %1224 = vmatmul.f32.gmra.mxu0 %v1185
    %v1225 = vpop.f32.mrf.mxu0
    %v1226 = vadd.f32 0.0, %v1225
    %1227 = vmatmul.f32.gmra.mxu0 %v1188
    %v1228 = vpop.f32.mrf.mxu0
    %v1229 = vadd.f32 0.0, %v1228
    %1230 = vmatmul.f32.gmra.mxu0 %v1191
    %v1231 = vpop.f32.mrf.mxu0
    %v1232 = vadd.f32 0.0, %v1231
    %1233 = vmatmul.f32.gmra.mxu0 %v1194
    %v1234 = vpop.f32.mrf.mxu0
    %v1235 = vadd.f32 0.0, %v1234
    %1236 = vmatmul.f32.gmra.mxu0 %v1197
    %v1237 = vpop.f32.mrf.mxu0
    %v1238 = vadd.f32 0.0, %v1237
    %1239 = vdwg.mxu0
    %s1240 = scalar_lea.vmem %s23, 8
    %v1241 = vld [vmem:[%s1240] sm:$0xff]
    %v1243 = vsel %vm721, %v1217, 0
    %v1246 = vsel %vm721, %v1220, 0
    %v1249 = vsel %vm721, %v1223, 0
    %v1252 = vsel %vm721, %v1226, 0
    %v1255 = vsel %vm721, %v1229, 0
    %v1258 = vsel %vm721, %v1232, 0
    %v1261 = vsel %vm721, %v1235, 0
    %v1264 = vsel %vm721, %v1238, 0
    %1266 = vmatpush.msra.mxu0 0.0
    %1267 = vmatpush.msra.mxu0 0.0
    %1268 = vmatpush.msra.mxu0 0.0
    %1269 = vmatpush.msra.mxu0 0.0
    %1270 = vmatpush.msra.mxu0 0.0
    %1271 = vmatpush.msra.mxu0 0.0
    %1272 = vmatpush.msra.mxu0 0.0
    %1273 = vmatpush.msra.mxu0 0.0
    %1274 = vmatpush.msra.mxu0 0.0
    %1275 = vmatpush.msra.mxu0 0.0
    %1276 = vmatpush.msra.mxu0 0.0
    %1277 = vmatpush.msra.mxu0 0.0
    %1278 = vmatpush.msra.mxu0 0.0
    %1279 = vmatpush.msra.mxu0 0.0
    %1280 = vmatpush.msra.mxu0 0.0
    %1281 = vmatpush.msra.mxu0 %v1241
    %1282 = vmatmul.f32.gmra.mxu0 %v1243
    %v1283 = vpop.f32.mrf.mxu0
    %v1284 = vadd.f32 0.0, %v1283
    %1285 = vmatmul.f32.gmra.mxu0 %v1246
    %v1286 = vpop.f32.mrf.mxu0
    %v1287 = vadd.f32 0.0, %v1286
    %1288 = vmatmul.f32.gmra.mxu0 %v1249
    %v1289 = vpop.f32.mrf.mxu0
    %v1290 = vadd.f32 0.0, %v1289
    %1291 = vmatmul.f32.gmra.mxu0 %v1252
    %v1292 = vpop.f32.mrf.mxu0
    %v1293 = vadd.f32 0.0, %v1292
    %1294 = vmatmul.f32.gmra.mxu0 %v1255
    %v1295 = vpop.f32.mrf.mxu0
    %v1296 = vadd.f32 0.0, %v1295
    %1297 = vmatmul.f32.gmra.mxu0 %v1258
    %v1298 = vpop.f32.mrf.mxu0
    %v1299 = vadd.f32 0.0, %v1298
    %1300 = vmatmul.f32.gmra.mxu0 %v1261
    %v1301 = vpop.f32.mrf.mxu0
    %v1302 = vadd.f32 0.0, %v1301
    %1303 = vmatmul.f32.gmra.mxu0 %v1264
    %v1304 = vpop.f32.mrf.mxu0
    %v1305 = vadd.f32 0.0, %v1304
    %1306 = vdwg.mxu0
    %v1308 = vsel %vm721, %v926, 0
    %v1311 = vsel %vm721, %v929, 0
    %v1314 = vsel %vm721, %v932, 0
    %v1317 = vsel %vm721, %v935, 0
    %v1320 = vsel %vm721, %v938, 0
    %v1323 = vsel %vm721, %v941, 0
    %v1326 = vsel %vm721, %v944, 0
    %v1329 = vsel %vm721, %v947, 0
    %1331 = vmatpush.msra.mxu0 0.0
    %1332 = vmatpush.msra.mxu0 0.0
    %1333 = vmatpush.msra.mxu0 0.0
    %1334 = vmatpush.msra.mxu0 0.0
    %1335 = vmatpush.msra.mxu0 0.0
    %1336 = vmatpush.msra.mxu0 0.0
    %1337 = vmatpush.msra.mxu0 0.0
    %1338 = vmatpush.msra.mxu0 0.0
    %1339 = vmatpush.msra.mxu0 0.0
    %1340 = vmatpush.msra.mxu0 0.0
    %1341 = vmatpush.msra.mxu0 0.0
    %1342 = vmatpush.msra.mxu0 0.0
    %1343 = vmatpush.msra.mxu0 0.0
    %1344 = vmatpush.msra.mxu0 0.0
    %1345 = vmatpush.msra.mxu0 0.0
    %1346 = vmatpush.msra.mxu0 %v949
    %1347 = vmatmul.f32.gmra.mxu0 %v1308
    %v1348 = vpop.f32.mrf.mxu0
    %v1349 = vadd.f32 %v1284, %v1348
    %1350 = vmatmul.f32.gmra.mxu0 %v1311
    %v1351 = vpop.f32.mrf.mxu0
    %v1352 = vadd.f32 %v1287, %v1351
    %1353 = vmatmul.f32.gmra.mxu0 %v1314
    %v1354 = vpop.f32.mrf.mxu0
    %v1355 = vadd.f32 %v1290, %v1354
    %1356 = vmatmul.f32.gmra.mxu0 %v1317
    %v1357 = vpop.f32.mrf.mxu0
    %v1358 = vadd.f32 %v1293, %v1357
    %1359 = vmatmul.f32.gmra.mxu0 %v1320
    %v1360 = vpop.f32.mrf.mxu0
    %v1361 = vadd.f32 %v1296, %v1360
    %1362 = vmatmul.f32.gmra.mxu0 %v1323
    %v1363 = vpop.f32.mrf.mxu0
    %v1364 = vadd.f32 %v1299, %v1363
    %1365 = vmatmul.f32.gmra.mxu0 %v1326
    %v1366 = vpop.f32.mrf.mxu0
    %v1367 = vadd.f32 %v1302, %v1366
    %1368 = vmatmul.f32.gmra.mxu0 %v1329
    %v1369 = vpop.f32.mrf.mxu0
    %v1370 = vadd.f32 %v1305, %v1369
    %1371 = vdwg.mxu0
    %1372 = vrot.lane.b32.xlu0 %v529, 112
    %v1373 = vpop.permute.xlu0 %1372
    %1374 = vrot.lane.b32.xlu0 %v532, 112
    %v1375 = vpop.permute.xlu0 %1374
    %1376 = vrot.lane.b32.xlu0 %v535, 112
    %v1377 = vpop.permute.xlu0 %1376
    %1378 = vrot.lane.b32.xlu0 %v538, 112
    %v1379 = vpop.permute.xlu0 %1378
    %1380 = vrot.lane.b32.xlu0 %v541, 112
    %v1381 = vpop.permute.xlu0 %1380
    %1382 = vrot.lane.b32.xlu0 %v544, 112
    %v1383 = vpop.permute.xlu0 %1382
    %1384 = vrot.lane.b32.xlu0 %v547, 112
    %v1385 = vpop.permute.xlu0 %1384
    %1386 = vrot.lane.b32.xlu0 %v550, 112
    %v1387 = vpop.permute.xlu0 %1386
    %1388 = vrot.lane.b32.xlu0 %v529, 80
    %v1389 = vpop.permute.xlu0 %1388
    %1390 = vrot.lane.b32.xlu0 %v532, 80
    %v1391 = vpop.permute.xlu0 %1390
    %1392 = vrot.lane.b32.xlu0 %v535, 80
    %v1393 = vpop.permute.xlu0 %1392
    %1394 = vrot.lane.b32.xlu0 %v538, 80
    %v1395 = vpop.permute.xlu0 %1394
    %1396 = vrot.lane.b32.xlu0 %v541, 80
    %v1397 = vpop.permute.xlu0 %1396
    %1398 = vrot.lane.b32.xlu0 %v544, 80
    %v1399 = vpop.permute.xlu0 %1398
    %1400 = vrot.lane.b32.xlu0 %v547, 80
    %v1401 = vpop.permute.xlu0 %1400
    %1402 = vrot.lane.b32.xlu0 %v550, 80
    %v1403 = vpop.permute.xlu0 %1402
    %v1404 = vsel %vm721, %v1373, 0
    %v1406 = vsel %vm721, %v1375, 0
    %v1408 = vsel %vm721, %v1377, 0
    %v1410 = vsel %vm721, %v1379, 0
    %v1412 = vsel %vm721, %v1381, 0
    %v1414 = vsel %vm721, %v1383, 0
    %v1416 = vsel %vm721, %v1385, 0
    %v1418 = vsel %vm721, %v1387, 0
    %v1420 = vsel %vm721, %v1389, 0
    %v1422 = vsel %vm721, %v1391, 0
    %v1424 = vsel %vm721, %v1393, 0
    %v1426 = vsel %vm721, %v1395, 0
    %v1428 = vsel %vm721, %v1397, 0
    %v1430 = vsel %vm721, %v1399, 0
    %v1432 = vsel %vm721, %v1401, 0
    %v1434 = vsel %vm721, %v1403, 0
    %1436 = vmatpush.xpose.msra.mxu0 0.0
    %1437 = vmatpush.xpose.msra.mxu0 0.0
    %1438 = vmatpush.xpose.msra.mxu0 0.0
    %1439 = vmatpush.xpose.msra.mxu0 0.0
    %1440 = vmatpush.xpose.msra.mxu0 0.0
    %1441 = vmatpush.xpose.msra.mxu0 0.0
    %1442 = vmatpush.xpose.msra.mxu0 0.0
    %1443 = vmatpush.xpose.msra.mxu0 0.0
    %1444 = vmatpush.xpose.msra.mxu0 %v1434
    %1445 = vmatpush.xpose.msra.mxu0 %v1432
    %1446 = vmatpush.xpose.msra.mxu0 %v1430
    %1447 = vmatpush.xpose.msra.mxu0 %v1428
    %1448 = vmatpush.xpose.msra.mxu0 %v1426
    %1449 = vmatpush.xpose.msra.mxu0 %v1424
    %1450 = vmatpush.xpose.msra.mxu0 %v1422
    %1451 = vmatpush.xpose.msra.mxu0 %v1420
    %1452 = vmatmul.f32.gmra.mxu0 %v1404
    %v1453 = vpop.f32.mrf.mxu0
    %v1454 = vadd.f32 0.0, %v1453
    %1455 = vmatmul.f32.gmra.mxu0 %v1406
    %v1456 = vpop.f32.mrf.mxu0
    %v1457 = vadd.f32 0.0, %v1456
    %1458 = vmatmul.f32.gmra.mxu0 %v1408
    %v1459 = vpop.f32.mrf.mxu0
    %v1460 = vadd.f32 0.0, %v1459
    %1461 = vmatmul.f32.gmra.mxu0 %v1410
    %v1462 = vpop.f32.mrf.mxu0
    %v1463 = vadd.f32 0.0, %v1462
    %1464 = vmatmul.f32.gmra.mxu0 %v1412
    %v1465 = vpop.f32.mrf.mxu0
    %v1466 = vadd.f32 0.0, %v1465
    %1467 = vmatmul.f32.gmra.mxu0 %v1414
    %v1468 = vpop.f32.mrf.mxu0
    %v1469 = vadd.f32 0.0, %v1468
    %1470 = vmatmul.f32.gmra.mxu0 %v1416
    %v1471 = vpop.f32.mrf.mxu0
    %v1472 = vadd.f32 0.0, %v1471
    %1473 = vmatmul.f32.gmra.mxu0 %v1418
    %v1474 = vpop.f32.mrf.mxu0
    %v1475 = vadd.f32 0.0, %v1474
    %1476 = vdwg.mxu0
    %v1477 = vsel %vm795, %v1454, -inf
    %1478 = vmax.xlane.f32.xlu0 %v1477
    %v1479 = vpop.xlane.xlu0 %1478
    %v1480 = vsel %vm795, %v1457, -inf
    %1481 = vmax.xlane.f32.xlu0 %v1480
    %v1482 = vpop.xlane.xlu0 %1481
    %v1483 = vsel %vm795, %v1460, -inf
    %1484 = vmax.xlane.f32.xlu0 %v1483
    %v1485 = vpop.xlane.xlu0 %1484
    %v1486 = vsel %vm795, %v1463, -inf
    %1487 = vmax.xlane.f32.xlu0 %v1486
    %v1488 = vpop.xlane.xlu0 %1487
    %v1489 = vsel %vm795, %v1466, -inf
    %1490 = vmax.xlane.f32.xlu0 %v1489
    %v1491 = vpop.xlane.xlu0 %1490
    %v1492 = vsel %vm795, %v1469, -inf
    %1493 = vmax.xlane.f32.xlu0 %v1492
    %v1494 = vpop.xlane.xlu0 %1493
    %v1495 = vsel %vm795, %v1472, -inf
    %1496 = vmax.xlane.f32.xlu0 %v1495
    %v1497 = vpop.xlane.xlu0 %1496
    %v1498 = vsel %vm795, %v1475, -inf
    %1499 = vmax.xlane.f32.xlu0 %v1498
    %v1500 = vpop.xlane.xlu0 %1499
    %v1501 = vsub.f32 %v1454, %v1479
    %v1502 = vsub.f32 %v1457, %v1482
    %v1503 = vsub.f32 %v1460, %v1485
    %v1504 = vsub.f32 %v1463, %v1488
    %v1505 = vsub.f32 %v1466, %v1491
    %v1506 = vsub.f32 %v1469, %v1494
    %v1507 = vsub.f32 %v1472, %v1497
    %v1508 = vsub.f32 %v1475, %v1500
    %v1509 = vmul.f32 %v1501, 1.442695
    %v1510 = vpow.pop %v1509
    %v1511 = vmul.f32 %v1502, 1.442695
    %v1512 = vpow.pop %v1511
    %v1513 = vmul.f32 %v1503, 1.442695
    %v1514 = vpow.pop %v1513
    %v1515 = vmul.f32 %v1504, 1.442695
    %v1516 = vpow.pop %v1515
    %v1517 = vmul.f32 %v1505, 1.442695
    %v1518 = vpow.pop %v1517
    %v1519 = vmul.f32 %v1506, 1.442695
    %v1520 = vpow.pop %v1519
    %v1521 = vmul.f32 %v1507, 1.442695
    %v1522 = vpow.pop %v1521
    %v1523 = vmul.f32 %v1508, 1.442695
    %v1524 = vpow.pop %v1523
    %v1525 = vsel %vm795, %v1510, 0.0
    %1526 = vadd.xlane.f32.xlu0 %v1525
    %v1527 = vpop.xlane.xlu0 %1526
    %v1528 = vsel %vm795, %v1512, 0.0
    %1529 = vadd.xlane.f32.xlu0 %v1528
    %v1530 = vpop.xlane.xlu0 %1529
    %v1531 = vsel %vm795, %v1514, 0.0
    %1532 = vadd.xlane.f32.xlu0 %v1531
    %v1533 = vpop.xlane.xlu0 %1532
    %v1534 = vsel %vm795, %v1516, 0.0
    %1535 = vadd.xlane.f32.xlu0 %v1534
    %v1536 = vpop.xlane.xlu0 %1535
    %v1537 = vsel %vm795, %v1518, 0.0
    %1538 = vadd.xlane.f32.xlu0 %v1537
    %v1539 = vpop.xlane.xlu0 %1538
    %v1540 = vsel %vm795, %v1520, 0.0
    %1541 = vadd.xlane.f32.xlu0 %v1540
    %v1542 = vpop.xlane.xlu0 %1541
    %v1543 = vsel %vm795, %v1522, 0.0
    %1544 = vadd.xlane.f32.xlu0 %v1543
    %v1545 = vpop.xlane.xlu0 %1544
    %v1546 = vsel %vm795, %v1524, 0.0
    %1547 = vadd.xlane.f32.xlu0 %v1546
    %v1548 = vpop.xlane.xlu0 %1547
    %v1549 = vrcp.pop %v1527
    %v1550 = vrcp.pop %v1530
    %v1551 = vrcp.pop %v1533
    %v1552 = vrcp.pop %v1536
    %v1553 = vrcp.pop %v1539
    %v1554 = vrcp.pop %v1542
    %v1555 = vrcp.pop %v1545
    %v1556 = vrcp.pop %v1548
    %v1557 = vmul.f32 %v1510, %v1549
    %v1558 = vmul.f32 %v1512, %v1550
    %v1559 = vmul.f32 %v1514, %v1551
    %v1560 = vmul.f32 %v1516, %v1552
    %v1561 = vmul.f32 %v1518, %v1553
    %v1562 = vmul.f32 %v1520, %v1554
    %v1563 = vmul.f32 %v1522, %v1555
    %v1564 = vmul.f32 %v1524, %v1556
    %1565 = vrot.lane.b32.xlu0 %v650, 112
    %v1566 = vpop.permute.xlu0 %1565
    %1567 = vrot.lane.b32.xlu0 %v653, 112
    %v1568 = vpop.permute.xlu0 %1567
    %1569 = vrot.lane.b32.xlu0 %v656, 112
    %v1570 = vpop.permute.xlu0 %1569
    %1571 = vrot.lane.b32.xlu0 %v659, 112
    %v1572 = vpop.permute.xlu0 %1571
    %1573 = vrot.lane.b32.xlu0 %v662, 112
    %v1574 = vpop.permute.xlu0 %1573
    %1575 = vrot.lane.b32.xlu0 %v665, 112
    %v1576 = vpop.permute.xlu0 %1575
    %1577 = vrot.lane.b32.xlu0 %v668, 112
    %v1578 = vpop.permute.xlu0 %1577
    %1579 = vrot.lane.b32.xlu0 %v671, 112
    %v1580 = vpop.permute.xlu0 %1579
    %v1590 = vsel %vm795, %v1557, 0
    %v1593 = vsel %vm795, %v1558, 0
    %v1596 = vsel %vm795, %v1559, 0
    %v1599 = vsel %vm795, %v1560, 0
    %v1602 = vsel %vm795, %v1561, 0
    %v1605 = vsel %vm795, %v1562, 0
    %v1608 = vsel %vm795, %v1563, 0
    %v1611 = vsel %vm795, %v1564, 0
    %1613 = vmatpush.msra.mxu0 0.0
    %1614 = vmatpush.msra.mxu0 0.0
    %1615 = vmatpush.msra.mxu0 0.0
    %1616 = vmatpush.msra.mxu0 0.0
    %1617 = vmatpush.msra.mxu0 0.0
    %1618 = vmatpush.msra.mxu0 0.0
    %1619 = vmatpush.msra.mxu0 0.0
    %1620 = vmatpush.msra.mxu0 0.0
    %1621 = vmatpush.msra.mxu0 %v1580
    %1622 = vmatpush.msra.mxu0 %v1578
    %1623 = vmatpush.msra.mxu0 %v1576
    %1624 = vmatpush.msra.mxu0 %v1574
    %1625 = vmatpush.msra.mxu0 %v1572
    %1626 = vmatpush.msra.mxu0 %v1570
    %1627 = vmatpush.msra.mxu0 %v1568
    %1628 = vmatpush.msra.mxu0 %v1566
    %1629 = vmatmul.f32.gmra.mxu0 %v1590
    %v1630 = vpop.f32.mrf.mxu0
    %v1631 = vadd.f32 0.0, %v1630
    %1632 = vmatmul.f32.gmra.mxu0 %v1593
    %v1633 = vpop.f32.mrf.mxu0
    %v1634 = vadd.f32 0.0, %v1633
    %1635 = vmatmul.f32.gmra.mxu0 %v1596
    %v1636 = vpop.f32.mrf.mxu0
    %v1637 = vadd.f32 0.0, %v1636
    %1638 = vmatmul.f32.gmra.mxu0 %v1599
    %v1639 = vpop.f32.mrf.mxu0
    %v1640 = vadd.f32 0.0, %v1639
    %1641 = vmatmul.f32.gmra.mxu0 %v1602
    %v1642 = vpop.f32.mrf.mxu0
    %v1643 = vadd.f32 0.0, %v1642
    %1644 = vmatmul.f32.gmra.mxu0 %v1605
    %v1645 = vpop.f32.mrf.mxu0
    %v1646 = vadd.f32 0.0, %v1645
    %1647 = vmatmul.f32.gmra.mxu0 %v1608
    %v1648 = vpop.f32.mrf.mxu0
    %v1649 = vadd.f32 0.0, %v1648
    %1650 = vmatmul.f32.gmra.mxu0 %v1611
    %v1651 = vpop.f32.mrf.mxu0
    %v1652 = vadd.f32 0.0, %v1651
    %1653 = vdwg.mxu0
    %s1654 = scalar_lea.vmem %s23, 16
    %v1655 = vld [vmem:[%s1654] sm:$0xff]
    %v1657 = vsel %vm721, %v1631, 0
    %v1660 = vsel %vm721, %v1634, 0
    %v1663 = vsel %vm721, %v1637, 0
    %v1666 = vsel %vm721, %v1640, 0
    %v1669 = vsel %vm721, %v1643, 0
    %v1672 = vsel %vm721, %v1646, 0
    %v1675 = vsel %vm721, %v1649, 0
    %v1678 = vsel %vm721, %v1652, 0
    %1680 = vmatpush.msra.mxu0 0.0
    %1681 = vmatpush.msra.mxu0 0.0
    %1682 = vmatpush.msra.mxu0 0.0
    %1683 = vmatpush.msra.mxu0 0.0
    %1684 = vmatpush.msra.mxu0 0.0
    %1685 = vmatpush.msra.mxu0 0.0
    %1686 = vmatpush.msra.mxu0 0.0
    %1687 = vmatpush.msra.mxu0 0.0
    %1688 = vmatpush.msra.mxu0 0.0
    %1689 = vmatpush.msra.mxu0 0.0
    %1690 = vmatpush.msra.mxu0 0.0
    %1691 = vmatpush.msra.mxu0 0.0
    %1692 = vmatpush.msra.mxu0 0.0
    %1693 = vmatpush.msra.mxu0 0.0
    %1694 = vmatpush.msra.mxu0 0.0
    %1695 = vmatpush.msra.mxu0 %v1655
    %1696 = vmatmul.f32.gmra.mxu0 %v1657
    %v1697 = vpop.f32.mrf.mxu0
    %v1698 = vadd.f32 0.0, %v1697
    %1699 = vmatmul.f32.gmra.mxu0 %v1660
    %v1700 = vpop.f32.mrf.mxu0
    %v1701 = vadd.f32 0.0, %v1700
    %1702 = vmatmul.f32.gmra.mxu0 %v1663
    %v1703 = vpop.f32.mrf.mxu0
    %v1704 = vadd.f32 0.0, %v1703
    %1705 = vmatmul.f32.gmra.mxu0 %v1666
    %v1706 = vpop.f32.mrf.mxu0
    %v1707 = vadd.f32 0.0, %v1706
    %1708 = vmatmul.f32.gmra.mxu0 %v1669
    %v1709 = vpop.f32.mrf.mxu0
    %v1710 = vadd.f32 0.0, %v1709
    %1711 = vmatmul.f32.gmra.mxu0 %v1672
    %v1712 = vpop.f32.mrf.mxu0
    %v1713 = vadd.f32 0.0, %v1712
    %1714 = vmatmul.f32.gmra.mxu0 %v1675
    %v1715 = vpop.f32.mrf.mxu0
    %v1716 = vadd.f32 0.0, %v1715
    %1717 = vmatmul.f32.gmra.mxu0 %v1678
    %v1718 = vpop.f32.mrf.mxu0
    %v1719 = vadd.f32 0.0, %v1718
    %1720 = vdwg.mxu0
    %v1721 = vadd.f32 %v1349, %v1698
    %v1722 = vadd.f32 %v1352, %v1701
    %v1723 = vadd.f32 %v1355, %v1704
    %v1724 = vadd.f32 %v1358, %v1707
    %v1725 = vadd.f32 %v1361, %v1710
    %v1726 = vadd.f32 %v1364, %v1713
    %v1727 = vadd.f32 %v1367, %v1716
    %v1728 = vadd.f32 %v1370, %v1719
    %1729 = vrot.lane.b32.xlu0 %v529, 104
    %v1730 = vpop.permute.xlu0 %1729
    %1731 = vrot.lane.b32.xlu0 %v532, 104
    %v1732 = vpop.permute.xlu0 %1731
    %1733 = vrot.lane.b32.xlu0 %v535, 104
    %v1734 = vpop.permute.xlu0 %1733
    %1735 = vrot.lane.b32.xlu0 %v538, 104
    %v1736 = vpop.permute.xlu0 %1735
    %1737 = vrot.lane.b32.xlu0 %v541, 104
    %v1738 = vpop.permute.xlu0 %1737
    %1739 = vrot.lane.b32.xlu0 %v544, 104
    %v1740 = vpop.permute.xlu0 %1739
    %1741 = vrot.lane.b32.xlu0 %v547, 104
    %v1742 = vpop.permute.xlu0 %1741
    %1743 = vrot.lane.b32.xlu0 %v550, 104
    %v1744 = vpop.permute.xlu0 %1743
    %1745 = vrot.lane.b32.xlu0 %v529, 72
    %v1746 = vpop.permute.xlu0 %1745
    %1747 = vrot.lane.b32.xlu0 %v532, 72
    %v1748 = vpop.permute.xlu0 %1747
    %1749 = vrot.lane.b32.xlu0 %v535, 72
    %v1750 = vpop.permute.xlu0 %1749
    %1751 = vrot.lane.b32.xlu0 %v538, 72
    %v1752 = vpop.permute.xlu0 %1751
    %1753 = vrot.lane.b32.xlu0 %v541, 72
    %v1754 = vpop.permute.xlu0 %1753
    %1755 = vrot.lane.b32.xlu0 %v544, 72
    %v1756 = vpop.permute.xlu0 %1755
    %1757 = vrot.lane.b32.xlu0 %v547, 72
    %v1758 = vpop.permute.xlu0 %1757
    %1759 = vrot.lane.b32.xlu0 %v550, 72
    %v1760 = vpop.permute.xlu0 %1759
    %v1761 = vsel %vm721, %v1730, 0
    %v1763 = vsel %vm721, %v1732, 0
    %v1765 = vsel %vm721, %v1734, 0
    %v1767 = vsel %vm721, %v1736, 0
    %v1769 = vsel %vm721, %v1738, 0
    %v1771 = vsel %vm721, %v1740, 0
    %v1773 = vsel %vm721, %v1742, 0
    %v1775 = vsel %vm721, %v1744, 0
    %v1777 = vsel %vm721, %v1746, 0
    %v1779 = vsel %vm721, %v1748, 0
    %v1781 = vsel %vm721, %v1750, 0
    %v1783 = vsel %vm721, %v1752, 0
    %v1785 = vsel %vm721, %v1754, 0
    %v1787 = vsel %vm721, %v1756, 0
    %v1789 = vsel %vm721, %v1758, 0
    %v1791 = vsel %vm721, %v1760, 0
    %1793 = vmatpush.xpose.msra.mxu0 0.0
    %1794 = vmatpush.xpose.msra.mxu0 0.0
    %1795 = vmatpush.xpose.msra.mxu0 0.0
    %1796 = vmatpush.xpose.msra.mxu0 0.0
    %1797 = vmatpush.xpose.msra.mxu0 0.0
    %1798 = vmatpush.xpose.msra.mxu0 0.0
    %1799 = vmatpush.xpose.msra.mxu0 0.0
    %1800 = vmatpush.xpose.msra.mxu0 0.0
    %1801 = vmatpush.xpose.msra.mxu0 %v1791
    %1802 = vmatpush.xpose.msra.mxu0 %v1789
    %1803 = vmatpush.xpose.msra.mxu0 %v1787
    %1804 = vmatpush.xpose.msra.mxu0 %v1785
    %1805 = vmatpush.xpose.msra.mxu0 %v1783
    %1806 = vmatpush.xpose.msra.mxu0 %v1781
    %1807 = vmatpush.xpose.msra.mxu0 %v1779
    %1808 = vmatpush.xpose.msra.mxu0 %v1777
    %1809 = vmatmul.f32.gmra.mxu0 %v1761
    %v1810 = vpop.f32.mrf.mxu0
    %v1811 = vadd.f32 0.0, %v1810
    %1812 = vmatmul.f32.gmra.mxu0 %v1763
    %v1813 = vpop.f32.mrf.mxu0
    %v1814 = vadd.f32 0.0, %v1813
    %1815 = vmatmul.f32.gmra.mxu0 %v1765
    %v1816 = vpop.f32.mrf.mxu0
    %v1817 = vadd.f32 0.0, %v1816
    %1818 = vmatmul.f32.gmra.mxu0 %v1767
    %v1819 = vpop.f32.mrf.mxu0
    %v1820 = vadd.f32 0.0, %v1819
    %1821 = vmatmul.f32.gmra.mxu0 %v1769
    %v1822 = vpop.f32.mrf.mxu0
    %v1823 = vadd.f32 0.0, %v1822
    %1824 = vmatmul.f32.gmra.mxu0 %v1771
    %v1825 = vpop.f32.mrf.mxu0
    %v1826 = vadd.f32 0.0, %v1825
    %1827 = vmatmul.f32.gmra.mxu0 %v1773
    %v1828 = vpop.f32.mrf.mxu0
    %v1829 = vadd.f32 0.0, %v1828
    %1830 = vmatmul.f32.gmra.mxu0 %v1775
    %v1831 = vpop.f32.mrf.mxu0
    %v1832 = vadd.f32 0.0, %v1831
    %1833 = vdwg.mxu0
    %v1834 = vsel %vm795, %v1811, -inf
    %1835 = vmax.xlane.f32.xlu0 %v1834
    %v1836 = vpop.xlane.xlu0 %1835
    %v1837 = vsel %vm795, %v1814, -inf
    %1838 = vmax.xlane.f32.xlu0 %v1837
    %v1839 = vpop.xlane.xlu0 %1838
    %v1840 = vsel %vm795, %v1817, -inf
    %1841 = vmax.xlane.f32.xlu0 %v1840
    %v1842 = vpop.xlane.xlu0 %1841
    %v1843 = vsel %vm795, %v1820, -inf
    %1844 = vmax.xlane.f32.xlu0 %v1843
    %v1845 = vpop.xlane.xlu0 %1844
    %v1846 = vsel %vm795, %v1823, -inf
    %1847 = vmax.xlane.f32.xlu0 %v1846
    %v1848 = vpop.xlane.xlu0 %1847
    %v1849 = vsel %vm795, %v1826, -inf
    %1850 = vmax.xlane.f32.xlu0 %v1849
    %v1851 = vpop.xlane.xlu0 %1850
    %v1852 = vsel %vm795, %v1829, -inf
    %1853 = vmax.xlane.f32.xlu0 %v1852
    %v1854 = vpop.xlane.xlu0 %1853
    %v1855 = vsel %vm795, %v1832, -inf
    %1856 = vmax.xlane.f32.xlu0 %v1855
    %v1857 = vpop.xlane.xlu0 %1856
    %v1858 = vsub.f32 %v1811, %v1836
    %v1859 = vsub.f32 %v1814, %v1839
    %v1860 = vsub.f32 %v1817, %v1842
    %v1861 = vsub.f32 %v1820, %v1845
    %v1862 = vsub.f32 %v1823, %v1848
    %v1863 = vsub.f32 %v1826, %v1851
    %v1864 = vsub.f32 %v1829, %v1854
    %v1865 = vsub.f32 %v1832, %v1857
    %v1866 = vmul.f32 %v1858, 1.442695
    %v1867 = vpow.pop %v1866
    %v1868 = vmul.f32 %v1859, 1.442695
    %v1869 = vpow.pop %v1868
    %v1870 = vmul.f32 %v1860, 1.442695
    %v1871 = vpow.pop %v1870
    %v1872 = vmul.f32 %v1861, 1.442695
    %v1873 = vpow.pop %v1872
    %v1874 = vmul.f32 %v1862, 1.442695
    %v1875 = vpow.pop %v1874
    %v1876 = vmul.f32 %v1863, 1.442695
    %v1877 = vpow.pop %v1876
    %v1878 = vmul.f32 %v1864, 1.442695
    %v1879 = vpow.pop %v1878
    %v1880 = vmul.f32 %v1865, 1.442695
    %v1881 = vpow.pop %v1880
    %v1882 = vsel %vm795, %v1867, 0.0
    %1883 = vadd.xlane.f32.xlu0 %v1882
    %v1884 = vpop.xlane.xlu0 %1883
    %v1885 = vsel %vm795, %v1869, 0.0
    %1886 = vadd.xlane.f32.xlu0 %v1885
    %v1887 = vpop.xlane.xlu0 %1886
    %v1888 = vsel %vm795, %v1871, 0.0
    %1889 = vadd.xlane.f32.xlu0 %v1888
    %v1890 = vpop.xlane.xlu0 %1889
    %v1891 = vsel %vm795, %v1873, 0.0
    %1892 = vadd.xlane.f32.xlu0 %v1891
    %v1893 = vpop.xlane.xlu0 %1892
    %v1894 = vsel %vm795, %v1875, 0.0
    %1895 = vadd.xlane.f32.xlu0 %v1894
    %v1896 = vpop.xlane.xlu0 %1895
    %v1897 = vsel %vm795, %v1877, 0.0
    %1898 = vadd.xlane.f32.xlu0 %v1897
    %v1899 = vpop.xlane.xlu0 %1898
    %v1900 = vsel %vm795, %v1879, 0.0
    %1901 = vadd.xlane.f32.xlu0 %v1900
    %v1902 = vpop.xlane.xlu0 %1901
    %v1903 = vsel %vm795, %v1881, 0.0
    %1904 = vadd.xlane.f32.xlu0 %v1903
    %v1905 = vpop.xlane.xlu0 %1904
    %v1906 = vrcp.pop %v1884
    %v1907 = vrcp.pop %v1887
    %v1908 = vrcp.pop %v1890
    %v1909 = vrcp.pop %v1893
    %v1910 = vrcp.pop %v1896
    %v1911 = vrcp.pop %v1899
    %v1912 = vrcp.pop %v1902
    %v1913 = vrcp.pop %v1905
    %v1914 = vmul.f32 %v1867, %v1906
    %v1915 = vmul.f32 %v1869, %v1907
    %v1916 = vmul.f32 %v1871, %v1908
    %v1917 = vmul.f32 %v1873, %v1909
    %v1918 = vmul.f32 %v1875, %v1910
    %v1919 = vmul.f32 %v1877, %v1911
    %v1920 = vmul.f32 %v1879, %v1912
    %v1921 = vmul.f32 %v1881, %v1913
    %1922 = vrot.lane.b32.xlu0 %v650, 104
    %v1923 = vpop.permute.xlu0 %1922
    %1924 = vrot.lane.b32.xlu0 %v653, 104
    %v1925 = vpop.permute.xlu0 %1924
    %1926 = vrot.lane.b32.xlu0 %v656, 104
    %v1927 = vpop.permute.xlu0 %1926
    %1928 = vrot.lane.b32.xlu0 %v659, 104
    %v1929 = vpop.permute.xlu0 %1928
    %1930 = vrot.lane.b32.xlu0 %v662, 104
    %v1931 = vpop.permute.xlu0 %1930
    %1932 = vrot.lane.b32.xlu0 %v665, 104
    %v1933 = vpop.permute.xlu0 %1932
    %1934 = vrot.lane.b32.xlu0 %v668, 104
    %v1935 = vpop.permute.xlu0 %1934
    %1936 = vrot.lane.b32.xlu0 %v671, 104
    %v1937 = vpop.permute.xlu0 %1936
    %v1947 = vsel %vm795, %v1914, 0
    %v1950 = vsel %vm795, %v1915, 0
    %v1953 = vsel %vm795, %v1916, 0
    %v1956 = vsel %vm795, %v1917, 0
    %v1959 = vsel %vm795, %v1918, 0
    %v1962 = vsel %vm795, %v1919, 0
    %v1965 = vsel %vm795, %v1920, 0
    %v1968 = vsel %vm795, %v1921, 0
    %1970 = vmatpush.msra.mxu0 0.0
    %1971 = vmatpush.msra.mxu0 0.0
    %1972 = vmatpush.msra.mxu0 0.0
    %1973 = vmatpush.msra.mxu0 0.0
    %1974 = vmatpush.msra.mxu0 0.0
    %1975 = vmatpush.msra.mxu0 0.0
    %1976 = vmatpush.msra.mxu0 0.0
    %1977 = vmatpush.msra.mxu0 0.0
    %1978 = vmatpush.msra.mxu0 %v1937
    %1979 = vmatpush.msra.mxu0 %v1935
    %1980 = vmatpush.msra.mxu0 %v1933
    %1981 = vmatpush.msra.mxu0 %v1931
    %1982 = vmatpush.msra.mxu0 %v1929
    %1983 = vmatpush.msra.mxu0 %v1927
    %1984 = vmatpush.msra.mxu0 %v1925
    %1985 = vmatpush.msra.mxu0 %v1923
    %1986 = vmatmul.f32.gmra.mxu0 %v1947
    %v1987 = vpop.f32.mrf.mxu0
    %v1988 = vadd.f32 0.0, %v1987
    %1989 = vmatmul.f32.gmra.mxu0 %v1950
    %v1990 = vpop.f32.mrf.mxu0
    %v1991 = vadd.f32 0.0, %v1990
    %1992 = vmatmul.f32.gmra.mxu0 %v1953
    %v1993 = vpop.f32.mrf.mxu0
    %v1994 = vadd.f32 0.0, %v1993
    %1995 = vmatmul.f32.gmra.mxu0 %v1956
    %v1996 = vpop.f32.mrf.mxu0
    %v1997 = vadd.f32 0.0, %v1996
    %1998 = vmatmul.f32.gmra.mxu0 %v1959
    %v1999 = vpop.f32.mrf.mxu0
    %v2000 = vadd.f32 0.0, %v1999
    %2001 = vmatmul.f32.gmra.mxu0 %v1962
    %v2002 = vpop.f32.mrf.mxu0
    %v2003 = vadd.f32 0.0, %v2002
    %2004 = vmatmul.f32.gmra.mxu0 %v1965
    %v2005 = vpop.f32.mrf.mxu0
    %v2006 = vadd.f32 0.0, %v2005
    %2007 = vmatmul.f32.gmra.mxu0 %v1968
    %v2008 = vpop.f32.mrf.mxu0
    %v2009 = vadd.f32 0.0, %v2008
    %2010 = vdwg.mxu0
    %s2011 = scalar_lea.vmem %s23, 24
    %v2012 = vld [vmem:[%s2011] sm:$0xff]
    %v2014 = vsel %vm721, %v1988, 0
    %v2017 = vsel %vm721, %v1991, 0
    %v2020 = vsel %vm721, %v1994, 0
    %v2023 = vsel %vm721, %v1997, 0
    %v2026 = vsel %vm721, %v2000, 0
    %v2029 = vsel %vm721, %v2003, 0
    %v2032 = vsel %vm721, %v2006, 0
    %v2035 = vsel %vm721, %v2009, 0
    %2037 = vmatpush.msra.mxu0 0.0
    %2038 = vmatpush.msra.mxu0 0.0
    %2039 = vmatpush.msra.mxu0 0.0
    %2040 = vmatpush.msra.mxu0 0.0
    %2041 = vmatpush.msra.mxu0 0.0
    %2042 = vmatpush.msra.mxu0 0.0
    %2043 = vmatpush.msra.mxu0 0.0
    %2044 = vmatpush.msra.mxu0 0.0
    %2045 = vmatpush.msra.mxu0 0.0
    %2046 = vmatpush.msra.mxu0 0.0
    %2047 = vmatpush.msra.mxu0 0.0
    %2048 = vmatpush.msra.mxu0 0.0
    %2049 = vmatpush.msra.mxu0 0.0
    %2050 = vmatpush.msra.mxu0 0.0
    %2051 = vmatpush.msra.mxu0 0.0
    %2052 = vmatpush.msra.mxu0 %v2012
    %2053 = vmatmul.f32.gmra.mxu0 %v2014
    %v2054 = vpop.f32.mrf.mxu0
    %v2055 = vadd.f32 0.0, %v2054
    %2056 = vmatmul.f32.gmra.mxu0 %v2017
    %v2057 = vpop.f32.mrf.mxu0
    %v2058 = vadd.f32 0.0, %v2057
    %2059 = vmatmul.f32.gmra.mxu0 %v2020
    %v2060 = vpop.f32.mrf.mxu0
    %v2061 = vadd.f32 0.0, %v2060
    %2062 = vmatmul.f32.gmra.mxu0 %v2023
    %v2063 = vpop.f32.mrf.mxu0
    %v2064 = vadd.f32 0.0, %v2063
    %2065 = vmatmul.f32.gmra.mxu0 %v2026
    %v2066 = vpop.f32.mrf.mxu0
    %v2067 = vadd.f32 0.0, %v2066
    %2068 = vmatmul.f32.gmra.mxu0 %v2029
    %v2069 = vpop.f32.mrf.mxu0
    %v2070 = vadd.f32 0.0, %v2069
    %2071 = vmatmul.f32.gmra.mxu0 %v2032
    %v2072 = vpop.f32.mrf.mxu0
    %v2073 = vadd.f32 0.0, %v2072
    %2074 = vmatmul.f32.gmra.mxu0 %v2035
    %v2075 = vpop.f32.mrf.mxu0
    %v2076 = vadd.f32 0.0, %v2075
    %2077 = vdwg.mxu0
    %v2078 = vadd.f32 %v1721, %v2055
    %v2079 = vadd.f32 %v1722, %v2058
    %v2080 = vadd.f32 %v1723, %v2061
    %v2081 = vadd.f32 %v1724, %v2064
    %v2082 = vadd.f32 %v1725, %v2067
    %v2083 = vadd.f32 %v1726, %v2070
    %v2084 = vadd.f32 %v1727, %v2073
    %v2085 = vadd.f32 %v1728, %v2076
    %v2086 = vld [vmem:[#allocation7] sm:$0x1]
    %v2088 = vperm.slane %v2086, 0
    %v2090 = vadd.f32 %v2078, %v2088
    %v2091 = vadd.f32 %v2079, %v2088
    %v2092 = vadd.f32 %v2080, %v2088
    %v2093 = vadd.f32 %v2081, %v2088
    %v2094 = vadd.f32 %v2082, %v2088
    %v2095 = vadd.f32 %v2083, %v2088
    %v2096 = vadd.f32 %v2084, %v2088
    %v2097 = vadd.f32 %v2085, %v2088
    %2106 = vrot.lane.b32.xlu0 %v553, 96
    %v2107 = vpop.permute.xlu0 %2106
    %2108 = vrot.lane.b32.xlu0 %v556, 96
    %v2109 = vpop.permute.xlu0 %2108
    %2110 = vrot.lane.b32.xlu0 %v559, 96
    %v2111 = vpop.permute.xlu0 %2110
    %2112 = vrot.lane.b32.xlu0 %v562, 96
    %v2113 = vpop.permute.xlu0 %2112
    %2114 = vrot.lane.b32.xlu0 %v565, 96
    %v2115 = vpop.permute.xlu0 %2114
    %2116 = vrot.lane.b32.xlu0 %v568, 96
    %v2117 = vpop.permute.xlu0 %2116
    %2118 = vrot.lane.b32.xlu0 %v571, 96
    %v2119 = vpop.permute.xlu0 %2118
    %2120 = vrot.lane.b32.xlu0 %v574, 96
    %v2121 = vpop.permute.xlu0 %2120
    %v2122 = vsel %vm721, %v553, 0
    %v2124 = vsel %vm721, %v556, 0
    %v2126 = vsel %vm721, %v559, 0
    %v2128 = vsel %vm721, %v562, 0
    %v2130 = vsel %vm721, %v565, 0
    %v2132 = vsel %vm721, %v568, 0
    %v2134 = vsel %vm721, %v571, 0
    %v2136 = vsel %vm721, %v574, 0
    %v2138 = vsel %vm721, %v2107, 0
    %v2140 = vsel %vm721, %v2109, 0
    %v2142 = vsel %vm721, %v2111, 0
    %v2144 = vsel %vm721, %v2113, 0
    %v2146 = vsel %vm721, %v2115, 0
    %v2148 = vsel %vm721, %v2117, 0
    %v2150 = vsel %vm721, %v2119, 0
    %v2152 = vsel %vm721, %v2121, 0
    %2154 = vmatpush.xpose.msra.mxu0 0.0
    %2155 = vmatpush.xpose.msra.mxu0 0.0
    %2156 = vmatpush.xpose.msra.mxu0 0.0
    %2157 = vmatpush.xpose.msra.mxu0 0.0
    %2158 = vmatpush.xpose.msra.mxu0 0.0
    %2159 = vmatpush.xpose.msra.mxu0 0.0
    %2160 = vmatpush.xpose.msra.mxu0 0.0
    %2161 = vmatpush.xpose.msra.mxu0 0.0
    %2162 = vmatpush.xpose.msra.mxu0 %v2152
    %2163 = vmatpush.xpose.msra.mxu0 %v2150
    %2164 = vmatpush.xpose.msra.mxu0 %v2148
    %2165 = vmatpush.xpose.msra.mxu0 %v2146
    %2166 = vmatpush.xpose.msra.mxu0 %v2144
    %2167 = vmatpush.xpose.msra.mxu0 %v2142
    %2168 = vmatpush.xpose.msra.mxu0 %v2140
    %2169 = vmatpush.xpose.msra.mxu0 %v2138
    %2170 = vmatmul.f32.gmra.mxu0 %v2122
    %v2171 = vpop.f32.mrf.mxu0
    %v2172 = vadd.f32 0.0, %v2171
    %2173 = vmatmul.f32.gmra.mxu0 %v2124
    %v2174 = vpop.f32.mrf.mxu0
    %v2175 = vadd.f32 0.0, %v2174
    %2176 = vmatmul.f32.gmra.mxu0 %v2126
    %v2177 = vpop.f32.mrf.mxu0
    %v2178 = vadd.f32 0.0, %v2177
    %2179 = vmatmul.f32.gmra.mxu0 %v2128
    %v2180 = vpop.f32.mrf.mxu0
    %v2181 = vadd.f32 0.0, %v2180
    %2182 = vmatmul.f32.gmra.mxu0 %v2130
    %v2183 = vpop.f32.mrf.mxu0
    %v2184 = vadd.f32 0.0, %v2183
    %2185 = vmatmul.f32.gmra.mxu0 %v2132
    %v2186 = vpop.f32.mrf.mxu0
    %v2187 = vadd.f32 0.0, %v2186
    %2188 = vmatmul.f32.gmra.mxu0 %v2134
    %v2189 = vpop.f32.mrf.mxu0
    %v2190 = vadd.f32 0.0, %v2189
    %2191 = vmatmul.f32.gmra.mxu0 %v2136
    %v2192 = vpop.f32.mrf.mxu0
    %v2193 = vadd.f32 0.0, %v2192
    %2194 = vdwg.mxu0
    %v2195 = vsel %vm795, %v2172, -inf
    %2196 = vmax.xlane.f32.xlu0 %v2195
    %v2197 = vpop.xlane.xlu0 %2196
    %v2198 = vsel %vm795, %v2175, -inf
    %2199 = vmax.xlane.f32.xlu0 %v2198
    %v2200 = vpop.xlane.xlu0 %2199
    %v2201 = vsel %vm795, %v2178, -inf
    %2202 = vmax.xlane.f32.xlu0 %v2201
    %v2203 = vpop.xlane.xlu0 %2202
    %v2204 = vsel %vm795, %v2181, -inf
    %2205 = vmax.xlane.f32.xlu0 %v2204
    %v2206 = vpop.xlane.xlu0 %2205
    %v2207 = vsel %vm795, %v2184, -inf
    %2208 = vmax.xlane.f32.xlu0 %v2207
    %v2209 = vpop.xlane.xlu0 %2208
    %v2210 = vsel %vm795, %v2187, -inf
    %2211 = vmax.xlane.f32.xlu0 %v2210
    %v2212 = vpop.xlane.xlu0 %2211
    %v2213 = vsel %vm795, %v2190, -inf
    %2214 = vmax.xlane.f32.xlu0 %v2213
    %v2215 = vpop.xlane.xlu0 %2214
    %v2216 = vsel %vm795, %v2193, -inf
    %2217 = vmax.xlane.f32.xlu0 %v2216
    %v2218 = vpop.xlane.xlu0 %2217
    %v2219 = vsub.f32 %v2172, %v2197
    %v2220 = vsub.f32 %v2175, %v2200
    %v2221 = vsub.f32 %v2178, %v2203
    %v2222 = vsub.f32 %v2181, %v2206
    %v2223 = vsub.f32 %v2184, %v2209
    %v2224 = vsub.f32 %v2187, %v2212
    %v2225 = vsub.f32 %v2190, %v2215
    %v2226 = vsub.f32 %v2193, %v2218
    %v2227 = vmul.f32 %v2219, 1.442695
    %v2228 = vpow.pop %v2227
    %v2229 = vmul.f32 %v2220, 1.442695
    %v2230 = vpow.pop %v2229
    %v2231 = vmul.f32 %v2221, 1.442695
    %v2232 = vpow.pop %v2231
    %v2233 = vmul.f32 %v2222, 1.442695
    %v2234 = vpow.pop %v2233
    %v2235 = vmul.f32 %v2223, 1.442695
    %v2236 = vpow.pop %v2235
    %v2237 = vmul.f32 %v2224, 1.442695
    %v2238 = vpow.pop %v2237
    %v2239 = vmul.f32 %v2225, 1.442695
    %v2240 = vpow.pop %v2239
    %v2241 = vmul.f32 %v2226, 1.442695
    %v2242 = vpow.pop %v2241
    %v2243 = vsel %vm795, %v2228, 0.0
    %2244 = vadd.xlane.f32.xlu0 %v2243
    %v2245 = vpop.xlane.xlu0 %2244
    %v2246 = vsel %vm795, %v2230, 0.0
    %2247 = vadd.xlane.f32.xlu0 %v2246
    %v2248 = vpop.xlane.xlu0 %2247
    %v2249 = vsel %vm795, %v2232, 0.0
    %2250 = vadd.xlane.f32.xlu0 %v2249
    %v2251 = vpop.xlane.xlu0 %2250
    %v2252 = vsel %vm795, %v2234, 0.0
    %2253 = vadd.xlane.f32.xlu0 %v2252
    %v2254 = vpop.xlane.xlu0 %2253
    %v2255 = vsel %vm795, %v2236, 0.0
    %2256 = vadd.xlane.f32.xlu0 %v2255
    %v2257 = vpop.xlane.xlu0 %2256
    %v2258 = vsel %vm795, %v2238, 0.0
    %2259 = vadd.xlane.f32.xlu0 %v2258
    %v2260 = vpop.xlane.xlu0 %2259
    %v2261 = vsel %vm795, %v2240, 0.0
    %2262 = vadd.xlane.f32.xlu0 %v2261
    %v2263 = vpop.xlane.xlu0 %2262
    %v2264 = vsel %vm795, %v2242, 0.0
    %2265 = vadd.xlane.f32.xlu0 %v2264
    %v2266 = vpop.xlane.xlu0 %2265
    %v2267 = vrcp.pop %v2245
    %v2268 = vrcp.pop %v2248
    %v2269 = vrcp.pop %v2251
    %v2270 = vrcp.pop %v2254
    %v2271 = vrcp.pop %v2257
    %v2272 = vrcp.pop %v2260
    %v2273 = vrcp.pop %v2263
    %v2274 = vrcp.pop %v2266
    %v2275 = vmul.f32 %v2228, %v2267
    %v2276 = vmul.f32 %v2230, %v2268
    %v2277 = vmul.f32 %v2232, %v2269
    %v2278 = vmul.f32 %v2234, %v2270
    %v2279 = vmul.f32 %v2236, %v2271
    %v2280 = vmul.f32 %v2238, %v2272
    %v2281 = vmul.f32 %v2240, %v2273
    %v2282 = vmul.f32 %v2242, %v2274
    %v2284 = vsel %vm795, %v2275, 0
    %v2287 = vsel %vm795, %v2276, 0
    %v2290 = vsel %vm795, %v2277, 0
    %v2293 = vsel %vm795, %v2278, 0
    %v2296 = vsel %vm795, %v2279, 0
    %v2299 = vsel %vm795, %v2280, 0
    %v2302 = vsel %vm795, %v2281, 0
    %v2305 = vsel %vm795, %v2282, 0
    %2307 = vmatpush.msra.mxu0 0.0
    %2308 = vmatpush.msra.mxu0 0.0
    %2309 = vmatpush.msra.mxu0 0.0
    %2310 = vmatpush.msra.mxu0 0.0
    %2311 = vmatpush.msra.mxu0 0.0
    %2312 = vmatpush.msra.mxu0 0.0
    %2313 = vmatpush.msra.mxu0 0.0
    %2314 = vmatpush.msra.mxu0 0.0
    %2315 = vmatpush.msra.mxu0 %v695
    %2316 = vmatpush.msra.mxu0 %v692
    %2317 = vmatpush.msra.mxu0 %v689
    %2318 = vmatpush.msra.mxu0 %v686
    %2319 = vmatpush.msra.mxu0 %v683
    %2320 = vmatpush.msra.mxu0 %v680
    %2321 = vmatpush.msra.mxu0 %v677
    %2322 = vmatpush.msra.mxu0 %v674
    %2323 = vmatmul.f32.gmra.mxu0 %v2284
    %v2324 = vpop.f32.mrf.mxu0
    %v2325 = vadd.f32 0.0, %v2324
    %2326 = vmatmul.f32.gmra.mxu0 %v2287
    %v2327 = vpop.f32.mrf.mxu0
    %v2328 = vadd.f32 0.0, %v2327
    %2329 = vmatmul.f32.gmra.mxu0 %v2290
    %v2330 = vpop.f32.mrf.mxu0
    %v2331 = vadd.f32 0.0, %v2330
    %2332 = vmatmul.f32.gmra.mxu0 %v2293
    %v2333 = vpop.f32.mrf.mxu0
    %v2334 = vadd.f32 0.0, %v2333
    %2335 = vmatmul.f32.gmra.mxu0 %v2296
    %v2336 = vpop.f32.mrf.mxu0
    %v2337 = vadd.f32 0.0, %v2336
    %2338 = vmatmul.f32.gmra.mxu0 %v2299
    %v2339 = vpop.f32.mrf.mxu0
    %v2340 = vadd.f32 0.0, %v2339
    %2341 = vmatmul.f32.gmra.mxu0 %v2302
    %v2342 = vpop.f32.mrf.mxu0
    %v2343 = vadd.f32 0.0, %v2342
    %2344 = vmatmul.f32.gmra.mxu0 %v2305
    %v2345 = vpop.f32.mrf.mxu0
    %v2346 = vadd.f32 0.0, %v2345
    %2347 = vdwg.mxu0
    %2348 = vrot.lane.b32.xlu0 %v553, 120
    %v2349 = vpop.permute.xlu0 %2348
    %2350 = vrot.lane.b32.xlu0 %v556, 120
    %v2351 = vpop.permute.xlu0 %2350
    %2352 = vrot.lane.b32.xlu0 %v559, 120
    %v2353 = vpop.permute.xlu0 %2352
    %2354 = vrot.lane.b32.xlu0 %v562, 120
    %v2355 = vpop.permute.xlu0 %2354
    %2356 = vrot.lane.b32.xlu0 %v565, 120
    %v2357 = vpop.permute.xlu0 %2356
    %2358 = vrot.lane.b32.xlu0 %v568, 120
    %v2359 = vpop.permute.xlu0 %2358
    %2360 = vrot.lane.b32.xlu0 %v571, 120
    %v2361 = vpop.permute.xlu0 %2360
    %2362 = vrot.lane.b32.xlu0 %v574, 120
    %v2363 = vpop.permute.xlu0 %2362
    %2364 = vrot.lane.b32.xlu0 %v553, 88
    %v2365 = vpop.permute.xlu0 %2364
    %2366 = vrot.lane.b32.xlu0 %v556, 88
    %v2367 = vpop.permute.xlu0 %2366
    %2368 = vrot.lane.b32.xlu0 %v559, 88
    %v2369 = vpop.permute.xlu0 %2368
    %2370 = vrot.lane.b32.xlu0 %v562, 88
    %v2371 = vpop.permute.xlu0 %2370
    %2372 = vrot.lane.b32.xlu0 %v565, 88
    %v2373 = vpop.permute.xlu0 %2372
    %2374 = vrot.lane.b32.xlu0 %v568, 88
    %v2375 = vpop.permute.xlu0 %2374
    %2376 = vrot.lane.b32.xlu0 %v571, 88
    %v2377 = vpop.permute.xlu0 %2376
    %2378 = vrot.lane.b32.xlu0 %v574, 88
    %v2379 = vpop.permute.xlu0 %2378
    %v2380 = vsel %vm721, %v2349, 0
    %v2382 = vsel %vm721, %v2351, 0
    %v2384 = vsel %vm721, %v2353, 0
    %v2386 = vsel %vm721, %v2355, 0
    %v2388 = vsel %vm721, %v2357, 0
    %v2390 = vsel %vm721, %v2359, 0
    %v2392 = vsel %vm721, %v2361, 0
    %v2394 = vsel %vm721, %v2363, 0
    %v2396 = vsel %vm721, %v2365, 0
    %v2398 = vsel %vm721, %v2367, 0
    %v2400 = vsel %vm721, %v2369, 0
    %v2402 = vsel %vm721, %v2371, 0
    %v2404 = vsel %vm721, %v2373, 0
    %v2406 = vsel %vm721, %v2375, 0
    %v2408 = vsel %vm721, %v2377, 0
    %v2410 = vsel %vm721, %v2379, 0
    %2412 = vmatpush.xpose.msra.mxu0 0.0
    %2413 = vmatpush.xpose.msra.mxu0 0.0
    %2414 = vmatpush.xpose.msra.mxu0 0.0
    %2415 = vmatpush.xpose.msra.mxu0 0.0
    %2416 = vmatpush.xpose.msra.mxu0 0.0
    %2417 = vmatpush.xpose.msra.mxu0 0.0
    %2418 = vmatpush.xpose.msra.mxu0 0.0
    %2419 = vmatpush.xpose.msra.mxu0 0.0
    %2420 = vmatpush.xpose.msra.mxu0 %v2410
    %2421 = vmatpush.xpose.msra.mxu0 %v2408
    %2422 = vmatpush.xpose.msra.mxu0 %v2406
    %2423 = vmatpush.xpose.msra.mxu0 %v2404
    %2424 = vmatpush.xpose.msra.mxu0 %v2402
    %2425 = vmatpush.xpose.msra.mxu0 %v2400
    %2426 = vmatpush.xpose.msra.mxu0 %v2398
    %2427 = vmatpush.xpose.msra.mxu0 %v2396
    %2428 = vmatmul.f32.gmra.mxu0 %v2380
    %v2429 = vpop.f32.mrf.mxu0
    %v2430 = vadd.f32 0.0, %v2429
    %2431 = vmatmul.f32.gmra.mxu0 %v2382
    %v2432 = vpop.f32.mrf.mxu0
    %v2433 = vadd.f32 0.0, %v2432
    %2434 = vmatmul.f32.gmra.mxu0 %v2384
    %v2435 = vpop.f32.mrf.mxu0
    %v2436 = vadd.f32 0.0, %v2435
    %2437 = vmatmul.f32.gmra.mxu0 %v2386
    %v2438 = vpop.f32.mrf.mxu0
    %v2439 = vadd.f32 0.0, %v2438
    %2440 = vmatmul.f32.gmra.mxu0 %v2388
    %v2441 = vpop.f32.mrf.mxu0
    %v2442 = vadd.f32 0.0, %v2441
    %2443 = vmatmul.f32.gmra.mxu0 %v2390
    %v2444 = vpop.f32.mrf.mxu0
    %v2445 = vadd.f32 0.0, %v2444
    %2446 = vmatmul.f32.gmra.mxu0 %v2392
    %v2447 = vpop.f32.mrf.mxu0
    %v2448 = vadd.f32 0.0, %v2447
    %2449 = vmatmul.f32.gmra.mxu0 %v2394
    %v2450 = vpop.f32.mrf.mxu0
    %v2451 = vadd.f32 0.0, %v2450
    %2452 = vdwg.mxu0
    %v2453 = vsel %vm795, %v2430, -inf
    %2454 = vmax.xlane.f32.xlu0 %v2453
    %v2455 = vpop.xlane.xlu0 %2454
    %v2456 = vsel %vm795, %v2433, -inf
    %2457 = vmax.xlane.f32.xlu0 %v2456
    %v2458 = vpop.xlane.xlu0 %2457
    %v2459 = vsel %vm795, %v2436, -inf
    %2460 = vmax.xlane.f32.xlu0 %v2459
    %v2461 = vpop.xlane.xlu0 %2460
    %v2462 = vsel %vm795, %v2439, -inf
    %2463 = vmax.xlane.f32.xlu0 %v2462
    %v2464 = vpop.xlane.xlu0 %2463
    %v2465 = vsel %vm795, %v2442, -inf
    %2466 = vmax.xlane.f32.xlu0 %v2465
    %v2467 = vpop.xlane.xlu0 %2466
    %v2468 = vsel %vm795, %v2445, -inf
    %2469 = vmax.xlane.f32.xlu0 %v2468
    %v2470 = vpop.xlane.xlu0 %2469
    %v2471 = vsel %vm795, %v2448, -inf
    %2472 = vmax.xlane.f32.xlu0 %v2471
    %v2473 = vpop.xlane.xlu0 %2472
    %v2474 = vsel %vm795, %v2451, -inf
    %2475 = vmax.xlane.f32.xlu0 %v2474
    %v2476 = vpop.xlane.xlu0 %2475
    %v2477 = vsub.f32 %v2430, %v2455
    %v2478 = vsub.f32 %v2433, %v2458
    %v2479 = vsub.f32 %v2436, %v2461
    %v2480 = vsub.f32 %v2439, %v2464
    %v2481 = vsub.f32 %v2442, %v2467
    %v2482 = vsub.f32 %v2445, %v2470
    %v2483 = vsub.f32 %v2448, %v2473
    %v2484 = vsub.f32 %v2451, %v2476
    %v2485 = vmul.f32 %v2477, 1.442695
    %v2486 = vpow.pop %v2485
    %v2487 = vmul.f32 %v2478, 1.442695
    %v2488 = vpow.pop %v2487
    %v2489 = vmul.f32 %v2479, 1.442695
    %v2490 = vpow.pop %v2489
    %v2491 = vmul.f32 %v2480, 1.442695
    %v2492 = vpow.pop %v2491
    %v2493 = vmul.f32 %v2481, 1.442695
    %v2494 = vpow.pop %v2493
    %v2495 = vmul.f32 %v2482, 1.442695
    %v2496 = vpow.pop %v2495
    %v2497 = vmul.f32 %v2483, 1.442695
    %v2498 = vpow.pop %v2497
    %v2499 = vmul.f32 %v2484, 1.442695
    %v2500 = vpow.pop %v2499
    %v2501 = vsel %vm795, %v2486, 0.0
    %2502 = vadd.xlane.f32.xlu0 %v2501
    %v2503 = vpop.xlane.xlu0 %2502
    %v2504 = vsel %vm795, %v2488, 0.0
    %2505 = vadd.xlane.f32.xlu0 %v2504
    %v2506 = vpop.xlane.xlu0 %2505
    %v2507 = vsel %vm795, %v2490, 0.0
    %2508 = vadd.xlane.f32.xlu0 %v2507
    %v2509 = vpop.xlane.xlu0 %2508
    %v2510 = vsel %vm795, %v2492, 0.0
    %2511 = vadd.xlane.f32.xlu0 %v2510
    %v2512 = vpop.xlane.xlu0 %2511
    %v2513 = vsel %vm795, %v2494, 0.0
    %2514 = vadd.xlane.f32.xlu0 %v2513
    %v2515 = vpop.xlane.xlu0 %2514
    %v2516 = vsel %vm795, %v2496, 0.0
    %2517 = vadd.xlane.f32.xlu0 %v2516
    %v2518 = vpop.xlane.xlu0 %2517
    %v2519 = vsel %vm795, %v2498, 0.0
    %2520 = vadd.xlane.f32.xlu0 %v2519
    %v2521 = vpop.xlane.xlu0 %2520
    %v2522 = vsel %vm795, %v2500, 0.0
    %2523 = vadd.xlane.f32.xlu0 %v2522
    %v2524 = vpop.xlane.xlu0 %2523
    %v2525 = vrcp.pop %v2503
    %v2526 = vrcp.pop %v2506
    %v2527 = vrcp.pop %v2509
    %v2528 = vrcp.pop %v2512
    %v2529 = vrcp.pop %v2515
    %v2530 = vrcp.pop %v2518
    %v2531 = vrcp.pop %v2521
    %v2532 = vrcp.pop %v2524
    %v2533 = vmul.f32 %v2486, %v2525
    %v2534 = vmul.f32 %v2488, %v2526
    %v2535 = vmul.f32 %v2490, %v2527
    %v2536 = vmul.f32 %v2492, %v2528
    %v2537 = vmul.f32 %v2494, %v2529
    %v2538 = vmul.f32 %v2496, %v2530
    %v2539 = vmul.f32 %v2498, %v2531
    %v2540 = vmul.f32 %v2500, %v2532
    %2549 = vrot.lane.b32.xlu0 %v674, 120
    %v2550 = vpop.permute.xlu0 %2549
    %2551 = vrot.lane.b32.xlu0 %v677, 120
    %v2552 = vpop.permute.xlu0 %2551
    %2553 = vrot.lane.b32.xlu0 %v680, 120
    %v2554 = vpop.permute.xlu0 %2553
    %2555 = vrot.lane.b32.xlu0 %v683, 120
    %v2556 = vpop.permute.xlu0 %2555
    %2557 = vrot.lane.b32.xlu0 %v686, 120
    %v2558 = vpop.permute.xlu0 %2557
    %2559 = vrot.lane.b32.xlu0 %v689, 120
    %v2560 = vpop.permute.xlu0 %2559
    %2561 = vrot.lane.b32.xlu0 %v692, 120
    %v2562 = vpop.permute.xlu0 %2561
    %2563 = vrot.lane.b32.xlu0 %v695, 120
    %v2564 = vpop.permute.xlu0 %2563
    %v2574 = vsel %vm795, %v2533, 0
    %v2577 = vsel %vm795, %v2534, 0
    %v2580 = vsel %vm795, %v2535, 0
    %v2583 = vsel %vm795, %v2536, 0
    %v2586 = vsel %vm795, %v2537, 0
    %v2589 = vsel %vm795, %v2538, 0
    %v2592 = vsel %vm795, %v2539, 0
    %v2595 = vsel %vm795, %v2540, 0
    %2597 = vmatpush.msra.mxu0 0.0
    %2598 = vmatpush.msra.mxu0 0.0
    %2599 = vmatpush.msra.mxu0 0.0
    %2600 = vmatpush.msra.mxu0 0.0
    %2601 = vmatpush.msra.mxu0 0.0
    %2602 = vmatpush.msra.mxu0 0.0
    %2603 = vmatpush.msra.mxu0 0.0
    %2604 = vmatpush.msra.mxu0 0.0
    %2605 = vmatpush.msra.mxu0 %v2564
    %2606 = vmatpush.msra.mxu0 %v2562
    %2607 = vmatpush.msra.mxu0 %v2560
    %2608 = vmatpush.msra.mxu0 %v2558
    %2609 = vmatpush.msra.mxu0 %v2556
    %2610 = vmatpush.msra.mxu0 %v2554
    %2611 = vmatpush.msra.mxu0 %v2552
    %2612 = vmatpush.msra.mxu0 %v2550
    %2613 = vmatmul.f32.gmra.mxu0 %v2574
    %v2614 = vpop.f32.mrf.mxu0
    %v2615 = vadd.f32 0.0, %v2614
    %2616 = vmatmul.f32.gmra.mxu0 %v2577
    %v2617 = vpop.f32.mrf.mxu0
    %v2618 = vadd.f32 0.0, %v2617
    %2619 = vmatmul.f32.gmra.mxu0 %v2580
    %v2620 = vpop.f32.mrf.mxu0
    %v2621 = vadd.f32 0.0, %v2620
    %2622 = vmatmul.f32.gmra.mxu0 %v2583
    %v2623 = vpop.f32.mrf.mxu0
    %v2624 = vadd.f32 0.0, %v2623
    %2625 = vmatmul.f32.gmra.mxu0 %v2586
    %v2626 = vpop.f32.mrf.mxu0
    %v2627 = vadd.f32 0.0, %v2626
    %2628 = vmatmul.f32.gmra.mxu0 %v2589
    %v2629 = vpop.f32.mrf.mxu0
    %v2630 = vadd.f32 0.0, %v2629
    %2631 = vmatmul.f32.gmra.mxu0 %v2592
    %v2632 = vpop.f32.mrf.mxu0
    %v2633 = vadd.f32 0.0, %v2632
    %2634 = vmatmul.f32.gmra.mxu0 %v2595
    %v2635 = vpop.f32.mrf.mxu0
    %v2636 = vadd.f32 0.0, %v2635
    %2637 = vdwg.mxu0
    %v2639 = vsel %vm721, %v2615, 0
    %v2642 = vsel %vm721, %v2618, 0
    %v2645 = vsel %vm721, %v2621, 0
    %v2648 = vsel %vm721, %v2624, 0
    %v2651 = vsel %vm721, %v2627, 0
    %v2654 = vsel %vm721, %v2630, 0
    %v2657 = vsel %vm721, %v2633, 0
    %v2660 = vsel %vm721, %v2636, 0
    %2662 = vmatpush.msra.mxu0 0.0
    %2663 = vmatpush.msra.mxu0 0.0
    %2664 = vmatpush.msra.mxu0 0.0
    %2665 = vmatpush.msra.mxu0 0.0
    %2666 = vmatpush.msra.mxu0 0.0
    %2667 = vmatpush.msra.mxu0 0.0
    %2668 = vmatpush.msra.mxu0 0.0
    %2669 = vmatpush.msra.mxu0 0.0
    %2670 = vmatpush.msra.mxu0 0.0
    %2671 = vmatpush.msra.mxu0 0.0
    %2672 = vmatpush.msra.mxu0 0.0
    %2673 = vmatpush.msra.mxu0 0.0
    %2674 = vmatpush.msra.mxu0 0.0
    %2675 = vmatpush.msra.mxu0 0.0
    %2676 = vmatpush.msra.mxu0 0.0
    %2677 = vmatpush.msra.mxu0 %v1241
    %2678 = vmatmul.f32.gmra.mxu0 %v2639
    %v2679 = vpop.f32.mrf.mxu0
    %v2680 = vadd.f32 0.0, %v2679
    %2681 = vmatmul.f32.gmra.mxu0 %v2642
    %v2682 = vpop.f32.mrf.mxu0
    %v2683 = vadd.f32 0.0, %v2682
    %2684 = vmatmul.f32.gmra.mxu0 %v2645
    %v2685 = vpop.f32.mrf.mxu0
    %v2686 = vadd.f32 0.0, %v2685
    %2687 = vmatmul.f32.gmra.mxu0 %v2648
    %v2688 = vpop.f32.mrf.mxu0
    %v2689 = vadd.f32 0.0, %v2688
    %2690 = vmatmul.f32.gmra.mxu0 %v2651
    %v2691 = vpop.f32.mrf.mxu0
    %v2692 = vadd.f32 0.0, %v2691
    %2693 = vmatmul.f32.gmra.mxu0 %v2654
    %v2694 = vpop.f32.mrf.mxu0
    %v2695 = vadd.f32 0.0, %v2694
    %2696 = vmatmul.f32.gmra.mxu0 %v2657
    %v2697 = vpop.f32.mrf.mxu0
    %v2698 = vadd.f32 0.0, %v2697
    %2699 = vmatmul.f32.gmra.mxu0 %v2660
    %v2700 = vpop.f32.mrf.mxu0
    %v2701 = vadd.f32 0.0, %v2700
    %2702 = vdwg.mxu0
    %v2704 = vsel %vm721, %v2325, 0
    %v2707 = vsel %vm721, %v2328, 0
    %v2710 = vsel %vm721, %v2331, 0
    %v2713 = vsel %vm721, %v2334, 0
    %v2716 = vsel %vm721, %v2337, 0
    %v2719 = vsel %vm721, %v2340, 0
    %v2722 = vsel %vm721, %v2343, 0
    %v2725 = vsel %vm721, %v2346, 0
    %2727 = vmatpush.msra.mxu0 0.0
    %2728 = vmatpush.msra.mxu0 0.0
    %2729 = vmatpush.msra.mxu0 0.0
    %2730 = vmatpush.msra.mxu0 0.0
    %2731 = vmatpush.msra.mxu0 0.0
    %2732 = vmatpush.msra.mxu0 0.0
    %2733 = vmatpush.msra.mxu0 0.0
    %2734 = vmatpush.msra.mxu0 0.0
    %2735 = vmatpush.msra.mxu0 0.0
    %2736 = vmatpush.msra.mxu0 0.0
    %2737 = vmatpush.msra.mxu0 0.0
    %2738 = vmatpush.msra.mxu0 0.0
    %2739 = vmatpush.msra.mxu0 0.0
    %2740 = vmatpush.msra.mxu0 0.0
    %2741 = vmatpush.msra.mxu0 0.0
    %2742 = vmatpush.msra.mxu0 %v949
    %2743 = vmatmul.f32.gmra.mxu0 %v2704
    %v2744 = vpop.f32.mrf.mxu0
    %v2745 = vadd.f32 %v2680, %v2744
    %2746 = vmatmul.f32.gmra.mxu0 %v2707
    %v2747 = vpop.f32.mrf.mxu0
    %v2748 = vadd.f32 %v2683, %v2747
    %2749 = vmatmul.f32.gmra.mxu0 %v2710
    %v2750 = vpop.f32.mrf.mxu0
    %v2751 = vadd.f32 %v2686, %v2750
    %2752 = vmatmul.f32.gmra.mxu0 %v2713
    %v2753 = vpop.f32.mrf.mxu0
    %v2754 = vadd.f32 %v2689, %v2753
    %2755 = vmatmul.f32.gmra.mxu0 %v2716
    %v2756 = vpop.f32.mrf.mxu0
    %v2757 = vadd.f32 %v2692, %v2756
    %2758 = vmatmul.f32.gmra.mxu0 %v2719
    %v2759 = vpop.f32.mrf.mxu0
    %v2760 = vadd.f32 %v2695, %v2759
    %2761 = vmatmul.f32.gmra.mxu0 %v2722
    %v2762 = vpop.f32.mrf.mxu0
    %v2763 = vadd.f32 %v2698, %v2762
    %2764 = vmatmul.f32.gmra.mxu0 %v2725
    %v2765 = vpop.f32.mrf.mxu0
    %v2766 = vadd.f32 %v2701, %v2765
    %2767 = vdwg.mxu0
    %2768 = vrot.lane.b32.xlu0 %v553, 112
    %v2769 = vpop.permute.xlu0 %2768
    %2770 = vrot.lane.b32.xlu0 %v556, 112
    %v2771 = vpop.permute.xlu0 %2770
    %2772 = vrot.lane.b32.xlu0 %v559, 112
    %v2773 = vpop.permute.xlu0 %2772
    %2774 = vrot.lane.b32.xlu0 %v562, 112
    %v2775 = vpop.permute.xlu0 %2774
    %2776 = vrot.lane.b32.xlu0 %v565, 112
    %v2777 = vpop.permute.xlu0 %2776
    %2778 = vrot.lane.b32.xlu0 %v568, 112
    %v2779 = vpop.permute.xlu0 %2778
    %2780 = vrot.lane.b32.xlu0 %v571, 112
    %v2781 = vpop.permute.xlu0 %2780
    %2782 = vrot.lane.b32.xlu0 %v574, 112
    %v2783 = vpop.permute.xlu0 %2782
    %2784 = vrot.lane.b32.xlu0 %v553, 80
    %v2785 = vpop.permute.xlu0 %2784
    %2786 = vrot.lane.b32.xlu0 %v556, 80
    %v2787 = vpop.permute.xlu0 %2786
    %2788 = vrot.lane.b32.xlu0 %v559, 80
    %v2789 = vpop.permute.xlu0 %2788
    %2790 = vrot.lane.b32.xlu0 %v562, 80
    %v2791 = vpop.permute.xlu0 %2790
    %2792 = vrot.lane.b32.xlu0 %v565, 80
    %v2793 = vpop.permute.xlu0 %2792
    %2794 = vrot.lane.b32.xlu0 %v568, 80
    %v2795 = vpop.permute.xlu0 %2794
    %2796 = vrot.lane.b32.xlu0 %v571, 80
    %v2797 = vpop.permute.xlu0 %2796
    %2798 = vrot.lane.b32.xlu0 %v574, 80
    %v2799 = vpop.permute.xlu0 %2798
    %v2800 = vsel %vm721, %v2769, 0
    %v2802 = vsel %vm721, %v2771, 0
    %v2804 = vsel %vm721, %v2773, 0
    %v2806 = vsel %vm721, %v2775, 0
    %v2808 = vsel %vm721, %v2777, 0
    %v2810 = vsel %vm721, %v2779, 0
    %v2812 = vsel %vm721, %v2781, 0
    %v2814 = vsel %vm721, %v2783, 0
    %v2816 = vsel %vm721, %v2785, 0
    %v2818 = vsel %vm721, %v2787, 0
    %v2820 = vsel %vm721, %v2789, 0
    %v2822 = vsel %vm721, %v2791, 0
    %v2824 = vsel %vm721, %v2793, 0
    %v2826 = vsel %vm721, %v2795, 0
    %v2828 = vsel %vm721, %v2797, 0
    %v2830 = vsel %vm721, %v2799, 0
    %2832 = vmatpush.xpose.msra.mxu0 0.0
    %2833 = vmatpush.xpose.msra.mxu0 0.0
    %2834 = vmatpush.xpose.msra.mxu0 0.0
    %2835 = vmatpush.xpose.msra.mxu0 0.0
    %2836 = vmatpush.xpose.msra.mxu0 0.0
    %2837 = vmatpush.xpose.msra.mxu0 0.0
    %2838 = vmatpush.xpose.msra.mxu0 0.0
    %2839 = vmatpush.xpose.msra.mxu0 0.0
    %2840 = vmatpush.xpose.msra.mxu0 %v2830
    %2841 = vmatpush.xpose.msra.mxu0 %v2828
    %2842 = vmatpush.xpose.msra.mxu0 %v2826
    %2843 = vmatpush.xpose.msra.mxu0 %v2824
    %2844 = vmatpush.xpose.msra.mxu0 %v2822
    %2845 = vmatpush.xpose.msra.mxu0 %v2820
    %2846 = vmatpush.xpose.msra.mxu0 %v2818
    %2847 = vmatpush.xpose.msra.mxu0 %v2816
    %2848 = vmatmul.f32.gmra.mxu0 %v2800
    %v2849 = vpop.f32.mrf.mxu0
    %v2850 = vadd.f32 0.0, %v2849
    %2851 = vmatmul.f32.gmra.mxu0 %v2802
    %v2852 = vpop.f32.mrf.mxu0
    %v2853 = vadd.f32 0.0, %v2852
    %2854 = vmatmul.f32.gmra.mxu0 %v2804
    %v2855 = vpop.f32.mrf.mxu0
    %v2856 = vadd.f32 0.0, %v2855
    %2857 = vmatmul.f32.gmra.mxu0 %v2806
    %v2858 = vpop.f32.mrf.mxu0
    %v2859 = vadd.f32 0.0, %v2858
    %2860 = vmatmul.f32.gmra.mxu0 %v2808
    %v2861 = vpop.f32.mrf.mxu0
    %v2862 = vadd.f32 0.0, %v2861
    %2863 = vmatmul.f32.gmra.mxu0 %v2810
    %v2864 = vpop.f32.mrf.mxu0
    %v2865 = vadd.f32 0.0, %v2864
    %2866 = vmatmul.f32.gmra.mxu0 %v2812
    %v2867 = vpop.f32.mrf.mxu0
    %v2868 = vadd.f32 0.0, %v2867
    %2869 = vmatmul.f32.gmra.mxu0 %v2814
    %v2870 = vpop.f32.mrf.mxu0
    %v2871 = vadd.f32 0.0, %v2870
    %2872 = vdwg.mxu0
    %v2873 = vsel %vm795, %v2850, -inf
    %2874 = vmax.xlane.f32.xlu0 %v2873
    %v2875 = vpop.xlane.xlu0 %2874
    %v2876 = vsel %vm795, %v2853, -inf
    %2877 = vmax.xlane.f32.xlu0 %v2876
    %v2878 = vpop.xlane.xlu0 %2877
    %v2879 = vsel %vm795, %v2856, -inf
    %2880 = vmax.xlane.f32.xlu0 %v2879
    %v2881 = vpop.xlane.xlu0 %2880
    %v2882 = vsel %vm795, %v2859, -inf
    %2883 = vmax.xlane.f32.xlu0 %v2882
    %v2884 = vpop.xlane.xlu0 %2883
    %v2885 = vsel %vm795, %v2862, -inf
    %2886 = vmax.xlane.f32.xlu0 %v2885
    %v2887 = vpop.xlane.xlu0 %2886
    %v2888 = vsel %vm795, %v2865, -inf
    %2889 = vmax.xlane.f32.xlu0 %v2888
    %v2890 = vpop.xlane.xlu0 %2889
    %v2891 = vsel %vm795, %v2868, -inf
    %2892 = vmax.xlane.f32.xlu0 %v2891
    %v2893 = vpop.xlane.xlu0 %2892
    %v2894 = vsel %vm795, %v2871, -inf
    %2895 = vmax.xlane.f32.xlu0 %v2894
    %v2896 = vpop.xlane.xlu0 %2895
    %v2897 = vsub.f32 %v2850, %v2875
    %v2898 = vsub.f32 %v2853, %v2878
    %v2899 = vsub.f32 %v2856, %v2881
    %v2900 = vsub.f32 %v2859, %v2884
    %v2901 = vsub.f32 %v2862, %v2887
    %v2902 = vsub.f32 %v2865, %v2890
    %v2903 = vsub.f32 %v2868, %v2893
    %v2904 = vsub.f32 %v2871, %v2896
    %v2905 = vmul.f32 %v2897, 1.442695
    %v2906 = vpow.pop %v2905
    %v2907 = vmul.f32 %v2898, 1.442695
    %v2908 = vpow.pop %v2907
    %v2909 = vmul.f32 %v2899, 1.442695
    %v2910 = vpow.pop %v2909
    %v2911 = vmul.f32 %v2900, 1.442695
    %v2912 = vpow.pop %v2911
    %v2913 = vmul.f32 %v2901, 1.442695
    %v2914 = vpow.pop %v2913
    %v2915 = vmul.f32 %v2902, 1.442695
    %v2916 = vpow.pop %v2915
    %v2917 = vmul.f32 %v2903, 1.442695
    %v2918 = vpow.pop %v2917
    %v2919 = vmul.f32 %v2904, 1.442695
    %v2920 = vpow.pop %v2919
    %v2921 = vsel %vm795, %v2906, 0.0
    %2922 = vadd.xlane.f32.xlu0 %v2921
    %v2923 = vpop.xlane.xlu0 %2922
    %v2924 = vsel %vm795, %v2908, 0.0
    %2925 = vadd.xlane.f32.xlu0 %v2924
    %v2926 = vpop.xlane.xlu0 %2925
    %v2927 = vsel %vm795, %v2910, 0.0
    %2928 = vadd.xlane.f32.xlu0 %v2927
    %v2929 = vpop.xlane.xlu0 %2928
    %v2930 = vsel %vm795, %v2912, 0.0
    %2931 = vadd.xlane.f32.xlu0 %v2930
    %v2932 = vpop.xlane.xlu0 %2931
    %v2933 = vsel %vm795, %v2914, 0.0
    %2934 = vadd.xlane.f32.xlu0 %v2933
    %v2935 = vpop.xlane.xlu0 %2934
    %v2936 = vsel %vm795, %v2916, 0.0
    %2937 = vadd.xlane.f32.xlu0 %v2936
    %v2938 = vpop.xlane.xlu0 %2937
    %v2939 = vsel %vm795, %v2918, 0.0
    %2940 = vadd.xlane.f32.xlu0 %v2939
    %v2941 = vpop.xlane.xlu0 %2940
    %v2942 = vsel %vm795, %v2920, 0.0
    %2943 = vadd.xlane.f32.xlu0 %v2942
    %v2944 = vpop.xlane.xlu0 %2943
    %v2945 = vrcp.pop %v2923
    %v2946 = vrcp.pop %v2926
    %v2947 = vrcp.pop %v2929
    %v2948 = vrcp.pop %v2932
    %v2949 = vrcp.pop %v2935
    %v2950 = vrcp.pop %v2938
    %v2951 = vrcp.pop %v2941
    %v2952 = vrcp.pop %v2944
    %v2953 = vmul.f32 %v2906, %v2945
    %v2954 = vmul.f32 %v2908, %v2946
    %v2955 = vmul.f32 %v2910, %v2947
    %v2956 = vmul.f32 %v2912, %v2948
    %v2957 = vmul.f32 %v2914, %v2949
    %v2958 = vmul.f32 %v2916, %v2950
    %v2959 = vmul.f32 %v2918, %v2951
    %v2960 = vmul.f32 %v2920, %v2952
    %2961 = vrot.lane.b32.xlu0 %v674, 112
    %v2962 = vpop.permute.xlu0 %2961
    %2963 = vrot.lane.b32.xlu0 %v677, 112
    %v2964 = vpop.permute.xlu0 %2963
    %2965 = vrot.lane.b32.xlu0 %v680, 112
    %v2966 = vpop.permute.xlu0 %2965
    %2967 = vrot.lane.b32.xlu0 %v683, 112
    %v2968 = vpop.permute.xlu0 %2967
    %2969 = vrot.lane.b32.xlu0 %v686, 112
    %v2970 = vpop.permute.xlu0 %2969
    %2971 = vrot.lane.b32.xlu0 %v689, 112
    %v2972 = vpop.permute.xlu0 %2971
    %2973 = vrot.lane.b32.xlu0 %v692, 112
    %v2974 = vpop.permute.xlu0 %2973
    %2975 = vrot.lane.b32.xlu0 %v695, 112
    %v2976 = vpop.permute.xlu0 %2975
    %v2986 = vsel %vm795, %v2953, 0
    %v2989 = vsel %vm795, %v2954, 0
    %v2992 = vsel %vm795, %v2955, 0
    %v2995 = vsel %vm795, %v2956, 0
    %v2998 = vsel %vm795, %v2957, 0
    %v3001 = vsel %vm795, %v2958, 0
    %v3004 = vsel %vm795, %v2959, 0
    %v3007 = vsel %vm795, %v2960, 0
    %3009 = vmatpush.msra.mxu0 0.0
    %3010 = vmatpush.msra.mxu0 0.0
    %3011 = vmatpush.msra.mxu0 0.0
    %3012 = vmatpush.msra.mxu0 0.0
    %3013 = vmatpush.msra.mxu0 0.0
    %3014 = vmatpush.msra.mxu0 0.0
    %3015 = vmatpush.msra.mxu0 0.0
    %3016 = vmatpush.msra.mxu0 0.0
    %3017 = vmatpush.msra.mxu0 %v2976
    %3018 = vmatpush.msra.mxu0 %v2974
    %3019 = vmatpush.msra.mxu0 %v2972
    %3020 = vmatpush.msra.mxu0 %v2970
    %3021 = vmatpush.msra.mxu0 %v2968
    %3022 = vmatpush.msra.mxu0 %v2966
    %3023 = vmatpush.msra.mxu0 %v2964
    %3024 = vmatpush.msra.mxu0 %v2962
    %3025 = vmatmul.f32.gmra.mxu0 %v2986
    %v3026 = vpop.f32.mrf.mxu0
    %v3027 = vadd.f32 0.0, %v3026
    %3028 = vmatmul.f32.gmra.mxu0 %v2989
    %v3029 = vpop.f32.mrf.mxu0
    %v3030 = vadd.f32 0.0, %v3029
    %3031 = vmatmul.f32.gmra.mxu0 %v2992
    %v3032 = vpop.f32.mrf.mxu0
    %v3033 = vadd.f32 0.0, %v3032
    %3034 = vmatmul.f32.gmra.mxu0 %v2995
    %v3035 = vpop.f32.mrf.mxu0
    %v3036 = vadd.f32 0.0, %v3035
    %3037 = vmatmul.f32.gmra.mxu0 %v2998
    %v3038 = vpop.f32.mrf.mxu0
    %v3039 = vadd.f32 0.0, %v3038
    %3040 = vmatmul.f32.gmra.mxu0 %v3001
    %v3041 = vpop.f32.mrf.mxu0
    %v3042 = vadd.f32 0.0, %v3041
    %3043 = vmatmul.f32.gmra.mxu0 %v3004
    %v3044 = vpop.f32.mrf.mxu0
    %v3045 = vadd.f32 0.0, %v3044
    %3046 = vmatmul.f32.gmra.mxu0 %v3007
    %v3047 = vpop.f32.mrf.mxu0
    %v3048 = vadd.f32 0.0, %v3047
    %3049 = vdwg.mxu0
    %v3051 = vsel %vm721, %v3027, 0
    %v3054 = vsel %vm721, %v3030, 0
    %v3057 = vsel %vm721, %v3033, 0
    %v3060 = vsel %vm721, %v3036, 0
    %v3063 = vsel %vm721, %v3039, 0
    %v3066 = vsel %vm721, %v3042, 0
    %v3069 = vsel %vm721, %v3045, 0
    %v3072 = vsel %vm721, %v3048, 0
    %3074 = vmatpush.msra.mxu0 0.0
    %3075 = vmatpush.msra.mxu0 0.0
    %3076 = vmatpush.msra.mxu0 0.0
    %3077 = vmatpush.msra.mxu0 0.0
    %3078 = vmatpush.msra.mxu0 0.0
    %3079 = vmatpush.msra.mxu0 0.0
    %3080 = vmatpush.msra.mxu0 0.0
    %3081 = vmatpush.msra.mxu0 0.0
    %3082 = vmatpush.msra.mxu0 0.0
    %3083 = vmatpush.msra.mxu0 0.0
    %3084 = vmatpush.msra.mxu0 0.0
    %3085 = vmatpush.msra.mxu0 0.0
    %3086 = vmatpush.msra.mxu0 0.0
    %3087 = vmatpush.msra.mxu0 0.0
    %3088 = vmatpush.msra.mxu0 0.0
    %3089 = vmatpush.msra.mxu0 %v1655
    %3090 = vmatmul.f32.gmra.mxu0 %v3051
    %v3091 = vpop.f32.mrf.mxu0
    %v3092 = vadd.f32 0.0, %v3091
    %3093 = vmatmul.f32.gmra.mxu0 %v3054
    %v3094 = vpop.f32.mrf.mxu0
    %v3095 = vadd.f32 0.0, %v3094
    %3096 = vmatmul.f32.gmra.mxu0 %v3057
    %v3097 = vpop.f32.mrf.mxu0
    %v3098 = vadd.f32 0.0, %v3097
    %3099 = vmatmul.f32.gmra.mxu0 %v3060
    %v3100 = vpop.f32.mrf.mxu0
    %v3101 = vadd.f32 0.0, %v3100
    %3102 = vmatmul.f32.gmra.mxu0 %v3063
    %v3103 = vpop.f32.mrf.mxu0
    %v3104 = vadd.f32 0.0, %v3103
    %3105 = vmatmul.f32.gmra.mxu0 %v3066
    %v3106 = vpop.f32.mrf.mxu0
    %v3107 = vadd.f32 0.0, %v3106
    %3108 = vmatmul.f32.gmra.mxu0 %v3069
    %v3109 = vpop.f32.mrf.mxu0
    %v3110 = vadd.f32 0.0, %v3109
    %3111 = vmatmul.f32.gmra.mxu0 %v3072
    %v3112 = vpop.f32.mrf.mxu0
    %v3113 = vadd.f32 0.0, %v3112
    %3114 = vdwg.mxu0
    %v3115 = vadd.f32 %v2745, %v3092
    %v3116 = vadd.f32 %v2748, %v3095
    %v3117 = vadd.f32 %v2751, %v3098
    %v3118 = vadd.f32 %v2754, %v3101
    %v3119 = vadd.f32 %v2757, %v3104
    %v3120 = vadd.f32 %v2760, %v3107
    %v3121 = vadd.f32 %v2763, %v3110
    %v3122 = vadd.f32 %v2766, %v3113
    %3123 = vrot.lane.b32.xlu0 %v553, 104
    %v3124 = vpop.permute.xlu0 %3123
    %3125 = vrot.lane.b32.xlu0 %v556, 104
    %v3126 = vpop.permute.xlu0 %3125
    %3127 = vrot.lane.b32.xlu0 %v559, 104
    %v3128 = vpop.permute.xlu0 %3127
    %3129 = vrot.lane.b32.xlu0 %v562, 104
    %v3130 = vpop.permute.xlu0 %3129
    %3131 = vrot.lane.b32.xlu0 %v565, 104
    %v3132 = vpop.permute.xlu0 %3131
    %3133 = vrot.lane.b32.xlu0 %v568, 104
    %v3134 = vpop.permute.xlu0 %3133
    %3135 = vrot.lane.b32.xlu0 %v571, 104
    %v3136 = vpop.permute.xlu0 %3135
    %3137 = vrot.lane.b32.xlu0 %v574, 104
    %v3138 = vpop.permute.xlu0 %3137
    %3139 = vrot.lane.b32.xlu0 %v553, 72
    %v3140 = vpop.permute.xlu0 %3139
    %3141 = vrot.lane.b32.xlu0 %v556, 72
    %v3142 = vpop.permute.xlu0 %3141
    %3143 = vrot.lane.b32.xlu0 %v559, 72
    %v3144 = vpop.permute.xlu0 %3143
    %3145 = vrot.lane.b32.xlu0 %v562, 72
    %v3146 = vpop.permute.xlu0 %3145
    %3147 = vrot.lane.b32.xlu0 %v565, 72
    %v3148 = vpop.permute.xlu0 %3147
    %3149 = vrot.lane.b32.xlu0 %v568, 72
    %v3150 = vpop.permute.xlu0 %3149
    %3151 = vrot.lane.b32.xlu0 %v571, 72
    %v3152 = vpop.permute.xlu0 %3151
    %3153 = vrot.lane.b32.xlu0 %v574, 72
    %v3154 = vpop.permute.xlu0 %3153
    %v3155 = vsel %vm721, %v3124, 0
    %v3157 = vsel %vm721, %v3126, 0
    %v3159 = vsel %vm721, %v3128, 0
    %v3161 = vsel %vm721, %v3130, 0
    %v3163 = vsel %vm721, %v3132, 0
    %v3165 = vsel %vm721, %v3134, 0
    %v3167 = vsel %vm721, %v3136, 0
    %v3169 = vsel %vm721, %v3138, 0
    %v3171 = vsel %vm721, %v3140, 0
    %v3173 = vsel %vm721, %v3142, 0
    %v3175 = vsel %vm721, %v3144, 0
    %v3177 = vsel %vm721, %v3146, 0
    %v3179 = vsel %vm721, %v3148, 0
    %v3181 = vsel %vm721, %v3150, 0
    %v3183 = vsel %vm721, %v3152, 0
    %v3185 = vsel %vm721, %v3154, 0
    %3187 = vmatpush.xpose.msra.mxu0 0.0
    %3188 = vmatpush.xpose.msra.mxu0 0.0
    %3189 = vmatpush.xpose.msra.mxu0 0.0
    %3190 = vmatpush.xpose.msra.mxu0 0.0
    %3191 = vmatpush.xpose.msra.mxu0 0.0
    %3192 = vmatpush.xpose.msra.mxu0 0.0
    %3193 = vmatpush.xpose.msra.mxu0 0.0
    %3194 = vmatpush.xpose.msra.mxu0 0.0
    %3195 = vmatpush.xpose.msra.mxu0 %v3185
    %3196 = vmatpush.xpose.msra.mxu0 %v3183
    %3197 = vmatpush.xpose.msra.mxu0 %v3181
    %3198 = vmatpush.xpose.msra.mxu0 %v3179
    %3199 = vmatpush.xpose.msra.mxu0 %v3177
    %3200 = vmatpush.xpose.msra.mxu0 %v3175
    %3201 = vmatpush.xpose.msra.mxu0 %v3173
    %3202 = vmatpush.xpose.msra.mxu0 %v3171
    %3203 = vmatmul.f32.gmra.mxu0 %v3155
    %v3204 = vpop.f32.mrf.mxu0
    %v3205 = vadd.f32 0.0, %v3204
    %3206 = vmatmul.f32.gmra.mxu0 %v3157
    %v3207 = vpop.f32.mrf.mxu0
    %v3208 = vadd.f32 0.0, %v3207
    %3209 = vmatmul.f32.gmra.mxu0 %v3159
    %v3210 = vpop.f32.mrf.mxu0
    %v3211 = vadd.f32 0.0, %v3210
    %3212 = vmatmul.f32.gmra.mxu0 %v3161
    %v3213 = vpop.f32.mrf.mxu0
    %v3214 = vadd.f32 0.0, %v3213
    %3215 = vmatmul.f32.gmra.mxu0 %v3163
    %v3216 = vpop.f32.mrf.mxu0
    %v3217 = vadd.f32 0.0, %v3216
    %3218 = vmatmul.f32.gmra.mxu0 %v3165
    %v3219 = vpop.f32.mrf.mxu0
    %v3220 = vadd.f32 0.0, %v3219
    %3221 = vmatmul.f32.gmra.mxu0 %v3167
    %v3222 = vpop.f32.mrf.mxu0
    %v3223 = vadd.f32 0.0, %v3222
    %3224 = vmatmul.f32.gmra.mxu0 %v3169
    %v3225 = vpop.f32.mrf.mxu0
    %v3226 = vadd.f32 0.0, %v3225
    %3227 = vdwg.mxu0
    %v3228 = vsel %vm795, %v3205, -inf
    %3229 = vmax.xlane.f32.xlu0 %v3228
    %v3230 = vpop.xlane.xlu0 %3229
    %v3231 = vsel %vm795, %v3208, -inf
    %3232 = vmax.xlane.f32.xlu0 %v3231
    %v3233 = vpop.xlane.xlu0 %3232
    %v3234 = vsel %vm795, %v3211, -inf
    %3235 = vmax.xlane.f32.xlu0 %v3234
    %v3236 = vpop.xlane.xlu0 %3235
    %v3237 = vsel %vm795, %v3214, -inf
    %3238 = vmax.xlane.f32.xlu0 %v3237
    %v3239 = vpop.xlane.xlu0 %3238
    %v3240 = vsel %vm795, %v3217, -inf
    %3241 = vmax.xlane.f32.xlu0 %v3240
    %v3242 = vpop.xlane.xlu0 %3241
    %v3243 = vsel %vm795, %v3220, -inf
    %3244 = vmax.xlane.f32.xlu0 %v3243
    %v3245 = vpop.xlane.xlu0 %3244
    %v3246 = vsel %vm795, %v3223, -inf
    %3247 = vmax.xlane.f32.xlu0 %v3246
    %v3248 = vpop.xlane.xlu0 %3247
    %v3249 = vsel %vm795, %v3226, -inf
    %3250 = vmax.xlane.f32.xlu0 %v3249
    %v3251 = vpop.xlane.xlu0 %3250
    %v3252 = vsub.f32 %v3205, %v3230
    %v3253 = vsub.f32 %v3208, %v3233
    %v3254 = vsub.f32 %v3211, %v3236
    %v3255 = vsub.f32 %v3214, %v3239
    %v3256 = vsub.f32 %v3217, %v3242
    %v3257 = vsub.f32 %v3220, %v3245
    %v3258 = vsub.f32 %v3223, %v3248
    %v3259 = vsub.f32 %v3226, %v3251
    %v3260 = vmul.f32 %v3252, 1.442695
    %v3261 = vpow.pop %v3260
    %v3262 = vmul.f32 %v3253, 1.442695
    %v3263 = vpow.pop %v3262
    %v3264 = vmul.f32 %v3254, 1.442695
    %v3265 = vpow.pop %v3264
    %v3266 = vmul.f32 %v3255, 1.442695
    %v3267 = vpow.pop %v3266
    %v3268 = vmul.f32 %v3256, 1.442695
    %v3269 = vpow.pop %v3268
    %v3270 = vmul.f32 %v3257, 1.442695
    %v3271 = vpow.pop %v3270
    %v3272 = vmul.f32 %v3258, 1.442695
    %v3273 = vpow.pop %v3272
    %v3274 = vmul.f32 %v3259, 1.442695
    %v3275 = vpow.pop %v3274
    %v3276 = vsel %vm795, %v3261, 0.0
    %3277 = vadd.xlane.f32.xlu0 %v3276
    %v3278 = vpop.xlane.xlu0 %3277
    %v3279 = vsel %vm795, %v3263, 0.0
    %3280 = vadd.xlane.f32.xlu0 %v3279
    %v3281 = vpop.xlane.xlu0 %3280
    %v3282 = vsel %vm795, %v3265, 0.0
    %3283 = vadd.xlane.f32.xlu0 %v3282
    %v3284 = vpop.xlane.xlu0 %3283
    %v3285 = vsel %vm795, %v3267, 0.0
    %3286 = vadd.xlane.f32.xlu0 %v3285
    %v3287 = vpop.xlane.xlu0 %3286
    %v3288 = vsel %vm795, %v3269, 0.0
    %3289 = vadd.xlane.f32.xlu0 %v3288
    %v3290 = vpop.xlane.xlu0 %3289
    %v3291 = vsel %vm795, %v3271, 0.0
    %3292 = vadd.xlane.f32.xlu0 %v3291
    %v3293 = vpop.xlane.xlu0 %3292
    %v3294 = vsel %vm795, %v3273, 0.0
    %3295 = vadd.xlane.f32.xlu0 %v3294
    %v3296 = vpop.xlane.xlu0 %3295
    %v3297 = vsel %vm795, %v3275, 0.0
    %3298 = vadd.xlane.f32.xlu0 %v3297
    %v3299 = vpop.xlane.xlu0 %3298
    %v3300 = vrcp.pop %v3278
    %v3301 = vrcp.pop %v3281
    %v3302 = vrcp.pop %v3284
    %v3303 = vrcp.pop %v3287
    %v3304 = vrcp.pop %v3290
    %v3305 = vrcp.pop %v3293
    %v3306 = vrcp.pop %v3296
    %v3307 = vrcp.pop %v3299
    %v3308 = vmul.f32 %v3261, %v3300
    %v3309 = vmul.f32 %v3263, %v3301
    %v3310 = vmul.f32 %v3265, %v3302
    %v3311 = vmul.f32 %v3267, %v3303
    %v3312 = vmul.f32 %v3269, %v3304
    %v3313 = vmul.f32 %v3271, %v3305
    %v3314 = vmul.f32 %v3273, %v3306
    %v3315 = vmul.f32 %v3275, %v3307
    %3316 = vrot.lane.b32.xlu0 %v674, 104
    %v3317 = vpop.permute.xlu0 %3316
    %3318 = vrot.lane.b32.xlu0 %v677, 104
    %v3319 = vpop.permute.xlu0 %3318
    %3320 = vrot.lane.b32.xlu0 %v680, 104
    %v3321 = vpop.permute.xlu0 %3320
    %3322 = vrot.lane.b32.xlu0 %v683, 104
    %v3323 = vpop.permute.xlu0 %3322
    %3324 = vrot.lane.b32.xlu0 %v686, 104
    %v3325 = vpop.permute.xlu0 %3324
    %3326 = vrot.lane.b32.xlu0 %v689, 104
    %v3327 = vpop.permute.xlu0 %3326
    %3328 = vrot.lane.b32.xlu0 %v692, 104
    %v3329 = vpop.permute.xlu0 %3328
    %3330 = vrot.lane.b32.xlu0 %v695, 104
    %v3331 = vpop.permute.xlu0 %3330
    %v3341 = vsel %vm795, %v3308, 0
    %v3344 = vsel %vm795, %v3309, 0
    %v3347 = vsel %vm795, %v3310, 0
    %v3350 = vsel %vm795, %v3311, 0
    %v3353 = vsel %vm795, %v3312, 0
    %v3356 = vsel %vm795, %v3313, 0
    %v3359 = vsel %vm795, %v3314, 0
    %v3362 = vsel %vm795, %v3315, 0
    %3364 = vmatpush.msra.mxu0 0.0
    %3365 = vmatpush.msra.mxu0 0.0
    %3366 = vmatpush.msra.mxu0 0.0
    %3367 = vmatpush.msra.mxu0 0.0
    %3368 = vmatpush.msra.mxu0 0.0
    %3369 = vmatpush.msra.mxu0 0.0
    %3370 = vmatpush.msra.mxu0 0.0
    %3371 = vmatpush.msra.mxu0 0.0
    %3372 = vmatpush.msra.mxu0 %v3331
    %3373 = vmatpush.msra.mxu0 %v3329
    %3374 = vmatpush.msra.mxu0 %v3327
    %3375 = vmatpush.msra.mxu0 %v3325
    %3376 = vmatpush.msra.mxu0 %v3323
    %3377 = vmatpush.msra.mxu0 %v3321
    %3378 = vmatpush.msra.mxu0 %v3319
    %3379 = vmatpush.msra.mxu0 %v3317
    %3380 = vmatmul.f32.gmra.mxu0 %v3341
    %v3381 = vpop.f32.mrf.mxu0
    %v3382 = vadd.f32 0.0, %v3381
    %3383 = vmatmul.f32.gmra.mxu0 %v3344
    %v3384 = vpop.f32.mrf.mxu0
    %v3385 = vadd.f32 0.0, %v3384
    %3386 = vmatmul.f32.gmra.mxu0 %v3347
    %v3387 = vpop.f32.mrf.mxu0
    %v3388 = vadd.f32 0.0, %v3387
    %3389 = vmatmul.f32.gmra.mxu0 %v3350
    %v3390 = vpop.f32.mrf.mxu0
    %v3391 = vadd.f32 0.0, %v3390
    %3392 = vmatmul.f32.gmra.mxu0 %v3353
    %v3393 = vpop.f32.mrf.mxu0
    %v3394 = vadd.f32 0.0, %v3393
    %3395 = vmatmul.f32.gmra.mxu0 %v3356
    %v3396 = vpop.f32.mrf.mxu0
    %v3397 = vadd.f32 0.0, %v3396
    %3398 = vmatmul.f32.gmra.mxu0 %v3359
    %v3399 = vpop.f32.mrf.mxu0
    %v3400 = vadd.f32 0.0, %v3399
    %3401 = vmatmul.f32.gmra.mxu0 %v3362
    %v3402 = vpop.f32.mrf.mxu0
    %v3403 = vadd.f32 0.0, %v3402
    %3404 = vdwg.mxu0
    %v3406 = vsel %vm721, %v3382, 0
    %v3409 = vsel %vm721, %v3385, 0
    %v3412 = vsel %vm721, %v3388, 0
    %v3415 = vsel %vm721, %v3391, 0
    %v3418 = vsel %vm721, %v3394, 0
    %v3421 = vsel %vm721, %v3397, 0
    %v3424 = vsel %vm721, %v3400, 0
    %v3427 = vsel %vm721, %v3403, 0
    %3429 = vmatpush.msra.mxu0 0.0
    %3430 = vmatpush.msra.mxu0 0.0
    %3431 = vmatpush.msra.mxu0 0.0
    %3432 = vmatpush.msra.mxu0 0.0
    %3433 = vmatpush.msra.mxu0 0.0
    %3434 = vmatpush.msra.mxu0 0.0
    %3435 = vmatpush.msra.mxu0 0.0
    %3436 = vmatpush.msra.mxu0 0.0
    %3437 = vmatpush.msra.mxu0 0.0
    %3438 = vmatpush.msra.mxu0 0.0
    %3439 = vmatpush.msra.mxu0 0.0
    %3440 = vmatpush.msra.mxu0 0.0
    %3441 = vmatpush.msra.mxu0 0.0
    %3442 = vmatpush.msra.mxu0 0.0
    %3443 = vmatpush.msra.mxu0 0.0
    %3444 = vmatpush.msra.mxu0 %v2012
    %3445 = vmatmul.f32.gmra.mxu0 %v3406
    %v3446 = vpop.f32.mrf.mxu0
    %v3447 = vadd.f32 0.0, %v3446
    %3448 = vmatmul.f32.gmra.mxu0 %v3409
    %v3449 = vpop.f32.mrf.mxu0
    %v3450 = vadd.f32 0.0, %v3449
    %3451 = vmatmul.f32.gmra.mxu0 %v3412
    %v3452 = vpop.f32.mrf.mxu0
    %v3453 = vadd.f32 0.0, %v3452
    %3454 = vmatmul.f32.gmra.mxu0 %v3415
    %v3455 = vpop.f32.mrf.mxu0
    %v3456 = vadd.f32 0.0, %v3455
    %3457 = vmatmul.f32.gmra.mxu0 %v3418
    %v3458 = vpop.f32.mrf.mxu0
    %v3459 = vadd.f32 0.0, %v3458
    %3460 = vmatmul.f32.gmra.mxu0 %v3421
    %v3461 = vpop.f32.mrf.mxu0
    %v3462 = vadd.f32 0.0, %v3461
    %3463 = vmatmul.f32.gmra.mxu0 %v3424
    %v3464 = vpop.f32.mrf.mxu0
    %v3465 = vadd.f32 0.0, %v3464
    %3466 = vmatmul.f32.gmra.mxu0 %v3427
    %v3467 = vpop.f32.mrf.mxu0
    %v3468 = vadd.f32 0.0, %v3467
    %3469 = vdwg.mxu0
    %v3470 = vadd.f32 %v3115, %v3447
    %v3471 = vadd.f32 %v3116, %v3450
    %v3472 = vadd.f32 %v3117, %v3453
    %v3473 = vadd.f32 %v3118, %v3456
    %v3474 = vadd.f32 %v3119, %v3459
    %v3475 = vadd.f32 %v3120, %v3462
    %v3476 = vadd.f32 %v3121, %v3465
    %v3477 = vadd.f32 %v3122, %v3468
    %v3478 = vadd.f32 %v3470, %v2088
    %v3479 = vadd.f32 %v3471, %v2088
    %v3480 = vadd.f32 %v3472, %v2088
    %v3481 = vadd.f32 %v3473, %v2088
    %v3482 = vadd.f32 %v3474, %v2088
    %v3483 = vadd.f32 %v3475, %v2088
    %v3484 = vadd.f32 %v3476, %v2088
    %v3485 = vadd.f32 %v3477, %v2088
    %v3486 = vadd.f32 %v375, %v2090
    %v3487 = vadd.f32 %v378, %v2091
    %v3488 = vadd.f32 %v381, %v2092
    %v3489 = vadd.f32 %v384, %v2093
    %v3490 = vadd.f32 %v387, %v2094
    %v3491 = vadd.f32 %v390, %v2095
    %v3492 = vadd.f32 %v393, %v2096
    %v3493 = vadd.f32 %v396, %v2097
    %v3494 = vadd.f32 %v399, %v3478
    %v3495 = vadd.f32 %v402, %v3479
    %v3496 = vadd.f32 %v405, %v3480
    %v3497 = vadd.f32 %v408, %v3481
    %v3498 = vadd.f32 %v411, %v3482
    %v3499 = vadd.f32 %v414, %v3483
    %v3500 = vadd.f32 %v417, %v3484
    %v3501 = vadd.f32 %v420, %v3485
    %v3502 = vld [vmem:[#allocation12] sm:$0x3]
    %v3503 = vsel %vm462, %v3486, 0.0
    %3504 = vadd.xlane.f32.xlu0 %v3503
    %v3505 = vpop.xlane.xlu0 %3504
    %v3506 = vsel %vm462, %v3487, 0.0
    %3507 = vadd.xlane.f32.xlu0 %v3506
    %v3508 = vpop.xlane.xlu0 %3507
    %v3509 = vsel %vm462, %v3488, 0.0
    %3510 = vadd.xlane.f32.xlu0 %v3509
    %v3511 = vpop.xlane.xlu0 %3510
    %v3512 = vsel %vm462, %v3489, 0.0
    %3513 = vadd.xlane.f32.xlu0 %v3512
    %v3514 = vpop.xlane.xlu0 %3513
    %v3515 = vsel %vm462, %v3490, 0.0
    %3516 = vadd.xlane.f32.xlu0 %v3515
    %v3517 = vpop.xlane.xlu0 %3516
    %v3518 = vsel %vm462, %v3491, 0.0
    %3519 = vadd.xlane.f32.xlu0 %v3518
    %v3520 = vpop.xlane.xlu0 %3519
    %v3521 = vsel %vm462, %v3492, 0.0
    %3522 = vadd.xlane.f32.xlu0 %v3521
    %v3523 = vpop.xlane.xlu0 %3522
    %v3524 = vsel %vm462, %v3493, 0.0
    %3525 = vadd.xlane.f32.xlu0 %v3524
    %v3526 = vpop.xlane.xlu0 %3525
    %v3527 = vsel %vm462, %v3494, 0.0
    %3528 = vadd.xlane.f32.xlu0 %v3527
    %v3529 = vpop.xlane.xlu0 %3528
    %v3530 = vsel %vm462, %v3495, 0.0
    %3531 = vadd.xlane.f32.xlu0 %v3530
    %v3532 = vpop.xlane.xlu0 %3531
    %v3533 = vsel %vm462, %v3496, 0.0
    %3534 = vadd.xlane.f32.xlu0 %v3533
    %v3535 = vpop.xlane.xlu0 %3534
    %v3536 = vsel %vm462, %v3497, 0.0
    %3537 = vadd.xlane.f32.xlu0 %v3536
    %v3538 = vpop.xlane.xlu0 %3537
    %v3539 = vsel %vm462, %v3498, 0.0
    %3540 = vadd.xlane.f32.xlu0 %v3539
    %v3541 = vpop.xlane.xlu0 %3540
    %v3542 = vsel %vm462, %v3499, 0.0
    %3543 = vadd.xlane.f32.xlu0 %v3542
    %v3544 = vpop.xlane.xlu0 %3543
    %v3545 = vsel %vm462, %v3500, 0.0
    %3546 = vadd.xlane.f32.xlu0 %v3545
    %v3547 = vpop.xlane.xlu0 %3546
    %v3548 = vsel %vm462, %v3501, 0.0
    %3549 = vadd.xlane.f32.xlu0 %v3548
    %v3550 = vpop.xlane.xlu0 %3549
    %v3551 = vrcp.pop 32.0
    %v3552 = vmul.f32 32.0, %v3551
    %v3553 = vsub.f32 1.0, %v3552
    %v3554 = vmul.f32 %v3551, %v3553
    %v3555 = vadd.f32 %v3551, %v3554
    %vm3556 = vweird.f32 %v3551
    %v3557 = vsel %vm3556, %v3551, %v3555
    %v3558 = vmul.f32 %v3505, %v3557
    %v3559 = vmul.f32 %v3508, %v3557
    %v3560 = vmul.f32 %v3511, %v3557
    %v3561 = vmul.f32 %v3514, %v3557
    %v3562 = vmul.f32 %v3517, %v3557
    %v3563 = vmul.f32 %v3520, %v3557
    %v3564 = vmul.f32 %v3523, %v3557
    %v3565 = vmul.f32 %v3526, %v3557
    %v3566 = vmul.f32 %v3529, %v3557
    %v3567 = vmul.f32 %v3532, %v3557
    %v3568 = vmul.f32 %v3535, %v3557
    %v3569 = vmul.f32 %v3538, %v3557
    %v3570 = vmul.f32 %v3541, %v3557
    %v3571 = vmul.f32 %v3544, %v3557
    %v3572 = vmul.f32 %v3547, %v3557
    %v3573 = vmul.f32 %v3550, %v3557
    %v3574 = vsub.f32 %v3486, %v3558
    %v3575 = vsub.f32 %v3487, %v3559
    %v3576 = vsub.f32 %v3488, %v3560
    %v3577 = vsub.f32 %v3489, %v3561
    %v3578 = vsub.f32 %v3490, %v3562
    %v3579 = vsub.f32 %v3491, %v3563
    %v3580 = vsub.f32 %v3492, %v3564
    %v3581 = vsub.f32 %v3493, %v3565
    %v3582 = vsub.f32 %v3494, %v3566
    %v3583 = vsub.f32 %v3495, %v3567
    %v3584 = vsub.f32 %v3496, %v3568
    %v3585 = vsub.f32 %v3497, %v3569
    %v3586 = vsub.f32 %v3498, %v3570
    %v3587 = vsub.f32 %v3499, %v3571
    %v3588 = vsub.f32 %v3500, %v3572
    %v3589 = vsub.f32 %v3501, %v3573
    %v3590 = vmul.f32 %v3574, %v3574
    %v3591 = vmul.f32 %v3575, %v3575
    %v3592 = vmul.f32 %v3576, %v3576
    %v3593 = vmul.f32 %v3577, %v3577
    %v3594 = vmul.f32 %v3578, %v3578
    %v3595 = vmul.f32 %v3579, %v3579
    %v3596 = vmul.f32 %v3580, %v3580
    %v3597 = vmul.f32 %v3581, %v3581
    %v3598 = vmul.f32 %v3582, %v3582
    %v3599 = vmul.f32 %v3583, %v3583
    %v3600 = vmul.f32 %v3584, %v3584
    %v3601 = vmul.f32 %v3585, %v3585
    %v3602 = vmul.f32 %v3586, %v3586
    %v3603 = vmul.f32 %v3587, %v3587
    %v3604 = vmul.f32 %v3588, %v3588
    %v3605 = vmul.f32 %v3589, %v3589
    %v3606 = vsel %vm462, %v3590, 0.0
    %3607 = vadd.xlane.f32.xlu0 %v3606
    %v3608 = vpop.xlane.xlu0 %3607
    %v3609 = vsel %vm462, %v3591, 0.0
    %3610 = vadd.xlane.f32.xlu0 %v3609
    %v3611 = vpop.xlane.xlu0 %3610
    %v3612 = vsel %vm462, %v3592, 0.0
    %3613 = vadd.xlane.f32.xlu0 %v3612
    %v3614 = vpop.xlane.xlu0 %3613
    %v3615 = vsel %vm462, %v3593, 0.0
    %3616 = vadd.xlane.f32.xlu0 %v3615
    %v3617 = vpop.xlane.xlu0 %3616
    %v3618 = vsel %vm462, %v3594, 0.0
    %3619 = vadd.xlane.f32.xlu0 %v3618
    %v3620 = vpop.xlane.xlu0 %3619
    %v3621 = vsel %vm462, %v3595, 0.0
    %3622 = vadd.xlane.f32.xlu0 %v3621
    %v3623 = vpop.xlane.xlu0 %3622
    %v3624 = vsel %vm462, %v3596, 0.0
    %3625 = vadd.xlane.f32.xlu0 %v3624
    %v3626 = vpop.xlane.xlu0 %3625
    %v3627 = vsel %vm462, %v3597, 0.0
    %3628 = vadd.xlane.f32.xlu0 %v3627
    %v3629 = vpop.xlane.xlu0 %3628
    %v3630 = vsel %vm462, %v3598, 0.0
    %3631 = vadd.xlane.f32.xlu0 %v3630
    %v3632 = vpop.xlane.xlu0 %3631
    %v3633 = vsel %vm462, %v3599, 0.0
    %3634 = vadd.xlane.f32.xlu0 %v3633
    %v3635 = vpop.xlane.xlu0 %3634
    %v3636 = vsel %vm462, %v3600, 0.0
    %3637 = vadd.xlane.f32.xlu0 %v3636
    %v3638 = vpop.xlane.xlu0 %3637
    %v3639 = vsel %vm462, %v3601, 0.0
    %3640 = vadd.xlane.f32.xlu0 %v3639
    %v3641 = vpop.xlane.xlu0 %3640
    %v3642 = vsel %vm462, %v3602, 0.0
    %3643 = vadd.xlane.f32.xlu0 %v3642
    %v3644 = vpop.xlane.xlu0 %3643
    %v3645 = vsel %vm462, %v3603, 0.0
    %3646 = vadd.xlane.f32.xlu0 %v3645
    %v3647 = vpop.xlane.xlu0 %3646
    %v3648 = vsel %vm462, %v3604, 0.0
    %3649 = vadd.xlane.f32.xlu0 %v3648
    %v3650 = vpop.xlane.xlu0 %3649
    %v3651 = vsel %vm462, %v3605, 0.0
    %3652 = vadd.xlane.f32.xlu0 %v3651
    %v3653 = vpop.xlane.xlu0 %3652
    %v3654 = vmul.f32 %v3608, %v3557
    %v3655 = vmul.f32 %v3611, %v3557
    %v3656 = vmul.f32 %v3614, %v3557
    %v3657 = vmul.f32 %v3617, %v3557
    %v3658 = vmul.f32 %v3620, %v3557
    %v3659 = vmul.f32 %v3623, %v3557
    %v3660 = vmul.f32 %v3626, %v3557
    %v3661 = vmul.f32 %v3629, %v3557
    %v3662 = vmul.f32 %v3632, %v3557
    %v3663 = vmul.f32 %v3635, %v3557
    %v3664 = vmul.f32 %v3638, %v3557
    %v3665 = vmul.f32 %v3641, %v3557
    %v3666 = vmul.f32 %v3644, %v3557
    %v3667 = vmul.f32 %v3647, %v3557
    %v3668 = vmul.f32 %v3650, %v3557
    %v3669 = vmul.f32 %v3653, %v3557
    %v3670 = vadd.f32 %v3654, 1e-05
    %v3671 = vadd.f32 %v3655, 1e-05
    %v3672 = vadd.f32 %v3656, 1e-05
    %v3673 = vadd.f32 %v3657, 1e-05
    %v3674 = vadd.f32 %v3658, 1e-05
    %v3675 = vadd.f32 %v3659, 1e-05
    %v3676 = vadd.f32 %v3660, 1e-05
    %v3677 = vadd.f32 %v3661, 1e-05
    %v3678 = vadd.f32 %v3662, 1e-05
    %v3679 = vadd.f32 %v3663, 1e-05
    %v3680 = vadd.f32 %v3664, 1e-05
    %v3681 = vadd.f32 %v3665, 1e-05
    %v3682 = vadd.f32 %v3666, 1e-05
    %v3683 = vadd.f32 %v3667, 1e-05
    %v3684 = vadd.f32 %v3668, 1e-05
    %v3685 = vadd.f32 %v3669, 1e-05
    %v3686 = vrsqrt.pop %v3670
    %v3687 = vmul.f32 %v3686, %v3670
    %v3688 = vmul.f32 %v3687, %v3686
    %v3689 = vmul.f32 0.5, %v3688
    %v3690 = vsub.f32 1.5, %v3689
    %v3691 = vmul.f32 %v3686, %v3690
    %vm3692 = vweird.f32 %v3670
    %vm3693 = vweird.f32 %v3686
    %vm3694 = vmor %vm3692, %vm3693
    %v3695 = vsel %vm3694, %v3686, %v3691
    %v3696 = vrsqrt.pop %v3671
    %v3697 = vmul.f32 %v3696, %v3671
    %v3698 = vmul.f32 %v3697, %v3696
    %v3699 = vmul.f32 0.5, %v3698
    %v3700 = vsub.f32 1.5, %v3699
    %v3701 = vmul.f32 %v3696, %v3700
    %vm3702 = vweird.f32 %v3671
    %vm3703 = vweird.f32 %v3696
    %vm3704 = vmor %vm3702, %vm3703
    %v3705 = vsel %vm3704, %v3696, %v3701
    %v3706 = vrsqrt.pop %v3672
    %v3707 = vmul.f32 %v3706, %v3672
    %v3708 = vmul.f32 %v3707, %v3706
    %v3709 = vmul.f32 0.5, %v3708
    %v3710 = vsub.f32 1.5, %v3709
    %v3711 = vmul.f32 %v3706, %v3710
    %vm3712 = vweird.f32 %v3672
    %vm3713 = vweird.f32 %v3706
    %vm3714 = vmor %vm3712, %vm3713
    %v3715 = vsel %vm3714, %v3706, %v3711
    %v3716 = vrsqrt.pop %v3673
    %v3717 = vmul.f32 %v3716, %v3673
    %v3718 = vmul.f32 %v3717, %v3716
    %v3719 = vmul.f32 0.5, %v3718
    %v3720 = vsub.f32 1.5, %v3719
    %v3721 = vmul.f32 %v3716, %v3720
    %vm3722 = vweird.f32 %v3673
    %vm3723 = vweird.f32 %v3716
    %vm3724 = vmor %vm3722, %vm3723
    %v3725 = vsel %vm3724, %v3716, %v3721
    %v3726 = vrsqrt.pop %v3674
    %v3727 = vmul.f32 %v3726, %v3674
    %v3728 = vmul.f32 %v3727, %v3726
    %v3729 = vmul.f32 0.5, %v3728
    %v3730 = vsub.f32 1.5, %v3729
    %v3731 = vmul.f32 %v3726, %v3730
    %vm3732 = vweird.f32 %v3674
    %vm3733 = vweird.f32 %v3726
    %vm3734 = vmor %vm3732, %vm3733
    %v3735 = vsel %vm3734, %v3726, %v3731
    %v3736 = vrsqrt.pop %v3675
    %v3737 = vmul.f32 %v3736, %v3675
    %v3738 = vmul.f32 %v3737, %v3736
    %v3739 = vmul.f32 0.5, %v3738
    %v3740 = vsub.f32 1.5, %v3739
    %v3741 = vmul.f32 %v3736, %v3740
    %vm3742 = vweird.f32 %v3675
    %vm3743 = vweird.f32 %v3736
    %vm3744 = vmor %vm3742, %vm3743
    %v3745 = vsel %vm3744, %v3736, %v3741
    %v3746 = vrsqrt.pop %v3676
    %v3747 = vmul.f32 %v3746, %v3676
    %v3748 = vmul.f32 %v3747, %v3746
    %v3749 = vmul.f32 0.5, %v3748
    %v3750 = vsub.f32 1.5, %v3749
    %v3751 = vmul.f32 %v3746, %v3750
    %vm3752 = vweird.f32 %v3676
    %vm3753 = vweird.f32 %v3746
    %vm3754 = vmor %vm3752, %vm3753
    %v3755 = vsel %vm3754, %v3746, %v3751
    %v3756 = vrsqrt.pop %v3677
    %v3757 = vmul.f32 %v3756, %v3677
    %v3758 = vmul.f32 %v3757, %v3756
    %v3759 = vmul.f32 0.5, %v3758
    %v3760 = vsub.f32 1.5, %v3759
    %v3761 = vmul.f32 %v3756, %v3760
    %vm3762 = vweird.f32 %v3677
    %vm3763 = vweird.f32 %v3756
    %vm3764 = vmor %vm3762, %vm3763
    %v3765 = vsel %vm3764, %v3756, %v3761
    %v3766 = vrsqrt.pop %v3678
    %v3767 = vmul.f32 %v3766, %v3678
    %v3768 = vmul.f32 %v3767, %v3766
    %v3769 = vmul.f32 0.5, %v3768
    %v3770 = vsub.f32 1.5, %v3769
    %v3771 = vmul.f32 %v3766, %v3770
    %vm3772 = vweird.f32 %v3678
    %vm3773 = vweird.f32 %v3766
    %vm3774 = vmor %vm3772, %vm3773
    %v3775 = vsel %vm3774, %v3766, %v3771
    %v3776 = vrsqrt.pop %v3679
    %v3777 = vmul.f32 %v3776, %v3679
    %v3778 = vmul.f32 %v3777, %v3776
    %v3779 = vmul.f32 0.5, %v3778
    %v3780 = vsub.f32 1.5, %v3779
    %v3781 = vmul.f32 %v3776, %v3780
    %vm3782 = vweird.f32 %v3679
    %vm3783 = vweird.f32 %v3776
    %vm3784 = vmor %vm3782, %vm3783
    %v3785 = vsel %vm3784, %v3776, %v3781
    %v3786 = vrsqrt.pop %v3680
    %v3787 = vmul.f32 %v3786, %v3680
    %v3788 = vmul.f32 %v3787, %v3786
    %v3789 = vmul.f32 0.5, %v3788
    %v3790 = vsub.f32 1.5, %v3789
    %v3791 = vmul.f32 %v3786, %v3790
    %vm3792 = vweird.f32 %v3680
    %vm3793 = vweird.f32 %v3786
    %vm3794 = vmor %vm3792, %vm3793
    %v3795 = vsel %vm3794, %v3786, %v3791
    %v3796 = vrsqrt.pop %v3681
    %v3797 = vmul.f32 %v3796, %v3681
    %v3798 = vmul.f32 %v3797, %v3796
    %v3799 = vmul.f32 0.5, %v3798
    %v3800 = vsub.f32 1.5, %v3799
    %v3801 = vmul.f32 %v3796, %v3800
    %vm3802 = vweird.f32 %v3681
    %vm3803 = vweird.f32 %v3796
    %vm3804 = vmor %vm3802, %vm3803
    %v3805 = vsel %vm3804, %v3796, %v3801
    %v3806 = vrsqrt.pop %v3682
    %v3807 = vmul.f32 %v3806, %v3682
    %v3808 = vmul.f32 %v3807, %v3806
    %v3809 = vmul.f32 0.5, %v3808
    %v3810 = vsub.f32 1.5, %v3809
    %v3811 = vmul.f32 %v3806, %v3810
    %vm3812 = vweird.f32 %v3682
    %vm3813 = vweird.f32 %v3806
    %vm3814 = vmor %vm3812, %vm3813
    %v3815 = vsel %vm3814, %v3806, %v3811
    %v3816 = vrsqrt.pop %v3683
    %v3817 = vmul.f32 %v3816, %v3683
    %v3818 = vmul.f32 %v3817, %v3816
    %v3819 = vmul.f32 0.5, %v3818
    %v3820 = vsub.f32 1.5, %v3819
    %v3821 = vmul.f32 %v3816, %v3820
    %vm3822 = vweird.f32 %v3683
    %vm3823 = vweird.f32 %v3816
    %vm3824 = vmor %vm3822, %vm3823
    %v3825 = vsel %vm3824, %v3816, %v3821
    %v3826 = vrsqrt.pop %v3684
    %v3827 = vmul.f32 %v3826, %v3684
    %v3828 = vmul.f32 %v3827, %v3826
    %v3829 = vmul.f32 0.5, %v3828
    %v3830 = vsub.f32 1.5, %v3829
    %v3831 = vmul.f32 %v3826, %v3830
    %vm3832 = vweird.f32 %v3684
    %vm3833 = vweird.f32 %v3826
    %vm3834 = vmor %vm3832, %vm3833
    %v3835 = vsel %vm3834, %v3826, %v3831
    %v3836 = vrsqrt.pop %v3685
    %v3837 = vmul.f32 %v3836, %v3685
    %v3838 = vmul.f32 %v3837, %v3836
    %v3839 = vmul.f32 0.5, %v3838
    %v3840 = vsub.f32 1.5, %v3839
    %v3841 = vmul.f32 %v3836, %v3840
    %vm3842 = vweird.f32 %v3685
    %vm3843 = vweird.f32 %v3836
    %vm3844 = vmor %vm3842, %vm3843
    %v3845 = vsel %vm3844, %v3836, %v3841
    %v3846 = vmul.f32 %v3574, %v3695
    %v3847 = vmul.f32 %v3575, %v3705
    %v3848 = vmul.f32 %v3576, %v3715
    %v3849 = vmul.f32 %v3577, %v3725
    %v3850 = vmul.f32 %v3578, %v3735
    %v3851 = vmul.f32 %v3579, %v3745
    %v3852 = vmul.f32 %v3580, %v3755
    %v3853 = vmul.f32 %v3581, %v3765
    %v3854 = vmul.f32 %v3582, %v3775
    %v3855 = vmul.f32 %v3583, %v3785
    %v3856 = vmul.f32 %v3584, %v3795
    %v3857 = vmul.f32 %v3585, %v3805
    %v3858 = vmul.f32 %v3586, %v3815
    %v3859 = vmul.f32 %v3587, %v3825
    %v3860 = vmul.f32 %v3588, %v3835
    %v3861 = vmul.f32 %v3589, %v3845
    %v3862 = vperm.slane %v3502, 0
    %v3863 = vmul.f32 %v3846, %v3862
    %v3864 = vmul.f32 %v3847, %v3862
    %v3865 = vmul.f32 %v3848, %v3862
    %v3866 = vmul.f32 %v3849, %v3862
    %v3867 = vmul.f32 %v3850, %v3862
    %v3868 = vmul.f32 %v3851, %v3862
    %v3869 = vmul.f32 %v3852, %v3862
    %v3870 = vmul.f32 %v3853, %v3862
    %v3871 = vmul.f32 %v3854, %v3862
    %v3872 = vmul.f32 %v3855, %v3862
    %v3873 = vmul.f32 %v3856, %v3862
    %v3874 = vmul.f32 %v3857, %v3862
    %v3875 = vmul.f32 %v3858, %v3862
    %v3876 = vmul.f32 %v3859, %v3862
    %v3877 = vmul.f32 %v3860, %v3862
    %v3878 = vmul.f32 %v3861, %v3862
    %v3879 = vperm.slane %v3502, 1
    %v3880 = vadd.f32 %v3863, %v3879
    %v3881 = vadd.f32 %v3864, %v3879
    %v3882 = vadd.f32 %v3865, %v3879
    %v3883 = vadd.f32 %v3866, %v3879
    %v3884 = vadd.f32 %v3867, %v3879
    %v3885 = vadd.f32 %v3868, %v3879
    %v3886 = vadd.f32 %v3869, %v3879
    %v3887 = vadd.f32 %v3870, %v3879
    %v3888 = vadd.f32 %v3871, %v3879
    %v3889 = vadd.f32 %v3872, %v3879
    %v3890 = vadd.f32 %v3873, %v3879
    %v3891 = vadd.f32 %v3874, %v3879
    %v3892 = vadd.f32 %v3875, %v3879
    %v3893 = vadd.f32 %v3876, %v3879
    %v3894 = vadd.f32 %v3877, %v3879
    %v3895 = vadd.f32 %v3878, %v3879
    %v3896 = vld [vmem:[%s27] sm:$0xff]
    %v3897 = vld [vmem:[%s27 + $0x8] sm:$0xff]
    %v3898 = vld [vmem:[%s27 + $0x10] sm:$0xff]
    %v3899 = vld [vmem:[%s27 + $0x18] sm:$0xff]
    %v3900 = vld [vmem:[#allocation9] sm:$0x1]
    %v3902 = vperm.slane %v3900, 0
    %v3905 = vsel %vm462, %v3880, 0
    %v3908 = vsel %vm462, %v3881, 0
    %v3911 = vsel %vm462, %v3882, 0
    %v3914 = vsel %vm462, %v3883, 0
    %v3917 = vsel %vm462, %v3884, 0
    %v3920 = vsel %vm462, %v3885, 0
    %v3923 = vsel %vm462, %v3886, 0
    %v3926 = vsel %vm462, %v3887, 0
    %v3929 = vsel %vm462, %v3888, 0
    %v3932 = vsel %vm462, %v3889, 0
    %v3935 = vsel %vm462, %v3890, 0
    %v3938 = vsel %vm462, %v3891, 0
    %v3941 = vsel %vm462, %v3892, 0
    %v3944 = vsel %vm462, %v3893, 0
    %v3947 = vsel %vm462, %v3894, 0
    %v3950 = vsel %vm462, %v3895, 0
    %3952 = vmatpush.msra.mxu0 0.0
    %3953 = vmatpush.msra.mxu0 0.0
    %3954 = vmatpush.msra.mxu0 0.0
    %3955 = vmatpush.msra.mxu0 0.0
    %3956 = vmatpush.msra.mxu0 0.0
    %3957 = vmatpush.msra.mxu0 0.0
    %3958 = vmatpush.msra.mxu0 0.0
    %3959 = vmatpush.msra.mxu0 0.0
    %3960 = vmatpush.msra.mxu0 0.0
    %3961 = vmatpush.msra.mxu0 0.0
    %3962 = vmatpush.msra.mxu0 0.0
    %3963 = vmatpush.msra.mxu0 0.0
    %3964 = vmatpush.msra.mxu0 %v3899
    %3965 = vmatpush.msra.mxu0 %v3898
    %3966 = vmatpush.msra.mxu0 %v3897
    %3967 = vmatpush.msra.mxu0 %v3896
    %3968 = vmatmul.f32.gmra.mxu0 %v3905
    %v3969 = vpop.f32.mrf.mxu0
    %v3970 = vadd.f32 %v3902, %v3969
    %3971 = vmatmul.f32.gmra.mxu0 %v3908
    %v3972 = vpop.f32.mrf.mxu0
    %v3973 = vadd.f32 %v3902, %v3972
    %3974 = vmatmul.f32.gmra.mxu0 %v3911
    %v3975 = vpop.f32.mrf.mxu0
    %v3976 = vadd.f32 %v3902, %v3975
    %3977 = vmatmul.f32.gmra.mxu0 %v3914
    %v3978 = vpop.f32.mrf.mxu0
    %v3979 = vadd.f32 %v3902, %v3978
    %3980 = vmatmul.f32.gmra.mxu0 %v3917
    %v3981 = vpop.f32.mrf.mxu0
    %v3982 = vadd.f32 %v3902, %v3981
    %3983 = vmatmul.f32.gmra.mxu0 %v3920
    %v3984 = vpop.f32.mrf.mxu0
    %v3985 = vadd.f32 %v3902, %v3984
    %3986 = vmatmul.f32.gmra.mxu0 %v3923
    %v3987 = vpop.f32.mrf.mxu0
    %v3988 = vadd.f32 %v3902, %v3987
    %3989 = vmatmul.f32.gmra.mxu0 %v3926
    %v3990 = vpop.f32.mrf.mxu0
    %v3991 = vadd.f32 %v3902, %v3990
    %3992 = vmatmul.f32.gmra.mxu0 %v3929
    %v3993 = vpop.f32.mrf.mxu0
    %v3994 = vadd.f32 %v3902, %v3993
    %3995 = vmatmul.f32.gmra.mxu0 %v3932
    %v3996 = vpop.f32.mrf.mxu0
    %v3997 = vadd.f32 %v3902, %v3996
    %3998 = vmatmul.f32.gmra.mxu0 %v3935
    %v3999 = vpop.f32.mrf.mxu0
    %v4000 = vadd.f32 %v3902, %v3999
    %4001 = vmatmul.f32.gmra.mxu0 %v3938
    %v4002 = vpop.f32.mrf.mxu0
    %v4003 = vadd.f32 %v3902, %v4002
    %4004 = vmatmul.f32.gmra.mxu0 %v3941
    %v4005 = vpop.f32.mrf.mxu0
    %v4006 = vadd.f32 %v3902, %v4005
    %4007 = vmatmul.f32.gmra.mxu0 %v3944
    %v4008 = vpop.f32.mrf.mxu0
    %v4009 = vadd.f32 %v3902, %v4008
    %4010 = vmatmul.f32.gmra.mxu0 %v3947
    %v4011 = vpop.f32.mrf.mxu0
    %v4012 = vadd.f32 %v3902, %v4011
    %4013 = vmatmul.f32.gmra.mxu0 %v3950
    %v4014 = vpop.f32.mrf.mxu0
    %v4015 = vadd.f32 %v3902, %v4014
    %4016 = vdwg.mxu0
    %v4017 = vmax.f32 %v3970, 0.0
    %v4018 = vmax.f32 %v3973, 0.0
    %v4019 = vmax.f32 %v3976, 0.0
    %v4020 = vmax.f32 %v3979, 0.0
    %v4021 = vmax.f32 %v3982, 0.0
    %v4022 = vmax.f32 %v3985, 0.0
    %v4023 = vmax.f32 %v3988, 0.0
    %v4024 = vmax.f32 %v3991, 0.0
    %v4025 = vmax.f32 %v3994, 0.0
    %v4026 = vmax.f32 %v3997, 0.0
    %v4027 = vmax.f32 %v4000, 0.0
    %v4028 = vmax.f32 %v4003, 0.0
    %v4029 = vmax.f32 %v4006, 0.0
    %v4030 = vmax.f32 %v4009, 0.0
    %v4031 = vmax.f32 %v4012, 0.0
    %v4032 = vmax.f32 %v4015, 0.0
    %v4033 = vld [vmem:[%s31] sm:$0xff]
    %v4034 = vld [vmem:[%s31 + $0x8] sm:$0xff]
    %v4035 = vld [vmem:[%s31 + $0x10] sm:$0xff]
    %v4036 = vld [vmem:[%s31 + $0x18] sm:$0xff]
    %v4037 = vld [vmem:[%s31 + $0x20] sm:$0xff]
    %v4038 = vld [vmem:[%s31 + $0x28] sm:$0xff]
    %v4039 = vld [vmem:[%s31 + $0x30] sm:$0xff]
    %v4040 = vld [vmem:[%s31 + $0x38] sm:$0xff]
    %v4041 = vld [vmem:[#allocation10] sm:$0x1]
    %v4043 = vperm.slane %v4041, 0
    %v4046 = vsel %vm795, %v4017, 0
    %v4049 = vsel %vm795, %v4018, 0
    %v4052 = vsel %vm795, %v4019, 0
    %v4055 = vsel %vm795, %v4020, 0
    %v4058 = vsel %vm795, %v4021, 0
    %v4061 = vsel %vm795, %v4022, 0
    %v4064 = vsel %vm795, %v4023, 0
    %v4067 = vsel %vm795, %v4024, 0
    %v4070 = vsel %vm795, %v4025, 0
    %v4073 = vsel %vm795, %v4026, 0
    %v4076 = vsel %vm795, %v4027, 0
    %v4079 = vsel %vm795, %v4028, 0
    %v4082 = vsel %vm795, %v4029, 0
    %v4085 = vsel %vm795, %v4030, 0
    %v4088 = vsel %vm795, %v4031, 0
    %v4091 = vsel %vm795, %v4032, 0
    %4093 = vmatpush.msra.mxu0 0.0
    %4094 = vmatpush.msra.mxu0 0.0
    %4095 = vmatpush.msra.mxu0 0.0
    %4096 = vmatpush.msra.mxu0 0.0
    %4097 = vmatpush.msra.mxu0 0.0
    %4098 = vmatpush.msra.mxu0 0.0
    %4099 = vmatpush.msra.mxu0 0.0
    %4100 = vmatpush.msra.mxu0 0.0
    %4101 = vmatpush.msra.mxu0 %v4040
    %4102 = vmatpush.msra.mxu0 %v4039
    %4103 = vmatpush.msra.mxu0 %v4038
    %4104 = vmatpush.msra.mxu0 %v4037
    %4105 = vmatpush.msra.mxu0 %v4036
    %4106 = vmatpush.msra.mxu0 %v4035
    %4107 = vmatpush.msra.mxu0 %v4034
    %4108 = vmatpush.msra.mxu0 %v4033
    %4109 = vmatmul.f32.gmra.mxu0 %v4046
    %v4110 = vpop.f32.mrf.mxu0
    %v4111 = vadd.f32 %v4043, %v4110
    %4112 = vmatmul.f32.gmra.mxu0 %v4049
    %v4113 = vpop.f32.mrf.mxu0
    %v4114 = vadd.f32 %v4043, %v4113
    %4115 = vmatmul.f32.gmra.mxu0 %v4052
    %v4116 = vpop.f32.mrf.mxu0
    %v4117 = vadd.f32 %v4043, %v4116
    %4118 = vmatmul.f32.gmra.mxu0 %v4055
    %v4119 = vpop.f32.mrf.mxu0
    %v4120 = vadd.f32 %v4043, %v4119
    %4121 = vmatmul.f32.gmra.mxu0 %v4058
    %v4122 = vpop.f32.mrf.mxu0
    %v4123 = vadd.f32 %v4043, %v4122
    %4124 = vmatmul.f32.gmra.mxu0 %v4061
    %v4125 = vpop.f32.mrf.mxu0
    %v4126 = vadd.f32 %v4043, %v4125
    %4127 = vmatmul.f32.gmra.mxu0 %v4064
    %v4128 = vpop.f32.mrf.mxu0
    %v4129 = vadd.f32 %v4043, %v4128
    %4130 = vmatmul.f32.gmra.mxu0 %v4067
    %v4131 = vpop.f32.mrf.mxu0
    %v4132 = vadd.f32 %v4043, %v4131
    %4133 = vmatmul.f32.gmra.mxu0 %v4070
    %v4134 = vpop.f32.mrf.mxu0
    %v4135 = vadd.f32 %v4043, %v4134
    %4136 = vmatmul.f32.gmra.mxu0 %v4073
    %v4137 = vpop.f32.mrf.mxu0
    %v4138 = vadd.f32 %v4043, %v4137
    %4139 = vmatmul.f32.gmra.mxu0 %v4076
    %v4140 = vpop.f32.mrf.mxu0
    %v4141 = vadd.f32 %v4043, %v4140
    %4142 = vmatmul.f32.gmra.mxu0 %v4079
    %v4143 = vpop.f32.mrf.mxu0
    %v4144 = vadd.f32 %v4043, %v4143
    %4145 = vmatmul.f32.gmra.mxu0 %v4082
    %v4146 = vpop.f32.mrf.mxu0
    %v4147 = vadd.f32 %v4043, %v4146
    %4148 = vmatmul.f32.gmra.mxu0 %v4085
    %v4149 = vpop.f32.mrf.mxu0
    %v4150 = vadd.f32 %v4043, %v4149
    %4151 = vmatmul.f32.gmra.mxu0 %v4088
    %v4152 = vpop.f32.mrf.mxu0
    %v4153 = vadd.f32 %v4043, %v4152
    %4154 = vmatmul.f32.gmra.mxu0 %v4091
    %v4155 = vpop.f32.mrf.mxu0
    %v4156 = vadd.f32 %v4043, %v4155
    %4157 = vdwg.mxu0
    %v4158 = vadd.f32 %v3880, %v4111
    %v4159 = vadd.f32 %v3881, %v4114
    %v4160 = vadd.f32 %v3882, %v4117
    %v4161 = vadd.f32 %v3883, %v4120
    %v4162 = vadd.f32 %v3884, %v4123
    %v4163 = vadd.f32 %v3885, %v4126
    %v4164 = vadd.f32 %v3886, %v4129
    %v4165 = vadd.f32 %v3887, %v4132
    %v4166 = vadd.f32 %v3888, %v4135
    %v4167 = vadd.f32 %v3889, %v4138
    %v4168 = vadd.f32 %v3890, %v4141
    %v4169 = vadd.f32 %v3891, %v4144
    %v4170 = vadd.f32 %v3892, %v4147
    %v4171 = vadd.f32 %v3893, %v4150
    %v4172 = vadd.f32 %v3894, %v4153
    %v4173 = vadd.f32 %v3895, %v4156
    %s4174 = scalar_lea.vmem [#allocation12], 2
    %v4175 = vld [vmem:[%s4174] sm:$0x3]
    %v4176 = vsel %vm462, %v4158, 0.0
    %4177 = vadd.xlane.f32.xlu0 %v4176
    %v4178 = vpop.xlane.xlu0 %4177
    %v4179 = vsel %vm462, %v4159, 0.0
    %4180 = vadd.xlane.f32.xlu0 %v4179
    %v4181 = vpop.xlane.xlu0 %4180
    %v4182 = vsel %vm462, %v4160, 0.0
    %4183 = vadd.xlane.f32.xlu0 %v4182
    %v4184 = vpop.xlane.xlu0 %4183
    %v4185 = vsel %vm462, %v4161, 0.0
    %4186 = vadd.xlane.f32.xlu0 %v4185
    %v4187 = vpop.xlane.xlu0 %4186
    %v4188 = vsel %vm462, %v4162, 0.0
    %4189 = vadd.xlane.f32.xlu0 %v4188
    %v4190 = vpop.xlane.xlu0 %4189
    %v4191 = vsel %vm462, %v4163, 0.0
    %4192 = vadd.xlane.f32.xlu0 %v4191
    %v4193 = vpop.xlane.xlu0 %4192
    %v4194 = vsel %vm462, %v4164, 0.0
    %4195 = vadd.xlane.f32.xlu0 %v4194
    %v4196 = vpop.xlane.xlu0 %4195
    %v4197 = vsel %vm462, %v4165, 0.0
    %4198 = vadd.xlane.f32.xlu0 %v4197
    %v4199 = vpop.xlane.xlu0 %4198
    %v4200 = vsel %vm462, %v4166, 0.0
    %4201 = vadd.xlane.f32.xlu0 %v4200
    %v4202 = vpop.xlane.xlu0 %4201
    %v4203 = vsel %vm462, %v4167, 0.0
    %4204 = vadd.xlane.f32.xlu0 %v4203
    %v4205 = vpop.xlane.xlu0 %4204
    %v4206 = vsel %vm462, %v4168, 0.0
    %4207 = vadd.xlane.f32.xlu0 %v4206
    %v4208 = vpop.xlane.xlu0 %4207
    %v4209 = vsel %vm462, %v4169, 0.0
    %4210 = vadd.xlane.f32.xlu0 %v4209
    %v4211 = vpop.xlane.xlu0 %4210
    %v4212 = vsel %vm462, %v4170, 0.0
    %4213 = vadd.xlane.f32.xlu0 %v4212
    %v4214 = vpop.xlane.xlu0 %4213
    %v4215 = vsel %vm462, %v4171, 0.0
    %4216 = vadd.xlane.f32.xlu0 %v4215
    %v4217 = vpop.xlane.xlu0 %4216
    %v4218 = vsel %vm462, %v4172, 0.0
    %4219 = vadd.xlane.f32.xlu0 %v4218
    %v4220 = vpop.xlane.xlu0 %4219
    %v4221 = vsel %vm462, %v4173, 0.0
    %4222 = vadd.xlane.f32.xlu0 %v4221
    %v4223 = vpop.xlane.xlu0 %4222
    %v4224 = vmul.f32 %v4178, %v3557
    %v4225 = vmul.f32 %v4181, %v3557
    %v4226 = vmul.f32 %v4184, %v3557
    %v4227 = vmul.f32 %v4187, %v3557
    %v4228 = vmul.f32 %v4190, %v3557
    %v4229 = vmul.f32 %v4193, %v3557
    %v4230 = vmul.f32 %v4196, %v3557
    %v4231 = vmul.f32 %v4199, %v3557
    %v4232 = vmul.f32 %v4202, %v3557
    %v4233 = vmul.f32 %v4205, %v3557
    %v4234 = vmul.f32 %v4208, %v3557
    %v4235 = vmul.f32 %v4211, %v3557
    %v4236 = vmul.f32 %v4214, %v3557
    %v4237 = vmul.f32 %v4217, %v3557
    %v4238 = vmul.f32 %v4220, %v3557
    %v4239 = vmul.f32 %v4223, %v3557
    %v4240 = vsub.f32 %v4158, %v4224
    %v4241 = vsub.f32 %v4159, %v4225
    %v4242 = vsub.f32 %v4160, %v4226
    %v4243 = vsub.f32 %v4161, %v4227
    %v4244 = vsub.f32 %v4162, %v4228
    %v4245 = vsub.f32 %v4163, %v4229
    %v4246 = vsub.f32 %v4164, %v4230
    %v4247 = vsub.f32 %v4165, %v4231
    %v4248 = vsub.f32 %v4166, %v4232
    %v4249 = vsub.f32 %v4167, %v4233
    %v4250 = vsub.f32 %v4168, %v4234
    %v4251 = vsub.f32 %v4169, %v4235
    %v4252 = vsub.f32 %v4170, %v4236
    %v4253 = vsub.f32 %v4171, %v4237
    %v4254 = vsub.f32 %v4172, %v4238
    %v4255 = vsub.f32 %v4173, %v4239
    %v4256 = vmul.f32 %v4240, %v4240
    %v4257 = vmul.f32 %v4241, %v4241
    %v4258 = vmul.f32 %v4242, %v4242
    %v4259 = vmul.f32 %v4243, %v4243
    %v4260 = vmul.f32 %v4244, %v4244
    %v4261 = vmul.f32 %v4245, %v4245
    %v4262 = vmul.f32 %v4246, %v4246
    %v4263 = vmul.f32 %v4247, %v4247
    %v4264 = vmul.f32 %v4248, %v4248
    %v4265 = vmul.f32 %v4249, %v4249
    %v4266 = vmul.f32 %v4250, %v4250
    %v4267 = vmul.f32 %v4251, %v4251
    %v4268 = vmul.f32 %v4252, %v4252
    %v4269 = vmul.f32 %v4253, %v4253
    %v4270 = vmul.f32 %v4254, %v4254
    %v4271 = vmul.f32 %v4255, %v4255
    %v4272 = vsel %vm462, %v4256, 0.0
    %4273 = vadd.xlane.f32.xlu0 %v4272
    %v4274 = vpop.xlane.xlu0 %4273
    %v4275 = vsel %vm462, %v4257, 0.0
    %4276 = vadd.xlane.f32.xlu0 %v4275
    %v4277 = vpop.xlane.xlu0 %4276
    %v4278 = vsel %vm462, %v4258, 0.0
    %4279 = vadd.xlane.f32.xlu0 %v4278
    %v4280 = vpop.xlane.xlu0 %4279
    %v4281 = vsel %vm462, %v4259, 0.0
    %4282 = vadd.xlane.f32.xlu0 %v4281
    %v4283 = vpop.xlane.xlu0 %4282
    %v4284 = vsel %vm462, %v4260, 0.0
    %4285 = vadd.xlane.f32.xlu0 %v4284
    %v4286 = vpop.xlane.xlu0 %4285
    %v4287 = vsel %vm462, %v4261, 0.0
    %4288 = vadd.xlane.f32.xlu0 %v4287
    %v4289 = vpop.xlane.xlu0 %4288
    %v4290 = vsel %vm462, %v4262, 0.0
    %4291 = vadd.xlane.f32.xlu0 %v4290
    %v4292 = vpop.xlane.xlu0 %4291
    %v4293 = vsel %vm462, %v4263, 0.0
    %4294 = vadd.xlane.f32.xlu0 %v4293
    %v4295 = vpop.xlane.xlu0 %4294
    %v4296 = vsel %vm462, %v4264, 0.0
    %4297 = vadd.xlane.f32.xlu0 %v4296
    %v4298 = vpop.xlane.xlu0 %4297
    %v4299 = vsel %vm462, %v4265, 0.0
    %4300 = vadd.xlane.f32.xlu0 %v4299
    %v4301 = vpop.xlane.xlu0 %4300
    %v4302 = vsel %vm462, %v4266, 0.0
    %4303 = vadd.xlane.f32.xlu0 %v4302
    %v4304 = vpop.xlane.xlu0 %4303
    %v4305 = vsel %vm462, %v4267, 0.0
    %4306 = vadd.xlane.f32.xlu0 %v4305
    %v4307 = vpop.xlane.xlu0 %4306
    %v4308 = vsel %vm462, %v4268, 0.0
    %4309 = vadd.xlane.f32.xlu0 %v4308
    %v4310 = vpop.xlane.xlu0 %4309
    %v4311 = vsel %vm462, %v4269, 0.0
    %4312 = vadd.xlane.f32.xlu0 %v4311
    %v4313 = vpop.xlane.xlu0 %4312
    %v4314 = vsel %vm462, %v4270, 0.0
    %4315 = vadd.xlane.f32.xlu0 %v4314
    %v4316 = vpop.xlane.xlu0 %4315
    %v4317 = vsel %vm462, %v4271, 0.0
    %4318 = vadd.xlane.f32.xlu0 %v4317
    %v4319 = vpop.xlane.xlu0 %4318
    %v4320 = vmul.f32 %v4274, %v3557
    %v4321 = vmul.f32 %v4277, %v3557
    %v4322 = vmul.f32 %v4280, %v3557
    %v4323 = vmul.f32 %v4283, %v3557
    %v4324 = vmul.f32 %v4286, %v3557
    %v4325 = vmul.f32 %v4289, %v3557
    %v4326 = vmul.f32 %v4292, %v3557
    %v4327 = vmul.f32 %v4295, %v3557
    %v4328 = vmul.f32 %v4298, %v3557
    %v4329 = vmul.f32 %v4301, %v3557
    %v4330 = vmul.f32 %v4304, %v3557
    %v4331 = vmul.f32 %v4307, %v3557
    %v4332 = vmul.f32 %v4310, %v3557
    %v4333 = vmul.f32 %v4313, %v3557
    %v4334 = vmul.f32 %v4316, %v3557
    %v4335 = vmul.f32 %v4319, %v3557
    %v4336 = vadd.f32 %v4320, 1e-05
    %v4337 = vadd.f32 %v4321, 1e-05
    %v4338 = vadd.f32 %v4322, 1e-05
    %v4339 = vadd.f32 %v4323, 1e-05
    %v4340 = vadd.f32 %v4324, 1e-05
    %v4341 = vadd.f32 %v4325, 1e-05
    %v4342 = vadd.f32 %v4326, 1e-05
    %v4343 = vadd.f32 %v4327, 1e-05
    %v4344 = vadd.f32 %v4328, 1e-05
    %v4345 = vadd.f32 %v4329, 1e-05
    %v4346 = vadd.f32 %v4330, 1e-05
    %v4347 = vadd.f32 %v4331, 1e-05
    %v4348 = vadd.f32 %v4332, 1e-05
    %v4349 = vadd.f32 %v4333, 1e-05
    %v4350 = vadd.f32 %v4334, 1e-05
    %v4351 = vadd.f32 %v4335, 1e-05
    %v4352 = vrsqrt.pop %v4336
    %v4353 = vmul.f32 %v4352, %v4336
    %v4354 = vmul.f32 %v4353, %v4352
    %v4355 = vmul.f32 0.5, %v4354
    %v4356 = vsub.f32 1.5, %v4355
    %v4357 = vmul.f32 %v4352, %v4356
    %vm4358 = vweird.f32 %v4336
    %vm4359 = vweird.f32 %v4352
    %vm4360 = vmor %vm4358, %vm4359
    %v4361 = vsel %vm4360, %v4352, %v4357
    %v4362 = vrsqrt.pop %v4337
    %v4363 = vmul.f32 %v4362, %v4337
    %v4364 = vmul.f32 %v4363, %v4362
    %v4365 = vmul.f32 0.5, %v4364
    %v4366 = vsub.f32 1.5, %v4365
    %v4367 = vmul.f32 %v4362, %v4366
    %vm4368 = vweird.f32 %v4337
    %vm4369 = vweird.f32 %v4362
    %vm4370 = vmor %vm4368, %vm4369
    %v4371 = vsel %vm4370, %v4362, %v4367
    %v4372 = vrsqrt.pop %v4338
    %v4373 = vmul.f32 %v4372, %v4338
    %v4374 = vmul.f32 %v4373, %v4372
    %v4375 = vmul.f32 0.5, %v4374
    %v4376 = vsub.f32 1.5, %v4375
    %v4377 = vmul.f32 %v4372, %v4376
    %vm4378 = vweird.f32 %v4338
    %vm4379 = vweird.f32 %v4372
    %vm4380 = vmor %vm4378, %vm4379
    %v4381 = vsel %vm4380, %v4372, %v4377
    %v4382 = vrsqrt.pop %v4339
    %v4383 = vmul.f32 %v4382, %v4339
    %v4384 = vmul.f32 %v4383, %v4382
    %v4385 = vmul.f32 0.5, %v4384
    %v4386 = vsub.f32 1.5, %v4385
    %v4387 = vmul.f32 %v4382, %v4386
    %vm4388 = vweird.f32 %v4339
    %vm4389 = vweird.f32 %v4382
    %vm4390 = vmor %vm4388, %vm4389
    %v4391 = vsel %vm4390, %v4382, %v4387
    %v4392 = vrsqrt.pop %v4340
    %v4393 = vmul.f32 %v4392, %v4340
    %v4394 = vmul.f32 %v4393, %v4392
    %v4395 = vmul.f32 0.5, %v4394
    %v4396 = vsub.f32 1.5, %v4395
    %v4397 = vmul.f32 %v4392, %v4396
    %vm4398 = vweird.f32 %v4340
    %vm4399 = vweird.f32 %v4392
    %vm4400 = vmor %vm4398, %vm4399
    %v4401 = vsel %vm4400, %v4392, %v4397
    %v4402 = vrsqrt.pop %v4341
    %v4403 = vmul.f32 %v4402, %v4341
    %v4404 = vmul.f32 %v4403, %v4402
    %v4405 = vmul.f32 0.5, %v4404
    %v4406 = vsub.f32 1.5, %v4405
    %v4407 = vmul.f32 %v4402, %v4406
    %vm4408 = vweird.f32 %v4341
    %vm4409 = vweird.f32 %v4402
    %vm4410 = vmor %vm4408, %vm4409
    %v4411 = vsel %vm4410, %v4402, %v4407
    %v4412 = vrsqrt.pop %v4342
    %v4413 = vmul.f32 %v4412, %v4342
    %v4414 = vmul.f32 %v4413, %v4412
    %v4415 = vmul.f32 0.5, %v4414
    %v4416 = vsub.f32 1.5, %v4415
    %v4417 = vmul.f32 %v4412, %v4416
    %vm4418 = vweird.f32 %v4342
    %vm4419 = vweird.f32 %v4412
    %vm4420 = vmor %vm4418, %vm4419
    %v4421 = vsel %vm4420, %v4412, %v4417
    %v4422 = vrsqrt.pop %v4343
    %v4423 = vmul.f32 %v4422, %v4343
    %v4424 = vmul.f32 %v4423, %v4422
    %v4425 = vmul.f32 0.5, %v4424
    %v4426 = vsub.f32 1.5, %v4425
    %v4427 = vmul.f32 %v4422, %v4426
    %vm4428 = vweird.f32 %v4343
    %vm4429 = vweird.f32 %v4422
    %vm4430 = vmor %vm4428, %vm4429
    %v4431 = vsel %vm4430, %v4422, %v4427
    %v4432 = vrsqrt.pop %v4344
    %v4433 = vmul.f32 %v4432, %v4344
    %v4434 = vmul.f32 %v4433, %v4432
    %v4435 = vmul.f32 0.5, %v4434
    %v4436 = vsub.f32 1.5, %v4435
    %v4437 = vmul.f32 %v4432, %v4436
    %vm4438 = vweird.f32 %v4344
    %vm4439 = vweird.f32 %v4432
    %vm4440 = vmor %vm4438, %vm4439
    %v4441 = vsel %vm4440, %v4432, %v4437
    %v4442 = vrsqrt.pop %v4345
    %v4443 = vmul.f32 %v4442, %v4345
    %v4444 = vmul.f32 %v4443, %v4442
    %v4445 = vmul.f32 0.5, %v4444
    %v4446 = vsub.f32 1.5, %v4445
    %v4447 = vmul.f32 %v4442, %v4446
    %vm4448 = vweird.f32 %v4345
    %vm4449 = vweird.f32 %v4442
    %vm4450 = vmor %vm4448, %vm4449
    %v4451 = vsel %vm4450, %v4442, %v4447
    %v4452 = vrsqrt.pop %v4346
    %v4453 = vmul.f32 %v4452, %v4346
    %v4454 = vmul.f32 %v4453, %v4452
    %v4455 = vmul.f32 0.5, %v4454
    %v4456 = vsub.f32 1.5, %v4455
    %v4457 = vmul.f32 %v4452, %v4456
    %vm4458 = vweird.f32 %v4346
    %vm4459 = vweird.f32 %v4452
    %vm4460 = vmor %vm4458, %vm4459
    %v4461 = vsel %vm4460, %v4452, %v4457
    %v4462 = vrsqrt.pop %v4347
    %v4463 = vmul.f32 %v4462, %v4347
    %v4464 = vmul.f32 %v4463, %v4462
    %v4465 = vmul.f32 0.5, %v4464
    %v4466 = vsub.f32 1.5, %v4465
    %v4467 = vmul.f32 %v4462, %v4466
    %vm4468 = vweird.f32 %v4347
    %vm4469 = vweird.f32 %v4462
    %vm4470 = vmor %vm4468, %vm4469
    %v4471 = vsel %vm4470, %v4462, %v4467
    %v4472 = vrsqrt.pop %v4348
    %v4473 = vmul.f32 %v4472, %v4348
    %v4474 = vmul.f32 %v4473, %v4472
    %v4475 = vmul.f32 0.5, %v4474
    %v4476 = vsub.f32 1.5, %v4475
    %v4477 = vmul.f32 %v4472, %v4476
    %vm4478 = vweird.f32 %v4348
    %vm4479 = vweird.f32 %v4472
    %vm4480 = vmor %vm4478, %vm4479
    %v4481 = vsel %vm4480, %v4472, %v4477
    %v4482 = vrsqrt.pop %v4349
    %v4483 = vmul.f32 %v4482, %v4349
    %v4484 = vmul.f32 %v4483, %v4482
    %v4485 = vmul.f32 0.5, %v4484
    %v4486 = vsub.f32 1.5, %v4485
    %v4487 = vmul.f32 %v4482, %v4486
    %vm4488 = vweird.f32 %v4349
    %vm4489 = vweird.f32 %v4482
    %vm4490 = vmor %vm4488, %vm4489
    %v4491 = vsel %vm4490, %v4482, %v4487
    %v4492 = vrsqrt.pop %v4350
    %v4493 = vmul.f32 %v4492, %v4350
    %v4494 = vmul.f32 %v4493, %v4492
    %v4495 = vmul.f32 0.5, %v4494
    %v4496 = vsub.f32 1.5, %v4495
    %v4497 = vmul.f32 %v4492, %v4496
    %vm4498 = vweird.f32 %v4350
    %vm4499 = vweird.f32 %v4492
    %vm4500 = vmor %vm4498, %vm4499
    %v4501 = vsel %vm4500, %v4492, %v4497
    %v4502 = vrsqrt.pop %v4351
    %v4503 = vmul.f32 %v4502, %v4351
    %v4504 = vmul.f32 %v4503, %v4502
    %v4505 = vmul.f32 0.5, %v4504
    %v4506 = vsub.f32 1.5, %v4505
    %v4507 = vmul.f32 %v4502, %v4506
    %vm4508 = vweird.f32 %v4351
    %vm4509 = vweird.f32 %v4502
    %vm4510 = vmor %vm4508, %vm4509
    %v4511 = vsel %vm4510, %v4502, %v4507
    %v4512 = vmul.f32 %v4240, %v4361
    %v4513 = vmul.f32 %v4241, %v4371
    %v4514 = vmul.f32 %v4242, %v4381
    %v4515 = vmul.f32 %v4243, %v4391
    %v4516 = vmul.f32 %v4244, %v4401
    %v4517 = vmul.f32 %v4245, %v4411
    %v4518 = vmul.f32 %v4246, %v4421
    %v4519 = vmul.f32 %v4247, %v4431
    %v4520 = vmul.f32 %v4248, %v4441
    %v4521 = vmul.f32 %v4249, %v4451
    %v4522 = vmul.f32 %v4250, %v4461
    %v4523 = vmul.f32 %v4251, %v4471
    %v4524 = vmul.f32 %v4252, %v4481
    %v4525 = vmul.f32 %v4253, %v4491
    %v4526 = vmul.f32 %v4254, %v4501
    %v4527 = vmul.f32 %v4255, %v4511
    %v4528 = vperm.slane %v4175, 0
    %v4529 = vmul.f32 %v4512, %v4528
    %v4530 = vmul.f32 %v4513, %v4528
    %v4531 = vmul.f32 %v4514, %v4528
    %v4532 = vmul.f32 %v4515, %v4528
    %v4533 = vmul.f32 %v4516, %v4528
    %v4534 = vmul.f32 %v4517, %v4528
    %v4535 = vmul.f32 %v4518, %v4528
    %v4536 = vmul.f32 %v4519, %v4528
    %v4537 = vmul.f32 %v4520, %v4528
    %v4538 = vmul.f32 %v4521, %v4528
    %v4539 = vmul.f32 %v4522, %v4528
    %v4540 = vmul.f32 %v4523, %v4528
    %v4541 = vmul.f32 %v4524, %v4528
    %v4542 = vmul.f32 %v4525, %v4528
    %v4543 = vmul.f32 %v4526, %v4528
    %v4544 = vmul.f32 %v4527, %v4528
    %v4545 = vperm.slane %v4175, 1
    %v4546 = vadd.f32 %v4529, %v4545
    %v4547 = vadd.f32 %v4530, %v4545
    %v4548 = vadd.f32 %v4531, %v4545
    %v4549 = vadd.f32 %v4532, %v4545
    %v4550 = vadd.f32 %v4533, %v4545
    %v4551 = vadd.f32 %v4534, %v4545
    %v4552 = vadd.f32 %v4535, %v4545
    %v4553 = vadd.f32 %v4536, %v4545
    %v4554 = vadd.f32 %v4537, %v4545
    %v4555 = vadd.f32 %v4538, %v4545
    %v4556 = vadd.f32 %v4539, %v4545
    %v4557 = vadd.f32 %v4540, %v4545
    %v4558 = vadd.f32 %v4541, %v4545
    %v4559 = vadd.f32 %v4542, %v4545
    %v4560 = vadd.f32 %v4543, %v4545
    %v4561 = vadd.f32 %v4544, %v4545
    %v4562 = vld [vmem:[%s5] sm:$0xff]
    %v4563 = vld [vmem:[%s5 + $0x8] sm:$0xff]
    %v4564 = vld [vmem:[%s7] sm:$0x3]
    %v4565 = vld [vmem:[%s7 + $0x2] sm:$0x1]
    %v4566 = vperm.slane %v4565, 0
    %vm4567 = vcmask 15360
    %v4569 = vsel %vm4567, %v4562, 0
    %v4572 = vsel %vm4567, %v4563, 0
    %vm4574 = vcmask 1041408
    %v4576 = vsel %vm4574, %v4564, 0
    %4578 = vmatpush.msra.mxu0 0.0
    %4579 = vmatpush.msra.mxu0 0.0
    %4580 = vmatpush.msra.mxu0 0.0
    %4581 = vmatpush.msra.mxu0 0.0
    %4582 = vmatpush.msra.mxu0 0.0
    %4583 = vmatpush.msra.mxu0 0.0
    %4584 = vmatpush.msra.mxu0 0.0
    %4585 = vmatpush.msra.mxu0 0.0
    %4586 = vmatpush.msra.mxu0 0.0
    %4587 = vmatpush.msra.mxu0 0.0
    %4588 = vmatpush.msra.mxu0 0.0
    %4589 = vmatpush.msra.mxu0 0.0
    %4590 = vmatpush.msra.mxu0 0.0
    %4591 = vmatpush.msra.mxu0 0.0
    %4592 = vmatpush.msra.mxu0 0.0
    %4593 = vmatpush.msra.mxu0 %v4576
    %4594 = vmatmul.f32.gmra.mxu0 %v4569
    %v4595 = vpop.f32.mrf.mxu0
    %v4596 = vadd.f32 %v4566, %v4595
    %4597 = vmatmul.f32.gmra.mxu0 %v4572
    %v4598 = vpop.f32.mrf.mxu0
    %v4599 = vadd.f32 %v4566, %v4598
    %4600 = vdwg.mxu0
    %v4601 = vand.u32 2147483647, %v4596
    %vm4602 = vcmp.le.f32.partialorder %v4601, 0.7853982
    %vm4603 = vcmp.lt.s32.totalorder %v4596, 0
    %v4604 = vand.u32 %v4596, 2139095040
    %v4605 = vshrl.u32 %v4604, 23
    %v4606 = vsub.s32 %v4605, 127
    %v4607 = vand.u32 2147483647, %v4596
    %v4608 = vand.u32 %v4607, 8388607
    %v4609 = vor.u32 %v4608, 8388608
    %v4610 = vsub.s32 0, %v4609
    %v4611 = vadd.s32 %v4606, 1
    %vm4612 = vcmp.gt.s32.totalorder %v4611, 0
    %v4613 = vsel %vm4612, %v4611, 0
    %v4614 = vshrl.u32 %v4613, 5
    %v4615 = vand.u32 %v4613, 31
    %v4616 = vsub.s32 32, %v4615
    %v4617 = vshrl.u32 683565275, %v4616
    %v4618 = vshll.u32 683565275, %v4615
    %v4619 = vshrl.u32 2475754826, %v4616
    %v4620 = vor.u32 %v4618, %v4619
    %v4621 = vshll.u32 2475754826, %v4615
    %v4622 = vshrl.u32 2131351028, %v4616
    %v4623 = vor.u32 %v4621, %v4622
    %v4624 = vshll.u32 2131351028, %v4615
    %v4625 = vshrl.u32 2102212464, %v4616
    %v4626 = vor.u32 %v4624, %v4625
    %v4627 = vshll.u32 2102212464, %v4615
    %v4628 = vshrl.u32 920167782, %v4616
    %v4629 = vor.u32 %v4627, %v4628
    %v4630 = vshll.u32 920167782, %v4615
    %v4631 = vshrl.u32 1326507024, %v4616
    %v4632 = vor.u32 %v4630, %v4631
    %vm4633 = vcmp.lt.s32.totalorder %v4614, 1
    %vm4634 = vcmp.lt.s32.totalorder %v4614, 2
    %vm4635 = vcmp.lt.s32.totalorder %v4614, 3
    %vm4636 = vcmp.lt.s32.totalorder %v4614, 4
    %v4637 = vsel %vm4633, %v4617, %v4620
    %v4638 = vsel %vm4636, %v4626, 2102212464
    %v4639 = vsel %vm4635, %v4623, %v4638
    %v4640 = vsel %vm4634, %v4637, %v4639
    %v4641 = vsel %vm4633, %v4620, %v4623
    %v4642 = vsel %vm4636, %v4629, 920167782
    %v4643 = vsel %vm4635, %v4626, %v4642
    %v4644 = vsel %vm4634, %v4641, %v4643
    %v4645 = vsel %vm4633, %v4623, %v4626
    %v4646 = vsel %vm4636, %v4632, 1326507024
    %v4647 = vsel %vm4635, %v4629, %v4646
    %v4648 = vsel %vm4634, %v4645, %v4647
    %v4649 = vshll.u32 %v4609, 8
    %v4650 = vand.u32 %v4649, 65535
    %v4651 = vshrl.u32 %v4649, 16
    %v4652 = vand.u32 %v4648, 65535
    %v4653 = vshrl.u32 %v4648, 16
    %v4654 = vmul.u32 %v4650, %v4652
    %v4655 = vmul.u32 %v4650, %v4653
    %v4656 = vmul.u32 %v4651, %v4652
    %v4657 = vmul.u32 %v4651, %v4653
    %v4658 = vshll.u32 %v4655, 16
    %v4659 = vshrl.u32 %v4655, 16
    %v4660 = vshll.u32 %v4656, 16
    %v4661 = vshrl.u32 %v4656, 16
    %vm4662 = vc.u32 %v4654, %v4658
    %v4663 = vsel %vm4662, 1, 0
    %v4664 = vadd.s32 %v4654, %v4658
    %v4665 = vadd.s32 %v4657, %v4663
    %vm4666 = vc.u32 %v4664, %v4660
    %v4667 = vsel %vm4666, 1, 0
    %v4668 = vadd.s32 %v4664, %v4660
    %v4669 = vadd.s32 %v4665, %v4667
    %v4670 = vadd.s32 %v4669, %v4659
    %v4671 = vadd.s32 %v4670, %v4661
    %v4672 = vand.u32 %v4649, 65535
    %v4673 = vshrl.u32 %v4649, 16
    %v4674 = vand.u32 %v4644, 65535
    %v4675 = vshrl.u32 %v4644, 16
    %v4676 = vmul.u32 %v4672, %v4674
    %v4677 = vmul.u32 %v4672, %v4675
    %v4678 = vmul.u32 %v4673, %v4674
    %v4679 = vmul.u32 %v4673, %v4675
    %v4680 = vshll.u32 %v4677, 16
    %v4681 = vshrl.u32 %v4677, 16
    %v4682 = vshll.u32 %v4678, 16
    %v4683 = vshrl.u32 %v4678, 16
    %vm4684 = vc.u32 %v4676, %v4680
    %v4685 = vsel %vm4684, 1, 0
    %v4686 = vadd.s32 %v4676, %v4680
    %v4687 = vadd.s32 %v4679, %v4685
    %vm4688 = vc.u32 %v4686, %v4682
    %v4689 = vsel %vm4688, 1, 0
    %v4690 = vadd.s32 %v4686, %v4682
    %v4691 = vadd.s32 %v4687, %v4689
    %v4692 = vadd.s32 %v4691, %v4681
    %v4693 = vadd.s32 %v4692, %v4683
    %v4694 = vmul.u32 %v4649, %v4640
    %v4695 = vadd.s32 %v4671, %v4690
    %vm4696 = vc.u32 %v4671, %v4690
    %v4697 = vadd.s32 %v4693, 1
    %v4698 = vsel %vm4696, %v4697, %v4693
    %v4699 = vadd.s32 %v4694, %v4698
    %v4700 = vadd.s32 %v4699, 536870912
    %v4701 = vshrl.u32 %v4700, 30
    %v4702 = vshll.u32 %v4701, 30
    %v4703 = vsub.s32 %v4699, %v4702
    %vm4704 = vcmp.lt.s32.totalorder %v4703, 0
    %v4705 = vsub.s32 0, %v4703
    %v4706 = vsel %vm4704, %v4705, %v4703
    %v4707 = vclz %v4706
    %v4708 = vsub.s32 %v4707, 2
    %vm4709 = vcmp.gt.s32.totalorder 0, %v4708
    %v4710 = vsel %vm4709, 0, %v4708
    %v4711 = vsub.s32 32, %v4710
    %v4712 = vshll.u32 %v4703, %v4710
    %v4713 = vshrl.u32 %v4695, %v4711
    %v4714 = vor.u32 %v4712, %v4713
    %v4715 = vsub.s32 4294967266, %v4710
    %v4716 = vadd.s32 %v4715, 127
    %v4717 = vshll.u32 %v4716, 23
    %v4718 = vor.u32 4788187, %v4717
    %v4719 = vand.u32 2147483647, %v4718
    %v4721 = vcvt.s32.f32 %v4714
    %v4722 = vmul.f32 %v4721, %v4719
    %v4723 = vxor.u32 %v4722, 2147483648
    %v4724 = vsel %vm4603, %v4723, %v4722
    %v4725 = vsub.s32 4, %v4701
    %v4726 = vsel %vm4603, %v4725, %v4701
    %v4727 = vsel %vm4602, %v4596, %v4724
    %v4728 = vsel %vm4602, 0, %v4726
    %v4729 = vmul.f32 %v4727, %v4727
    %v4730 = vmul.f32 %v4729, -0.001358992
    %v4731 = vadd.f32 %v4730, 0.041655596
    %v4732 = vmul.f32 %v4729, %v4731
    %v4733 = vadd.f32 %v4732, -0.4999988
    %v4734 = vmul.f32 %v4729, %v4733
    %v4735 = vadd.f32 1.0, %v4734
    %v4736 = vmul.f32 %v4727, %v4727
    %v4737 = vmul.f32 %v4736, -0.00019511016
    %v4738 = vadd.f32 %v4737, 0.008332121
    %v4739 = vmul.f32 %v4736, %v4738
    %v4740 = vadd.f32 %v4739, -0.16666654
    %v4741 = vmul.f32 %v4736, %v4740
    %v4742 = vadd.f32 %v4741, 1.0
    %v4743 = vmul.f32 %v4742, %v4727
    %vm4744 = vweird.f32 %v4596
    %v4745 = vadd.s32 %v4728, 3
    %v4746 = vand.u32 %v4745, 3
    %vm4747 = vcmp.lt.s32.totalorder %v4746, 2
    %vm4748 = vcmp.eq.s32.totalorder %v4746, 0
    %v4749 = vxor.u32 %v4743, 2147483648
    %v4750 = vsel %vm4748, %v4735, %v4749
    %vm4751 = vcmp.eq.s32.totalorder %v4746, 2
    %v4752 = vxor.u32 %v4735, 2147483648
    %v4753 = vsel %vm4751, %v4752, %v4743
    %v4754 = vsel %vm4747, %v4750, %v4753
    %v4755 = vsel %vm4744, nan, %v4754
    %v4756 = vand.u32 2147483647, %v4599
    %vm4757 = vcmp.le.f32.partialorder %v4756, 0.7853982
    %vm4758 = vcmp.lt.s32.totalorder %v4599, 0
    %v4759 = vand.u32 %v4599, 2139095040
    %v4760 = vshrl.u32 %v4759, 23
    %v4761 = vsub.s32 %v4760, 127
    %v4762 = vand.u32 2147483647, %v4599
    %v4763 = vand.u32 %v4762, 8388607
    %v4764 = vor.u32 %v4763, 8388608
    %v4765 = vsub.s32 0, %v4764
    %v4766 = vadd.s32 %v4761, 1
    %vm4767 = vcmp.gt.s32.totalorder %v4766, 0
    %v4768 = vsel %vm4767, %v4766, 0
    %v4769 = vshrl.u32 %v4768, 5
    %v4770 = vand.u32 %v4768, 31
    %v4771 = vsub.s32 32, %v4770
    %v4772 = vshrl.u32 683565275, %v4771
    %v4773 = vshll.u32 683565275, %v4770
    %v4774 = vshrl.u32 2475754826, %v4771
    %v4775 = vor.u32 %v4773, %v4774
    %v4776 = vshll.u32 2475754826, %v4770
    %v4777 = vshrl.u32 2131351028, %v4771
    %v4778 = vor.u32 %v4776, %v4777
    %v4779 = vshll.u32 2131351028, %v4770
    %v4780 = vshrl.u32 2102212464, %v4771
    %v4781 = vor.u32 %v4779, %v4780
    %v4782 = vshll.u32 2102212464, %v4770
    %v4783 = vshrl.u32 920167782, %v4771
    %v4784 = vor.u32 %v4782, %v4783
    %v4785 = vshll.u32 920167782, %v4770
    %v4786 = vshrl.u32 1326507024, %v4771
    %v4787 = vor.u32 %v4785, %v4786
    %vm4788 = vcmp.lt.s32.totalorder %v4769, 1
    %vm4789 = vcmp.lt.s32.totalorder %v4769, 2
    %vm4790 = vcmp.lt.s32.totalorder %v4769, 3
    %vm4791 = vcmp.lt.s32.totalorder %v4769, 4
    %v4792 = vsel %vm4788, %v4772, %v4775
    %v4793 = vsel %vm4791, %v4781, 2102212464
    %v4794 = vsel %vm4790, %v4778, %v4793
    %v4795 = vsel %vm4789, %v4792, %v4794
    %v4796 = vsel %vm4788, %v4775, %v4778
    %v4797 = vsel %vm4791, %v4784, 920167782
    %v4798 = vsel %vm4790, %v4781, %v4797
    %v4799 = vsel %vm4789, %v4796, %v4798
    %v4800 = vsel %vm4788, %v4778, %v4781
    %v4801 = vsel %vm4791, %v4787, 1326507024
    %v4802 = vsel %vm4790, %v4784, %v4801
    %v4803 = vsel %vm4789, %v4800, %v4802
    %v4804 = vshll.u32 %v4764, 8
    %v4805 = vand.u32 %v4804, 65535
    %v4806 = vshrl.u32 %v4804, 16
    %v4807 = vand.u32 %v4803, 65535
    %v4808 = vshrl.u32 %v4803, 16
    %v4809 = vmul.u32 %v4805, %v4807
    %v4810 = vmul.u32 %v4805, %v4808
    %v4811 = vmul.u32 %v4806, %v4807
    %v4812 = vmul.u32 %v4806, %v4808
    %v4813 = vshll.u32 %v4810, 16
    %v4814 = vshrl.u32 %v4810, 16
    %v4815 = vshll.u32 %v4811, 16
    %v4816 = vshrl.u32 %v4811, 16
    %vm4817 = vc.u32 %v4809, %v4813
    %v4818 = vsel %vm4817, 1, 0
    %v4819 = vadd.s32 %v4809, %v4813
    %v4820 = vadd.s32 %v4812, %v4818
    %vm4821 = vc.u32 %v4819, %v4815
    %v4822 = vsel %vm4821, 1, 0
    %v4823 = vadd.s32 %v4819, %v4815
    %v4824 = vadd.s32 %v4820, %v4822
    %v4825 = vadd.s32 %v4824, %v4814
    %v4826 = vadd.s32 %v4825, %v4816
    %v4827 = vand.u32 %v4804, 65535
    %v4828 = vshrl.u32 %v4804, 16
    %v4829 = vand.u32 %v4799, 65535
    %v4830 = vshrl.u32 %v4799, 16
    %v4831 = vmul.u32 %v4827, %v4829
    %v4832 = vmul.u32 %v4827, %v4830
    %v4833 = vmul.u32 %v4828, %v4829
    %v4834 = vmul.u32 %v4828, %v4830
    %v4835 = vshll.u32 %v4832, 16
    %v4836 = vshrl.u32 %v4832, 16
    %v4837 = vshll.u32 %v4833, 16
    %v4838 = vshrl.u32 %v4833, 16
    %vm4839 = vc.u32 %v4831, %v4835
    %v4840 = vsel %vm4839, 1, 0
    %v4841 = vadd.s32 %v4831, %v4835
    %v4842 = vadd.s32 %v4834, %v4840
    %vm4843 = vc.u32 %v4841, %v4837
    %v4844 = vsel %vm4843, 1, 0
    %v4845 = vadd.s32 %v4841, %v4837
    %v4846 = vadd.s32 %v4842, %v4844
    %v4847 = vadd.s32 %v4846, %v4836
    %v4848 = vadd.s32 %v4847, %v4838
    %v4849 = vmul.u32 %v4804, %v4795
    %v4850 = vadd.s32 %v4826, %v4845
    %vm4851 = vc.u32 %v4826, %v4845
    %v4852 = vadd.s32 %v4848, 1
    %v4853 = vsel %vm4851, %v4852, %v4848
    %v4854 = vadd.s32 %v4849, %v4853
    %v4855 = vadd.s32 %v4854, 536870912
    %v4856 = vshrl.u32 %v4855, 30
    %v4857 = vshll.u32 %v4856, 30
    %v4858 = vsub.s32 %v4854, %v4857
    %vm4859 = vcmp.lt.s32.totalorder %v4858, 0
    %v4860 = vsub.s32 0, %v4858
    %v4861 = vsel %vm4859, %v4860, %v4858
    %v4862 = vclz %v4861
    %v4863 = vsub.s32 %v4862, 2
    %vm4864 = vcmp.gt.s32.totalorder 0, %v4863
    %v4865 = vsel %vm4864, 0, %v4863
    %v4866 = vsub.s32 32, %v4865
    %v4867 = vshll.u32 %v4858, %v4865
    %v4868 = vshrl.u32 %v4850, %v4866
    %v4869 = vor.u32 %v4867, %v4868
    %v4870 = vsub.s32 4294967266, %v4865
    %v4871 = vadd.s32 %v4870, 127
    %v4872 = vshll.u32 %v4871, 23
    %v4873 = vor.u32 4788187, %v4872
    %v4874 = vand.u32 2147483647, %v4873
    %v4876 = vcvt.s32.f32 %v4869
    %v4877 = vmul.f32 %v4876, %v4874
    %v4878 = vxor.u32 %v4877, 2147483648
    %v4879 = vsel %vm4758, %v4878, %v4877
    %v4880 = vsub.s32 4, %v4856
    %v4881 = vsel %vm4758, %v4880, %v4856
    %v4882 = vsel %vm4757, %v4599, %v4879
    %v4883 = vsel %vm4757, 0, %v4881
    %v4884 = vmul.f32 %v4882, %v4882
    %v4885 = vmul.f32 %v4884, -0.001358992
    %v4886 = vadd.f32 %v4885, 0.041655596
    %v4887 = vmul.f32 %v4884, %v4886
    %v4888 = vadd.f32 %v4887, -0.4999988
    %v4889 = vmul.f32 %v4884, %v4888
    %v4890 = vadd.f32 1.0, %v4889
    %v4891 = vmul.f32 %v4882, %v4882
    %v4892 = vmul.f32 %v4891, -0.00019511016
    %v4893 = vadd.f32 %v4892, 0.008332121
    %v4894 = vmul.f32 %v4891, %v4893
    %v4895 = vadd.f32 %v4894, -0.16666654
    %v4896 = vmul.f32 %v4891, %v4895
    %v4897 = vadd.f32 %v4896, 1.0
    %v4898 = vmul.f32 %v4897, %v4882
    %vm4899 = vweird.f32 %v4599
    %v4900 = vadd.s32 %v4883, 3
    %v4901 = vand.u32 %v4900, 3
    %vm4902 = vcmp.lt.s32.totalorder %v4901, 2
    %vm4903 = vcmp.eq.s32.totalorder %v4901, 0
    %v4904 = vxor.u32 %v4898, 2147483648
    %v4905 = vsel %vm4903, %v4890, %v4904
    %vm4906 = vcmp.eq.s32.totalorder %v4901, 2
    %v4907 = vxor.u32 %v4890, 2147483648
    %v4908 = vsel %vm4906, %v4907, %v4898
    %v4909 = vsel %vm4902, %v4905, %v4908
    %v4910 = vsel %vm4899, nan, %v4909
    %v4911 = vld [vmem:[%s9] sm:$0x1]
    %v4912 = vadd.f32 %v4546, %v422
    %v4913 = vadd.f32 %v4547, %v423
    %v4914 = vadd.f32 %v4548, %v424
    %v4915 = vadd.f32 %v4549, %v425
    %v4916 = vadd.f32 %v4550, %v426
    %v4917 = vadd.f32 %v4551, %v427
    %v4918 = vadd.f32 %v4552, %v428
    %v4919 = vadd.f32 %v4553, %v429
    %v4920 = vadd.f32 %v4554, %v430
    %v4921 = vadd.f32 %v4555, %v431
    %v4922 = vadd.f32 %v4556, %v432
    %v4923 = vadd.f32 %v4557, %v433
    %v4924 = vadd.f32 %v4558, %v434
    %v4925 = vadd.f32 %v4559, %v435
    %v4926 = vadd.f32 %v4560, %v436
    %v4927 = vadd.f32 %v4561, %v437
    %v4929 = vperm.slane %v4911, 0
    %v4931 = vadd.f32 %v4929, %v4755
    %v4932 = vadd.f32 %v4929, %v4910
    %v4933 = vld [vmem:[%s37] sm:$0xff]
    %v4934 = vld [vmem:[%s37 + $0x8] sm:$0xff]
    %v4935 = vld [vmem:[%s37 + $0x10] sm:$0xff]
    %v4936 = vld [vmem:[%s37 + $0x18] sm:$0xff]
    %v4937 = vld [vmem:[%s39] sm:$0x1]
    %v4939 = vperm.slane %v4937, 0
    %v4942 = vsel %vm462, %v4931, 0
    %v4945 = vsel %vm462, %v4932, 0
    %4947 = vmatpush.msra.mxu0 0.0
    %4948 = vmatpush.msra.mxu0 0.0
    %4949 = vmatpush.msra.mxu0 0.0
    %4950 = vmatpush.msra.mxu0 0.0
    %4951 = vmatpush.msra.mxu0 0.0
    %4952 = vmatpush.msra.mxu0 0.0
    %4953 = vmatpush.msra.mxu0 0.0
    %4954 = vmatpush.msra.mxu0 0.0
    %4955 = vmatpush.msra.mxu0 0.0
    %4956 = vmatpush.msra.mxu0 0.0
    %4957 = vmatpush.msra.mxu0 0.0
    %4958 = vmatpush.msra.mxu0 0.0
    %4959 = vmatpush.msra.mxu0 %v4936
    %4960 = vmatpush.msra.mxu0 %v4935
    %4961 = vmatpush.msra.mxu0 %v4934
    %4962 = vmatpush.msra.mxu0 %v4933
    %4963 = vmatmul.f32.gmra.mxu0 %v4942
    %v4964 = vpop.f32.mrf.mxu0
    %v4965 = vadd.f32 %v4939, %v4964
    %4966 = vmatmul.f32.gmra.mxu0 %v4945
    %v4967 = vpop.f32.mrf.mxu0
    %v4968 = vadd.f32 %v4939, %v4967
    %4969 = vdwg.mxu0
    %s4970 = scalar_lea.vmem %s37, 32
    %v4971 = vld [vmem:[%s4970] sm:$0xff]
    %v4972 = vld [vmem:[%s4970 + $0x8] sm:$0xff]
    %v4973 = vld [vmem:[%s4970 + $0x10] sm:$0xff]
    %v4974 = vld [vmem:[%s4970 + $0x18] sm:$0xff]
    %s4975 = scalar_lea.vmem %s39, 1
    %v4976 = vld [vmem:[%s4975] sm:$0x1]
    %v4978 = vperm.slane %v4976, 0
    %v4981 = vsel %vm462, %v4912, 0
    %v4984 = vsel %vm462, %v4913, 0
    %v4987 = vsel %vm462, %v4914, 0
    %v4990 = vsel %vm462, %v4915, 0
    %v4993 = vsel %vm462, %v4916, 0
    %v4996 = vsel %vm462, %v4917, 0
    %v4999 = vsel %vm462, %v4918, 0
    %v5002 = vsel %vm462, %v4919, 0
    %v5005 = vsel %vm462, %v4920, 0
    %v5008 = vsel %vm462, %v4921, 0
    %v5011 = vsel %vm462, %v4922, 0
    %v5014 = vsel %vm462, %v4923, 0
    %v5017 = vsel %vm462, %v4924, 0
    %v5020 = vsel %vm462, %v4925, 0
    %v5023 = vsel %vm462, %v4926, 0
    %v5026 = vsel %vm462, %v4927, 0
    %5028 = vmatpush.msra.mxu0 0.0
    %5029 = vmatpush.msra.mxu0 0.0
    %5030 = vmatpush.msra.mxu0 0.0
    %5031 = vmatpush.msra.mxu0 0.0
    %5032 = vmatpush.msra.mxu0 0.0
    %5033 = vmatpush.msra.mxu0 0.0
    %5034 = vmatpush.msra.mxu0 0.0
    %5035 = vmatpush.msra.mxu0 0.0
    %5036 = vmatpush.msra.mxu0 0.0
    %5037 = vmatpush.msra.mxu0 0.0
    %5038 = vmatpush.msra.mxu0 0.0
    %5039 = vmatpush.msra.mxu0 0.0
    %5040 = vmatpush.msra.mxu0 %v4974
    %5041 = vmatpush.msra.mxu0 %v4973
    %5042 = vmatpush.msra.mxu0 %v4972
    %5043 = vmatpush.msra.mxu0 %v4971
    %5044 = vmatmul.f32.gmra.mxu0 %v4981
    %v5045 = vpop.f32.mrf.mxu0
    %v5046 = vadd.f32 %v4978, %v5045
    %5047 = vmatmul.f32.gmra.mxu0 %v4984
    %v5048 = vpop.f32.mrf.mxu0
    %v5049 = vadd.f32 %v4978, %v5048
    %5050 = vmatmul.f32.gmra.mxu0 %v4987
    %v5051 = vpop.f32.mrf.mxu0
    %v5052 = vadd.f32 %v4978, %v5051
    %5053 = vmatmul.f32.gmra.mxu0 %v4990
    %v5054 = vpop.f32.mrf.mxu0
    %v5055 = vadd.f32 %v4978, %v5054
    %5056 = vmatmul.f32.gmra.mxu0 %v4993
    %v5057 = vpop.f32.mrf.mxu0
    %v5058 = vadd.f32 %v4978, %v5057
    %5059 = vmatmul.f32.gmra.mxu0 %v4996
    %v5060 = vpop.f32.mrf.mxu0
    %v5061 = vadd.f32 %v4978, %v5060
    %5062 = vmatmul.f32.gmra.mxu0 %v4999
    %v5063 = vpop.f32.mrf.mxu0
    %v5064 = vadd.f32 %v4978, %v5063
    %5065 = vmatmul.f32.gmra.mxu0 %v5002
    %v5066 = vpop.f32.mrf.mxu0
    %v5067 = vadd.f32 %v4978, %v5066
    %5068 = vmatmul.f32.gmra.mxu0 %v5005
    %v5069 = vpop.f32.mrf.mxu0
    %v5070 = vadd.f32 %v4978, %v5069
    %5071 = vmatmul.f32.gmra.mxu0 %v5008
    %v5072 = vpop.f32.mrf.mxu0
    %v5073 = vadd.f32 %v4978, %v5072
    %5074 = vmatmul.f32.gmra.mxu0 %v5011
    %v5075 = vpop.f32.mrf.mxu0
    %v5076 = vadd.f32 %v4978, %v5075
    %5077 = vmatmul.f32.gmra.mxu0 %v5014
    %v5078 = vpop.f32.mrf.mxu0
    %v5079 = vadd.f32 %v4978, %v5078
    %5080 = vmatmul.f32.gmra.mxu0 %v5017
    %v5081 = vpop.f32.mrf.mxu0
    %v5082 = vadd.f32 %v4978, %v5081
    %5083 = vmatmul.f32.gmra.mxu0 %v5020
    %v5084 = vpop.f32.mrf.mxu0
    %v5085 = vadd.f32 %v4978, %v5084
    %5086 = vmatmul.f32.gmra.mxu0 %v5023
    %v5087 = vpop.f32.mrf.mxu0
    %v5088 = vadd.f32 %v4978, %v5087
    %5089 = vmatmul.f32.gmra.mxu0 %v5026
    %v5090 = vpop.f32.mrf.mxu0
    %v5091 = vadd.f32 %v4978, %v5090
    %5092 = vdwg.mxu0
    %s5093 = scalar_lea.vmem %s37, 64
    %v5094 = vld [vmem:[%s5093] sm:$0xff]
    %v5095 = vld [vmem:[%s5093 + $0x8] sm:$0xff]
    %v5096 = vld [vmem:[%s5093 + $0x10] sm:$0xff]
    %v5097 = vld [vmem:[%s5093 + $0x18] sm:$0xff]
    %s5098 = scalar_lea.vmem %s39, 2
    %v5099 = vld [vmem:[%s5098] sm:$0x1]
    %v5101 = vperm.slane %v5099, 0
    %v5104 = vsel %vm462, %v4546, 0
    %v5107 = vsel %vm462, %v4547, 0
    %v5110 = vsel %vm462, %v4548, 0
    %v5113 = vsel %vm462, %v4549, 0
    %v5116 = vsel %vm462, %v4550, 0
    %v5119 = vsel %vm462, %v4551, 0
    %v5122 = vsel %vm462, %v4552, 0
    %v5125 = vsel %vm462, %v4553, 0
    %v5128 = vsel %vm462, %v4554, 0
    %v5131 = vsel %vm462, %v4555, 0
    %v5134 = vsel %vm462, %v4556, 0
    %v5137 = vsel %vm462, %v4557, 0
    %v5140 = vsel %vm462, %v4558, 0
    %v5143 = vsel %vm462, %v4559, 0
    %v5146 = vsel %vm462, %v4560, 0
    %v5149 = vsel %vm462, %v4561, 0
    %5151 = vmatpush.msra.mxu0 0.0
    %5152 = vmatpush.msra.mxu0 0.0
    %5153 = vmatpush.msra.mxu0 0.0
    %5154 = vmatpush.msra.mxu0 0.0
    %5155 = vmatpush.msra.mxu0 0.0
    %5156 = vmatpush.msra.mxu0 0.0
    %5157 = vmatpush.msra.mxu0 0.0
    %5158 = vmatpush.msra.mxu0 0.0
    %5159 = vmatpush.msra.mxu0 0.0
    %5160 = vmatpush.msra.mxu0 0.0
    %5161 = vmatpush.msra.mxu0 0.0
    %5162 = vmatpush.msra.mxu0 0.0
    %5163 = vmatpush.msra.mxu0 %v5097
    %5164 = vmatpush.msra.mxu0 %v5096
    %5165 = vmatpush.msra.mxu0 %v5095
    %5166 = vmatpush.msra.mxu0 %v5094
    %5167 = vmatmul.f32.gmra.mxu0 %v5104
    %v5168 = vpop.f32.mrf.mxu0
    %v5169 = vadd.f32 %v5101, %v5168
    %5170 = vmatmul.f32.gmra.mxu0 %v5107
    %v5171 = vpop.f32.mrf.mxu0
    %v5172 = vadd.f32 %v5101, %v5171
    %5173 = vmatmul.f32.gmra.mxu0 %v5110
    %v5174 = vpop.f32.mrf.mxu0
    %v5175 = vadd.f32 %v5101, %v5174
    %5176 = vmatmul.f32.gmra.mxu0 %v5113
    %v5177 = vpop.f32.mrf.mxu0
    %v5178 = vadd.f32 %v5101, %v5177
    %5179 = vmatmul.f32.gmra.mxu0 %v5116
    %v5180 = vpop.f32.mrf.mxu0
    %v5181 = vadd.f32 %v5101, %v5180
    %5182 = vmatmul.f32.gmra.mxu0 %v5119
    %v5183 = vpop.f32.mrf.mxu0
    %v5184 = vadd.f32 %v5101, %v5183
    %5185 = vmatmul.f32.gmra.mxu0 %v5122
    %v5186 = vpop.f32.mrf.mxu0
    %v5187 = vadd.f32 %v5101, %v5186
    %5188 = vmatmul.f32.gmra.mxu0 %v5125
    %v5189 = vpop.f32.mrf.mxu0
    %v5190 = vadd.f32 %v5101, %v5189
    %5191 = vmatmul.f32.gmra.mxu0 %v5128
    %v5192 = vpop.f32.mrf.mxu0
    %v5193 = vadd.f32 %v5101, %v5192
    %5194 = vmatmul.f32.gmra.mxu0 %v5131
    %v5195 = vpop.f32.mrf.mxu0
    %v5196 = vadd.f32 %v5101, %v5195
    %5197 = vmatmul.f32.gmra.mxu0 %v5134
    %v5198 = vpop.f32.mrf.mxu0
    %v5199 = vadd.f32 %v5101, %v5198
    %5200 = vmatmul.f32.gmra.mxu0 %v5137
    %v5201 = vpop.f32.mrf.mxu0
    %v5202 = vadd.f32 %v5101, %v5201
    %5203 = vmatmul.f32.gmra.mxu0 %v5140
    %v5204 = vpop.f32.mrf.mxu0
    %v5205 = vadd.f32 %v5101, %v5204
    %5206 = vmatmul.f32.gmra.mxu0 %v5143
    %v5207 = vpop.f32.mrf.mxu0
    %v5208 = vadd.f32 %v5101, %v5207
    %5209 = vmatmul.f32.gmra.mxu0 %v5146
    %v5210 = vpop.f32.mrf.mxu0
    %v5211 = vadd.f32 %v5101, %v5210
    %5212 = vmatmul.f32.gmra.mxu0 %v5149
    %v5213 = vpop.f32.mrf.mxu0
    %v5214 = vadd.f32 %v5101, %v5213
    %5215 = vdwg.mxu0
    %v5217 = vsel %vm721, %v4965, 0
    %v5220 = vsel %vm721, %v5046, 0
    %v5223 = vsel %vm721, %v5049, 0
    %v5226 = vsel %vm721, %v5052, 0
    %v5229 = vsel %vm721, %v5055, 0
    %v5232 = vsel %vm721, %v5058, 0
    %v5235 = vsel %vm721, %v5061, 0
    %v5238 = vsel %vm721, %v5064, 0
    %v5241 = vsel %vm721, %v5067, 0
    %5243 = vmatpush.xpose.msra.mxu0 0.0
    %5244 = vmatpush.xpose.msra.mxu0 0.0
    %5245 = vmatpush.xpose.msra.mxu0 0.0
    %5246 = vmatpush.xpose.msra.mxu0 0.0
    %5247 = vmatpush.xpose.msra.mxu0 0.0
    %5248 = vmatpush.xpose.msra.mxu0 0.0
    %5249 = vmatpush.xpose.msra.mxu0 0.0
    %5250 = vmatpush.xpose.msra.mxu0 0.0
    %5251 = vmatpush.xpose.msra.mxu0 %v5241
    %5252 = vmatpush.xpose.msra.mxu0 %v5238
    %5253 = vmatpush.xpose.msra.mxu0 %v5235
    %5254 = vmatpush.xpose.msra.mxu0 %v5232
    %5255 = vmatpush.xpose.msra.mxu0 %v5229
    %5256 = vmatpush.xpose.msra.mxu0 %v5226
    %5257 = vmatpush.xpose.msra.mxu0 %v5223
    %5258 = vmatpush.xpose.msra.mxu0 %v5220
    %5259 = vmatmul.f32.gmra.mxu0 %v5217
    %v5260 = vpop.f32.mrf.mxu0
    %v5261 = vadd.f32 0.0, %v5260
    %5262 = vdwg.mxu0
    %v5263 = vsel %vm795, %v5261, -inf
    %5264 = vmax.xlane.f32.xlu0 %v5263
    %v5265 = vpop.xlane.xlu0 %5264
    %v5266 = vsub.f32 %v5261, %v5265
    %v5267 = vmul.f32 %v5266, 1.442695
    %v5268 = vpow.pop %v5267
    %v5269 = vsel %vm795, %v5268, 0.0
    %5270 = vadd.xlane.f32.xlu0 %v5269
    %v5271 = vpop.xlane.xlu0 %5270
    %v5272 = vrcp.pop %v5271
    %v5273 = vmul.f32 %v5268, %v5272
    %v5275 = vsel %vm795, %v5273, 0
    %5277 = vmatpush.msra.mxu0 0.0
    %5278 = vmatpush.msra.mxu0 0.0
    %5279 = vmatpush.msra.mxu0 0.0
    %5280 = vmatpush.msra.mxu0 0.0
    %5281 = vmatpush.msra.mxu0 0.0
    %5282 = vmatpush.msra.mxu0 0.0
    %5283 = vmatpush.msra.mxu0 0.0
    %5284 = vmatpush.msra.mxu0 0.0
    %5285 = vmatpush.msra.mxu0 %v5190
    %5286 = vmatpush.msra.mxu0 %v5187
    %5287 = vmatpush.msra.mxu0 %v5184
    %5288 = vmatpush.msra.mxu0 %v5181
    %5289 = vmatpush.msra.mxu0 %v5178
    %5290 = vmatpush.msra.mxu0 %v5175
    %5291 = vmatpush.msra.mxu0 %v5172
    %5292 = vmatpush.msra.mxu0 %v5169
    %5293 = vmatmul.f32.gmra.mxu0 %v5275
    %v5294 = vpop.f32.mrf.mxu0
    %v5295 = vadd.f32 0.0, %v5294
    %5296 = vdwg.mxu0
    %v5297 = vld [vmem:[%s41] sm:$0xff]
    %5298 = vrot.lane.b32.xlu0 %v4965, 120
    %v5299 = vpop.permute.xlu0 %5298
    %5300 = vrot.lane.b32.xlu0 %v5046, 120
    %v5301 = vpop.permute.xlu0 %5300
    %5302 = vrot.lane.b32.xlu0 %v5049, 120
    %v5303 = vpop.permute.xlu0 %5302
    %5304 = vrot.lane.b32.xlu0 %v5052, 120
    %v5305 = vpop.permute.xlu0 %5304
    %5306 = vrot.lane.b32.xlu0 %v5055, 120
    %v5307 = vpop.permute.xlu0 %5306
    %5308 = vrot.lane.b32.xlu0 %v5058, 120
    %v5309 = vpop.permute.xlu0 %5308
    %5310 = vrot.lane.b32.xlu0 %v5061, 120
    %v5311 = vpop.permute.xlu0 %5310
    %5312 = vrot.lane.b32.xlu0 %v5064, 120
    %v5313 = vpop.permute.xlu0 %5312
    %5314 = vrot.lane.b32.xlu0 %v5067, 120
    %v5315 = vpop.permute.xlu0 %5314
    %v5316 = vsel %vm721, %v5299, 0
    %v5318 = vsel %vm721, %v5301, 0
    %v5320 = vsel %vm721, %v5303, 0
    %v5322 = vsel %vm721, %v5305, 0
    %v5324 = vsel %vm721, %v5307, 0
    %v5326 = vsel %vm721, %v5309, 0
    %v5328 = vsel %vm721, %v5311, 0
    %v5330 = vsel %vm721, %v5313, 0
    %v5332 = vsel %vm721, %v5315, 0
    %5334 = vmatpush.xpose.msra.mxu0 0.0
    %5335 = vmatpush.xpose.msra.mxu0 0.0
    %5336 = vmatpush.xpose.msra.mxu0 0.0
    %5337 = vmatpush.xpose.msra.mxu0 0.0
    %5338 = vmatpush.xpose.msra.mxu0 0.0
    %5339 = vmatpush.xpose.msra.mxu0 0.0
    %5340 = vmatpush.xpose.msra.mxu0 0.0
    %5341 = vmatpush.xpose.msra.mxu0 0.0
    %5342 = vmatpush.xpose.msra.mxu0 %v5332
    %5343 = vmatpush.xpose.msra.mxu0 %v5330
    %5344 = vmatpush.xpose.msra.mxu0 %v5328
    %5345 = vmatpush.xpose.msra.mxu0 %v5326
    %5346 = vmatpush.xpose.msra.mxu0 %v5324
    %5347 = vmatpush.xpose.msra.mxu0 %v5322
    %5348 = vmatpush.xpose.msra.mxu0 %v5320
    %5349 = vmatpush.xpose.msra.mxu0 %v5318
    %5350 = vmatmul.f32.gmra.mxu0 %v5316
    %v5351 = vpop.f32.mrf.mxu0
    %v5352 = vadd.f32 0.0, %v5351
    %5353 = vdwg.mxu0
    %v5354 = vsel %vm795, %v5352, -inf
    %5355 = vmax.xlane.f32.xlu0 %v5354
    %v5356 = vpop.xlane.xlu0 %5355
    %v5357 = vsub.f32 %v5352, %v5356
    %v5358 = vmul.f32 %v5357, 1.442695
    %v5359 = vpow.pop %v5358
    %v5360 = vsel %vm795, %v5359, 0.0
    %5361 = vadd.xlane.f32.xlu0 %v5360
    %v5362 = vpop.xlane.xlu0 %5361
    %v5363 = vrcp.pop %v5362
    %v5364 = vmul.f32 %v5359, %v5363
    %5373 = vrot.lane.b32.xlu0 %v5169, 120
    %v5374 = vpop.permute.xlu0 %5373
    %5375 = vrot.lane.b32.xlu0 %v5172, 120
    %v5376 = vpop.permute.xlu0 %5375
    %5377 = vrot.lane.b32.xlu0 %v5175, 120
    %v5378 = vpop.permute.xlu0 %5377
    %5379 = vrot.lane.b32.xlu0 %v5178, 120
    %v5380 = vpop.permute.xlu0 %5379
    %5381 = vrot.lane.b32.xlu0 %v5181, 120
    %v5382 = vpop.permute.xlu0 %5381
    %5383 = vrot.lane.b32.xlu0 %v5184, 120
    %v5384 = vpop.permute.xlu0 %5383
    %5385 = vrot.lane.b32.xlu0 %v5187, 120
    %v5386 = vpop.permute.xlu0 %5385
    %5387 = vrot.lane.b32.xlu0 %v5190, 120
    %v5388 = vpop.permute.xlu0 %5387
    %v5398 = vsel %vm795, %v5364, 0
    %5400 = vmatpush.msra.mxu0 0.0
    %5401 = vmatpush.msra.mxu0 0.0
    %5402 = vmatpush.msra.mxu0 0.0
    %5403 = vmatpush.msra.mxu0 0.0
    %5404 = vmatpush.msra.mxu0 0.0
    %5405 = vmatpush.msra.mxu0 0.0
    %5406 = vmatpush.msra.mxu0 0.0
    %5407 = vmatpush.msra.mxu0 0.0
    %5408 = vmatpush.msra.mxu0 %v5388
    %5409 = vmatpush.msra.mxu0 %v5386
    %5410 = vmatpush.msra.mxu0 %v5384
    %5411 = vmatpush.msra.mxu0 %v5382
    %5412 = vmatpush.msra.mxu0 %v5380
    %5413 = vmatpush.msra.mxu0 %v5378
    %5414 = vmatpush.msra.mxu0 %v5376
    %5415 = vmatpush.msra.mxu0 %v5374
    %5416 = vmatmul.f32.gmra.mxu0 %v5398
    %v5417 = vpop.f32.mrf.mxu0
    %v5418 = vadd.f32 0.0, %v5417
    %5419 = vdwg.mxu0
    %s5420 = scalar_lea.vmem %s41, 8
    %v5421 = vld [vmem:[%s5420] sm:$0xff]
    %v5423 = vsel %vm721, %v5418, 0
    %5425 = vmatpush.msra.mxu0 0.0
    %5426 = vmatpush.msra.mxu0 0.0
    %5427 = vmatpush.msra.mxu0 0.0
    %5428 = vmatpush.msra.mxu0 0.0
    %5429 = vmatpush.msra.mxu0 0.0
    %5430 = vmatpush.msra.mxu0 0.0
    %5431 = vmatpush.msra.mxu0 0.0
    %5432 = vmatpush.msra.mxu0 0.0
    %5433 = vmatpush.msra.mxu0 0.0
    %5434 = vmatpush.msra.mxu0 0.0
    %5435 = vmatpush.msra.mxu0 0.0
    %5436 = vmatpush.msra.mxu0 0.0
    %5437 = vmatpush.msra.mxu0 0.0
    %5438 = vmatpush.msra.mxu0 0.0
    %5439 = vmatpush.msra.mxu0 0.0
    %5440 = vmatpush.msra.mxu0 %v5421
    %5441 = vmatmul.f32.gmra.mxu0 %v5423
    %v5442 = vpop.f32.mrf.mxu0
    %v5443 = vadd.f32 0.0, %v5442
    %5444 = vdwg.mxu0
    %v5446 = vsel %vm721, %v5295, 0
    %5448 = vmatpush.msra.mxu0 0.0
    %5449 = vmatpush.msra.mxu0 0.0
    %5450 = vmatpush.msra.mxu0 0.0
    %5451 = vmatpush.msra.mxu0 0.0
    %5452 = vmatpush.msra.mxu0 0.0
    %5453 = vmatpush.msra.mxu0 0.0
    %5454 = vmatpush.msra.mxu0 0.0
    %5455 = vmatpush.msra.mxu0 0.0
    %5456 = vmatpush.msra.mxu0 0.0
    %5457 = vmatpush.msra.mxu0 0.0
    %5458 = vmatpush.msra.mxu0 0.0
    %5459 = vmatpush.msra.mxu0 0.0
    %5460 = vmatpush.msra.mxu0 0.0
    %5461 = vmatpush.msra.mxu0 0.0
    %5462 = vmatpush.msra.mxu0 0.0
    %5463 = vmatpush.msra.mxu0 %v5297
    %5464 = vmatmul.f32.gmra.mxu0 %v5446
    %v5465 = vpop.f32.mrf.mxu0
    %v5466 = vadd.f32 %v5443, %v5465
    %5467 = vdwg.mxu0
    %5468 = vrot.lane.b32.xlu0 %v4965, 112
    %v5469 = vpop.permute.xlu0 %5468
    %5470 = vrot.lane.b32.xlu0 %v5046, 112
    %v5471 = vpop.permute.xlu0 %5470
    %5472 = vrot.lane.b32.xlu0 %v5049, 112
    %v5473 = vpop.permute.xlu0 %5472
    %5474 = vrot.lane.b32.xlu0 %v5052, 112
    %v5475 = vpop.permute.xlu0 %5474
    %5476 = vrot.lane.b32.xlu0 %v5055, 112
    %v5477 = vpop.permute.xlu0 %5476
    %5478 = vrot.lane.b32.xlu0 %v5058, 112
    %v5479 = vpop.permute.xlu0 %5478
    %5480 = vrot.lane.b32.xlu0 %v5061, 112
    %v5481 = vpop.permute.xlu0 %5480
    %5482 = vrot.lane.b32.xlu0 %v5064, 112
    %v5483 = vpop.permute.xlu0 %5482
    %5484 = vrot.lane.b32.xlu0 %v5067, 112
    %v5485 = vpop.permute.xlu0 %5484
    %v5486 = vsel %vm721, %v5469, 0
    %v5488 = vsel %vm721, %v5471, 0
    %v5490 = vsel %vm721, %v5473, 0
    %v5492 = vsel %vm721, %v5475, 0
    %v5494 = vsel %vm721, %v5477, 0
    %v5496 = vsel %vm721, %v5479, 0
    %v5498 = vsel %vm721, %v5481, 0
    %v5500 = vsel %vm721, %v5483, 0
    %v5502 = vsel %vm721, %v5485, 0
    %5504 = vmatpush.xpose.msra.mxu0 0.0
    %5505 = vmatpush.xpose.msra.mxu0 0.0
    %5506 = vmatpush.xpose.msra.mxu0 0.0
    %5507 = vmatpush.xpose.msra.mxu0 0.0
    %5508 = vmatpush.xpose.msra.mxu0 0.0
    %5509 = vmatpush.xpose.msra.mxu0 0.0
    %5510 = vmatpush.xpose.msra.mxu0 0.0
    %5511 = vmatpush.xpose.msra.mxu0 0.0
    %5512 = vmatpush.xpose.msra.mxu0 %v5502
    %5513 = vmatpush.xpose.msra.mxu0 %v5500
    %5514 = vmatpush.xpose.msra.mxu0 %v5498
    %5515 = vmatpush.xpose.msra.mxu0 %v5496
    %5516 = vmatpush.xpose.msra.mxu0 %v5494
    %5517 = vmatpush.xpose.msra.mxu0 %v5492
    %5518 = vmatpush.xpose.msra.mxu0 %v5490
    %5519 = vmatpush.xpose.msra.mxu0 %v5488
    %5520 = vmatmul.f32.gmra.mxu0 %v5486
    %v5521 = vpop.f32.mrf.mxu0
    %v5522 = vadd.f32 0.0, %v5521
    %5523 = vdwg.mxu0
    %v5524 = vsel %vm795, %v5522, -inf
    %5525 = vmax.xlane.f32.xlu0 %v5524
    %v5526 = vpop.xlane.xlu0 %5525
    %v5527 = vsub.f32 %v5522, %v5526
    %v5528 = vmul.f32 %v5527, 1.442695
    %v5529 = vpow.pop %v5528
    %v5530 = vsel %vm795, %v5529, 0.0
    %5531 = vadd.xlane.f32.xlu0 %v5530
    %v5532 = vpop.xlane.xlu0 %5531
    %v5533 = vrcp.pop %v5532
    %v5534 = vmul.f32 %v5529, %v5533
    %5535 = vrot.lane.b32.xlu0 %v5169, 112
    %v5536 = vpop.permute.xlu0 %5535
    %5537 = vrot.lane.b32.xlu0 %v5172, 112
    %v5538 = vpop.permute.xlu0 %5537
    %5539 = vrot.lane.b32.xlu0 %v5175, 112
    %v5540 = vpop.permute.xlu0 %5539
    %5541 = vrot.lane.b32.xlu0 %v5178, 112
    %v5542 = vpop.permute.xlu0 %5541
    %5543 = vrot.lane.b32.xlu0 %v5181, 112
    %v5544 = vpop.permute.xlu0 %5543
    %5545 = vrot.lane.b32.xlu0 %v5184, 112
    %v5546 = vpop.permute.xlu0 %5545
    %5547 = vrot.lane.b32.xlu0 %v5187, 112
    %v5548 = vpop.permute.xlu0 %5547
    %5549 = vrot.lane.b32.xlu0 %v5190, 112
    %v5550 = vpop.permute.xlu0 %5549
    %v5560 = vsel %vm795, %v5534, 0
    %5562 = vmatpush.msra.mxu0 0.0
    %5563 = vmatpush.msra.mxu0 0.0
    %5564 = vmatpush.msra.mxu0 0.0
    %5565 = vmatpush.msra.mxu0 0.0
    %5566 = vmatpush.msra.mxu0 0.0
    %5567 = vmatpush.msra.mxu0 0.0
    %5568 = vmatpush.msra.mxu0 0.0
    %5569 = vmatpush.msra.mxu0 0.0
    %5570 = vmatpush.msra.mxu0 %v5550
    %5571 = vmatpush.msra.mxu0 %v5548
    %5572 = vmatpush.msra.mxu0 %v5546
    %5573 = vmatpush.msra.mxu0 %v5544
    %5574 = vmatpush.msra.mxu0 %v5542
    %5575 = vmatpush.msra.mxu0 %v5540
    %5576 = vmatpush.msra.mxu0 %v5538
    %5577 = vmatpush.msra.mxu0 %v5536
    %5578 = vmatmul.f32.gmra.mxu0 %v5560
    %v5579 = vpop.f32.mrf.mxu0
    %v5580 = vadd.f32 0.0, %v5579
    %5581 = vdwg.mxu0
    %s5582 = scalar_lea.vmem %s41, 16
    %v5583 = vld [vmem:[%s5582] sm:$0xff]
    %v5585 = vsel %vm721, %v5580, 0
    %5587 = vmatpush.msra.mxu0 0.0
    %5588 = vmatpush.msra.mxu0 0.0
    %5589 = vmatpush.msra.mxu0 0.0
    %5590 = vmatpush.msra.mxu0 0.0
    %5591 = vmatpush.msra.mxu0 0.0
    %5592 = vmatpush.msra.mxu0 0.0
    %5593 = vmatpush.msra.mxu0 0.0
    %5594 = vmatpush.msra.mxu0 0.0
    %5595 = vmatpush.msra.mxu0 0.0
    %5596 = vmatpush.msra.mxu0 0.0
    %5597 = vmatpush.msra.mxu0 0.0
    %5598 = vmatpush.msra.mxu0 0.0
    %5599 = vmatpush.msra.mxu0 0.0
    %5600 = vmatpush.msra.mxu0 0.0
    %5601 = vmatpush.msra.mxu0 0.0
    %5602 = vmatpush.msra.mxu0 %v5583
    %5603 = vmatmul.f32.gmra.mxu0 %v5585
    %v5604 = vpop.f32.mrf.mxu0
    %v5605 = vadd.f32 0.0, %v5604
    %5606 = vdwg.mxu0
    %v5607 = vadd.f32 %v5466, %v5605
    %5608 = vrot.lane.b32.xlu0 %v4965, 104
    %v5609 = vpop.permute.xlu0 %5608
    %5610 = vrot.lane.b32.xlu0 %v5046, 104
    %v5611 = vpop.permute.xlu0 %5610
    %5612 = vrot.lane.b32.xlu0 %v5049, 104
    %v5613 = vpop.permute.xlu0 %5612
    %5614 = vrot.lane.b32.xlu0 %v5052, 104
    %v5615 = vpop.permute.xlu0 %5614
    %5616 = vrot.lane.b32.xlu0 %v5055, 104
    %v5617 = vpop.permute.xlu0 %5616
    %5618 = vrot.lane.b32.xlu0 %v5058, 104
    %v5619 = vpop.permute.xlu0 %5618
    %5620 = vrot.lane.b32.xlu0 %v5061, 104
    %v5621 = vpop.permute.xlu0 %5620
    %5622 = vrot.lane.b32.xlu0 %v5064, 104
    %v5623 = vpop.permute.xlu0 %5622
    %5624 = vrot.lane.b32.xlu0 %v5067, 104
    %v5625 = vpop.permute.xlu0 %5624
    %v5626 = vsel %vm721, %v5609, 0
    %v5628 = vsel %vm721, %v5611, 0
    %v5630 = vsel %vm721, %v5613, 0
    %v5632 = vsel %vm721, %v5615, 0
    %v5634 = vsel %vm721, %v5617, 0
    %v5636 = vsel %vm721, %v5619, 0
    %v5638 = vsel %vm721, %v5621, 0
    %v5640 = vsel %vm721, %v5623, 0
    %v5642 = vsel %vm721, %v5625, 0
    %5644 = vmatpush.xpose.msra.mxu0 0.0
    %5645 = vmatpush.xpose.msra.mxu0 0.0
    %5646 = vmatpush.xpose.msra.mxu0 0.0
    %5647 = vmatpush.xpose.msra.mxu0 0.0
    %5648 = vmatpush.xpose.msra.mxu0 0.0
    %5649 = vmatpush.xpose.msra.mxu0 0.0
    %5650 = vmatpush.xpose.msra.mxu0 0.0
    %5651 = vmatpush.xpose.msra.mxu0 0.0
    %5652 = vmatpush.xpose.msra.mxu0 %v5642
    %5653 = vmatpush.xpose.msra.mxu0 %v5640
    %5654 = vmatpush.xpose.msra.mxu0 %v5638
    %5655 = vmatpush.xpose.msra.mxu0 %v5636
    %5656 = vmatpush.xpose.msra.mxu0 %v5634
    %5657 = vmatpush.xpose.msra.mxu0 %v5632
    %5658 = vmatpush.xpose.msra.mxu0 %v5630
    %5659 = vmatpush.xpose.msra.mxu0 %v5628
    %5660 = vmatmul.f32.gmra.mxu0 %v5626
    %v5661 = vpop.f32.mrf.mxu0
    %v5662 = vadd.f32 0.0, %v5661
    %5663 = vdwg.mxu0
    %v5664 = vsel %vm795, %v5662, -inf
    %5665 = vmax.xlane.f32.xlu0 %v5664
    %v5666 = vpop.xlane.xlu0 %5665
    %v5667 = vsub.f32 %v5662, %v5666
    %v5668 = vmul.f32 %v5667, 1.442695
    %v5669 = vpow.pop %v5668
    %v5670 = vsel %vm795, %v5669, 0.0
    %5671 = vadd.xlane.f32.xlu0 %v5670
    %v5672 = vpop.xlane.xlu0 %5671
    %v5673 = vrcp.pop %v5672
    %v5674 = vmul.f32 %v5669, %v5673
    %5675 = vrot.lane.b32.xlu0 %v5169, 104
    %v5676 = vpop.permute.xlu0 %5675
    %5677 = vrot.lane.b32.xlu0 %v5172, 104
    %v5678 = vpop.permute.xlu0 %5677
    %5679 = vrot.lane.b32.xlu0 %v5175, 104
    %v5680 = vpop.permute.xlu0 %5679
    %5681 = vrot.lane.b32.xlu0 %v5178, 104
    %v5682 = vpop.permute.xlu0 %5681
    %5683 = vrot.lane.b32.xlu0 %v5181, 104
    %v5684 = vpop.permute.xlu0 %5683
    %5685 = vrot.lane.b32.xlu0 %v5184, 104
    %v5686 = vpop.permute.xlu0 %5685
    %5687 = vrot.lane.b32.xlu0 %v5187, 104
    %v5688 = vpop.permute.xlu0 %5687
    %5689 = vrot.lane.b32.xlu0 %v5190, 104
    %v5690 = vpop.permute.xlu0 %5689
    %v5700 = vsel %vm795, %v5674, 0
    %5702 = vmatpush.msra.mxu0 0.0
    %5703 = vmatpush.msra.mxu0 0.0
    %5704 = vmatpush.msra.mxu0 0.0
    %5705 = vmatpush.msra.mxu0 0.0
    %5706 = vmatpush.msra.mxu0 0.0
    %5707 = vmatpush.msra.mxu0 0.0
    %5708 = vmatpush.msra.mxu0 0.0
    %5709 = vmatpush.msra.mxu0 0.0
    %5710 = vmatpush.msra.mxu0 %v5690
    %5711 = vmatpush.msra.mxu0 %v5688
    %5712 = vmatpush.msra.mxu0 %v5686
    %5713 = vmatpush.msra.mxu0 %v5684
    %5714 = vmatpush.msra.mxu0 %v5682
    %5715 = vmatpush.msra.mxu0 %v5680
    %5716 = vmatpush.msra.mxu0 %v5678
    %5717 = vmatpush.msra.mxu0 %v5676
    %5718 = vmatmul.f32.gmra.mxu0 %v5700
    %v5719 = vpop.f32.mrf.mxu0
    %v5720 = vadd.f32 0.0, %v5719
    %5721 = vdwg.mxu0
    %s5722 = scalar_lea.vmem %s41, 24
    %v5723 = vld [vmem:[%s5722] sm:$0xff]
    %v5725 = vsel %vm721, %v5720, 0
    %5727 = vmatpush.msra.mxu0 0.0
    %5728 = vmatpush.msra.mxu0 0.0
    %5729 = vmatpush.msra.mxu0 0.0
    %5730 = vmatpush.msra.mxu0 0.0
    %5731 = vmatpush.msra.mxu0 0.0
    %5732 = vmatpush.msra.mxu0 0.0
    %5733 = vmatpush.msra.mxu0 0.0
    %5734 = vmatpush.msra.mxu0 0.0
    %5735 = vmatpush.msra.mxu0 0.0
    %5736 = vmatpush.msra.mxu0 0.0
    %5737 = vmatpush.msra.mxu0 0.0
    %5738 = vmatpush.msra.mxu0 0.0
    %5739 = vmatpush.msra.mxu0 0.0
    %5740 = vmatpush.msra.mxu0 0.0
    %5741 = vmatpush.msra.mxu0 0.0
    %5742 = vmatpush.msra.mxu0 %v5723
    %5743 = vmatmul.f32.gmra.mxu0 %v5725
    %v5744 = vpop.f32.mrf.mxu0
    %v5745 = vadd.f32 0.0, %v5744
    %5746 = vdwg.mxu0
    %v5747 = vadd.f32 %v5607, %v5745
    %v5748 = vld [vmem:[%s43] sm:$0x1]
    %v5750 = vperm.slane %v5748, 0
    %v5752 = vadd.f32 %v5747, %v5750
    %v5754 = vsel %vm721, %v4968, 0
    %v5757 = vsel %vm721, %v5070, 0
    %v5760 = vsel %vm721, %v5073, 0
    %v5763 = vsel %vm721, %v5076, 0
    %v5766 = vsel %vm721, %v5079, 0
    %v5769 = vsel %vm721, %v5082, 0
    %v5772 = vsel %vm721, %v5085, 0
    %v5775 = vsel %vm721, %v5088, 0
    %v5778 = vsel %vm721, %v5091, 0
    %5780 = vmatpush.xpose.msra.mxu0 0.0
    %5781 = vmatpush.xpose.msra.mxu0 0.0
    %5782 = vmatpush.xpose.msra.mxu0 0.0
    %5783 = vmatpush.xpose.msra.mxu0 0.0
    %5784 = vmatpush.xpose.msra.mxu0 0.0
    %5785 = vmatpush.xpose.msra.mxu0 0.0
    %5786 = vmatpush.xpose.msra.mxu0 0.0
    %5787 = vmatpush.xpose.msra.mxu0 0.0
    %5788 = vmatpush.xpose.msra.mxu0 %v5778
    %5789 = vmatpush.xpose.msra.mxu0 %v5775
    %5790 = vmatpush.xpose.msra.mxu0 %v5772
    %5791 = vmatpush.xpose.msra.mxu0 %v5769
    %5792 = vmatpush.xpose.msra.mxu0 %v5766
    %5793 = vmatpush.xpose.msra.mxu0 %v5763
    %5794 = vmatpush.xpose.msra.mxu0 %v5760
    %5795 = vmatpush.xpose.msra.mxu0 %v5757
    %5796 = vmatmul.f32.gmra.mxu0 %v5754
    %v5797 = vpop.f32.mrf.mxu0
    %v5798 = vadd.f32 0.0, %v5797
    %5799 = vdwg.mxu0
    %v5800 = vsel %vm795, %v5798, -inf
    %5801 = vmax.xlane.f32.xlu0 %v5800
    %v5802 = vpop.xlane.xlu0 %5801
    %v5803 = vsub.f32 %v5798, %v5802
    %v5804 = vmul.f32 %v5803, 1.442695
    %v5805 = vpow.pop %v5804
    %v5806 = vsel %vm795, %v5805, 0.0
    %5807 = vadd.xlane.f32.xlu0 %v5806
    %v5808 = vpop.xlane.xlu0 %5807
    %v5809 = vrcp.pop %v5808
    %v5810 = vmul.f32 %v5805, %v5809
    %v5812 = vsel %vm795, %v5810, 0
    %5814 = vmatpush.msra.mxu0 0.0
    %5815 = vmatpush.msra.mxu0 0.0
    %5816 = vmatpush.msra.mxu0 0.0
    %5817 = vmatpush.msra.mxu0 0.0
    %5818 = vmatpush.msra.mxu0 0.0
    %5819 = vmatpush.msra.mxu0 0.0
    %5820 = vmatpush.msra.mxu0 0.0
    %5821 = vmatpush.msra.mxu0 0.0
    %5822 = vmatpush.msra.mxu0 %v5214
    %5823 = vmatpush.msra.mxu0 %v5211
    %5824 = vmatpush.msra.mxu0 %v5208
    %5825 = vmatpush.msra.mxu0 %v5205
    %5826 = vmatpush.msra.mxu0 %v5202
    %5827 = vmatpush.msra.mxu0 %v5199
    %5828 = vmatpush.msra.mxu0 %v5196
    %5829 = vmatpush.msra.mxu0 %v5193
    %5830 = vmatmul.f32.gmra.mxu0 %v5812
    %v5831 = vpop.f32.mrf.mxu0
    %v5832 = vadd.f32 0.0, %v5831
    %5833 = vdwg.mxu0
    %5834 = vrot.lane.b32.xlu0 %v4968, 120
    %v5835 = vpop.permute.xlu0 %5834
    %5836 = vrot.lane.b32.xlu0 %v5070, 120
    %v5837 = vpop.permute.xlu0 %5836
    %5838 = vrot.lane.b32.xlu0 %v5073, 120
    %v5839 = vpop.permute.xlu0 %5838
    %5840 = vrot.lane.b32.xlu0 %v5076, 120
    %v5841 = vpop.permute.xlu0 %5840
    %5842 = vrot.lane.b32.xlu0 %v5079, 120
    %v5843 = vpop.permute.xlu0 %5842
    %5844 = vrot.lane.b32.xlu0 %v5082, 120
    %v5845 = vpop.permute.xlu0 %5844
    %5846 = vrot.lane.b32.xlu0 %v5085, 120
    %v5847 = vpop.permute.xlu0 %5846
    %5848 = vrot.lane.b32.xlu0 %v5088, 120
    %v5849 = vpop.permute.xlu0 %5848
    %5850 = vrot.lane.b32.xlu0 %v5091, 120
    %v5851 = vpop.permute.xlu0 %5850
    %v5852 = vsel %vm721, %v5835, 0
    %v5854 = vsel %vm721, %v5837, 0
    %v5856 = vsel %vm721, %v5839, 0
    %v5858 = vsel %vm721, %v5841, 0
    %v5860 = vsel %vm721, %v5843, 0
    %v5862 = vsel %vm721, %v5845, 0
    %v5864 = vsel %vm721, %v5847, 0
    %v5866 = vsel %vm721, %v5849, 0
    %v5868 = vsel %vm721, %v5851, 0
    %5870 = vmatpush.xpose.msra.mxu0 0.0
    %5871 = vmatpush.xpose.msra.mxu0 0.0
    %5872 = vmatpush.xpose.msra.mxu0 0.0
    %5873 = vmatpush.xpose.msra.mxu0 0.0
    %5874 = vmatpush.xpose.msra.mxu0 0.0
    %5875 = vmatpush.xpose.msra.mxu0 0.0
    %5876 = vmatpush.xpose.msra.mxu0 0.0
    %5877 = vmatpush.xpose.msra.mxu0 0.0
    %5878 = vmatpush.xpose.msra.mxu0 %v5868
    %5879 = vmatpush.xpose.msra.mxu0 %v5866
    %5880 = vmatpush.xpose.msra.mxu0 %v5864
    %5881 = vmatpush.xpose.msra.mxu0 %v5862
    %5882 = vmatpush.xpose.msra.mxu0 %v5860
    %5883 = vmatpush.xpose.msra.mxu0 %v5858
    %5884 = vmatpush.xpose.msra.mxu0 %v5856
    %5885 = vmatpush.xpose.msra.mxu0 %v5854
    %5886 = vmatmul.f32.gmra.mxu0 %v5852
    %v5887 = vpop.f32.mrf.mxu0
    %v5888 = vadd.f32 0.0, %v5887
    %5889 = vdwg.mxu0
    %v5890 = vsel %vm795, %v5888, -inf
    %5891 = vmax.xlane.f32.xlu0 %v5890
    %v5892 = vpop.xlane.xlu0 %5891
    %v5893 = vsub.f32 %v5888, %v5892
    %v5894 = vmul.f32 %v5893, 1.442695
    %v5895 = vpow.pop %v5894
    %v5896 = vsel %vm795, %v5895, 0.0
    %5897 = vadd.xlane.f32.xlu0 %v5896
    %v5898 = vpop.xlane.xlu0 %5897
    %v5899 = vrcp.pop %v5898
    %v5900 = vmul.f32 %v5895, %v5899
    %5909 = vrot.lane.b32.xlu0 %v5193, 120
    %v5910 = vpop.permute.xlu0 %5909
    %5911 = vrot.lane.b32.xlu0 %v5196, 120
    %v5912 = vpop.permute.xlu0 %5911
    %5913 = vrot.lane.b32.xlu0 %v5199, 120
    %v5914 = vpop.permute.xlu0 %5913
    %5915 = vrot.lane.b32.xlu0 %v5202, 120
    %v5916 = vpop.permute.xlu0 %5915
    %5917 = vrot.lane.b32.xlu0 %v5205, 120
    %v5918 = vpop.permute.xlu0 %5917
    %5919 = vrot.lane.b32.xlu0 %v5208, 120
    %v5920 = vpop.permute.xlu0 %5919
    %5921 = vrot.lane.b32.xlu0 %v5211, 120
    %v5922 = vpop.permute.xlu0 %5921
    %5923 = vrot.lane.b32.xlu0 %v5214, 120
    %v5924 = vpop.permute.xlu0 %5923
    %v5934 = vsel %vm795, %v5900, 0
    %5936 = vmatpush.msra.mxu0 0.0
    %5937 = vmatpush.msra.mxu0 0.0
    %5938 = vmatpush.msra.mxu0 0.0
    %5939 = vmatpush.msra.mxu0 0.0
    %5940 = vmatpush.msra.mxu0 0.0
    %5941 = vmatpush.msra.mxu0 0.0
    %5942 = vmatpush.msra.mxu0 0.0
    %5943 = vmatpush.msra.mxu0 0.0
    %5944 = vmatpush.msra.mxu0 %v5924
    %5945 = vmatpush.msra.mxu0 %v5922
    %5946 = vmatpush.msra.mxu0 %v5920
    %5947 = vmatpush.msra.mxu0 %v5918
    %5948 = vmatpush.msra.mxu0 %v5916
    %5949 = vmatpush.msra.mxu0 %v5914
    %5950 = vmatpush.msra.mxu0 %v5912
    %5951 = vmatpush.msra.mxu0 %v5910
    %5952 = vmatmul.f32.gmra.mxu0 %v5934
    %v5953 = vpop.f32.mrf.mxu0
    %v5954 = vadd.f32 0.0, %v5953
    %5955 = vdwg.mxu0
    %v5957 = vsel %vm721, %v5954, 0
    %5959 = vmatpush.msra.mxu0 0.0
    %5960 = vmatpush.msra.mxu0 0.0
    %5961 = vmatpush.msra.mxu0 0.0
    %5962 = vmatpush.msra.mxu0 0.0
    %5963 = vmatpush.msra.mxu0 0.0
    %5964 = vmatpush.msra.mxu0 0.0
    %5965 = vmatpush.msra.mxu0 0.0
    %5966 = vmatpush.msra.mxu0 0.0
    %5967 = vmatpush.msra.mxu0 0.0
    %5968 = vmatpush.msra.mxu0 0.0
    %5969 = vmatpush.msra.mxu0 0.0
    %5970 = vmatpush.msra.mxu0 0.0
    %5971 = vmatpush.msra.mxu0 0.0
    %5972 = vmatpush.msra.mxu0 0.0
    %5973 = vmatpush.msra.mxu0 0.0
    %5974 = vmatpush.msra.mxu0 %v5421
    %5975 = vmatmul.f32.gmra.mxu0 %v5957
    %v5976 = vpop.f32.mrf.mxu0
    %v5977 = vadd.f32 0.0, %v5976
    %5978 = vdwg.mxu0
    %v5980 = vsel %vm721, %v5832, 0
    %5982 = vmatpush.msra.mxu0 0.0
    %5983 = vmatpush.msra.mxu0 0.0
    %5984 = vmatpush.msra.mxu0 0.0
    %5985 = vmatpush.msra.mxu0 0.0
    %5986 = vmatpush.msra.mxu0 0.0
    %5987 = vmatpush.msra.mxu0 0.0
    %5988 = vmatpush.msra.mxu0 0.0
    %5989 = vmatpush.msra.mxu0 0.0
    %5990 = vmatpush.msra.mxu0 0.0
    %5991 = vmatpush.msra.mxu0 0.0
    %5992 = vmatpush.msra.mxu0 0.0
    %5993 = vmatpush.msra.mxu0 0.0
    %5994 = vmatpush.msra.mxu0 0.0
    %5995 = vmatpush.msra.mxu0 0.0
    %5996 = vmatpush.msra.mxu0 0.0
    %5997 = vmatpush.msra.mxu0 %v5297
    %5998 = vmatmul.f32.gmra.mxu0 %v5980
    %v5999 = vpop.f32.mrf.mxu0
    %v6000 = vadd.f32 %v5977, %v5999
    %6001 = vdwg.mxu0
    %6002 = vrot.lane.b32.xlu0 %v4968, 112
    %v6003 = vpop.permute.xlu0 %6002
    %6004 = vrot.lane.b32.xlu0 %v5070, 112
    %v6005 = vpop.permute.xlu0 %6004
    %6006 = vrot.lane.b32.xlu0 %v5073, 112
    %v6007 = vpop.permute.xlu0 %6006
    %6008 = vrot.lane.b32.xlu0 %v5076, 112
    %v6009 = vpop.permute.xlu0 %6008
    %6010 = vrot.lane.b32.xlu0 %v5079, 112
    %v6011 = vpop.permute.xlu0 %6010
    %6012 = vrot.lane.b32.xlu0 %v5082, 112
    %v6013 = vpop.permute.xlu0 %6012
    %6014 = vrot.lane.b32.xlu0 %v5085, 112
    %v6015 = vpop.permute.xlu0 %6014
    %6016 = vrot.lane.b32.xlu0 %v5088, 112
    %v6017 = vpop.permute.xlu0 %6016
    %6018 = vrot.lane.b32.xlu0 %v5091, 112
    %v6019 = vpop.permute.xlu0 %6018
    %v6020 = vsel %vm721, %v6003, 0
    %v6022 = vsel %vm721, %v6005, 0
    %v6024 = vsel %vm721, %v6007, 0
    %v6026 = vsel %vm721, %v6009, 0
    %v6028 = vsel %vm721, %v6011, 0
    %v6030 = vsel %vm721, %v6013, 0
    %v6032 = vsel %vm721, %v6015, 0
    %v6034 = vsel %vm721, %v6017, 0
    %v6036 = vsel %vm721, %v6019, 0
    %6038 = vmatpush.xpose.msra.mxu0 0.0
    %6039 = vmatpush.xpose.msra.mxu0 0.0
    %6040 = vmatpush.xpose.msra.mxu0 0.0
    %6041 = vmatpush.xpose.msra.mxu0 0.0
    %6042 = vmatpush.xpose.msra.mxu0 0.0
    %6043 = vmatpush.xpose.msra.mxu0 0.0
    %6044 = vmatpush.xpose.msra.mxu0 0.0
    %6045 = vmatpush.xpose.msra.mxu0 0.0
    %6046 = vmatpush.xpose.msra.mxu0 %v6036
    %6047 = vmatpush.xpose.msra.mxu0 %v6034
    %6048 = vmatpush.xpose.msra.mxu0 %v6032
    %6049 = vmatpush.xpose.msra.mxu0 %v6030
    %6050 = vmatpush.xpose.msra.mxu0 %v6028
    %6051 = vmatpush.xpose.msra.mxu0 %v6026
    %6052 = vmatpush.xpose.msra.mxu0 %v6024
    %6053 = vmatpush.xpose.msra.mxu0 %v6022
    %6054 = vmatmul.f32.gmra.mxu0 %v6020
    %v6055 = vpop.f32.mrf.mxu0
    %v6056 = vadd.f32 0.0, %v6055
    %6057 = vdwg.mxu0
    %v6058 = vsel %vm795, %v6056, -inf
    %6059 = vmax.xlane.f32.xlu0 %v6058
    %v6060 = vpop.xlane.xlu0 %6059
    %v6061 = vsub.f32 %v6056, %v6060
    %v6062 = vmul.f32 %v6061, 1.442695
    %v6063 = vpow.pop %v6062
    %v6064 = vsel %vm795, %v6063, 0.0
    %6065 = vadd.xlane.f32.xlu0 %v6064
    %v6066 = vpop.xlane.xlu0 %6065
    %v6067 = vrcp.pop %v6066
    %v6068 = vmul.f32 %v6063, %v6067
    %6069 = vrot.lane.b32.xlu0 %v5193, 112
    %v6070 = vpop.permute.xlu0 %6069
    %6071 = vrot.lane.b32.xlu0 %v5196, 112
    %v6072 = vpop.permute.xlu0 %6071
    %6073 = vrot.lane.b32.xlu0 %v5199, 112
    %v6074 = vpop.permute.xlu0 %6073
    %6075 = vrot.lane.b32.xlu0 %v5202, 112
    %v6076 = vpop.permute.xlu0 %6075
    %6077 = vrot.lane.b32.xlu0 %v5205, 112
    %v6078 = vpop.permute.xlu0 %6077
    %6079 = vrot.lane.b32.xlu0 %v5208, 112
    %v6080 = vpop.permute.xlu0 %6079
    %6081 = vrot.lane.b32.xlu0 %v5211, 112
    %v6082 = vpop.permute.xlu0 %6081
    %6083 = vrot.lane.b32.xlu0 %v5214, 112
    %v6084 = vpop.permute.xlu0 %6083
    %v6094 = vsel %vm795, %v6068, 0
    %6096 = vmatpush.msra.mxu0 0.0
    %6097 = vmatpush.msra.mxu0 0.0
    %6098 = vmatpush.msra.mxu0 0.0
    %6099 = vmatpush.msra.mxu0 0.0
    %6100 = vmatpush.msra.mxu0 0.0
    %6101 = vmatpush.msra.mxu0 0.0
    %6102 = vmatpush.msra.mxu0 0.0
    %6103 = vmatpush.msra.mxu0 0.0
    %6104 = vmatpush.msra.mxu0 %v6084
    %6105 = vmatpush.msra.mxu0 %v6082
    %6106 = vmatpush.msra.mxu0 %v6080
    %6107 = vmatpush.msra.mxu0 %v6078
    %6108 = vmatpush.msra.mxu0 %v6076
    %6109 = vmatpush.msra.mxu0 %v6074
    %6110 = vmatpush.msra.mxu0 %v6072
    %6111 = vmatpush.msra.mxu0 %v6070
    %6112 = vmatmul.f32.gmra.mxu0 %v6094
    %v6113 = vpop.f32.mrf.mxu0
    %v6114 = vadd.f32 0.0, %v6113
    %6115 = vdwg.mxu0
    %v6117 = vsel %vm721, %v6114, 0
    %6119 = vmatpush.msra.mxu0 0.0
    %6120 = vmatpush.msra.mxu0 0.0
    %6121 = vmatpush.msra.mxu0 0.0
    %6122 = vmatpush.msra.mxu0 0.0
    %6123 = vmatpush.msra.mxu0 0.0
    %6124 = vmatpush.msra.mxu0 0.0
    %6125 = vmatpush.msra.mxu0 0.0
    %6126 = vmatpush.msra.mxu0 0.0
    %6127 = vmatpush.msra.mxu0 0.0
    %6128 = vmatpush.msra.mxu0 0.0
    %6129 = vmatpush.msra.mxu0 0.0
    %6130 = vmatpush.msra.mxu0 0.0
    %6131 = vmatpush.msra.mxu0 0.0
    %6132 = vmatpush.msra.mxu0 0.0
    %6133 = vmatpush.msra.mxu0 0.0
    %6134 = vmatpush.msra.mxu0 %v5583
    %6135 = vmatmul.f32.gmra.mxu0 %v6117
    %v6136 = vpop.f32.mrf.mxu0
    %v6137 = vadd.f32 0.0, %v6136
    %6138 = vdwg.mxu0
    %v6139 = vadd.f32 %v6000, %v6137
    %6140 = vrot.lane.b32.xlu0 %v4968, 104
    %v6141 = vpop.permute.xlu0 %6140
    %6142 = vrot.lane.b32.xlu0 %v5070, 104
    %v6143 = vpop.permute.xlu0 %6142
    %6144 = vrot.lane.b32.xlu0 %v5073, 104
    %v6145 = vpop.permute.xlu0 %6144
    %6146 = vrot.lane.b32.xlu0 %v5076, 104
    %v6147 = vpop.permute.xlu0 %6146
    %6148 = vrot.lane.b32.xlu0 %v5079, 104
    %v6149 = vpop.permute.xlu0 %6148
    %6150 = vrot.lane.b32.xlu0 %v5082, 104
    %v6151 = vpop.permute.xlu0 %6150
    %6152 = vrot.lane.b32.xlu0 %v5085, 104
    %v6153 = vpop.permute.xlu0 %6152
    %6154 = vrot.lane.b32.xlu0 %v5088, 104
    %v6155 = vpop.permute.xlu0 %6154
    %6156 = vrot.lane.b32.xlu0 %v5091, 104
    %v6157 = vpop.permute.xlu0 %6156
    %v6158 = vsel %vm721, %v6141, 0
    %v6160 = vsel %vm721, %v6143, 0
    %v6162 = vsel %vm721, %v6145, 0
    %v6164 = vsel %vm721, %v6147, 0
    %v6166 = vsel %vm721, %v6149, 0
    %v6168 = vsel %vm721, %v6151, 0
    %v6170 = vsel %vm721, %v6153, 0
    %v6172 = vsel %vm721, %v6155, 0
    %v6174 = vsel %vm721, %v6157, 0
    %6176 = vmatpush.xpose.msra.mxu0 0.0
    %6177 = vmatpush.xpose.msra.mxu0 0.0
    %6178 = vmatpush.xpose.msra.mxu0 0.0
    %6179 = vmatpush.xpose.msra.mxu0 0.0
    %6180 = vmatpush.xpose.msra.mxu0 0.0
    %6181 = vmatpush.xpose.msra.mxu0 0.0
    %6182 = vmatpush.xpose.msra.mxu0 0.0
    %6183 = vmatpush.xpose.msra.mxu0 0.0
    %6184 = vmatpush.xpose.msra.mxu0 %v6174
    %6185 = vmatpush.xpose.msra.mxu0 %v6172
    %6186 = vmatpush.xpose.msra.mxu0 %v6170
    %6187 = vmatpush.xpose.msra.mxu0 %v6168
    %6188 = vmatpush.xpose.msra.mxu0 %v6166
    %6189 = vmatpush.xpose.msra.mxu0 %v6164
    %6190 = vmatpush.xpose.msra.mxu0 %v6162
    %6191 = vmatpush.xpose.msra.mxu0 %v6160
    %6192 = vmatmul.f32.gmra.mxu0 %v6158
    %v6193 = vpop.f32.mrf.mxu0
    %v6194 = vadd.f32 0.0, %v6193
    %6195 = vdwg.mxu0
    %v6196 = vsel %vm795, %v6194, -inf
    %6197 = vmax.xlane.f32.xlu0 %v6196
    %v6198 = vpop.xlane.xlu0 %6197
    %v6199 = vsub.f32 %v6194, %v6198
    %v6200 = vmul.f32 %v6199, 1.442695
    %v6201 = vpow.pop %v6200
    %v6202 = vsel %vm795, %v6201, 0.0
    %6203 = vadd.xlane.f32.xlu0 %v6202
    %v6204 = vpop.xlane.xlu0 %6203
    %v6205 = vrcp.pop %v6204
    %v6206 = vmul.f32 %v6201, %v6205
    %6207 = vrot.lane.b32.xlu0 %v5193, 104
    %v6208 = vpop.permute.xlu0 %6207
    %6209 = vrot.lane.b32.xlu0 %v5196, 104
    %v6210 = vpop.permute.xlu0 %6209
    %6211 = vrot.lane.b32.xlu0 %v5199, 104
    %v6212 = vpop.permute.xlu0 %6211
    %6213 = vrot.lane.b32.xlu0 %v5202, 104
    %v6214 = vpop.permute.xlu0 %6213
    %6215 = vrot.lane.b32.xlu0 %v5205, 104
    %v6216 = vpop.permute.xlu0 %6215
    %6217 = vrot.lane.b32.xlu0 %v5208, 104
    %v6218 = vpop.permute.xlu0 %6217
    %6219 = vrot.lane.b32.xlu0 %v5211, 104
    %v6220 = vpop.permute.xlu0 %6219
    %6221 = vrot.lane.b32.xlu0 %v5214, 104
    %v6222 = vpop.permute.xlu0 %6221
    %v6232 = vsel %vm795, %v6206, 0
    %6234 = vmatpush.msra.mxu0 0.0
    %6235 = vmatpush.msra.mxu0 0.0
    %6236 = vmatpush.msra.mxu0 0.0
    %6237 = vmatpush.msra.mxu0 0.0
    %6238 = vmatpush.msra.mxu0 0.0
    %6239 = vmatpush.msra.mxu0 0.0
    %6240 = vmatpush.msra.mxu0 0.0
    %6241 = vmatpush.msra.mxu0 0.0
    %6242 = vmatpush.msra.mxu0 %v6222
    %6243 = vmatpush.msra.mxu0 %v6220
    %6244 = vmatpush.msra.mxu0 %v6218
    %6245 = vmatpush.msra.mxu0 %v6216
    %6246 = vmatpush.msra.mxu0 %v6214
    %6247 = vmatpush.msra.mxu0 %v6212
    %6248 = vmatpush.msra.mxu0 %v6210
    %6249 = vmatpush.msra.mxu0 %v6208
    %6250 = vmatmul.f32.gmra.mxu0 %v6232
    %v6251 = vpop.f32.mrf.mxu0
    %v6252 = vadd.f32 0.0, %v6251
    %6253 = vdwg.mxu0
    %v6255 = vsel %vm721, %v6252, 0
    %6257 = vmatpush.msra.mxu0 0.0
    %6258 = vmatpush.msra.mxu0 0.0
    %6259 = vmatpush.msra.mxu0 0.0
    %6260 = vmatpush.msra.mxu0 0.0
    %6261 = vmatpush.msra.mxu0 0.0
    %6262 = vmatpush.msra.mxu0 0.0
    %6263 = vmatpush.msra.mxu0 0.0
    %6264 = vmatpush.msra.mxu0 0.0
    %6265 = vmatpush.msra.mxu0 0.0
    %6266 = vmatpush.msra.mxu0 0.0
    %6267 = vmatpush.msra.mxu0 0.0
    %6268 = vmatpush.msra.mxu0 0.0
    %6269 = vmatpush.msra.mxu0 0.0
    %6270 = vmatpush.msra.mxu0 0.0
    %6271 = vmatpush.msra.mxu0 0.0
    %6272 = vmatpush.msra.mxu0 %v5723
    %6273 = vmatmul.f32.gmra.mxu0 %v6255
    %v6274 = vpop.f32.mrf.mxu0
    %v6275 = vadd.f32 0.0, %v6274
    %6276 = vdwg.mxu0
    %v6277 = vadd.f32 %v6139, %v6275
    %v6278 = vadd.f32 %v6277, %v5750
    %v6279 = vadd.f32 %v4929, %v5752
    %v6280 = vadd.f32 %v4929, %v6278
    %v6281 = vld [vmem:[%s53] sm:$0x3]
    %v6282 = vsel %vm462, %v6279, 0.0
    %6283 = vadd.xlane.f32.xlu0 %v6282
    %v6284 = vpop.xlane.xlu0 %6283
    %v6285 = vsel %vm462, %v6280, 0.0
    %6286 = vadd.xlane.f32.xlu0 %v6285
    %v6287 = vpop.xlane.xlu0 %6286
    %v6288 = vmul.f32 %v6284, %v3557
    %v6289 = vmul.f32 %v6287, %v3557
    %v6290 = vsub.f32 %v6279, %v6288
    %v6291 = vsub.f32 %v6280, %v6289
    %v6292 = vmul.f32 %v6290, %v6290
    %v6293 = vmul.f32 %v6291, %v6291
    %v6294 = vsel %vm462, %v6292, 0.0
    %6295 = vadd.xlane.f32.xlu0 %v6294
    %v6296 = vpop.xlane.xlu0 %6295
    %v6297 = vsel %vm462, %v6293, 0.0
    %6298 = vadd.xlane.f32.xlu0 %v6297
    %v6299 = vpop.xlane.xlu0 %6298
    %v6300 = vmul.f32 %v6296, %v3557
    %v6301 = vmul.f32 %v6299, %v3557
    %v6302 = vadd.f32 %v6300, 1e-05
    %v6303 = vadd.f32 %v6301, 1e-05
    %v6304 = vrsqrt.pop %v6302
    %v6305 = vmul.f32 %v6304, %v6302
    %v6306 = vmul.f32 %v6305, %v6304
    %v6307 = vmul.f32 0.5, %v6306
    %v6308 = vsub.f32 1.5, %v6307
    %v6309 = vmul.f32 %v6304, %v6308
    %vm6310 = vweird.f32 %v6302
    %vm6311 = vweird.f32 %v6304
    %vm6312 = vmor %vm6310, %vm6311
    %v6313 = vsel %vm6312, %v6304, %v6309
    %v6314 = vrsqrt.pop %v6303
    %v6315 = vmul.f32 %v6314, %v6303
    %v6316 = vmul.f32 %v6315, %v6314
    %v6317 = vmul.f32 0.5, %v6316
    %v6318 = vsub.f32 1.5, %v6317
    %v6319 = vmul.f32 %v6314, %v6318
    %vm6320 = vweird.f32 %v6303
    %vm6321 = vweird.f32 %v6314
    %vm6322 = vmor %vm6320, %vm6321
    %v6323 = vsel %vm6322, %v6314, %v6319
    %v6324 = vmul.f32 %v6290, %v6313
    %v6325 = vmul.f32 %v6291, %v6323
    %v6326 = vperm.slane %v6281, 0
    %v6327 = vmul.f32 %v6324, %v6326
    %v6328 = vmul.f32 %v6325, %v6326
    %v6329 = vperm.slane %v6281, 1
    %v6330 = vadd.f32 %v6327, %v6329
    %v6331 = vadd.f32 %v6328, %v6329
    %v6332 = vld [vmem:[#allocation13] sm:$0xff]
    %v6333 = vld [vmem:[#allocation13 + $0x8] sm:$0xff]
    %v6334 = vld [vmem:[#allocation13 + $0x10] sm:$0xff]
    %v6335 = vld [vmem:[#allocation13 + $0x18] sm:$0xff]
    %v6336 = vld [vmem:[#allocation15] sm:$0x1]
    %v6338 = vperm.slane %v6336, 0
    %v6341 = vsel %vm462, %v6330, 0
    %v6344 = vsel %vm462, %v6331, 0
    %6346 = vmatpush.msra.mxu0 0.0
    %6347 = vmatpush.msra.mxu0 0.0
    %6348 = vmatpush.msra.mxu0 0.0
    %6349 = vmatpush.msra.mxu0 0.0
    %6350 = vmatpush.msra.mxu0 0.0
    %6351 = vmatpush.msra.mxu0 0.0
    %6352 = vmatpush.msra.mxu0 0.0
    %6353 = vmatpush.msra.mxu0 0.0
    %6354 = vmatpush.msra.mxu0 0.0
    %6355 = vmatpush.msra.mxu0 0.0
    %6356 = vmatpush.msra.mxu0 0.0
    %6357 = vmatpush.msra.mxu0 0.0
    %6358 = vmatpush.msra.mxu0 %v6335
    %6359 = vmatpush.msra.mxu0 %v6334
    %6360 = vmatpush.msra.mxu0 %v6333
    %6361 = vmatpush.msra.mxu0 %v6332
    %6362 = vmatmul.f32.gmra.mxu0 %v6341
    %v6363 = vpop.f32.mrf.mxu0
    %v6364 = vadd.f32 %v6338, %v6363
    %6365 = vmatmul.f32.gmra.mxu0 %v6344
    %v6366 = vpop.f32.mrf.mxu0
    %v6367 = vadd.f32 %v6338, %v6366
    %6368 = vdwg.mxu0
    %v6369 = vmax.f32 %v6364, 0.0
    %v6370 = vmax.f32 %v6367, 0.0
    %v6371 = vld [vmem:[%s49] sm:$0xff]
    %v6372 = vld [vmem:[%s49 + $0x8] sm:$0xff]
    %v6373 = vld [vmem:[%s49 + $0x10] sm:$0xff]
    %v6374 = vld [vmem:[%s49 + $0x18] sm:$0xff]
    %v6375 = vld [vmem:[%s49 + $0x20] sm:$0xff]
    %v6376 = vld [vmem:[%s49 + $0x28] sm:$0xff]
    %v6377 = vld [vmem:[%s49 + $0x30] sm:$0xff]
    %v6378 = vld [vmem:[%s49 + $0x38] sm:$0xff]
    %v6379 = vld [vmem:[#allocation16] sm:$0x1]
    %v6381 = vperm.slane %v6379, 0
    %v6384 = vsel %vm795, %v6369, 0
    %v6387 = vsel %vm795, %v6370, 0
    %6389 = vmatpush.msra.mxu0 0.0
    %6390 = vmatpush.msra.mxu0 0.0
    %6391 = vmatpush.msra.mxu0 0.0
    %6392 = vmatpush.msra.mxu0 0.0
    %6393 = vmatpush.msra.mxu0 0.0
    %6394 = vmatpush.msra.mxu0 0.0
    %6395 = vmatpush.msra.mxu0 0.0
    %6396 = vmatpush.msra.mxu0 0.0
    %6397 = vmatpush.msra.mxu0 %v6378
    %6398 = vmatpush.msra.mxu0 %v6377
    %6399 = vmatpush.msra.mxu0 %v6376
    %6400 = vmatpush.msra.mxu0 %v6375
    %6401 = vmatpush.msra.mxu0 %v6374
    %6402 = vmatpush.msra.mxu0 %v6373
    %6403 = vmatpush.msra.mxu0 %v6372
    %6404 = vmatpush.msra.mxu0 %v6371
    %6405 = vmatmul.f32.gmra.mxu0 %v6384
    %v6406 = vpop.f32.mrf.mxu0
    %v6407 = vadd.f32 %v6381, %v6406
    %6408 = vmatmul.f32.gmra.mxu0 %v6387
    %v6409 = vpop.f32.mrf.mxu0
    %v6410 = vadd.f32 %v6381, %v6409
    %6411 = vdwg.mxu0
    %v6412 = vadd.f32 %v6330, %v6407
    %v6413 = vadd.f32 %v6331, %v6410
    %s6414 = scalar_lea.vmem %s53, 2
    %v6415 = vld [vmem:[%s6414] sm:$0x3]
    %v6416 = vsel %vm462, %v6412, 0.0
    %6417 = vadd.xlane.f32.xlu0 %v6416
    %v6418 = vpop.xlane.xlu0 %6417
    %v6419 = vsel %vm462, %v6413, 0.0
    %6420 = vadd.xlane.f32.xlu0 %v6419
    %v6421 = vpop.xlane.xlu0 %6420
    %v6422 = vmul.f32 %v6418, %v3557
    %v6423 = vmul.f32 %v6421, %v3557
    %v6424 = vsub.f32 %v6412, %v6422
    %v6425 = vsub.f32 %v6413, %v6423
    %v6426 = vmul.f32 %v6424, %v6424
    %v6427 = vmul.f32 %v6425, %v6425
    %v6428 = vsel %vm462, %v6426, 0.0
    %6429 = vadd.xlane.f32.xlu0 %v6428
    %v6430 = vpop.xlane.xlu0 %6429
    %v6431 = vsel %vm462, %v6427, 0.0
    %6432 = vadd.xlane.f32.xlu0 %v6431
    %v6433 = vpop.xlane.xlu0 %6432
    %v6434 = vmul.f32 %v6430, %v3557
    %v6435 = vmul.f32 %v6433, %v3557
    %v6436 = vadd.f32 %v6434, 1e-05
    %v6437 = vadd.f32 %v6435, 1e-05
    %v6438 = vrsqrt.pop %v6436
    %v6439 = vmul.f32 %v6438, %v6436
    %v6440 = vmul.f32 %v6439, %v6438
    %v6441 = vmul.f32 0.5, %v6440
    %v6442 = vsub.f32 1.5, %v6441
    %v6443 = vmul.f32 %v6438, %v6442
    %vm6444 = vweird.f32 %v6436
    %vm6445 = vweird.f32 %v6438
    %vm6446 = vmor %vm6444, %vm6445
    %v6447 = vsel %vm6446, %v6438, %v6443
    %v6448 = vrsqrt.pop %v6437
    %v6449 = vmul.f32 %v6448, %v6437
    %v6450 = vmul.f32 %v6449, %v6448
    %v6451 = vmul.f32 0.5, %v6450
    %v6452 = vsub.f32 1.5, %v6451
    %v6453 = vmul.f32 %v6448, %v6452
    %vm6454 = vweird.f32 %v6437
    %vm6455 = vweird.f32 %v6448
    %vm6456 = vmor %vm6454, %vm6455
    %v6457 = vsel %vm6456, %v6448, %v6453
    %v6458 = vmul.f32 %v6424, %v6447
    %v6459 = vmul.f32 %v6425, %v6457
    %v6460 = vperm.slane %v6415, 0
    %v6461 = vmul.f32 %v6458, %v6460
    %v6462 = vmul.f32 %v6459, %v6460
    %v6463 = vperm.slane %v6415, 1
    %v6464 = vadd.f32 %v6461, %v6463
    %v6465 = vadd.f32 %v6462, %v6463
    %s6466 = scalar_lea.vmem %s53, 4
    %v6467 = vld [vmem:[%s6466] sm:$0x3]
    %v6468 = vsel %vm462, %v6464, 0.0
    %6469 = vadd.xlane.f32.xlu0 %v6468
    %v6470 = vpop.xlane.xlu0 %6469
    %v6471 = vsel %vm462, %v6465, 0.0
    %6472 = vadd.xlane.f32.xlu0 %v6471
    %v6473 = vpop.xlane.xlu0 %6472
    %v6474 = vmul.f32 %v6470, %v3557
    %v6475 = vmul.f32 %v6473, %v3557
    %v6476 = vsub.f32 %v6464, %v6474
    %v6477 = vsub.f32 %v6465, %v6475
    %v6478 = vmul.f32 %v6476, %v6476
    %v6479 = vmul.f32 %v6477, %v6477
    %v6480 = vsel %vm462, %v6478, 0.0
    %6481 = vadd.xlane.f32.xlu0 %v6480
    %v6482 = vpop.xlane.xlu0 %6481
    %v6483 = vsel %vm462, %v6479, 0.0
    %6484 = vadd.xlane.f32.xlu0 %v6483
    %v6485 = vpop.xlane.xlu0 %6484
    %v6486 = vmul.f32 %v6482, %v3557
    %v6487 = vmul.f32 %v6485, %v3557
    %v6488 = vadd.f32 %v6486, 1e-05
    %v6489 = vadd.f32 %v6487, 1e-05
    %v6490 = vrsqrt.pop %v6488
    %v6491 = vmul.f32 %v6490, %v6488
    %v6492 = vmul.f32 %v6491, %v6490
    %v6493 = vmul.f32 0.5, %v6492
    %v6494 = vsub.f32 1.5, %v6493
    %v6495 = vmul.f32 %v6490, %v6494
    %vm6496 = vweird.f32 %v6488
    %vm6497 = vweird.f32 %v6490
    %vm6498 = vmor %vm6496, %vm6497
    %v6499 = vsel %vm6498, %v6490, %v6495
    %v6500 = vrsqrt.pop %v6489
    %v6501 = vmul.f32 %v6500, %v6489
    %v6502 = vmul.f32 %v6501, %v6500
    %v6503 = vmul.f32 0.5, %v6502
    %v6504 = vsub.f32 1.5, %v6503
    %v6505 = vmul.f32 %v6500, %v6504
    %vm6506 = vweird.f32 %v6489
    %vm6507 = vweird.f32 %v6500
    %vm6508 = vmor %vm6506, %vm6507
    %v6509 = vsel %vm6508, %v6500, %v6505
    %v6510 = vmul.f32 %v6476, %v6499
    %v6511 = vmul.f32 %v6477, %v6509
    %v6512 = vperm.slane %v6467, 0
    %v6513 = vmul.f32 %v6510, %v6512
    %v6514 = vmul.f32 %v6511, %v6512
    %v6515 = vperm.slane %v6467, 1
    %v6516 = vadd.f32 %v6513, %v6515
    %v6517 = vadd.f32 %v6514, %v6515
    %v6518 = vld [vmem:[%s55] sm:$0xff]
    %v6519 = vld [vmem:[%s55 + $0x8] sm:$0xff]
    %v6520 = vld [vmem:[%s55 + $0x10] sm:$0xff]
    %v6521 = vld [vmem:[%s55 + $0x18] sm:$0xff]
    %v6522 = vld [vmem:[%s57] sm:$0x1]
    %v6524 = vperm.slane %v6522, 0
    %v6527 = vsel %vm462, %v6516, 0
    %v6530 = vsel %vm462, %v6517, 0
    %6532 = vmatpush.msra.mxu0 0.0
    %6533 = vmatpush.msra.mxu0 0.0
    %6534 = vmatpush.msra.mxu0 0.0
    %6535 = vmatpush.msra.mxu0 0.0
    %6536 = vmatpush.msra.mxu0 0.0
    %6537 = vmatpush.msra.mxu0 0.0
    %6538 = vmatpush.msra.mxu0 0.0
    %6539 = vmatpush.msra.mxu0 0.0
    %6540 = vmatpush.msra.mxu0 0.0
    %6541 = vmatpush.msra.mxu0 0.0
    %6542 = vmatpush.msra.mxu0 0.0
    %6543 = vmatpush.msra.mxu0 0.0
    %6544 = vmatpush.msra.mxu0 %v6521
    %6545 = vmatpush.msra.mxu0 %v6520
    %6546 = vmatpush.msra.mxu0 %v6519
    %6547 = vmatpush.msra.mxu0 %v6518
    %6548 = vmatmul.f32.gmra.mxu0 %v6527
    %v6549 = vpop.f32.mrf.mxu0
    %v6550 = vadd.f32 %v6524, %v6549
    %6551 = vmatmul.f32.gmra.mxu0 %v6530
    %v6552 = vpop.f32.mrf.mxu0
    %v6553 = vadd.f32 %v6524, %v6552
    %6554 = vdwg.mxu0
    %v6555 = vmax.f32 %v6550, 0.0
    %v6556 = vmax.f32 %v6553, 0.0
    %s6557 = scalar_lea.vmem %s55, 32
    %v6558 = vld [vmem:[%s6557] sm:$0xff]
    %v6559 = vld [vmem:[%s6557 + $0x8] sm:$0xff]
    %v6560 = vld [vmem:[%s6557 + $0x10] sm:$0xff]
    %v6561 = vld [vmem:[%s6557 + $0x18] sm:$0xff]
    %s6562 = scalar_lea.vmem %s57, 1
    %v6563 = vld [vmem:[%s6562] sm:$0x1]
    %v6565 = vperm.slane %v6563, 0
    %v6568 = vsel %vm462, %v6555, 0
    %v6571 = vsel %vm462, %v6556, 0
    %6573 = vmatpush.msra.mxu0 0.0
    %6574 = vmatpush.msra.mxu0 0.0
    %6575 = vmatpush.msra.mxu0 0.0
    %6576 = vmatpush.msra.mxu0 0.0
    %6577 = vmatpush.msra.mxu0 0.0
    %6578 = vmatpush.msra.mxu0 0.0
    %6579 = vmatpush.msra.mxu0 0.0
    %6580 = vmatpush.msra.mxu0 0.0
    %6581 = vmatpush.msra.mxu0 0.0
    %6582 = vmatpush.msra.mxu0 0.0
    %6583 = vmatpush.msra.mxu0 0.0
    %6584 = vmatpush.msra.mxu0 0.0
    %6585 = vmatpush.msra.mxu0 %v6561
    %6586 = vmatpush.msra.mxu0 %v6560
    %6587 = vmatpush.msra.mxu0 %v6559
    %6588 = vmatpush.msra.mxu0 %v6558
    %6589 = vmatmul.f32.gmra.mxu0 %v6568
    %v6590 = vpop.f32.mrf.mxu0
    %v6591 = vadd.f32 %v6565, %v6590
    %6592 = vmatmul.f32.gmra.mxu0 %v6571
    %v6593 = vpop.f32.mrf.mxu0
    %v6594 = vadd.f32 %v6565, %v6593
    %6595 = vdwg.mxu0
    %v6596 = vmax.f32 %v6591, 0.0
    %v6597 = vmax.f32 %v6594, 0.0
    %v6598 = vld [vmem:[%s59] sm:$0xff]
    %v6599 = vld [vmem:[%s59 + $0x8] sm:$0xff]
    %v6600 = vld [vmem:[%s59 + $0x10] sm:$0xff]
    %v6601 = vld [vmem:[%s59 + $0x18] sm:$0xff]
    %v6602 = vld [vmem:[#allocation18] sm:$0x1]
    %v6604 = vperm.slane %v6602, 0
    %v6607 = vsel %vm462, %v6596, 0
    %v6610 = vsel %vm462, %v6597, 0
    %6612 = vmatpush.msra.mxu0 0.0
    %6613 = vmatpush.msra.mxu0 0.0
    %6614 = vmatpush.msra.mxu0 0.0
    %6615 = vmatpush.msra.mxu0 0.0
    %6616 = vmatpush.msra.mxu0 0.0
    %6617 = vmatpush.msra.mxu0 0.0
    %6618 = vmatpush.msra.mxu0 0.0
    %6619 = vmatpush.msra.mxu0 0.0
    %6620 = vmatpush.msra.mxu0 0.0
    %6621 = vmatpush.msra.mxu0 0.0
    %6622 = vmatpush.msra.mxu0 0.0
    %6623 = vmatpush.msra.mxu0 0.0
    %6624 = vmatpush.msra.mxu0 %v6601
    %6625 = vmatpush.msra.mxu0 %v6600
    %6626 = vmatpush.msra.mxu0 %v6599
    %6627 = vmatpush.msra.mxu0 %v6598
    %6628 = vmatmul.f32.gmra.mxu0 %v6607
    %v6629 = vpop.f32.mrf.mxu0
    %v6630 = vadd.f32 %v6604, %v6629
    %6631 = vmatmul.f32.gmra.mxu0 %v6610
    %v6632 = vpop.f32.mrf.mxu0
    %v6633 = vadd.f32 %v6604, %v6632
    %6634 = vdwg.mxu0
    %6635 = vst.msk [vmem:[%s63] sm:$0xff] %vm4567, %v6630
    %6636 = vst.msk [vmem:[%s63 + $0x8] sm:$0xff] %vm4567, %v6633
    // Predicated region
    $region170: #{cotr_forward.1} parent=1 // pred_check
      _
    $region171: #{cotr_forward.1} parent=1 // pred_check_branch
      %6638 = sbr.rel (0) target = $region173
    $region172: #{cotr_forward.1} parent=1 // pred_region
      _
    $region173: #{cotr_forward.1} parent=1 // pred_fallthru
      _
    // Predicated region
    $region174: #{cotr_forward.1} parent=1 // pred_check
      _
    $region175: #{cotr_forward.1} parent=1 // pred_check_branch
      %6640 = sbr.rel (0) target = $region177
    $region176: #{cotr_forward.1} parent=1 // pred_region
      _
    $region177: #{cotr_forward.1} parent=1 // pred_fallthru
      _
    %6641 = vsyncpa [#allocation3], 1
    %6642 = vsyncpa [#allocation5], 1
    %6643 = vsyncpa [#allocation8], 1
    %6644 = vsyncpa [#allocation11], 1
    %6645 = vsyncpa [#allocation14], 1
    %6646 = vsyncpa [#allocation17], 1

</llo_original>
